<compile_context>
chip_gen: v5e
topology: v5e:2x2
jax: 0.10.0
libtpu: 0.0.40
codegen_flags: <defaults>
</compile_context>

<pallas_src>
import jax
import jax.numpy as jnp
from jax.experimental import pallas as pl
from jax.experimental.pallas import tpu as pltpu

HIDDEN_DIM = 256
OUTPUT_DIM = 28 * 28            # 784
BN_EPS = 0.8                    # nn.BatchNorm1d(N, 0.8) -> eps = 0.8
LRELU_SLOPE = 0.2


def _leaky_relu(x):
    return jnp.where(x > 0, x, LRELU_SLOPE * x)


def _batchnorm_train(x, gamma, beta):
    # Training-mode BatchNorm1d: batch mean, biased batch variance, eps=0.8.
    # Single reduction pass: var = E[x^2] - E[x]^2 (clamped at 0 for safety).
    mean = jnp.mean(x, axis=0, keepdims=True)
    mean_sq = jnp.mean(x * x, axis=0, keepdims=True)
    var = jnp.maximum(mean_sq - mean * mean, 0.0)
    scale = jax.lax.rsqrt(var + BN_EPS) * gamma      # [1, N], materialized once
    return (x - mean) * scale + beta


def _dequant(q_i8, scale_f32):
    # int8 -> f32 (exact) * per-output-channel scale, rounded once to bf16.
    return (q_i8.astype(jnp.float32) * scale_f32).astype(jnp.bfloat16)


def generator_kernel(z_ref,
                     w1_hbm, w2_hbm, w3_hbm, w4_hbm,
                     b1_ref,
                     b2_ref, g2_ref, be2_ref, s2_ref,
                     b3_ref, g3_ref, be3_ref, s3_ref,
                     b4_ref, s4_ref,
                     out_ref,
                     w1_buf, w2_buf, w3_buf, w4_buf, sems):
    # Kick off all weight DMAs up front; wait per-layer so compute on layer i
    # overlaps the transfers of layers i+1..4.
    cp1 = pltpu.make_async_copy(w1_hbm, w1_buf, sems.at[0])
    cp2 = pltpu.make_async_copy(w2_hbm, w2_buf, sems.at[1])
    cp3 = pltpu.make_async_copy(w3_hbm, w3_buf, sems.at[2])
    cp4 = pltpu.make_async_copy(w4_hbm, w4_buf, sems.at[3])
    cp1.start(); cp2.start(); cp3.start(); cp4.start()

    # Layer 1: Linear(hidden_dim, 256) + LeakyReLU   (bf16 MXU, f32 accumulate)
    cp1.wait()
    z = z_ref[...].astype(jnp.bfloat16)
    h1 = jnp.dot(z, w1_buf[...], preferred_element_type=jnp.float32) + b1_ref[...]
    h1 = _leaky_relu(h1)

    # Layer 2: Linear(256, 512) + BatchNorm1d(512, eps=0.8) + LeakyReLU
    cp2.wait()
    w2 = _dequant(w2_buf[...], s2_ref[...])
    h2 = jnp.dot(h1.astype(jnp.bfloat16), w2,
                 preferred_element_type=jnp.float32) + b2_ref[...]
    h2 = _leaky_relu(_batchnorm_train(h2, g2_ref[...], be2_ref[...]))

    # Layer 3: Linear(512, 1024) + BatchNorm1d(1024, eps=0.8) + LeakyReLU
    cp3.wait()
    w3 = _dequant(w3_buf[...], s3_ref[...])
    h3 = jnp.dot(h2.astype(jnp.bfloat16), w3,
                 preferred_element_type=jnp.float32) + b3_ref[...]
    h3 = _leaky_relu(_batchnorm_train(h3, g3_ref[...], be3_ref[...]))

    # Layer 4: Linear(1024, output_dim) + Tanh
    cp4.wait()
    w4 = _dequant(w4_buf[...], s4_ref[...])
    h4 = jnp.dot(h3.astype(jnp.bfloat16), w4,
                 preferred_element_type=jnp.float32) + b4_ref[...]
    out_ref[...] = jnp.tanh(h4)


def generator_forward(z, kp):
    """Fused Generator forward pass in one Pallas kernel (single grid point)."""
    B = z.shape[0]
    args = (z,
            kp["w1"], kp["w2q"], kp["w3q"], kp["w4q"],
            kp["b1"],
            kp["b2"], kp["g2"], kp["be2"], kp["s2"],
            kp["b3"], kp["g3"], kp["be3"], kp["s3"],
            kp["b4"], kp["s4"])

    vmem = pl.BlockSpec(memory_space=pltpu.MemorySpace.VMEM)
    hbm = pl.BlockSpec(memory_space=pl.ANY)
    in_specs = [vmem, hbm, hbm, hbm, hbm] + [vmem] * 11

    weight_bytes = (256 * 256 * 2          # w1 bf16
                    + 256 * 512            # w2 int8
                    + 512 * 1024           # w3 int8
                    + 1024 * OUTPUT_DIM)   # w4 int8
    small_bytes = (512 + 1024 + OUTPUT_DIM) * 4 \
        + (256 + 512 + 1024 + OUTPUT_DIM) * 4 + (512 + 1024) * 2 * 4
    cost = pl.CostEstimate(
        flops=2 * B * (256 * 256 + 256 * 512 + 512 * 1024 + 1024 * OUTPUT_DIM),
        transcendentals=B * OUTPUT_DIM + 2048,
        bytes_accessed=weight_bytes + small_bytes
        + B * (HIDDEN_DIM + OUTPUT_DIM) * 4)

    return pl.pallas_call(
        generator_kernel,
        out_shape=jax.ShapeDtypeStruct((B, OUTPUT_DIM), jnp.float32),
        in_specs=in_specs,
        out_specs=vmem,
        scratch_shapes=[
            pltpu.VMEM((256, 256), jnp.bfloat16),
            pltpu.VMEM((256, 512), jnp.int8),
            pltpu.VMEM((512, 1024), jnp.int8),
            pltpu.VMEM((1024, OUTPUT_DIM), jnp.int8),
            pltpu.SemaphoreType.DMA((4,)),
        ],
        compiler_params=pltpu.CompilerParams(vmem_limit_bytes=32 << 20),
        cost_estimate=cost,
    )(*args)


def init_params(key, hidden_dim=HIDDEN_DIM, output_dim=OUTPUT_DIM):
    """Deterministic synthetic parameter init (shapes match nn.Module), f32."""
    ks = jax.random.split(key, 4)
    dims = [(hidden_dim, 256), (256, 512), (512, 1024), (1024, output_dim)]

    def lin(k, d_in, d_out):
        kw, kb = jax.random.split(k)
        bound = 1.0 / jnp.sqrt(d_in)
        w = jax.random.uniform(kw, (d_in, d_out), jnp.float32, -bound, bound)
        b = jax.random.uniform(kb, (1, d_out), jnp.float32, -bound, bound)
        return w, b

    w1, b1 = lin(ks[0], *dims[0])
    w2, b2 = lin(ks[1], *dims[1])
    w3, b3 = lin(ks[2], *dims[2])
    w4, b4 = lin(ks[3], *dims[3])
    return {
        "w1": w1, "b1": b1,
        "w2": w2, "b2": b2,
        "g2": jnp.ones((1, 512), jnp.float32), "be2": jnp.zeros((1, 512), jnp.float32),
        "w3": w3, "b3": b3,
        "g3": jnp.ones((1, 1024), jnp.float32), "be3": jnp.zeros((1, 1024), jnp.float32),
        "w4": w4, "b4": b4,
    }


def _quantize_per_col(w):
    """int8 symmetric per-output-channel quantization.  Returns (q_i8, scale[1,N])."""
    amax = jnp.max(jnp.abs(w), axis=0, keepdims=True)
    scale = jnp.maximum(amax, 1e-12) / 127.0
    q = jnp.clip(jnp.round(w / scale), -127, 127).astype(jnp.int8)
    return q, scale.astype(jnp.float32)


def prepare_kernel_params(params):
    """One-time conversion to kernel-ready form: bf16 w1, int8 w2/w3/w4 + scales."""
    w2q, s2 = _quantize_per_col(params["w2"])
    w3q, s3 = _quantize_per_col(params["w3"])
    w4q, s4 = _quantize_per_col(params["w4"])
    return {
        "w1": params["w1"].astype(jnp.bfloat16), "b1": params["b1"],
        "w2q": w2q, "s2": s2, "b2": params["b2"],
        "g2": params["g2"], "be2": params["be2"],
        "w3q": w3q, "s3": s3, "b3": params["b3"],
        "g3": params["g3"], "be3": params["be3"],
        "w4q": w4q, "s4": s4, "b4": params["b4"],
    }


def generator_reference_matched(z, kp):
    """Pure-JAX reference mirroring the kernel precision (int8 dequant, bf16 MXU, f32 acc)."""
    def mm(x, w_bf16):
        return jnp.dot(x.astype(jnp.bfloat16), w_bf16,
                       preferred_element_type=jnp.float32)
    h = _leaky_relu(mm(z, kp["w1"]) + kp["b1"])
    h = _leaky_relu(_batchnorm_train(mm(h, _dequant(kp["w2q"], kp["s2"])) + kp["b2"],
                                     kp["g2"], kp["be2"]))
    h = _leaky_relu(_batchnorm_train(mm(h, _dequant(kp["w3q"], kp["s3"])) + kp["b3"],
                                     kp["g3"], kp["be3"]))
    return jnp.tanh(mm(h, _dequant(kp["w4q"], kp["s4"])) + kp["b4"])


def generator_reference_f32(z, p):
    """Full-precision pure-JAX reference (sanity bound for the quantized kernel)."""
    h = _leaky_relu(z @ p["w1"] + p["b1"])
    h = _leaky_relu(_batchnorm_train(h @ p["w2"] + p["b2"], p["g2"], p["be2"]))
    h = _leaky_relu(_batchnorm_train(h @ p["w3"] + p["b3"], p["g3"], p["be3"]))
    return jnp.tanh(h @ p["w4"] + p["b4"])


if __name__ == "__main__":
    key = jax.random.PRNGKey(0)
    k_param, k_z = jax.random.split(key)

    params = init_params(k_param)
    kparams = prepare_kernel_params(params)

    batch = 8
    z = jax.random.normal(k_z, (batch, HIDDEN_DIM), jnp.float32)

    out = generator_forward(z, kparams)
    out = jax.block_until_ready(out)
    assert out.shape == (batch, OUTPUT_DIM)

    # Strict check against a precision-matched reference (same quant/dequant path).
    ref_m = generator_reference_matched(z, kparams)
    assert jnp.max(jnp.abs(out - ref_m)) < 1e-3, "mismatch vs matched-precision reference"

    # Loose sanity check against the full-f32 reference (int8 weight quantization).
    ref_f32 = generator_reference_f32(z, params)
    assert jnp.max(jnp.abs(out - ref_f32)) < 1e-1, "mismatch vs f32 reference"

    print("KERNEL_OK")
</pallas_src>

<mosaic_0001>
module attributes {stable_mosaic.version = 11 : i64} {
  func.func @generator_kernel(%arg0: memref<8x256xf32, #tpu.memory_space<vmem>>, %arg1: memref<256x256xbf16, #tpu.memory_space<any>>, %arg2: memref<256x512xi8, #tpu.memory_space<any>>, %arg3: memref<512x1024xi8, #tpu.memory_space<any>>, %arg4: memref<1024x784xi8, #tpu.memory_space<any>>, %arg5: memref<1x256xf32, #tpu.memory_space<vmem>>, %arg6: memref<1x512xf32, #tpu.memory_space<vmem>>, %arg7: memref<1x512xf32, #tpu.memory_space<vmem>>, %arg8: memref<1x512xf32, #tpu.memory_space<vmem>>, %arg9: memref<1x512xf32, #tpu.memory_space<vmem>>, %arg10: memref<1x1024xf32, #tpu.memory_space<vmem>>, %arg11: memref<1x1024xf32, #tpu.memory_space<vmem>>, %arg12: memref<1x1024xf32, #tpu.memory_space<vmem>>, %arg13: memref<1x1024xf32, #tpu.memory_space<vmem>>, %arg14: memref<1x784xf32, #tpu.memory_space<vmem>>, %arg15: memref<1x784xf32, #tpu.memory_space<vmem>>, %arg16: memref<8x784xf32, #tpu.memory_space<vmem>>, %arg17: memref<256x256xbf16, #tpu.memory_space<vmem>>, %arg18: memref<256x512xi8, #tpu.memory_space<vmem>>, %arg19: memref<512x1024xi8, #tpu.memory_space<vmem>>, %arg20: memref<1024x784xi8, #tpu.memory_space<vmem>>, %arg21: memref<4x!tpu.dma_semaphore, #tpu.memory_space<semaphore_mem>>) attributes {dimension_semantics = [], scalar_prefetch = 0 : i64, scratch_operands = 5 : i64, tpu.core_type = #tpu.core_type<tc>} {
    %c0_i32 = arith.constant 0 : i32
    %0 = tpu.memref_slice %arg21[%c0_i32] : memref<4x!tpu.dma_semaphore, #tpu.memory_space<semaphore_mem>> -> memref<1x!tpu.dma_semaphore, #tpu.memory_space<semaphore_mem>>
    %1 = tpu.memref_squeeze %0 : memref<1x!tpu.dma_semaphore, #tpu.memory_space<semaphore_mem>> -> memref<!tpu.dma_semaphore, #tpu.memory_space<semaphore_mem>>
    tpu.enqueue_dma source(%arg1 : memref<256x256xbf16, #tpu.memory_space<any>>) target(%arg17 : memref<256x256xbf16, #tpu.memory_space<vmem>>) target_semaphore(%1 : memref<!tpu.dma_semaphore, #tpu.memory_space<semaphore_mem>>)
    %c1_i32 = arith.constant 1 : i32
    %2 = tpu.memref_slice %arg21[%c1_i32] : memref<4x!tpu.dma_semaphore, #tpu.memory_space<semaphore_mem>> -> memref<1x!tpu.dma_semaphore, #tpu.memory_space<semaphore_mem>>
    %3 = tpu.memref_squeeze %2 : memref<1x!tpu.dma_semaphore, #tpu.memory_space<semaphore_mem>> -> memref<!tpu.dma_semaphore, #tpu.memory_space<semaphore_mem>>
    tpu.enqueue_dma source(%arg2 : memref<256x512xi8, #tpu.memory_space<any>>) target(%arg18 : memref<256x512xi8, #tpu.memory_space<vmem>>) target_semaphore(%3 : memref<!tpu.dma_semaphore, #tpu.memory_space<semaphore_mem>>)
    %c2_i32 = arith.constant 2 : i32
    %4 = tpu.memref_slice %arg21[%c2_i32] : memref<4x!tpu.dma_semaphore, #tpu.memory_space<semaphore_mem>> -> memref<1x!tpu.dma_semaphore, #tpu.memory_space<semaphore_mem>>
    %5 = tpu.memref_squeeze %4 : memref<1x!tpu.dma_semaphore, #tpu.memory_space<semaphore_mem>> -> memref<!tpu.dma_semaphore, #tpu.memory_space<semaphore_mem>>
    tpu.enqueue_dma source(%arg3 : memref<512x1024xi8, #tpu.memory_space<any>>) target(%arg19 : memref<512x1024xi8, #tpu.memory_space<vmem>>) target_semaphore(%5 : memref<!tpu.dma_semaphore, #tpu.memory_space<semaphore_mem>>)
    %c3_i32 = arith.constant 3 : i32
    %6 = tpu.memref_slice %arg21[%c3_i32] : memref<4x!tpu.dma_semaphore, #tpu.memory_space<semaphore_mem>> -> memref<1x!tpu.dma_semaphore, #tpu.memory_space<semaphore_mem>>
    %7 = tpu.memref_squeeze %6 : memref<1x!tpu.dma_semaphore, #tpu.memory_space<semaphore_mem>> -> memref<!tpu.dma_semaphore, #tpu.memory_space<semaphore_mem>>
    tpu.enqueue_dma source(%arg4 : memref<1024x784xi8, #tpu.memory_space<any>>) target(%arg20 : memref<1024x784xi8, #tpu.memory_space<vmem>>) target_semaphore(%7 : memref<!tpu.dma_semaphore, #tpu.memory_space<semaphore_mem>>)
    %c0_i32_0 = arith.constant 0 : i32
    %8 = tpu.memref_slice %arg21[%c0_i32_0] : memref<4x!tpu.dma_semaphore, #tpu.memory_space<semaphore_mem>> -> memref<1x!tpu.dma_semaphore, #tpu.memory_space<semaphore_mem>>
    %9 = tpu.memref_squeeze %8 : memref<1x!tpu.dma_semaphore, #tpu.memory_space<semaphore_mem>> -> memref<!tpu.dma_semaphore, #tpu.memory_space<semaphore_mem>>
    tpu.wait_dma2 semaphore(%9 : memref<!tpu.dma_semaphore, #tpu.memory_space<semaphore_mem>>) src(%arg1 : memref<256x256xbf16, #tpu.memory_space<any>>) dst(%arg17 : memref<256x256xbf16, #tpu.memory_space<vmem>>)
    %c0 = arith.constant 0 : index
    %c0_1 = arith.constant 0 : index
    %10 = vector.load %arg0[%c0, %c0_1] : memref<8x256xf32, #tpu.memory_space<vmem>>, vector<8x256xf32>
    %11 = arith.truncf %10 : vector<8x256xf32> to vector<8x256xbf16>
    %c0_2 = arith.constant 0 : index
    %c0_3 = arith.constant 0 : index
    %12 = vector.load %arg17[%c0_2, %c0_3] : memref<256x256xbf16, #tpu.memory_space<vmem>>, vector<256x256xbf16>
    %cst = arith.constant dense<0.000000e+00> : vector<8x256xf32>
    %13 = tpu.matmul %11, %12, %cst {dimension_numbers = #tpu.dot_dimension_numbers<[1], [0], [0], [1], [0, 0, 1, 1], [], []>} : vector<8x256xbf16>, vector<256x256xbf16>, vector<8x256xf32> -> vector<8x256xf32>
    %c0_4 = arith.constant 0 : index
    %c0_5 = arith.constant 0 : index
    %14 = vector.load %arg5[%c0_4, %c0_5] : memref<1x256xf32, #tpu.memory_space<vmem>>, vector<1x256xf32>
    %15 = vector.broadcast %14 : vector<1x256xf32> to vector<8x256xf32>
    %16 = arith.addf %13, %15 : vector<8x256xf32>
    %cst_6 = arith.constant 0.000000e+00 : f32
    %17 = vector.broadcast %cst_6 : f32 to vector<8x256xf32>
    %18 = arith.cmpf ogt, %16, %17 : vector<8x256xf32>
    %cst_7 = arith.constant 2.000000e-01 : f32
    %19 = vector.broadcast %cst_7 : f32 to vector<8x256xf32>
    %20 = arith.mulf %19, %16 : vector<8x256xf32>
    %21 = arith.select %18, %16, %20 : vector<8x256xi1>, vector<8x256xf32>
    %c1_i32_8 = arith.constant 1 : i32
    %22 = tpu.memref_slice %arg21[%c1_i32_8] : memref<4x!tpu.dma_semaphore, #tpu.memory_space<semaphore_mem>> -> memref<1x!tpu.dma_semaphore, #tpu.memory_space<semaphore_mem>>
    %23 = tpu.memref_squeeze %22 : memref<1x!tpu.dma_semaphore, #tpu.memory_space<semaphore_mem>> -> memref<!tpu.dma_semaphore, #tpu.memory_space<semaphore_mem>>
    tpu.wait_dma2 semaphore(%23 : memref<!tpu.dma_semaphore, #tpu.memory_space<semaphore_mem>>) src(%arg2 : memref<256x512xi8, #tpu.memory_space<any>>) dst(%arg18 : memref<256x512xi8, #tpu.memory_space<vmem>>)
    %c0_9 = arith.constant 0 : index
    %c0_10 = arith.constant 0 : index
    %24 = vector.load %arg18[%c0_9, %c0_10] : memref<256x512xi8, #tpu.memory_space<vmem>>, vector<256x512xi8>
    %c0_11 = arith.constant 0 : index
    %c0_12 = arith.constant 0 : index
    %25 = vector.load %arg9[%c0_11, %c0_12] : memref<1x512xf32, #tpu.memory_space<vmem>>, vector<1x512xf32>
    %26 = arith.sitofp %24 : vector<256x512xi8> to vector<256x512xf32>
    %27 = vector.broadcast %25 : vector<1x512xf32> to vector<256x512xf32>
    %28 = arith.mulf %26, %27 : vector<256x512xf32>
    %29 = arith.truncf %28 : vector<256x512xf32> to vector<256x512xbf16>
    %30 = arith.truncf %21 : vector<8x256xf32> to vector<8x256xbf16>
    %cst_13 = arith.constant dense<0.000000e+00> : vector<8x512xf32>
    %31 = tpu.matmul %30, %29, %cst_13 {dimension_numbers = #tpu.dot_dimension_numbers<[1], [0], [0], [1], [0, 0, 1, 1], [], []>} : vector<8x256xbf16>, vector<256x512xbf16>, vector<8x512xf32> -> vector<8x512xf32>
    %c0_14 = arith.constant 0 : index
    %c0_15 = arith.constant 0 : index
    %32 = vector.load %arg6[%c0_14, %c0_15] : memref<1x512xf32, #tpu.memory_space<vmem>>, vector<1x512xf32>
    %33 = vector.broadcast %32 : vector<1x512xf32> to vector<8x512xf32>
    %34 = arith.addf %31, %33 : vector<8x512xf32>
    %c0_16 = arith.constant 0 : index
    %c0_17 = arith.constant 0 : index
    %35 = vector.load %arg7[%c0_16, %c0_17] : memref<1x512xf32, #tpu.memory_space<vmem>>, vector<1x512xf32>
    %c0_18 = arith.constant 0 : index
    %c0_19 = arith.constant 0 : index
    %36 = vector.load %arg8[%c0_18, %c0_19] : memref<1x512xf32, #tpu.memory_space<vmem>>, vector<1x512xf32>
    %cst_20 = arith.constant dense<0.000000e+00> : vector<512xf32>
    %37 = vector.multi_reduction <add>, %34, %cst_20 [0] : vector<8x512xf32> to vector<512xf32>
    %38 = vector.shape_cast %37 : vector<512xf32> to vector<1x512xf32>
    %cst_21 = arith.constant 8.000000e+00 : f32
    %39 = vector.broadcast %cst_21 : f32 to vector<1x512xf32>
    %40 = arith.divf %38, %39 : vector<1x512xf32>
    %41 = arith.mulf %34, %34 : vector<8x512xf32>
    %cst_22 = arith.constant dense<0.000000e+00> : vector<512xf32>
    %42 = vector.multi_reduction <add>, %41, %cst_22 [0] : vector<8x512xf32> to vector<512xf32>
    %43 = vector.shape_cast %42 : vector<512xf32> to vector<1x512xf32>
    %cst_23 = arith.constant 8.000000e+00 : f32
    %44 = vector.broadcast %cst_23 : f32 to vector<1x512xf32>
    %45 = arith.divf %43, %44 : vector<1x512xf32>
    %46 = arith.mulf %40, %40 : vector<1x512xf32>
    %47 = arith.subf %45, %46 : vector<1x512xf32>
    %cst_24 = arith.constant 0.000000e+00 : f32
    %48 = vector.broadcast %cst_24 : f32 to vector<1x512xf32>
    %49 = arith.maximumf %47, %48 : vector<1x512xf32>
    %cst_25 = arith.constant 8.000000e-01 : f32
    %50 = vector.broadcast %cst_25 : f32 to vector<1x512xf32>
    %51 = arith.addf %49, %50 : vector<1x512xf32>
    %52 = math.rsqrt %51 : vector<1x512xf32>
    %53 = arith.mulf %52, %35 : vector<1x512xf32>
    %54 = vector.broadcast %40 : vector<1x512xf32> to vector<8x512xf32>
    %55 = arith.subf %34, %54 : vector<8x512xf32>
    %56 = vector.broadcast %53 : vector<1x512xf32> to vector<8x512xf32>
    %57 = arith.mulf %55, %56 : vector<8x512xf32>
    %58 = vector.broadcast %36 : vector<1x512xf32> to vector<8x512xf32>
    %59 = arith.addf %57, %58 : vector<8x512xf32>
    %cst_26 = arith.constant 0.000000e+00 : f32
    %60 = vector.broadcast %cst_26 : f32 to vector<8x512xf32>
    %61 = arith.cmpf ogt, %59, %60 : vector<8x512xf32>
    %cst_27 = arith.constant 2.000000e-01 : f32
    %62 = vector.broadcast %cst_27 : f32 to vector<8x512xf32>
    %63 = arith.mulf %62, %59 : vector<8x512xf32>
    %64 = arith.select %61, %59, %63 : vector<8x512xi1>, vector<8x512xf32>
    %c2_i32_28 = arith.constant 2 : i32
    %65 = tpu.memref_slice %arg21[%c2_i32_28] : memref<4x!tpu.dma_semaphore, #tpu.memory_space<semaphore_mem>> -> memref<1x!tpu.dma_semaphore, #tpu.memory_space<semaphore_mem>>
    %66 = tpu.memref_squeeze %65 : memref<1x!tpu.dma_semaphore, #tpu.memory_space<semaphore_mem>> -> memref<!tpu.dma_semaphore, #tpu.memory_space<semaphore_mem>>
    tpu.wait_dma2 semaphore(%66 : memref<!tpu.dma_semaphore, #tpu.memory_space<semaphore_mem>>) src(%arg3 : memref<512x1024xi8, #tpu.memory_space<any>>) dst(%arg19 : memref<512x1024xi8, #tpu.memory_space<vmem>>)
    %c0_29 = arith.constant 0 : index
    %c0_30 = arith.constant 0 : index
    %67 = vector.load %arg19[%c0_29, %c0_30] : memref<512x1024xi8, #tpu.memory_space<vmem>>, vector<512x1024xi8>
    %c0_31 = arith.constant 0 : index
    %c0_32 = arith.constant 0 : index
    %68 = vector.load %arg13[%c0_31, %c0_32] : memref<1x1024xf32, #tpu.memory_space<vmem>>, vector<1x1024xf32>
    %69 = arith.sitofp %67 : vector<512x1024xi8> to vector<512x1024xf32>
    %70 = vector.broadcast %68 : vector<1x1024xf32> to vector<512x1024xf32>
    %71 = arith.mulf %69, %70 : vector<512x1024xf32>
    %72 = arith.truncf %71 : vector<512x1024xf32> to vector<512x1024xbf16>
    %73 = arith.truncf %64 : vector<8x512xf32> to vector<8x512xbf16>
    %cst_33 = arith.constant dense<0.000000e+00> : vector<8x1024xf32>
    %74 = tpu.matmul %73, %72, %cst_33 {dimension_numbers = #tpu.dot_dimension_numbers<[1], [0], [0], [1], [0, 0, 1, 1], [], []>} : vector<8x512xbf16>, vector<512x1024xbf16>, vector<8x1024xf32> -> vector<8x1024xf32>
    %c0_34 = arith.constant 0 : index
    %c0_35 = arith.constant 0 : index
    %75 = vector.load %arg10[%c0_34, %c0_35] : memref<1x1024xf32, #tpu.memory_space<vmem>>, vector<1x1024xf32>
    %76 = vector.broadcast %75 : vector<1x1024xf32> to vector<8x1024xf32>
    %77 = arith.addf %74, %76 : vector<8x1024xf32>
    %c0_36 = arith.constant 0 : index
    %c0_37 = arith.constant 0 : index
    %78 = vector.load %arg11[%c0_36, %c0_37] : memref<1x1024xf32, #tpu.memory_space<vmem>>, vector<1x1024xf32>
    %c0_38 = arith.constant 0 : index
    %c0_39 = arith.constant 0 : index
    %79 = vector.load %arg12[%c0_38, %c0_39] : memref<1x1024xf32, #tpu.memory_space<vmem>>, vector<1x1024xf32>
    %cst_40 = arith.constant dense<0.000000e+00> : vector<1024xf32>
    %80 = vector.multi_reduction <add>, %77, %cst_40 [0] : vector<8x1024xf32> to vector<1024xf32>
    %81 = vector.shape_cast %80 : vector<1024xf32> to vector<1x1024xf32>
    %cst_41 = arith.constant 8.000000e+00 : f32
    %82 = vector.broadcast %cst_41 : f32 to vector<1x1024xf32>
    %83 = arith.divf %81, %82 : vector<1x1024xf32>
    %84 = arith.mulf %77, %77 : vector<8x1024xf32>
    %cst_42 = arith.constant dense<0.000000e+00> : vector<1024xf32>
    %85 = vector.multi_reduction <add>, %84, %cst_42 [0] : vector<8x1024xf32> to vector<1024xf32>
    %86 = vector.shape_cast %85 : vector<1024xf32> to vector<1x1024xf32>
    %cst_43 = arith.constant 8.000000e+00 : f32
    %87 = vector.broadcast %cst_43 : f32 to vector<1x1024xf32>
    %88 = arith.divf %86, %87 : vector<1x1024xf32>
    %89 = arith.mulf %83, %83 : vector<1x1024xf32>
    %90 = arith.subf %88, %89 : vector<1x1024xf32>
    %cst_44 = arith.constant 0.000000e+00 : f32
    %91 = vector.broadcast %cst_44 : f32 to vector<1x1024xf32>
    %92 = arith.maximumf %90, %91 : vector<1x1024xf32>
    %cst_45 = arith.constant 8.000000e-01 : f32
    %93 = vector.broadcast %cst_45 : f32 to vector<1x1024xf32>
    %94 = arith.addf %92, %93 : vector<1x1024xf32>
    %95 = math.rsqrt %94 : vector<1x1024xf32>
    %96 = arith.mulf %95, %78 : vector<1x1024xf32>
    %97 = vector.broadcast %83 : vector<1x1024xf32> to vector<8x1024xf32>
    %98 = arith.subf %77, %97 : vector<8x1024xf32>
    %99 = vector.broadcast %96 : vector<1x1024xf32> to vector<8x1024xf32>
    %100 = arith.mulf %98, %99 : vector<8x1024xf32>
    %101 = vector.broadcast %79 : vector<1x1024xf32> to vector<8x1024xf32>
    %102 = arith.addf %100, %101 : vector<8x1024xf32>
    %cst_46 = arith.constant 0.000000e+00 : f32
    %103 = vector.broadcast %cst_46 : f32 to vector<8x1024xf32>
    %104 = arith.cmpf ogt, %102, %103 : vector<8x1024xf32>
    %cst_47 = arith.constant 2.000000e-01 : f32
    %105 = vector.broadcast %cst_47 : f32 to vector<8x1024xf32>
    %106 = arith.mulf %105, %102 : vector<8x1024xf32>
    %107 = arith.select %104, %102, %106 : vector<8x1024xi1>, vector<8x1024xf32>
    %c3_i32_48 = arith.constant 3 : i32
    %108 = tpu.memref_slice %arg21[%c3_i32_48] : memref<4x!tpu.dma_semaphore, #tpu.memory_space<semaphore_mem>> -> memref<1x!tpu.dma_semaphore, #tpu.memory_space<semaphore_mem>>
    %109 = tpu.memref_squeeze %108 : memref<1x!tpu.dma_semaphore, #tpu.memory_space<semaphore_mem>> -> memref<!tpu.dma_semaphore, #tpu.memory_space<semaphore_mem>>
    tpu.wait_dma2 semaphore(%109 : memref<!tpu.dma_semaphore, #tpu.memory_space<semaphore_mem>>) src(%arg4 : memref<1024x784xi8, #tpu.memory_space<any>>) dst(%arg20 : memref<1024x784xi8, #tpu.memory_space<vmem>>)
    %c0_49 = arith.constant 0 : index
    %c0_50 = arith.constant 0 : index
    %110 = vector.load %arg20[%c0_49, %c0_50] : memref<1024x784xi8, #tpu.memory_space<vmem>>, vector<1024x784xi8>
    %c0_51 = arith.constant 0 : index
    %c0_52 = arith.constant 0 : index
    %111 = vector.load %arg15[%c0_51, %c0_52] : memref<1x784xf32, #tpu.memory_space<vmem>>, vector<1x784xf32>
    %112 = arith.sitofp %110 : vector<1024x784xi8> to vector<1024x784xf32>
    %113 = vector.broadcast %111 : vector<1x784xf32> to vector<1024x784xf32>
    %114 = arith.mulf %112, %113 : vector<1024x784xf32>
    %115 = arith.truncf %114 : vector<1024x784xf32> to vector<1024x784xbf16>
    %116 = arith.truncf %107 : vector<8x1024xf32> to vector<8x1024xbf16>
    %cst_53 = arith.constant dense<0.000000e+00> : vector<8x784xf32>
    %117 = tpu.matmul %116, %115, %cst_53 {dimension_numbers = #tpu.dot_dimension_numbers<[1], [0], [0], [1], [0, 0, 1, 1], [], []>} : vector<8x1024xbf16>, vector<1024x784xbf16>, vector<8x784xf32> -> vector<8x784xf32>
    %c0_54 = arith.constant 0 : index
    %c0_55 = arith.constant 0 : index
    %118 = vector.load %arg14[%c0_54, %c0_55] : memref<1x784xf32, #tpu.memory_space<vmem>>, vector<1x784xf32>
    %119 = vector.broadcast %118 : vector<1x784xf32> to vector<8x784xf32>
    %120 = arith.addf %117, %119 : vector<8x784xf32>
    %121 = math.tanh %120 : vector<8x784xf32>
    %c0_56 = arith.constant 0 : index
    %c0_57 = arith.constant 0 : index
    %122 = vector.load %arg16[%c0_56, %c0_57] : memref<8x784xf32, #tpu.memory_space<vmem>>, vector<8x784xf32>
    tpu.vector_store %arg16[%c0_56, %c0_57], %121 {strides = array<i32>} : memref<8x784xf32, #tpu.memory_space<vmem>>, vector<8x784xf32>,
    return
  }
}

</mosaic_0001>

<llo_original>
// kernel: tpu_custom_call.1
$region0: #{tpu_custom_call.1}
  #allocation0 [shape = 'u32[]', space=smem, size = 0x4, offset = 0x4, fixed_abs, tag = 'smem constant byte address 0x4 - core index']
  #allocation1 [shape = 'u32[72,128]{1,0:T(1,128)}', space=vmem, size = 0x9000, scoped, tag = 'internal scratch']
  #allocation2 [shape = 'bf16[256,256]{1,0:T(8,128)(2,1)}', space=vmem, size = 0x20000, scoped, tag = 'scratch operand']
  #allocation3 [shape = 's8[256,512]{1,0:T(32,128)(4,1)}', space=vmem, size = 0x20000, scoped, tag = 'scratch operand']
  #allocation4 [shape = 's8[512,1024]{1,0:T(32,128)(4,1)}', space=vmem, size = 0x80000, scoped, tag = 'scratch operand']
  #allocation5 [shape = 's8[1024,784]{1,0:T(32,128)(4,1)}', space=vmem, size = 0xe0000, scoped, tag = 'scratch operand']
  #allocation6 [shape = 's32[4]{0}', space=sflag, size = 0x10, scoped, tag = 'scratch operand']
  #allocation9 [shape = 's32[]', space=sflag, size = 0x4, offset = 0, fixed_abs, tag = 'sflag constant byte address 0x0 - dummy sync flag']
  #allocation10 [shape = 's32[]', space=sflag, size = 0x4, offset = 0, fixed_abs, tag = 'sflag constant byte address 0x0 - dummy sync flag']
  #allocation11 [shape = 's32[]', space=sflag, size = 0x4, offset = 0, fixed_abs, tag = 'sflag constant byte address 0x0 - dummy sync flag']
  #allocation12 [shape = 's32[]', space=sflag, size = 0x4, offset = 0, fixed_abs, tag = 'sflag constant byte address 0x0 - dummy sync flag']
  %s0 = inlined_call_operand.vmem [shape: f32[8,256], index: 0, kind: input, shape index: {}]
  %s1 = inlined_call_operand.vmem [shape: bf16[256,256], index: 1, kind: input, shape index: {}]
  %s2 = inlined_call_operand.vmem [shape: s8[256,512], index: 2, kind: input, shape index: {}]
  %s3 = inlined_call_operand.vmem [shape: s8[512,1024], index: 3, kind: input, shape index: {}]
  %s4 = inlined_call_operand.vmem [shape: s8[1024,784], index: 4, kind: input, shape index: {}]
  %s5 = inlined_call_operand.vmem [shape: f32[1,256], index: 5, kind: input, shape index: {}]
  %s6 = inlined_call_operand.vmem [shape: f32[1,512], index: 6, kind: input, shape index: {}]
  %s7 = inlined_call_operand.vmem [shape: f32[1,512], index: 7, kind: input, shape index: {}]
  %s8 = inlined_call_operand.vmem [shape: f32[1,512], index: 8, kind: input, shape index: {}]
  %s9 = inlined_call_operand.vmem [shape: f32[1,512], index: 9, kind: input, shape index: {}]
  %s10 = inlined_call_operand.vmem [shape: f32[1,1024], index: 10, kind: input, shape index: {}]
  %s11 = inlined_call_operand.vmem [shape: f32[1,1024], index: 11, kind: input, shape index: {}]
  %s12 = inlined_call_operand.vmem [shape: f32[1,1024], index: 12, kind: input, shape index: {}]
  %s13 = inlined_call_operand.vmem [shape: f32[1,1024], index: 13, kind: input, shape index: {}]
  %s14 = inlined_call_operand.vmem [shape: f32[1,784], index: 14, kind: input, shape index: {}]
  %s15 = inlined_call_operand.vmem [shape: f32[1,784], index: 15, kind: input, shape index: {}]
  %s16 = inlined_call_operand.hbm [shape: f32[8,784], index: 16, kind: output, shape index: {}]
  %s17 = sld [smem:[#allocation0]]
  $region134: #{tpu_custom_call.1} parent=0
    _
  %s19 = ssub.s32 1, %s17
  %s20 = scalar_select 0, %s19, %s17
  $region1: #{tpu_custom_call.1} parent=0
    #allocation7 [shape = 'u8[28672]{0}', space=vmem, size = 0x7000, scoped, tag = 'output window, operand 0, single buffered']
    #allocation8 [shape = 's32[1]{0}', space=sflag, size = 0x4, scoped, tag = 'scoped memory for tpu_custom_call.1']
    %21 = vsyncpa [#allocation8], 0
    // Predicated region
    $region2: #{tpu_custom_call.1} parent=1 // pred_check
      _
    $region3: #{tpu_custom_call.1} parent=1 // pred_check_branch
      %23 = sbr.rel (0) target = $region5
    $region4: #{tpu_custom_call.1} parent=1 // pred_region
      _
    $region5: #{tpu_custom_call.1} parent=1 // pred_fallthru
      _
    // Predicated region
    $region6: #{tpu_custom_call.1} parent=1 // pred_check
      _
    $region7: #{tpu_custom_call.1} parent=1 // pred_check_branch
      %25 = sbr.rel (0) target = $region9
    $region8: #{tpu_custom_call.1} parent=1 // pred_region
      _
    $region9: #{tpu_custom_call.1} parent=1 // pred_fallthru
      _
    // Predicated region
    $region10: #{tpu_custom_call.1} parent=1 // pred_check
      _
    $region11: #{tpu_custom_call.1} parent=1 // pred_check_branch
      %27 = sbr.rel (0) target = $region13
    $region12: #{tpu_custom_call.1} parent=1 // pred_region
      _
    $region13: #{tpu_custom_call.1} parent=1 // pred_fallthru
      _
    // Predicated region
    $region14: #{tpu_custom_call.1} parent=1 // pred_check
      _
    $region15: #{tpu_custom_call.1} parent=1 // pred_check_branch
      %29 = sbr.rel (0) target = $region17
    $region16: #{tpu_custom_call.1} parent=1 // pred_region
      _
    $region17: #{tpu_custom_call.1} parent=1 // pred_fallthru
      _
    // Predicated region
    $region18: #{tpu_custom_call.1} parent=1 // pred_check
      _
    $region19: #{tpu_custom_call.1} parent=1 // pred_check_branch
      %31 = sbr.rel (0) target = $region21
    $region20: #{tpu_custom_call.1} parent=1 // pred_region
      _
    $region21: #{tpu_custom_call.1} parent=1 // pred_fallthru
      _
    // Predicated region
    $region22: #{tpu_custom_call.1} parent=1 // pred_check
      _
    $region23: #{tpu_custom_call.1} parent=1 // pred_check_branch
      %33 = sbr.rel (0) target = $region25
    $region24: #{tpu_custom_call.1} parent=1 // pred_region
      _
    $region25: #{tpu_custom_call.1} parent=1 // pred_fallthru
      _
    // Predicated region
    $region26: #{tpu_custom_call.1} parent=1 // pred_check
      _
    $region27: #{tpu_custom_call.1} parent=1 // pred_check_branch
      %35 = sbr.rel (0) target = $region29
    $region28: #{tpu_custom_call.1} parent=1 // pred_region
      _
    $region29: #{tpu_custom_call.1} parent=1 // pred_fallthru
      _
    // Predicated region
    $region30: #{tpu_custom_call.1} parent=1 // pred_check
      _
    $region31: #{tpu_custom_call.1} parent=1 // pred_check_branch
      %37 = sbr.rel (0) target = $region33
    $region32: #{tpu_custom_call.1} parent=1 // pred_region
      _
    $region33: #{tpu_custom_call.1} parent=1 // pred_fallthru
      _
    // Predicated region
    $region34: #{tpu_custom_call.1} parent=1 // pred_check
      _
    $region35: #{tpu_custom_call.1} parent=1 // pred_check_branch
      %39 = sbr.rel (0) target = $region37
    $region36: #{tpu_custom_call.1} parent=1 // pred_region
      _
    $region37: #{tpu_custom_call.1} parent=1 // pred_fallthru
      _
    // Predicated region
    $region38: #{tpu_custom_call.1} parent=1 // pred_check
      _
    $region39: #{tpu_custom_call.1} parent=1 // pred_check_branch
      %41 = sbr.rel (0) target = $region41
    $region40: #{tpu_custom_call.1} parent=1 // pred_region
      _
    $region41: #{tpu_custom_call.1} parent=1 // pred_fallthru
      _
    // Predicated region
    $region42: #{tpu_custom_call.1} parent=1 // pred_check
      _
    $region43: #{tpu_custom_call.1} parent=1 // pred_check_branch
      %43 = sbr.rel (0) target = $region45
    $region44: #{tpu_custom_call.1} parent=1 // pred_region
      _
    $region45: #{tpu_custom_call.1} parent=1 // pred_fallthru
      _
    // Predicated region
    $region46: #{tpu_custom_call.1} parent=1 // pred_check
      _
    $region47: #{tpu_custom_call.1} parent=1 // pred_check_branch
      %45 = sbr.rel (0) target = $region49
    $region48: #{tpu_custom_call.1} parent=1 // pred_region
      _
    $region49: #{tpu_custom_call.1} parent=1 // pred_fallthru
      _
    // Predicated region
    $region50: #{tpu_custom_call.1} parent=1 // pred_check
      _
    $region51: #{tpu_custom_call.1} parent=1 // pred_check_branch
      %47 = sbr.rel (0) target = $region53
    $region52: #{tpu_custom_call.1} parent=1 // pred_region
      loop: start=0, step=1, limit=1
      $region54: #{tpu_custom_call.1} parent=52 // loop_pre_header
        _
      $region55: #{tpu_custom_call.1} parent=52 // loop_header
        %s49 = sphi 0, %s53
        %p50 = scmp.ge.s32.totalorder %s49, 1
        %s54 = sphi %s1, %s1
        %s55 = sphi [#allocation2], [#allocation2]
      $region56: #{tpu_custom_call.1} parent=52 // loop_header_branch
        %52 = sbr.rel (%p50) target = $region60
      $region57: #{tpu_custom_call.1} parent=52 // loop_body
        %v56 = vld [vmem:[%s54] sm:$0xff]
        %57 = vst [vmem:[%s55] sm:$0xff] %v56
        %v58 = vld [vmem:[%s54 + $0x8] sm:$0xff]
        %59 = vst [vmem:[%s55 + $0x8] sm:$0xff] %v58
        %v60 = vld [vmem:[%s54 + $0x10] sm:$0xff]
        %61 = vst [vmem:[%s55 + $0x10] sm:$0xff] %v60
        %v62 = vld [vmem:[%s54 + $0x18] sm:$0xff]
        %63 = vst [vmem:[%s55 + $0x18] sm:$0xff] %v62
        %v64 = vld [vmem:[%s54 + $0x20] sm:$0xff]
        %65 = vst [vmem:[%s55 + $0x20] sm:$0xff] %v64
        %v66 = vld [vmem:[%s54 + $0x28] sm:$0xff]
        %67 = vst [vmem:[%s55 + $0x28] sm:$0xff] %v66
        %v68 = vld [vmem:[%s54 + $0x30] sm:$0xff]
        %69 = vst [vmem:[%s55 + $0x30] sm:$0xff] %v68
        %v70 = vld [vmem:[%s54 + $0x38] sm:$0xff]
        %71 = vst [vmem:[%s55 + $0x38] sm:$0xff] %v70
        %v72 = vld [vmem:[%s54 + $0x40] sm:$0xff]
        %73 = vst [vmem:[%s55 + $0x40] sm:$0xff] %v72
        %v74 = vld [vmem:[%s54 + $0x48] sm:$0xff]
        %75 = vst [vmem:[%s55 + $0x48] sm:$0xff] %v74
        %v76 = vld [vmem:[%s54 + $0x50] sm:$0xff]
        %77 = vst [vmem:[%s55 + $0x50] sm:$0xff] %v76
        %v78 = vld [vmem:[%s54 + $0x58] sm:$0xff]
        %79 = vst [vmem:[%s55 + $0x58] sm:$0xff] %v78
        %v80 = vld [vmem:[%s54 + $0x60] sm:$0xff]
        %81 = vst [vmem:[%s55 + $0x60] sm:$0xff] %v80
        %v82 = vld [vmem:[%s54 + $0x68] sm:$0xff]
        %83 = vst [vmem:[%s55 + $0x68] sm:$0xff] %v82
        %v84 = vld [vmem:[%s54 + $0x70] sm:$0xff]
        %85 = vst [vmem:[%s55 + $0x70] sm:$0xff] %v84
        %v86 = vld [vmem:[%s54 + $0x78] sm:$0xff]
        %87 = vst [vmem:[%s55 + $0x78] sm:$0xff] %v86
        %v88 = vld [vmem:[%s54 + $0x80] sm:$0xff]
        %89 = vst [vmem:[%s55 + $0x80] sm:$0xff] %v88
        %v90 = vld [vmem:[%s54 + $0x88] sm:$0xff]
        %91 = vst [vmem:[%s55 + $0x88] sm:$0xff] %v90
        %v92 = vld [vmem:[%s54 + $0x90] sm:$0xff]
        %93 = vst [vmem:[%s55 + $0x90] sm:$0xff] %v92
        %v94 = vld [vmem:[%s54 + $0x98] sm:$0xff]
        %95 = vst [vmem:[%s55 + $0x98] sm:$0xff] %v94
        %v96 = vld [vmem:[%s54 + $0xa0] sm:$0xff]
        %97 = vst [vmem:[%s55 + $0xa0] sm:$0xff] %v96
        %v98 = vld [vmem:[%s54 + $0xa8] sm:$0xff]
        %99 = vst [vmem:[%s55 + $0xa8] sm:$0xff] %v98
        %v100 = vld [vmem:[%s54 + $0xb0] sm:$0xff]
        %101 = vst [vmem:[%s55 + $0xb0] sm:$0xff] %v100
        %v102 = vld [vmem:[%s54 + $0xb8] sm:$0xff]
        %103 = vst [vmem:[%s55 + $0xb8] sm:$0xff] %v102
        %v104 = vld [vmem:[%s54 + $0xc0] sm:$0xff]
        %105 = vst [vmem:[%s55 + $0xc0] sm:$0xff] %v104
        %v106 = vld [vmem:[%s54 + $0xc8] sm:$0xff]
        %107 = vst [vmem:[%s55 + $0xc8] sm:$0xff] %v106
        %v108 = vld [vmem:[%s54 + $0xd0] sm:$0xff]
        %109 = vst [vmem:[%s55 + $0xd0] sm:$0xff] %v108
        %v110 = vld [vmem:[%s54 + $0xd8] sm:$0xff]
        %111 = vst [vmem:[%s55 + $0xd8] sm:$0xff] %v110
        %v112 = vld [vmem:[%s54 + $0xe0] sm:$0xff]
        %113 = vst [vmem:[%s55 + $0xe0] sm:$0xff] %v112
        %v114 = vld [vmem:[%s54 + $0xe8] sm:$0xff]
        %115 = vst [vmem:[%s55 + $0xe8] sm:$0xff] %v114
        %v116 = vld [vmem:[%s54 + $0xf0] sm:$0xff]
        %117 = vst [vmem:[%s55 + $0xf0] sm:$0xff] %v116
        %v118 = vld [vmem:[%s54 + $0xf8] sm:$0xff]
        %119 = vst [vmem:[%s55 + $0xf8] sm:$0xff] %v118
      $region58: #{tpu_custom_call.1} parent=52 // loop_footer
        %s53 = sadd.s32 1, %s49
      $region59: #{tpu_custom_call.1} parent=52 // loop_footer_branch
        %48 = sbr.rel target = $region55
      $region60: #{tpu_custom_call.1} parent=52 // loop_exit
        _
    $region53: #{tpu_custom_call.1} parent=1 // pred_fallthru
      _
    // Predicated region
    $region61: #{tpu_custom_call.1} parent=1 // pred_check
      _
    $region62: #{tpu_custom_call.1} parent=1 // pred_check_branch
      %121 = sbr.rel target = $region64
    $region63: #{tpu_custom_call.1} parent=1 // pred_region
      _
    $region64: #{tpu_custom_call.1} parent=1 // pred_fallthru
      _
    // Predicated region
    $region65: #{tpu_custom_call.1} parent=1 // pred_check
      _
    $region66: #{tpu_custom_call.1} parent=1 // pred_check_branch
      %124 = sbr.rel (0) target = $region68
    $region67: #{tpu_custom_call.1} parent=1 // pred_region
      %125 = vsyncadd [#allocation6], 4096
    $region68: #{tpu_custom_call.1} parent=1 // pred_fallthru
      _
    %s126 = scalar_lea.sflag [#allocation6], 1
    // Predicated region
    $region69: #{tpu_custom_call.1} parent=1 // pred_check
      _
    $region70: #{tpu_custom_call.1} parent=1 // pred_check_branch
      %128 = sbr.rel (0) target = $region72
    $region71: #{tpu_custom_call.1} parent=1 // pred_region
      loop: start=0, step=1, limit=1
      $region73: #{tpu_custom_call.1} parent=71 // loop_pre_header
        _
      $region74: #{tpu_custom_call.1} parent=71 // loop_header
        %s130 = sphi 0, %s134
        %p131 = scmp.ge.s32.totalorder %s130, 1
        %s135 = sphi %s2, %s2
        %s136 = sphi [#allocation3], [#allocation3]
      $region75: #{tpu_custom_call.1} parent=71 // loop_header_branch
        %133 = sbr.rel (%p131) target = $region79
      $region76: #{tpu_custom_call.1} parent=71 // loop_body
        %v137 = vld [vmem:[%s135] sm:$0xff]
        %138 = vst [vmem:[%s136] sm:$0xff] %v137
        %v139 = vld [vmem:[%s135 + $0x8] sm:$0xff]
        %140 = vst [vmem:[%s136 + $0x8] sm:$0xff] %v139
        %v141 = vld [vmem:[%s135 + $0x10] sm:$0xff]
        %142 = vst [vmem:[%s136 + $0x10] sm:$0xff] %v141
        %v143 = vld [vmem:[%s135 + $0x18] sm:$0xff]
        %144 = vst [vmem:[%s136 + $0x18] sm:$0xff] %v143
        %v145 = vld [vmem:[%s135 + $0x20] sm:$0xff]
        %146 = vst [vmem:[%s136 + $0x20] sm:$0xff] %v145
        %v147 = vld [vmem:[%s135 + $0x28] sm:$0xff]
        %148 = vst [vmem:[%s136 + $0x28] sm:$0xff] %v147
        %v149 = vld [vmem:[%s135 + $0x30] sm:$0xff]
        %150 = vst [vmem:[%s136 + $0x30] sm:$0xff] %v149
        %v151 = vld [vmem:[%s135 + $0x38] sm:$0xff]
        %152 = vst [vmem:[%s136 + $0x38] sm:$0xff] %v151
        %v153 = vld [vmem:[%s135 + $0x40] sm:$0xff]
        %154 = vst [vmem:[%s136 + $0x40] sm:$0xff] %v153
        %v155 = vld [vmem:[%s135 + $0x48] sm:$0xff]
        %156 = vst [vmem:[%s136 + $0x48] sm:$0xff] %v155
        %v157 = vld [vmem:[%s135 + $0x50] sm:$0xff]
        %158 = vst [vmem:[%s136 + $0x50] sm:$0xff] %v157
        %v159 = vld [vmem:[%s135 + $0x58] sm:$0xff]
        %160 = vst [vmem:[%s136 + $0x58] sm:$0xff] %v159
        %v161 = vld [vmem:[%s135 + $0x60] sm:$0xff]
        %162 = vst [vmem:[%s136 + $0x60] sm:$0xff] %v161
        %v163 = vld [vmem:[%s135 + $0x68] sm:$0xff]
        %164 = vst [vmem:[%s136 + $0x68] sm:$0xff] %v163
        %v165 = vld [vmem:[%s135 + $0x70] sm:$0xff]
        %166 = vst [vmem:[%s136 + $0x70] sm:$0xff] %v165
        %v167 = vld [vmem:[%s135 + $0x78] sm:$0xff]
        %168 = vst [vmem:[%s136 + $0x78] sm:$0xff] %v167
        %v169 = vld [vmem:[%s135 + $0x80] sm:$0xff]
        %170 = vst [vmem:[%s136 + $0x80] sm:$0xff] %v169
        %v171 = vld [vmem:[%s135 + $0x88] sm:$0xff]
        %172 = vst [vmem:[%s136 + $0x88] sm:$0xff] %v171
        %v173 = vld [vmem:[%s135 + $0x90] sm:$0xff]
        %174 = vst [vmem:[%s136 + $0x90] sm:$0xff] %v173
        %v175 = vld [vmem:[%s135 + $0x98] sm:$0xff]
        %176 = vst [vmem:[%s136 + $0x98] sm:$0xff] %v175
        %v177 = vld [vmem:[%s135 + $0xa0] sm:$0xff]
        %178 = vst [vmem:[%s136 + $0xa0] sm:$0xff] %v177
        %v179 = vld [vmem:[%s135 + $0xa8] sm:$0xff]
        %180 = vst [vmem:[%s136 + $0xa8] sm:$0xff] %v179
        %v181 = vld [vmem:[%s135 + $0xb0] sm:$0xff]
        %182 = vst [vmem:[%s136 + $0xb0] sm:$0xff] %v181
        %v183 = vld [vmem:[%s135 + $0xb8] sm:$0xff]
        %184 = vst [vmem:[%s136 + $0xb8] sm:$0xff] %v183
        %v185 = vld [vmem:[%s135 + $0xc0] sm:$0xff]
        %186 = vst [vmem:[%s136 + $0xc0] sm:$0xff] %v185
        %v187 = vld [vmem:[%s135 + $0xc8] sm:$0xff]
        %188 = vst [vmem:[%s136 + $0xc8] sm:$0xff] %v187
        %v189 = vld [vmem:[%s135 + $0xd0] sm:$0xff]
        %190 = vst [vmem:[%s136 + $0xd0] sm:$0xff] %v189
        %v191 = vld [vmem:[%s135 + $0xd8] sm:$0xff]
        %192 = vst [vmem:[%s136 + $0xd8] sm:$0xff] %v191
        %v193 = vld [vmem:[%s135 + $0xe0] sm:$0xff]
        %194 = vst [vmem:[%s136 + $0xe0] sm:$0xff] %v193
        %v195 = vld [vmem:[%s135 + $0xe8] sm:$0xff]
        %196 = vst [vmem:[%s136 + $0xe8] sm:$0xff] %v195
        %v197 = vld [vmem:[%s135 + $0xf0] sm:$0xff]
        %198 = vst [vmem:[%s136 + $0xf0] sm:$0xff] %v197
        %v199 = vld [vmem:[%s135 + $0xf8] sm:$0xff]
        %200 = vst [vmem:[%s136 + $0xf8] sm:$0xff] %v199
      $region77: #{tpu_custom_call.1} parent=71 // loop_footer
        %s134 = sadd.s32 1, %s130
      $region78: #{tpu_custom_call.1} parent=71 // loop_footer_branch
        %129 = sbr.rel target = $region74
      $region79: #{tpu_custom_call.1} parent=71 // loop_exit
        _
    $region72: #{tpu_custom_call.1} parent=1 // pred_fallthru
      _
    // Predicated region
    $region80: #{tpu_custom_call.1} parent=1 // pred_check
      _
    $region81: #{tpu_custom_call.1} parent=1 // pred_check_branch
      %202 = sbr.rel target = $region83
    $region82: #{tpu_custom_call.1} parent=1 // pred_region
      _
    $region83: #{tpu_custom_call.1} parent=1 // pred_fallthru
      _
    // Predicated region
    $region84: #{tpu_custom_call.1} parent=1 // pred_check
      _
    $region85: #{tpu_custom_call.1} parent=1 // pred_check_branch
      %205 = sbr.rel (0) target = $region87
    $region86: #{tpu_custom_call.1} parent=1 // pred_region
      %206 = vsyncadd %s126, 4096
    $region87: #{tpu_custom_call.1} parent=1 // pred_fallthru
      _
    %s207 = scalar_lea.sflag [#allocation6], 2
    // Predicated region
    $region88: #{tpu_custom_call.1} parent=1 // pred_check
      _
    $region89: #{tpu_custom_call.1} parent=1 // pred_check_branch
      %209 = sbr.rel (0) target = $region91
    $region90: #{tpu_custom_call.1} parent=1 // pred_region
      loop: start=0, step=1, limit=1
      $region92: #{tpu_custom_call.1} parent=90 // loop_pre_header
        _
      $region93: #{tpu_custom_call.1} parent=90 // loop_header
        %s211 = sphi 0, %s215
        %p212 = scmp.ge.s32.totalorder %s211, 1
        %s216 = sphi %s3, %s3
        %s217 = sphi [#allocation4], [#allocation4]
      $region94: #{tpu_custom_call.1} parent=90 // loop_header_branch
        %214 = sbr.rel (%p212) target = $region98
      $region95: #{tpu_custom_call.1} parent=90 // loop_body
        %v218 = vld [vmem:[%s216] sm:$0xff]
        %219 = vst [vmem:[%s217] sm:$0xff] %v218
        %v220 = vld [vmem:[%s216 + $0x8] sm:$0xff]
        %221 = vst [vmem:[%s217 + $0x8] sm:$0xff] %v220
        %v222 = vld [vmem:[%s216 + $0x10] sm:$0xff]
        %223 = vst [vmem:[%s217 + $0x10] sm:$0xff] %v222
        %v224 = vld [vmem:[%s216 + $0x18] sm:$0xff]
        %225 = vst [vmem:[%s217 + $0x18] sm:$0xff] %v224
        %v226 = vld [vmem:[%s216 + $0x20] sm:$0xff]
        %227 = vst [vmem:[%s217 + $0x20] sm:$0xff] %v226
        %v228 = vld [vmem:[%s216 + $0x28] sm:$0xff]
        %229 = vst [vmem:[%s217 + $0x28] sm:$0xff] %v228
        %v230 = vld [vmem:[%s216 + $0x30] sm:$0xff]
        %231 = vst [vmem:[%s217 + $0x30] sm:$0xff] %v230
        %v232 = vld [vmem:[%s216 + $0x38] sm:$0xff]
        %233 = vst [vmem:[%s217 + $0x38] sm:$0xff] %v232
        %v234 = vld [vmem:[%s216 + $0x40] sm:$0xff]
        %235 = vst [vmem:[%s217 + $0x40] sm:$0xff] %v234
        %v236 = vld [vmem:[%s216 + $0x48] sm:$0xff]
        %237 = vst [vmem:[%s217 + $0x48] sm:$0xff] %v236
        %v238 = vld [vmem:[%s216 + $0x50] sm:$0xff]
        %239 = vst [vmem:[%s217 + $0x50] sm:$0xff] %v238
        %v240 = vld [vmem:[%s216 + $0x58] sm:$0xff]
        %241 = vst [vmem:[%s217 + $0x58] sm:$0xff] %v240
        %v242 = vld [vmem:[%s216 + $0x60] sm:$0xff]
        %243 = vst [vmem:[%s217 + $0x60] sm:$0xff] %v242
        %v244 = vld [vmem:[%s216 + $0x68] sm:$0xff]
        %245 = vst [vmem:[%s217 + $0x68] sm:$0xff] %v244
        %v246 = vld [vmem:[%s216 + $0x70] sm:$0xff]
        %247 = vst [vmem:[%s217 + $0x70] sm:$0xff] %v246
        %v248 = vld [vmem:[%s216 + $0x78] sm:$0xff]
        %249 = vst [vmem:[%s217 + $0x78] sm:$0xff] %v248
        %v250 = vld [vmem:[%s216 + $0x80] sm:$0xff]
        %251 = vst [vmem:[%s217 + $0x80] sm:$0xff] %v250
        %v252 = vld [vmem:[%s216 + $0x88] sm:$0xff]
        %253 = vst [vmem:[%s217 + $0x88] sm:$0xff] %v252
        %v254 = vld [vmem:[%s216 + $0x90] sm:$0xff]
        %255 = vst [vmem:[%s217 + $0x90] sm:$0xff] %v254
        %v256 = vld [vmem:[%s216 + $0x98] sm:$0xff]
        %257 = vst [vmem:[%s217 + $0x98] sm:$0xff] %v256
        %v258 = vld [vmem:[%s216 + $0xa0] sm:$0xff]
        %259 = vst [vmem:[%s217 + $0xa0] sm:$0xff] %v258
        %v260 = vld [vmem:[%s216 + $0xa8] sm:$0xff]
        %261 = vst [vmem:[%s217 + $0xa8] sm:$0xff] %v260
        %v262 = vld [vmem:[%s216 + $0xb0] sm:$0xff]
        %263 = vst [vmem:[%s217 + $0xb0] sm:$0xff] %v262
        %v264 = vld [vmem:[%s216 + $0xb8] sm:$0xff]
        %265 = vst [vmem:[%s217 + $0xb8] sm:$0xff] %v264
        %v266 = vld [vmem:[%s216 + $0xc0] sm:$0xff]
        %267 = vst [vmem:[%s217 + $0xc0] sm:$0xff] %v266
        %v268 = vld [vmem:[%s216 + $0xc8] sm:$0xff]
        %269 = vst [vmem:[%s217 + $0xc8] sm:$0xff] %v268
        %v270 = vld [vmem:[%s216 + $0xd0] sm:$0xff]
        %271 = vst [vmem:[%s217 + $0xd0] sm:$0xff] %v270
        %v272 = vld [vmem:[%s216 + $0xd8] sm:$0xff]
        %273 = vst [vmem:[%s217 + $0xd8] sm:$0xff] %v272
        %v274 = vld [vmem:[%s216 + $0xe0] sm:$0xff]
        %275 = vst [vmem:[%s217 + $0xe0] sm:$0xff] %v274
        %v276 = vld [vmem:[%s216 + $0xe8] sm:$0xff]
        %277 = vst [vmem:[%s217 + $0xe8] sm:$0xff] %v276
        %v278 = vld [vmem:[%s216 + $0xf0] sm:$0xff]
        %279 = vst [vmem:[%s217 + $0xf0] sm:$0xff] %v278
        %v280 = vld [vmem:[%s216 + $0xf8] sm:$0xff]
        %281 = vst [vmem:[%s217 + $0xf8] sm:$0xff] %v280
        %v282 = vld [vmem:[%s216 + $0x100] sm:$0xff]
        %283 = vst [vmem:[%s217 + $0x100] sm:$0xff] %v282
        %v284 = vld [vmem:[%s216 + $0x108] sm:$0xff]
        %285 = vst [vmem:[%s217 + $0x108] sm:$0xff] %v284
        %v286 = vld [vmem:[%s216 + $0x110] sm:$0xff]
        %287 = vst [vmem:[%s217 + $0x110] sm:$0xff] %v286
        %v288 = vld [vmem:[%s216 + $0x118] sm:$0xff]
        %289 = vst [vmem:[%s217 + $0x118] sm:$0xff] %v288
        %v290 = vld [vmem:[%s216 + $0x120] sm:$0xff]
        %291 = vst [vmem:[%s217 + $0x120] sm:$0xff] %v290
        %v292 = vld [vmem:[%s216 + $0x128] sm:$0xff]
        %293 = vst [vmem:[%s217 + $0x128] sm:$0xff] %v292
        %v294 = vld [vmem:[%s216 + $0x130] sm:$0xff]
        %295 = vst [vmem:[%s217 + $0x130] sm:$0xff] %v294
        %v296 = vld [vmem:[%s216 + $0x138] sm:$0xff]
        %297 = vst [vmem:[%s217 + $0x138] sm:$0xff] %v296
        %v298 = vld [vmem:[%s216 + $0x140] sm:$0xff]
        %299 = vst [vmem:[%s217 + $0x140] sm:$0xff] %v298
        %v300 = vld [vmem:[%s216 + $0x148] sm:$0xff]
        %301 = vst [vmem:[%s217 + $0x148] sm:$0xff] %v300
        %v302 = vld [vmem:[%s216 + $0x150] sm:$0xff]
        %303 = vst [vmem:[%s217 + $0x150] sm:$0xff] %v302
        %v304 = vld [vmem:[%s216 + $0x158] sm:$0xff]
        %305 = vst [vmem:[%s217 + $0x158] sm:$0xff] %v304
        %v306 = vld [vmem:[%s216 + $0x160] sm:$0xff]
        %307 = vst [vmem:[%s217 + $0x160] sm:$0xff] %v306
        %v308 = vld [vmem:[%s216 + $0x168] sm:$0xff]
        %309 = vst [vmem:[%s217 + $0x168] sm:$0xff] %v308
        %v310 = vld [vmem:[%s216 + $0x170] sm:$0xff]
        %311 = vst [vmem:[%s217 + $0x170] sm:$0xff] %v310
        %v312 = vld [vmem:[%s216 + $0x178] sm:$0xff]
        %313 = vst [vmem:[%s217 + $0x178] sm:$0xff] %v312
        %v314 = vld [vmem:[%s216 + $0x180] sm:$0xff]
        %315 = vst [vmem:[%s217 + $0x180] sm:$0xff] %v314
        %v316 = vld [vmem:[%s216 + $0x188] sm:$0xff]
        %317 = vst [vmem:[%s217 + $0x188] sm:$0xff] %v316
        %v318 = vld [vmem:[%s216 + $0x190] sm:$0xff]
        %319 = vst [vmem:[%s217 + $0x190] sm:$0xff] %v318
        %v320 = vld [vmem:[%s216 + $0x198] sm:$0xff]
        %321 = vst [vmem:[%s217 + $0x198] sm:$0xff] %v320
        %v322 = vld [vmem:[%s216 + $0x1a0] sm:$0xff]
        %323 = vst [vmem:[%s217 + $0x1a0] sm:$0xff] %v322
        %v324 = vld [vmem:[%s216 + $0x1a8] sm:$0xff]
        %325 = vst [vmem:[%s217 + $0x1a8] sm:$0xff] %v324
        %v326 = vld [vmem:[%s216 + $0x1b0] sm:$0xff]
        %327 = vst [vmem:[%s217 + $0x1b0] sm:$0xff] %v326
        %v328 = vld [vmem:[%s216 + $0x1b8] sm:$0xff]
        %329 = vst [vmem:[%s217 + $0x1b8] sm:$0xff] %v328
        %v330 = vld [vmem:[%s216 + $0x1c0] sm:$0xff]
        %331 = vst [vmem:[%s217 + $0x1c0] sm:$0xff] %v330
        %v332 = vld [vmem:[%s216 + $0x1c8] sm:$0xff]
        %333 = vst [vmem:[%s217 + $0x1c8] sm:$0xff] %v332
        %v334 = vld [vmem:[%s216 + $0x1d0] sm:$0xff]
        %335 = vst [vmem:[%s217 + $0x1d0] sm:$0xff] %v334
        %v336 = vld [vmem:[%s216 + $0x1d8] sm:$0xff]
        %337 = vst [vmem:[%s217 + $0x1d8] sm:$0xff] %v336
        %v338 = vld [vmem:[%s216 + $0x1e0] sm:$0xff]
        %339 = vst [vmem:[%s217 + $0x1e0] sm:$0xff] %v338
        %v340 = vld [vmem:[%s216 + $0x1e8] sm:$0xff]
        %341 = vst [vmem:[%s217 + $0x1e8] sm:$0xff] %v340
        %v342 = vld [vmem:[%s216 + $0x1f0] sm:$0xff]
        %343 = vst [vmem:[%s217 + $0x1f0] sm:$0xff] %v342
        %v344 = vld [vmem:[%s216 + $0x1f8] sm:$0xff]
        %345 = vst [vmem:[%s217 + $0x1f8] sm:$0xff] %v344
        %v346 = vld [vmem:[%s216 + $0x200] sm:$0xff]
        %347 = vst [vmem:[%s217 + $0x200] sm:$0xff] %v346
        %v348 = vld [vmem:[%s216 + $0x208] sm:$0xff]
        %349 = vst [vmem:[%s217 + $0x208] sm:$0xff] %v348
        %v350 = vld [vmem:[%s216 + $0x210] sm:$0xff]
        %351 = vst [vmem:[%s217 + $0x210] sm:$0xff] %v350
        %v352 = vld [vmem:[%s216 + $0x218] sm:$0xff]
        %353 = vst [vmem:[%s217 + $0x218] sm:$0xff] %v352
        %v354 = vld [vmem:[%s216 + $0x220] sm:$0xff]
        %355 = vst [vmem:[%s217 + $0x220] sm:$0xff] %v354
        %v356 = vld [vmem:[%s216 + $0x228] sm:$0xff]
        %357 = vst [vmem:[%s217 + $0x228] sm:$0xff] %v356
        %v358 = vld [vmem:[%s216 + $0x230] sm:$0xff]
        %359 = vst [vmem:[%s217 + $0x230] sm:$0xff] %v358
        %v360 = vld [vmem:[%s216 + $0x238] sm:$0xff]
        %361 = vst [vmem:[%s217 + $0x238] sm:$0xff] %v360
        %v362 = vld [vmem:[%s216 + $0x240] sm:$0xff]
        %363 = vst [vmem:[%s217 + $0x240] sm:$0xff] %v362
        %v364 = vld [vmem:[%s216 + $0x248] sm:$0xff]
        %365 = vst [vmem:[%s217 + $0x248] sm:$0xff] %v364
        %v366 = vld [vmem:[%s216 + $0x250] sm:$0xff]
        %367 = vst [vmem:[%s217 + $0x250] sm:$0xff] %v366
        %v368 = vld [vmem:[%s216 + $0x258] sm:$0xff]
        %369 = vst [vmem:[%s217 + $0x258] sm:$0xff] %v368
        %v370 = vld [vmem:[%s216 + $0x260] sm:$0xff]
        %371 = vst [vmem:[%s217 + $0x260] sm:$0xff] %v370
        %v372 = vld [vmem:[%s216 + $0x268] sm:$0xff]
        %373 = vst [vmem:[%s217 + $0x268] sm:$0xff] %v372
        %v374 = vld [vmem:[%s216 + $0x270] sm:$0xff]
        %375 = vst [vmem:[%s217 + $0x270] sm:$0xff] %v374
        %v376 = vld [vmem:[%s216 + $0x278] sm:$0xff]
        %377 = vst [vmem:[%s217 + $0x278] sm:$0xff] %v376
        %v378 = vld [vmem:[%s216 + $0x280] sm:$0xff]
        %379 = vst [vmem:[%s217 + $0x280] sm:$0xff] %v378
        %v380 = vld [vmem:[%s216 + $0x288] sm:$0xff]
        %381 = vst [vmem:[%s217 + $0x288] sm:$0xff] %v380
        %v382 = vld [vmem:[%s216 + $0x290] sm:$0xff]
        %383 = vst [vmem:[%s217 + $0x290] sm:$0xff] %v382
        %v384 = vld [vmem:[%s216 + $0x298] sm:$0xff]
        %385 = vst [vmem:[%s217 + $0x298] sm:$0xff] %v384
        %v386 = vld [vmem:[%s216 + $0x2a0] sm:$0xff]
        %387 = vst [vmem:[%s217 + $0x2a0] sm:$0xff] %v386
        %v388 = vld [vmem:[%s216 + $0x2a8] sm:$0xff]
        %389 = vst [vmem:[%s217 + $0x2a8] sm:$0xff] %v388
        %v390 = vld [vmem:[%s216 + $0x2b0] sm:$0xff]
        %391 = vst [vmem:[%s217 + $0x2b0] sm:$0xff] %v390
        %v392 = vld [vmem:[%s216 + $0x2b8] sm:$0xff]
        %393 = vst [vmem:[%s217 + $0x2b8] sm:$0xff] %v392
        %v394 = vld [vmem:[%s216 + $0x2c0] sm:$0xff]
        %395 = vst [vmem:[%s217 + $0x2c0] sm:$0xff] %v394
        %v396 = vld [vmem:[%s216 + $0x2c8] sm:$0xff]
        %397 = vst [vmem:[%s217 + $0x2c8] sm:$0xff] %v396
        %v398 = vld [vmem:[%s216 + $0x2d0] sm:$0xff]
        %399 = vst [vmem:[%s217 + $0x2d0] sm:$0xff] %v398
        %v400 = vld [vmem:[%s216 + $0x2d8] sm:$0xff]
        %401 = vst [vmem:[%s217 + $0x2d8] sm:$0xff] %v400
        %v402 = vld [vmem:[%s216 + $0x2e0] sm:$0xff]
        %403 = vst [vmem:[%s217 + $0x2e0] sm:$0xff] %v402
        %v404 = vld [vmem:[%s216 + $0x2e8] sm:$0xff]
        %405 = vst [vmem:[%s217 + $0x2e8] sm:$0xff] %v404
        %v406 = vld [vmem:[%s216 + $0x2f0] sm:$0xff]
        %407 = vst [vmem:[%s217 + $0x2f0] sm:$0xff] %v406
        %v408 = vld [vmem:[%s216 + $0x2f8] sm:$0xff]
        %409 = vst [vmem:[%s217 + $0x2f8] sm:$0xff] %v408
        %v410 = vld [vmem:[%s216 + $0x300] sm:$0xff]
        %411 = vst [vmem:[%s217 + $0x300] sm:$0xff] %v410
        %v412 = vld [vmem:[%s216 + $0x308] sm:$0xff]
        %413 = vst [vmem:[%s217 + $0x308] sm:$0xff] %v412
        %v414 = vld [vmem:[%s216 + $0x310] sm:$0xff]
        %415 = vst [vmem:[%s217 + $0x310] sm:$0xff] %v414
        %v416 = vld [vmem:[%s216 + $0x318] sm:$0xff]
        %417 = vst [vmem:[%s217 + $0x318] sm:$0xff] %v416
        %v418 = vld [vmem:[%s216 + $0x320] sm:$0xff]
        %419 = vst [vmem:[%s217 + $0x320] sm:$0xff] %v418
        %v420 = vld [vmem:[%s216 + $0x328] sm:$0xff]
        %421 = vst [vmem:[%s217 + $0x328] sm:$0xff] %v420
        %v422 = vld [vmem:[%s216 + $0x330] sm:$0xff]
        %423 = vst [vmem:[%s217 + $0x330] sm:$0xff] %v422
        %v424 = vld [vmem:[%s216 + $0x338] sm:$0xff]
        %425 = vst [vmem:[%s217 + $0x338] sm:$0xff] %v424
        %v426 = vld [vmem:[%s216 + $0x340] sm:$0xff]
        %427 = vst [vmem:[%s217 + $0x340] sm:$0xff] %v426
        %v428 = vld [vmem:[%s216 + $0x348] sm:$0xff]
        %429 = vst [vmem:[%s217 + $0x348] sm:$0xff] %v428
        %v430 = vld [vmem:[%s216 + $0x350] sm:$0xff]
        %431 = vst [vmem:[%s217 + $0x350] sm:$0xff] %v430
        %v432 = vld [vmem:[%s216 + $0x358] sm:$0xff]
        %433 = vst [vmem:[%s217 + $0x358] sm:$0xff] %v432
        %v434 = vld [vmem:[%s216 + $0x360] sm:$0xff]
        %435 = vst [vmem:[%s217 + $0x360] sm:$0xff] %v434
        %v436 = vld [vmem:[%s216 + $0x368] sm:$0xff]
        %437 = vst [vmem:[%s217 + $0x368] sm:$0xff] %v436
        %v438 = vld [vmem:[%s216 + $0x370] sm:$0xff]
        %439 = vst [vmem:[%s217 + $0x370] sm:$0xff] %v438
        %v440 = vld [vmem:[%s216 + $0x378] sm:$0xff]
        %441 = vst [vmem:[%s217 + $0x378] sm:$0xff] %v440
        %v442 = vld [vmem:[%s216 + $0x380] sm:$0xff]
        %443 = vst [vmem:[%s217 + $0x380] sm:$0xff] %v442
        %v444 = vld [vmem:[%s216 + $0x388] sm:$0xff]
        %445 = vst [vmem:[%s217 + $0x388] sm:$0xff] %v444
        %v446 = vld [vmem:[%s216 + $0x390] sm:$0xff]
        %447 = vst [vmem:[%s217 + $0x390] sm:$0xff] %v446
        %v448 = vld [vmem:[%s216 + $0x398] sm:$0xff]
        %449 = vst [vmem:[%s217 + $0x398] sm:$0xff] %v448
        %v450 = vld [vmem:[%s216 + $0x3a0] sm:$0xff]
        %451 = vst [vmem:[%s217 + $0x3a0] sm:$0xff] %v450
        %v452 = vld [vmem:[%s216 + $0x3a8] sm:$0xff]
        %453 = vst [vmem:[%s217 + $0x3a8] sm:$0xff] %v452
        %v454 = vld [vmem:[%s216 + $0x3b0] sm:$0xff]
        %455 = vst [vmem:[%s217 + $0x3b0] sm:$0xff] %v454
        %v456 = vld [vmem:[%s216 + $0x3b8] sm:$0xff]
        %457 = vst [vmem:[%s217 + $0x3b8] sm:$0xff] %v456
        %v458 = vld [vmem:[%s216 + $0x3c0] sm:$0xff]
        %459 = vst [vmem:[%s217 + $0x3c0] sm:$0xff] %v458
        %v460 = vld [vmem:[%s216 + $0x3c8] sm:$0xff]
        %461 = vst [vmem:[%s217 + $0x3c8] sm:$0xff] %v460
        %v462 = vld [vmem:[%s216 + $0x3d0] sm:$0xff]
        %463 = vst [vmem:[%s217 + $0x3d0] sm:$0xff] %v462
        %v464 = vld [vmem:[%s216 + $0x3d8] sm:$0xff]
        %465 = vst [vmem:[%s217 + $0x3d8] sm:$0xff] %v464
        %v466 = vld [vmem:[%s216 + $0x3e0] sm:$0xff]
        %467 = vst [vmem:[%s217 + $0x3e0] sm:$0xff] %v466
        %v468 = vld [vmem:[%s216 + $0x3e8] sm:$0xff]
        %469 = vst [vmem:[%s217 + $0x3e8] sm:$0xff] %v468
        %v470 = vld [vmem:[%s216 + $0x3f0] sm:$0xff]
        %471 = vst [vmem:[%s217 + $0x3f0] sm:$0xff] %v470
        %v472 = vld [vmem:[%s216 + $0x3f8] sm:$0xff]
        %473 = vst [vmem:[%s217 + $0x3f8] sm:$0xff] %v472
      $region96: #{tpu_custom_call.1} parent=90 // loop_footer
        %s215 = sadd.s32 1, %s211
      $region97: #{tpu_custom_call.1} parent=90 // loop_footer_branch
        %210 = sbr.rel target = $region93
      $region98: #{tpu_custom_call.1} parent=90 // loop_exit
        _
    $region91: #{tpu_custom_call.1} parent=1 // pred_fallthru
      _
    // Predicated region
    $region99: #{tpu_custom_call.1} parent=1 // pred_check
      _
    $region100: #{tpu_custom_call.1} parent=1 // pred_check_branch
      %475 = sbr.rel target = $region102
    $region101: #{tpu_custom_call.1} parent=1 // pred_region
      _
    $region102: #{tpu_custom_call.1} parent=1 // pred_fallthru
      _
    // Predicated region
    $region103: #{tpu_custom_call.1} parent=1 // pred_check
      _
    $region104: #{tpu_custom_call.1} parent=1 // pred_check_branch
      %478 = sbr.rel (0) target = $region106
    $region105: #{tpu_custom_call.1} parent=1 // pred_region
      %479 = vsyncadd %s207, 16384
    $region106: #{tpu_custom_call.1} parent=1 // pred_fallthru
      _
    %s480 = scalar_lea.sflag [#allocation6], 3
    // Predicated region
    $region107: #{tpu_custom_call.1} parent=1 // pred_check
      _
    $region108: #{tpu_custom_call.1} parent=1 // pred_check_branch
      %482 = sbr.rel (0) target = $region110
    $region109: #{tpu_custom_call.1} parent=1 // pred_region
      loop: start=0, step=1, limit=1
      $region111: #{tpu_custom_call.1} parent=109 // loop_pre_header
        _
      $region112: #{tpu_custom_call.1} parent=109 // loop_header
        %s484 = sphi 0, %s488
        %p485 = scmp.ge.s32.totalorder %s484, 1
        %s489 = sphi %s4, %s4
        %s490 = sphi [#allocation5], [#allocation5]
      $region113: #{tpu_custom_call.1} parent=109 // loop_header_branch
        %487 = sbr.rel (%p485) target = $region117
      $region114: #{tpu_custom_call.1} parent=109 // loop_body
        %v491 = vld [vmem:[%s489] sm:$0xff]
        %492 = vst [vmem:[%s490] sm:$0xff] %v491
        %v493 = vld [vmem:[%s489 + $0x8] sm:$0xff]
        %494 = vst [vmem:[%s490 + $0x8] sm:$0xff] %v493
        %v495 = vld [vmem:[%s489 + $0x10] sm:$0xff]
        %496 = vst [vmem:[%s490 + $0x10] sm:$0xff] %v495
        %v497 = vld [vmem:[%s489 + $0x18] sm:$0xff]
        %498 = vst [vmem:[%s490 + $0x18] sm:$0xff] %v497
        %v499 = vld [vmem:[%s489 + $0x20] sm:$0xff]
        %500 = vst [vmem:[%s490 + $0x20] sm:$0xff] %v499
        %v501 = vld [vmem:[%s489 + $0x28] sm:$0xff]
        %502 = vst [vmem:[%s490 + $0x28] sm:$0xff] %v501
        %v503 = vld [vmem:[%s489 + $0x30] sm:$0xff]
        %504 = vst [vmem:[%s490 + $0x30] sm:$0xff] %v503
        %v505 = vld [vmem:[%s489 + $0x38] sm:$0xff]
        %506 = vst [vmem:[%s490 + $0x38] sm:$0xff] %v505
        %v507 = vld [vmem:[%s489 + $0x40] sm:$0xff]
        %508 = vst [vmem:[%s490 + $0x40] sm:$0xff] %v507
        %v509 = vld [vmem:[%s489 + $0x48] sm:$0xff]
        %510 = vst [vmem:[%s490 + $0x48] sm:$0xff] %v509
        %v511 = vld [vmem:[%s489 + $0x50] sm:$0xff]
        %512 = vst [vmem:[%s490 + $0x50] sm:$0xff] %v511
        %v513 = vld [vmem:[%s489 + $0x58] sm:$0xff]
        %514 = vst [vmem:[%s490 + $0x58] sm:$0xff] %v513
        %v515 = vld [vmem:[%s489 + $0x60] sm:$0xff]
        %516 = vst [vmem:[%s490 + $0x60] sm:$0xff] %v515
        %v517 = vld [vmem:[%s489 + $0x68] sm:$0xff]
        %518 = vst [vmem:[%s490 + $0x68] sm:$0xff] %v517
        %v519 = vld [vmem:[%s489 + $0x70] sm:$0xff]
        %520 = vst [vmem:[%s490 + $0x70] sm:$0xff] %v519
        %v521 = vld [vmem:[%s489 + $0x78] sm:$0xff]
        %522 = vst [vmem:[%s490 + $0x78] sm:$0xff] %v521
        %v523 = vld [vmem:[%s489 + $0x80] sm:$0xff]
        %524 = vst [vmem:[%s490 + $0x80] sm:$0xff] %v523
        %v525 = vld [vmem:[%s489 + $0x88] sm:$0xff]
        %526 = vst [vmem:[%s490 + $0x88] sm:$0xff] %v525
        %v527 = vld [vmem:[%s489 + $0x90] sm:$0xff]
        %528 = vst [vmem:[%s490 + $0x90] sm:$0xff] %v527
        %v529 = vld [vmem:[%s489 + $0x98] sm:$0xff]
        %530 = vst [vmem:[%s490 + $0x98] sm:$0xff] %v529
        %v531 = vld [vmem:[%s489 + $0xa0] sm:$0xff]
        %532 = vst [vmem:[%s490 + $0xa0] sm:$0xff] %v531
        %v533 = vld [vmem:[%s489 + $0xa8] sm:$0xff]
        %534 = vst [vmem:[%s490 + $0xa8] sm:$0xff] %v533
        %v535 = vld [vmem:[%s489 + $0xb0] sm:$0xff]
        %536 = vst [vmem:[%s490 + $0xb0] sm:$0xff] %v535
        %v537 = vld [vmem:[%s489 + $0xb8] sm:$0xff]
        %538 = vst [vmem:[%s490 + $0xb8] sm:$0xff] %v537
        %v539 = vld [vmem:[%s489 + $0xc0] sm:$0xff]
        %540 = vst [vmem:[%s490 + $0xc0] sm:$0xff] %v539
        %v541 = vld [vmem:[%s489 + $0xc8] sm:$0xff]
        %542 = vst [vmem:[%s490 + $0xc8] sm:$0xff] %v541
        %v543 = vld [vmem:[%s489 + $0xd0] sm:$0xff]
        %544 = vst [vmem:[%s490 + $0xd0] sm:$0xff] %v543
        %v545 = vld [vmem:[%s489 + $0xd8] sm:$0xff]
        %546 = vst [vmem:[%s490 + $0xd8] sm:$0xff] %v545
        %v547 = vld [vmem:[%s489 + $0xe0] sm:$0xff]
        %548 = vst [vmem:[%s490 + $0xe0] sm:$0xff] %v547
        %v549 = vld [vmem:[%s489 + $0xe8] sm:$0xff]
        %550 = vst [vmem:[%s490 + $0xe8] sm:$0xff] %v549
        %v551 = vld [vmem:[%s489 + $0xf0] sm:$0xff]
        %552 = vst [vmem:[%s490 + $0xf0] sm:$0xff] %v551
        %v553 = vld [vmem:[%s489 + $0xf8] sm:$0xff]
        %554 = vst [vmem:[%s490 + $0xf8] sm:$0xff] %v553
        %v555 = vld [vmem:[%s489 + $0x100] sm:$0xff]
        %556 = vst [vmem:[%s490 + $0x100] sm:$0xff] %v555
        %v557 = vld [vmem:[%s489 + $0x108] sm:$0xff]
        %558 = vst [vmem:[%s490 + $0x108] sm:$0xff] %v557
        %v559 = vld [vmem:[%s489 + $0x110] sm:$0xff]
        %560 = vst [vmem:[%s490 + $0x110] sm:$0xff] %v559
        %v561 = vld [vmem:[%s489 + $0x118] sm:$0xff]
        %562 = vst [vmem:[%s490 + $0x118] sm:$0xff] %v561
        %v563 = vld [vmem:[%s489 + $0x120] sm:$0xff]
        %564 = vst [vmem:[%s490 + $0x120] sm:$0xff] %v563
        %v565 = vld [vmem:[%s489 + $0x128] sm:$0xff]
        %566 = vst [vmem:[%s490 + $0x128] sm:$0xff] %v565
        %v567 = vld [vmem:[%s489 + $0x130] sm:$0xff]
        %568 = vst [vmem:[%s490 + $0x130] sm:$0xff] %v567
        %v569 = vld [vmem:[%s489 + $0x138] sm:$0xff]
        %570 = vst [vmem:[%s490 + $0x138] sm:$0xff] %v569
        %v571 = vld [vmem:[%s489 + $0x140] sm:$0xff]
        %572 = vst [vmem:[%s490 + $0x140] sm:$0xff] %v571
        %v573 = vld [vmem:[%s489 + $0x148] sm:$0xff]
        %574 = vst [vmem:[%s490 + $0x148] sm:$0xff] %v573
        %v575 = vld [vmem:[%s489 + $0x150] sm:$0xff]
        %576 = vst [vmem:[%s490 + $0x150] sm:$0xff] %v575
        %v577 = vld [vmem:[%s489 + $0x158] sm:$0xff]
        %578 = vst [vmem:[%s490 + $0x158] sm:$0xff] %v577
        %v579 = vld [vmem:[%s489 + $0x160] sm:$0xff]
        %580 = vst [vmem:[%s490 + $0x160] sm:$0xff] %v579
        %v581 = vld [vmem:[%s489 + $0x168] sm:$0xff]
        %582 = vst [vmem:[%s490 + $0x168] sm:$0xff] %v581
        %v583 = vld [vmem:[%s489 + $0x170] sm:$0xff]
        %584 = vst [vmem:[%s490 + $0x170] sm:$0xff] %v583
        %v585 = vld [vmem:[%s489 + $0x178] sm:$0xff]
        %586 = vst [vmem:[%s490 + $0x178] sm:$0xff] %v585
        %v587 = vld [vmem:[%s489 + $0x180] sm:$0xff]
        %588 = vst [vmem:[%s490 + $0x180] sm:$0xff] %v587
        %v589 = vld [vmem:[%s489 + $0x188] sm:$0xff]
        %590 = vst [vmem:[%s490 + $0x188] sm:$0xff] %v589
        %v591 = vld [vmem:[%s489 + $0x190] sm:$0xff]
        %592 = vst [vmem:[%s490 + $0x190] sm:$0xff] %v591
        %v593 = vld [vmem:[%s489 + $0x198] sm:$0xff]
        %594 = vst [vmem:[%s490 + $0x198] sm:$0xff] %v593
        %v595 = vld [vmem:[%s489 + $0x1a0] sm:$0xff]
        %596 = vst [vmem:[%s490 + $0x1a0] sm:$0xff] %v595
        %v597 = vld [vmem:[%s489 + $0x1a8] sm:$0xff]
        %598 = vst [vmem:[%s490 + $0x1a8] sm:$0xff] %v597
        %v599 = vld [vmem:[%s489 + $0x1b0] sm:$0xff]
        %600 = vst [vmem:[%s490 + $0x1b0] sm:$0xff] %v599
        %v601 = vld [vmem:[%s489 + $0x1b8] sm:$0xff]
        %602 = vst [vmem:[%s490 + $0x1b8] sm:$0xff] %v601
        %v603 = vld [vmem:[%s489 + $0x1c0] sm:$0xff]
        %604 = vst [vmem:[%s490 + $0x1c0] sm:$0xff] %v603
        %v605 = vld [vmem:[%s489 + $0x1c8] sm:$0xff]
        %606 = vst [vmem:[%s490 + $0x1c8] sm:$0xff] %v605
        %v607 = vld [vmem:[%s489 + $0x1d0] sm:$0xff]
        %608 = vst [vmem:[%s490 + $0x1d0] sm:$0xff] %v607
        %v609 = vld [vmem:[%s489 + $0x1d8] sm:$0xff]
        %610 = vst [vmem:[%s490 + $0x1d8] sm:$0xff] %v609
        %v611 = vld [vmem:[%s489 + $0x1e0] sm:$0xff]
        %612 = vst [vmem:[%s490 + $0x1e0] sm:$0xff] %v611
        %v613 = vld [vmem:[%s489 + $0x1e8] sm:$0xff]
        %614 = vst [vmem:[%s490 + $0x1e8] sm:$0xff] %v613
        %v615 = vld [vmem:[%s489 + $0x1f0] sm:$0xff]
        %616 = vst [vmem:[%s490 + $0x1f0] sm:$0xff] %v615
        %v617 = vld [vmem:[%s489 + $0x1f8] sm:$0xff]
        %618 = vst [vmem:[%s490 + $0x1f8] sm:$0xff] %v617
        %v619 = vld [vmem:[%s489 + $0x200] sm:$0xff]
        %620 = vst [vmem:[%s490 + $0x200] sm:$0xff] %v619
        %v621 = vld [vmem:[%s489 + $0x208] sm:$0xff]
        %622 = vst [vmem:[%s490 + $0x208] sm:$0xff] %v621
        %v623 = vld [vmem:[%s489 + $0x210] sm:$0xff]
        %624 = vst [vmem:[%s490 + $0x210] sm:$0xff] %v623
        %v625 = vld [vmem:[%s489 + $0x218] sm:$0xff]
        %626 = vst [vmem:[%s490 + $0x218] sm:$0xff] %v625
        %v627 = vld [vmem:[%s489 + $0x220] sm:$0xff]
        %628 = vst [vmem:[%s490 + $0x220] sm:$0xff] %v627
        %v629 = vld [vmem:[%s489 + $0x228] sm:$0xff]
        %630 = vst [vmem:[%s490 + $0x228] sm:$0xff] %v629
        %v631 = vld [vmem:[%s489 + $0x230] sm:$0xff]
        %632 = vst [vmem:[%s490 + $0x230] sm:$0xff] %v631
        %v633 = vld [vmem:[%s489 + $0x238] sm:$0xff]
        %634 = vst [vmem:[%s490 + $0x238] sm:$0xff] %v633
        %v635 = vld [vmem:[%s489 + $0x240] sm:$0xff]
        %636 = vst [vmem:[%s490 + $0x240] sm:$0xff] %v635
        %v637 = vld [vmem:[%s489 + $0x248] sm:$0xff]
        %638 = vst [vmem:[%s490 + $0x248] sm:$0xff] %v637
        %v639 = vld [vmem:[%s489 + $0x250] sm:$0xff]
        %640 = vst [vmem:[%s490 + $0x250] sm:$0xff] %v639
        %v641 = vld [vmem:[%s489 + $0x258] sm:$0xff]
        %642 = vst [vmem:[%s490 + $0x258] sm:$0xff] %v641
        %v643 = vld [vmem:[%s489 + $0x260] sm:$0xff]
        %644 = vst [vmem:[%s490 + $0x260] sm:$0xff] %v643
        %v645 = vld [vmem:[%s489 + $0x268] sm:$0xff]
        %646 = vst [vmem:[%s490 + $0x268] sm:$0xff] %v645
        %v647 = vld [vmem:[%s489 + $0x270] sm:$0xff]
        %648 = vst [vmem:[%s490 + $0x270] sm:$0xff] %v647
        %v649 = vld [vmem:[%s489 + $0x278] sm:$0xff]
        %650 = vst [vmem:[%s490 + $0x278] sm:$0xff] %v649
        %v651 = vld [vmem:[%s489 + $0x280] sm:$0xff]
        %652 = vst [vmem:[%s490 + $0x280] sm:$0xff] %v651
        %v653 = vld [vmem:[%s489 + $0x288] sm:$0xff]
        %654 = vst [vmem:[%s490 + $0x288] sm:$0xff] %v653
        %v655 = vld [vmem:[%s489 + $0x290] sm:$0xff]
        %656 = vst [vmem:[%s490 + $0x290] sm:$0xff] %v655
        %v657 = vld [vmem:[%s489 + $0x298] sm:$0xff]
        %658 = vst [vmem:[%s490 + $0x298] sm:$0xff] %v657
        %v659 = vld [vmem:[%s489 + $0x2a0] sm:$0xff]
        %660 = vst [vmem:[%s490 + $0x2a0] sm:$0xff] %v659
        %v661 = vld [vmem:[%s489 + $0x2a8] sm:$0xff]
        %662 = vst [vmem:[%s490 + $0x2a8] sm:$0xff] %v661
        %v663 = vld [vmem:[%s489 + $0x2b0] sm:$0xff]
        %664 = vst [vmem:[%s490 + $0x2b0] sm:$0xff] %v663
        %v665 = vld [vmem:[%s489 + $0x2b8] sm:$0xff]
        %666 = vst [vmem:[%s490 + $0x2b8] sm:$0xff] %v665
        %v667 = vld [vmem:[%s489 + $0x2c0] sm:$0xff]
        %668 = vst [vmem:[%s490 + $0x2c0] sm:$0xff] %v667
        %v669 = vld [vmem:[%s489 + $0x2c8] sm:$0xff]
        %670 = vst [vmem:[%s490 + $0x2c8] sm:$0xff] %v669
        %v671 = vld [vmem:[%s489 + $0x2d0] sm:$0xff]
        %672 = vst [vmem:[%s490 + $0x2d0] sm:$0xff] %v671
        %v673 = vld [vmem:[%s489 + $0x2d8] sm:$0xff]
        %674 = vst [vmem:[%s490 + $0x2d8] sm:$0xff] %v673
        %v675 = vld [vmem:[%s489 + $0x2e0] sm:$0xff]
        %676 = vst [vmem:[%s490 + $0x2e0] sm:$0xff] %v675
        %v677 = vld [vmem:[%s489 + $0x2e8] sm:$0xff]
        %678 = vst [vmem:[%s490 + $0x2e8] sm:$0xff] %v677
        %v679 = vld [vmem:[%s489 + $0x2f0] sm:$0xff]
        %680 = vst [vmem:[%s490 + $0x2f0] sm:$0xff] %v679
        %v681 = vld [vmem:[%s489 + $0x2f8] sm:$0xff]
        %682 = vst [vmem:[%s490 + $0x2f8] sm:$0xff] %v681
        %v683 = vld [vmem:[%s489 + $0x300] sm:$0xff]
        %684 = vst [vmem:[%s490 + $0x300] sm:$0xff] %v683
        %v685 = vld [vmem:[%s489 + $0x308] sm:$0xff]
        %686 = vst [vmem:[%s490 + $0x308] sm:$0xff] %v685
        %v687 = vld [vmem:[%s489 + $0x310] sm:$0xff]
        %688 = vst [vmem:[%s490 + $0x310] sm:$0xff] %v687
        %v689 = vld [vmem:[%s489 + $0x318] sm:$0xff]
        %690 = vst [vmem:[%s490 + $0x318] sm:$0xff] %v689
        %v691 = vld [vmem:[%s489 + $0x320] sm:$0xff]
        %692 = vst [vmem:[%s490 + $0x320] sm:$0xff] %v691
        %v693 = vld [vmem:[%s489 + $0x328] sm:$0xff]
        %694 = vst [vmem:[%s490 + $0x328] sm:$0xff] %v693
        %v695 = vld [vmem:[%s489 + $0x330] sm:$0xff]
        %696 = vst [vmem:[%s490 + $0x330] sm:$0xff] %v695
        %v697 = vld [vmem:[%s489 + $0x338] sm:$0xff]
        %698 = vst [vmem:[%s490 + $0x338] sm:$0xff] %v697
        %v699 = vld [vmem:[%s489 + $0x340] sm:$0xff]
        %700 = vst [vmem:[%s490 + $0x340] sm:$0xff] %v699
        %v701 = vld [vmem:[%s489 + $0x348] sm:$0xff]
        %702 = vst [vmem:[%s490 + $0x348] sm:$0xff] %v701
        %v703 = vld [vmem:[%s489 + $0x350] sm:$0xff]
        %704 = vst [vmem:[%s490 + $0x350] sm:$0xff] %v703
        %v705 = vld [vmem:[%s489 + $0x358] sm:$0xff]
        %706 = vst [vmem:[%s490 + $0x358] sm:$0xff] %v705
        %v707 = vld [vmem:[%s489 + $0x360] sm:$0xff]
        %708 = vst [vmem:[%s490 + $0x360] sm:$0xff] %v707
        %v709 = vld [vmem:[%s489 + $0x368] sm:$0xff]
        %710 = vst [vmem:[%s490 + $0x368] sm:$0xff] %v709
        %v711 = vld [vmem:[%s489 + $0x370] sm:$0xff]
        %712 = vst [vmem:[%s490 + $0x370] sm:$0xff] %v711
        %v713 = vld [vmem:[%s489 + $0x378] sm:$0xff]
        %714 = vst [vmem:[%s490 + $0x378] sm:$0xff] %v713
        %v715 = vld [vmem:[%s489 + $0x380] sm:$0xff]
        %716 = vst [vmem:[%s490 + $0x380] sm:$0xff] %v715
        %v717 = vld [vmem:[%s489 + $0x388] sm:$0xff]
        %718 = vst [vmem:[%s490 + $0x388] sm:$0xff] %v717
        %v719 = vld [vmem:[%s489 + $0x390] sm:$0xff]
        %720 = vst [vmem:[%s490 + $0x390] sm:$0xff] %v719
        %v721 = vld [vmem:[%s489 + $0x398] sm:$0xff]
        %722 = vst [vmem:[%s490 + $0x398] sm:$0xff] %v721
        %v723 = vld [vmem:[%s489 + $0x3a0] sm:$0xff]
        %724 = vst [vmem:[%s490 + $0x3a0] sm:$0xff] %v723
        %v725 = vld [vmem:[%s489 + $0x3a8] sm:$0xff]
        %726 = vst [vmem:[%s490 + $0x3a8] sm:$0xff] %v725
        %v727 = vld [vmem:[%s489 + $0x3b0] sm:$0xff]
        %728 = vst [vmem:[%s490 + $0x3b0] sm:$0xff] %v727
        %v729 = vld [vmem:[%s489 + $0x3b8] sm:$0xff]
        %730 = vst [vmem:[%s490 + $0x3b8] sm:$0xff] %v729
        %v731 = vld [vmem:[%s489 + $0x3c0] sm:$0xff]
        %732 = vst [vmem:[%s490 + $0x3c0] sm:$0xff] %v731
        %v733 = vld [vmem:[%s489 + $0x3c8] sm:$0xff]
        %734 = vst [vmem:[%s490 + $0x3c8] sm:$0xff] %v733
        %v735 = vld [vmem:[%s489 + $0x3d0] sm:$0xff]
        %736 = vst [vmem:[%s490 + $0x3d0] sm:$0xff] %v735
        %v737 = vld [vmem:[%s489 + $0x3d8] sm:$0xff]
        %738 = vst [vmem:[%s490 + $0x3d8] sm:$0xff] %v737
        %v739 = vld [vmem:[%s489 + $0x3e0] sm:$0xff]
        %740 = vst [vmem:[%s490 + $0x3e0] sm:$0xff] %v739
        %v741 = vld [vmem:[%s489 + $0x3e8] sm:$0xff]
        %742 = vst [vmem:[%s490 + $0x3e8] sm:$0xff] %v741
        %v743 = vld [vmem:[%s489 + $0x3f0] sm:$0xff]
        %744 = vst [vmem:[%s490 + $0x3f0] sm:$0xff] %v743
        %v745 = vld [vmem:[%s489 + $0x3f8] sm:$0xff]
        %746 = vst [vmem:[%s490 + $0x3f8] sm:$0xff] %v745
        %v747 = vld [vmem:[%s489 + $0x400] sm:$0xff]
        %748 = vst [vmem:[%s490 + $0x400] sm:$0xff] %v747
        %v749 = vld [vmem:[%s489 + $0x408] sm:$0xff]
        %750 = vst [vmem:[%s490 + $0x408] sm:$0xff] %v749
        %v751 = vld [vmem:[%s489 + $0x410] sm:$0xff]
        %752 = vst [vmem:[%s490 + $0x410] sm:$0xff] %v751
        %v753 = vld [vmem:[%s489 + $0x418] sm:$0xff]
        %754 = vst [vmem:[%s490 + $0x418] sm:$0xff] %v753
        %v755 = vld [vmem:[%s489 + $0x420] sm:$0xff]
        %756 = vst [vmem:[%s490 + $0x420] sm:$0xff] %v755
        %v757 = vld [vmem:[%s489 + $0x428] sm:$0xff]
        %758 = vst [vmem:[%s490 + $0x428] sm:$0xff] %v757
        %v759 = vld [vmem:[%s489 + $0x430] sm:$0xff]
        %760 = vst [vmem:[%s490 + $0x430] sm:$0xff] %v759
        %v761 = vld [vmem:[%s489 + $0x438] sm:$0xff]
        %762 = vst [vmem:[%s490 + $0x438] sm:$0xff] %v761
        %v763 = vld [vmem:[%s489 + $0x440] sm:$0xff]
        %764 = vst [vmem:[%s490 + $0x440] sm:$0xff] %v763
        %v765 = vld [vmem:[%s489 + $0x448] sm:$0xff]
        %766 = vst [vmem:[%s490 + $0x448] sm:$0xff] %v765
        %v767 = vld [vmem:[%s489 + $0x450] sm:$0xff]
        %768 = vst [vmem:[%s490 + $0x450] sm:$0xff] %v767
        %v769 = vld [vmem:[%s489 + $0x458] sm:$0xff]
        %770 = vst [vmem:[%s490 + $0x458] sm:$0xff] %v769
        %v771 = vld [vmem:[%s489 + $0x460] sm:$0xff]
        %772 = vst [vmem:[%s490 + $0x460] sm:$0xff] %v771
        %v773 = vld [vmem:[%s489 + $0x468] sm:$0xff]
        %774 = vst [vmem:[%s490 + $0x468] sm:$0xff] %v773
        %v775 = vld [vmem:[%s489 + $0x470] sm:$0xff]
        %776 = vst [vmem:[%s490 + $0x470] sm:$0xff] %v775
        %v777 = vld [vmem:[%s489 + $0x478] sm:$0xff]
        %778 = vst [vmem:[%s490 + $0x478] sm:$0xff] %v777
        %v779 = vld [vmem:[%s489 + $0x480] sm:$0xff]
        %780 = vst [vmem:[%s490 + $0x480] sm:$0xff] %v779
        %v781 = vld [vmem:[%s489 + $0x488] sm:$0xff]
        %782 = vst [vmem:[%s490 + $0x488] sm:$0xff] %v781
        %v783 = vld [vmem:[%s489 + $0x490] sm:$0xff]
        %784 = vst [vmem:[%s490 + $0x490] sm:$0xff] %v783
        %v785 = vld [vmem:[%s489 + $0x498] sm:$0xff]
        %786 = vst [vmem:[%s490 + $0x498] sm:$0xff] %v785
        %v787 = vld [vmem:[%s489 + $0x4a0] sm:$0xff]
        %788 = vst [vmem:[%s490 + $0x4a0] sm:$0xff] %v787
        %v789 = vld [vmem:[%s489 + $0x4a8] sm:$0xff]
        %790 = vst [vmem:[%s490 + $0x4a8] sm:$0xff] %v789
        %v791 = vld [vmem:[%s489 + $0x4b0] sm:$0xff]
        %792 = vst [vmem:[%s490 + $0x4b0] sm:$0xff] %v791
        %v793 = vld [vmem:[%s489 + $0x4b8] sm:$0xff]
        %794 = vst [vmem:[%s490 + $0x4b8] sm:$0xff] %v793
        %v795 = vld [vmem:[%s489 + $0x4c0] sm:$0xff]
        %796 = vst [vmem:[%s490 + $0x4c0] sm:$0xff] %v795
        %v797 = vld [vmem:[%s489 + $0x4c8] sm:$0xff]
        %798 = vst [vmem:[%s490 + $0x4c8] sm:$0xff] %v797
        %v799 = vld [vmem:[%s489 + $0x4d0] sm:$0xff]
        %800 = vst [vmem:[%s490 + $0x4d0] sm:$0xff] %v799
        %v801 = vld [vmem:[%s489 + $0x4d8] sm:$0xff]
        %802 = vst [vmem:[%s490 + $0x4d8] sm:$0xff] %v801
        %v803 = vld [vmem:[%s489 + $0x4e0] sm:$0xff]
        %804 = vst [vmem:[%s490 + $0x4e0] sm:$0xff] %v803
        %v805 = vld [vmem:[%s489 + $0x4e8] sm:$0xff]
        %806 = vst [vmem:[%s490 + $0x4e8] sm:$0xff] %v805
        %v807 = vld [vmem:[%s489 + $0x4f0] sm:$0xff]
        %808 = vst [vmem:[%s490 + $0x4f0] sm:$0xff] %v807
        %v809 = vld [vmem:[%s489 + $0x4f8] sm:$0xff]
        %810 = vst [vmem:[%s490 + $0x4f8] sm:$0xff] %v809
        %v811 = vld [vmem:[%s489 + $0x500] sm:$0xff]
        %812 = vst [vmem:[%s490 + $0x500] sm:$0xff] %v811
        %v813 = vld [vmem:[%s489 + $0x508] sm:$0xff]
        %814 = vst [vmem:[%s490 + $0x508] sm:$0xff] %v813
        %v815 = vld [vmem:[%s489 + $0x510] sm:$0xff]
        %816 = vst [vmem:[%s490 + $0x510] sm:$0xff] %v815
        %v817 = vld [vmem:[%s489 + $0x518] sm:$0xff]
        %818 = vst [vmem:[%s490 + $0x518] sm:$0xff] %v817
        %v819 = vld [vmem:[%s489 + $0x520] sm:$0xff]
        %820 = vst [vmem:[%s490 + $0x520] sm:$0xff] %v819
        %v821 = vld [vmem:[%s489 + $0x528] sm:$0xff]
        %822 = vst [vmem:[%s490 + $0x528] sm:$0xff] %v821
        %v823 = vld [vmem:[%s489 + $0x530] sm:$0xff]
        %824 = vst [vmem:[%s490 + $0x530] sm:$0xff] %v823
        %v825 = vld [vmem:[%s489 + $0x538] sm:$0xff]
        %826 = vst [vmem:[%s490 + $0x538] sm:$0xff] %v825
        %v827 = vld [vmem:[%s489 + $0x540] sm:$0xff]
        %828 = vst [vmem:[%s490 + $0x540] sm:$0xff] %v827
        %v829 = vld [vmem:[%s489 + $0x548] sm:$0xff]
        %830 = vst [vmem:[%s490 + $0x548] sm:$0xff] %v829
        %v831 = vld [vmem:[%s489 + $0x550] sm:$0xff]
        %832 = vst [vmem:[%s490 + $0x550] sm:$0xff] %v831
        %v833 = vld [vmem:[%s489 + $0x558] sm:$0xff]
        %834 = vst [vmem:[%s490 + $0x558] sm:$0xff] %v833
        %v835 = vld [vmem:[%s489 + $0x560] sm:$0xff]
        %836 = vst [vmem:[%s490 + $0x560] sm:$0xff] %v835
        %v837 = vld [vmem:[%s489 + $0x568] sm:$0xff]
        %838 = vst [vmem:[%s490 + $0x568] sm:$0xff] %v837
        %v839 = vld [vmem:[%s489 + $0x570] sm:$0xff]
        %840 = vst [vmem:[%s490 + $0x570] sm:$0xff] %v839
        %v841 = vld [vmem:[%s489 + $0x578] sm:$0xff]
        %842 = vst [vmem:[%s490 + $0x578] sm:$0xff] %v841
        %v843 = vld [vmem:[%s489 + $0x580] sm:$0xff]
        %844 = vst [vmem:[%s490 + $0x580] sm:$0xff] %v843
        %v845 = vld [vmem:[%s489 + $0x588] sm:$0xff]
        %846 = vst [vmem:[%s490 + $0x588] sm:$0xff] %v845
        %v847 = vld [vmem:[%s489 + $0x590] sm:$0xff]
        %848 = vst [vmem:[%s490 + $0x590] sm:$0xff] %v847
        %v849 = vld [vmem:[%s489 + $0x598] sm:$0xff]
        %850 = vst [vmem:[%s490 + $0x598] sm:$0xff] %v849
        %v851 = vld [vmem:[%s489 + $0x5a0] sm:$0xff]
        %852 = vst [vmem:[%s490 + $0x5a0] sm:$0xff] %v851
        %v853 = vld [vmem:[%s489 + $0x5a8] sm:$0xff]
        %854 = vst [vmem:[%s490 + $0x5a8] sm:$0xff] %v853
        %v855 = vld [vmem:[%s489 + $0x5b0] sm:$0xff]
        %856 = vst [vmem:[%s490 + $0x5b0] sm:$0xff] %v855
        %v857 = vld [vmem:[%s489 + $0x5b8] sm:$0xff]
        %858 = vst [vmem:[%s490 + $0x5b8] sm:$0xff] %v857
        %v859 = vld [vmem:[%s489 + $0x5c0] sm:$0xff]
        %860 = vst [vmem:[%s490 + $0x5c0] sm:$0xff] %v859
        %v861 = vld [vmem:[%s489 + $0x5c8] sm:$0xff]
        %862 = vst [vmem:[%s490 + $0x5c8] sm:$0xff] %v861
        %v863 = vld [vmem:[%s489 + $0x5d0] sm:$0xff]
        %864 = vst [vmem:[%s490 + $0x5d0] sm:$0xff] %v863
        %v865 = vld [vmem:[%s489 + $0x5d8] sm:$0xff]
        %866 = vst [vmem:[%s490 + $0x5d8] sm:$0xff] %v865
        %v867 = vld [vmem:[%s489 + $0x5e0] sm:$0xff]
        %868 = vst [vmem:[%s490 + $0x5e0] sm:$0xff] %v867
        %v869 = vld [vmem:[%s489 + $0x5e8] sm:$0xff]
        %870 = vst [vmem:[%s490 + $0x5e8] sm:$0xff] %v869
        %v871 = vld [vmem:[%s489 + $0x5f0] sm:$0xff]
        %872 = vst [vmem:[%s490 + $0x5f0] sm:$0xff] %v871
        %v873 = vld [vmem:[%s489 + $0x5f8] sm:$0xff]
        %874 = vst [vmem:[%s490 + $0x5f8] sm:$0xff] %v873
        %v875 = vld [vmem:[%s489 + $0x600] sm:$0xff]
        %876 = vst [vmem:[%s490 + $0x600] sm:$0xff] %v875
        %v877 = vld [vmem:[%s489 + $0x608] sm:$0xff]
        %878 = vst [vmem:[%s490 + $0x608] sm:$0xff] %v877
        %v879 = vld [vmem:[%s489 + $0x610] sm:$0xff]
        %880 = vst [vmem:[%s490 + $0x610] sm:$0xff] %v879
        %v881 = vld [vmem:[%s489 + $0x618] sm:$0xff]
        %882 = vst [vmem:[%s490 + $0x618] sm:$0xff] %v881
        %v883 = vld [vmem:[%s489 + $0x620] sm:$0xff]
        %884 = vst [vmem:[%s490 + $0x620] sm:$0xff] %v883
        %v885 = vld [vmem:[%s489 + $0x628] sm:$0xff]
        %886 = vst [vmem:[%s490 + $0x628] sm:$0xff] %v885
        %v887 = vld [vmem:[%s489 + $0x630] sm:$0xff]
        %888 = vst [vmem:[%s490 + $0x630] sm:$0xff] %v887
        %v889 = vld [vmem:[%s489 + $0x638] sm:$0xff]
        %890 = vst [vmem:[%s490 + $0x638] sm:$0xff] %v889
        %v891 = vld [vmem:[%s489 + $0x640] sm:$0xff]
        %892 = vst [vmem:[%s490 + $0x640] sm:$0xff] %v891
        %v893 = vld [vmem:[%s489 + $0x648] sm:$0xff]
        %894 = vst [vmem:[%s490 + $0x648] sm:$0xff] %v893
        %v895 = vld [vmem:[%s489 + $0x650] sm:$0xff]
        %896 = vst [vmem:[%s490 + $0x650] sm:$0xff] %v895
        %v897 = vld [vmem:[%s489 + $0x658] sm:$0xff]
        %898 = vst [vmem:[%s490 + $0x658] sm:$0xff] %v897
        %v899 = vld [vmem:[%s489 + $0x660] sm:$0xff]
        %900 = vst [vmem:[%s490 + $0x660] sm:$0xff] %v899
        %v901 = vld [vmem:[%s489 + $0x668] sm:$0xff]
        %902 = vst [vmem:[%s490 + $0x668] sm:$0xff] %v901
        %v903 = vld [vmem:[%s489 + $0x670] sm:$0xff]
        %904 = vst [vmem:[%s490 + $0x670] sm:$0xff] %v903
        %v905 = vld [vmem:[%s489 + $0x678] sm:$0xff]
        %906 = vst [vmem:[%s490 + $0x678] sm:$0xff] %v905
        %v907 = vld [vmem:[%s489 + $0x680] sm:$0xff]
        %908 = vst [vmem:[%s490 + $0x680] sm:$0xff] %v907
        %v909 = vld [vmem:[%s489 + $0x688] sm:$0xff]
        %910 = vst [vmem:[%s490 + $0x688] sm:$0xff] %v909
        %v911 = vld [vmem:[%s489 + $0x690] sm:$0xff]
        %912 = vst [vmem:[%s490 + $0x690] sm:$0xff] %v911
        %v913 = vld [vmem:[%s489 + $0x698] sm:$0xff]
        %914 = vst [vmem:[%s490 + $0x698] sm:$0xff] %v913
        %v915 = vld [vmem:[%s489 + $0x6a0] sm:$0xff]
        %916 = vst [vmem:[%s490 + $0x6a0] sm:$0xff] %v915
        %v917 = vld [vmem:[%s489 + $0x6a8] sm:$0xff]
        %918 = vst [vmem:[%s490 + $0x6a8] sm:$0xff] %v917
        %v919 = vld [vmem:[%s489 + $0x6b0] sm:$0xff]
        %920 = vst [vmem:[%s490 + $0x6b0] sm:$0xff] %v919
        %v921 = vld [vmem:[%s489 + $0x6b8] sm:$0xff]
        %922 = vst [vmem:[%s490 + $0x6b8] sm:$0xff] %v921
        %v923 = vld [vmem:[%s489 + $0x6c0] sm:$0xff]
        %924 = vst [vmem:[%s490 + $0x6c0] sm:$0xff] %v923
        %v925 = vld [vmem:[%s489 + $0x6c8] sm:$0xff]
        %926 = vst [vmem:[%s490 + $0x6c8] sm:$0xff] %v925
        %v927 = vld [vmem:[%s489 + $0x6d0] sm:$0xff]
        %928 = vst [vmem:[%s490 + $0x6d0] sm:$0xff] %v927
        %v929 = vld [vmem:[%s489 + $0x6d8] sm:$0xff]
        %930 = vst [vmem:[%s490 + $0x6d8] sm:$0xff] %v929
        %v931 = vld [vmem:[%s489 + $0x6e0] sm:$0xff]
        %932 = vst [vmem:[%s490 + $0x6e0] sm:$0xff] %v931
        %v933 = vld [vmem:[%s489 + $0x6e8] sm:$0xff]
        %934 = vst [vmem:[%s490 + $0x6e8] sm:$0xff] %v933
        %v935 = vld [vmem:[%s489 + $0x6f0] sm:$0xff]
        %936 = vst [vmem:[%s490 + $0x6f0] sm:$0xff] %v935
        %v937 = vld [vmem:[%s489 + $0x6f8] sm:$0xff]
        %938 = vst [vmem:[%s490 + $0x6f8] sm:$0xff] %v937
      $region115: #{tpu_custom_call.1} parent=109 // loop_footer
        %s488 = sadd.s32 1, %s484
      $region116: #{tpu_custom_call.1} parent=109 // loop_footer_branch
        %483 = sbr.rel target = $region112
      $region117: #{tpu_custom_call.1} parent=109 // loop_exit
        _
    $region110: #{tpu_custom_call.1} parent=1 // pred_fallthru
      _
    // Predicated region
    $region118: #{tpu_custom_call.1} parent=1 // pred_check
      _
    $region119: #{tpu_custom_call.1} parent=1 // pred_check_branch
      %940 = sbr.rel target = $region121
    $region120: #{tpu_custom_call.1} parent=1 // pred_region
      _
    $region121: #{tpu_custom_call.1} parent=1 // pred_fallthru
      _
    // Predicated region
    $region122: #{tpu_custom_call.1} parent=1 // pred_check
      _
    $region123: #{tpu_custom_call.1} parent=1 // pred_check_branch
      %943 = sbr.rel (0) target = $region125
    $region124: #{tpu_custom_call.1} parent=1 // pred_region
      %944 = vsyncadd %s480, 28672
    $region125: #{tpu_custom_call.1} parent=1 // pred_fallthru
      _
    %s945 = smul.u32 4, 32
    %s946 = smul.u32 %s945, 2
    %s947 = sshll.u32 %s946, 4
    %948 = dma.done [#allocation6], %s947
    %v949 = vld [vmem:[%s0] sm:$0xff]
    %v950 = vld [vmem:[%s0 + $0x8] sm:$0xff]
    %v951 = vpack.c.bf16 %v949, %v949
    %v952 = vpack.c.bf16 %v950, %v950
    %v953 = vld [vmem:[#allocation2] sm:$0xff]
    %v954 = vld [vmem:[#allocation2 + $0x8] sm:$0xff]
    %v955 = vld [vmem:[#allocation2 + $0x10] sm:$0xff]
    %v956 = vld [vmem:[#allocation2 + $0x18] sm:$0xff]
    %v957 = vld [vmem:[#allocation2 + $0x20] sm:$0xff]
    %v958 = vld [vmem:[#allocation2 + $0x28] sm:$0xff]
    %v959 = vld [vmem:[#allocation2 + $0x30] sm:$0xff]
    %v960 = vld [vmem:[#allocation2 + $0x38] sm:$0xff]
    %v961 = vld [vmem:[#allocation2 + $0x40] sm:$0xff]
    %v962 = vld [vmem:[#allocation2 + $0x48] sm:$0xff]
    %v963 = vld [vmem:[#allocation2 + $0x50] sm:$0xff]
    %v964 = vld [vmem:[#allocation2 + $0x58] sm:$0xff]
    %v965 = vld [vmem:[#allocation2 + $0x60] sm:$0xff]
    %v966 = vld [vmem:[#allocation2 + $0x68] sm:$0xff]
    %v967 = vld [vmem:[#allocation2 + $0x70] sm:$0xff]
    %v968 = vld [vmem:[#allocation2 + $0x78] sm:$0xff]
    %v969 = vld [vmem:[#allocation2 + $0x80] sm:$0xff]
    %v970 = vld [vmem:[#allocation2 + $0x88] sm:$0xff]
    %v971 = vld [vmem:[#allocation2 + $0x90] sm:$0xff]
    %v972 = vld [vmem:[#allocation2 + $0x98] sm:$0xff]
    %v973 = vld [vmem:[#allocation2 + $0xa0] sm:$0xff]
    %v974 = vld [vmem:[#allocation2 + $0xa8] sm:$0xff]
    %v975 = vld [vmem:[#allocation2 + $0xb0] sm:$0xff]
    %v976 = vld [vmem:[#allocation2 + $0xb8] sm:$0xff]
    %v977 = vld [vmem:[#allocation2 + $0xc0] sm:$0xff]
    %v978 = vld [vmem:[#allocation2 + $0xc8] sm:$0xff]
    %v979 = vld [vmem:[#allocation2 + $0xd0] sm:$0xff]
    %v980 = vld [vmem:[#allocation2 + $0xd8] sm:$0xff]
    %v981 = vld [vmem:[#allocation2 + $0xe0] sm:$0xff]
    %v982 = vld [vmem:[#allocation2 + $0xe8] sm:$0xff]
    %v983 = vld [vmem:[#allocation2 + $0xf0] sm:$0xff]
    %v984 = vld [vmem:[#allocation2 + $0xf8] sm:$0xff]
    %v985 = vld [vmem:[%s5] sm:$0x3]
    %v987 = vperm.slane %v985, 0
    %v988 = vperm.slane %v985, 1
    %v1023 = vunpack.c.l.b16 %v953
    %v1024 = vunpack.c.h.b16 %v953
    %v1025 = vunpack.c.l.b16 %v954
    %v1026 = vunpack.c.h.b16 %v954
    %v1027 = vunpack.c.l.b16 %v955
    %v1028 = vunpack.c.h.b16 %v955
    %v1029 = vunpack.c.l.b16 %v956
    %v1030 = vunpack.c.h.b16 %v956
    %v1031 = vunpack.c.l.b16 %v957
    %v1032 = vunpack.c.h.b16 %v957
    %v1033 = vunpack.c.l.b16 %v958
    %v1034 = vunpack.c.h.b16 %v958
    %v1035 = vunpack.c.l.b16 %v959
    %v1036 = vunpack.c.h.b16 %v959
    %v1037 = vunpack.c.l.b16 %v960
    %v1038 = vunpack.c.h.b16 %v960
    %v1039 = vunpack.c.l.b16 %v961
    %v1040 = vunpack.c.h.b16 %v961
    %v1041 = vunpack.c.l.b16 %v962
    %v1042 = vunpack.c.h.b16 %v962
    %v1043 = vunpack.c.l.b16 %v963
    %v1044 = vunpack.c.h.b16 %v963
    %v1045 = vunpack.c.l.b16 %v964
    %v1046 = vunpack.c.h.b16 %v964
    %v1047 = vunpack.c.l.b16 %v965
    %v1048 = vunpack.c.h.b16 %v965
    %v1049 = vunpack.c.l.b16 %v966
    %v1050 = vunpack.c.h.b16 %v966
    %v1051 = vunpack.c.l.b16 %v967
    %v1052 = vunpack.c.h.b16 %v967
    %v1053 = vunpack.c.l.b16 %v968
    %v1054 = vunpack.c.h.b16 %v968
    %v1055 = vunpack.c.l.b16 %v969
    %v1056 = vunpack.c.h.b16 %v969
    %v1057 = vunpack.c.l.b16 %v970
    %v1058 = vunpack.c.h.b16 %v970
    %v1059 = vunpack.c.l.b16 %v971
    %v1060 = vunpack.c.h.b16 %v971
    %v1061 = vunpack.c.l.b16 %v972
    %v1062 = vunpack.c.h.b16 %v972
    %v1063 = vunpack.c.l.b16 %v973
    %v1064 = vunpack.c.h.b16 %v973
    %v1065 = vunpack.c.l.b16 %v974
    %v1066 = vunpack.c.h.b16 %v974
    %v1067 = vunpack.c.l.b16 %v975
    %v1068 = vunpack.c.h.b16 %v975
    %v1069 = vunpack.c.l.b16 %v976
    %v1070 = vunpack.c.h.b16 %v976
    %v1071 = vunpack.c.l.b16 %v977
    %v1072 = vunpack.c.h.b16 %v977
    %v1073 = vunpack.c.l.b16 %v978
    %v1074 = vunpack.c.h.b16 %v978
    %v1075 = vunpack.c.l.b16 %v979
    %v1076 = vunpack.c.h.b16 %v979
    %v1077 = vunpack.c.l.b16 %v980
    %v1078 = vunpack.c.h.b16 %v980
    %v1079 = vunpack.c.l.b16 %v981
    %v1080 = vunpack.c.h.b16 %v981
    %v1081 = vunpack.c.l.b16 %v982
    %v1082 = vunpack.c.h.b16 %v982
    %v1083 = vunpack.c.l.b16 %v983
    %v1084 = vunpack.c.h.b16 %v983
    %v1085 = vunpack.c.l.b16 %v984
    %v1086 = vunpack.c.h.b16 %v984
    %v1087 = vpack.c.b16 %v1025, %v1023
    %v1088 = vpack.c.b16 %v1026, %v1024
    %v1089 = vpack.c.b16 %v1029, %v1027
    %v1090 = vpack.c.b16 %v1030, %v1028
    %v1091 = vpack.c.b16 %v1033, %v1031
    %v1092 = vpack.c.b16 %v1034, %v1032
    %v1093 = vpack.c.b16 %v1037, %v1035
    %v1094 = vpack.c.b16 %v1038, %v1036
    %v1095 = vpack.c.b16 %v1041, %v1039
    %v1096 = vpack.c.b16 %v1042, %v1040
    %v1097 = vpack.c.b16 %v1045, %v1043
    %v1098 = vpack.c.b16 %v1046, %v1044
    %v1099 = vpack.c.b16 %v1049, %v1047
    %v1100 = vpack.c.b16 %v1050, %v1048
    %v1101 = vpack.c.b16 %v1053, %v1051
    %v1102 = vpack.c.b16 %v1054, %v1052
    %v1103 = vpack.c.b16 %v1057, %v1055
    %v1104 = vpack.c.b16 %v1058, %v1056
    %v1105 = vpack.c.b16 %v1061, %v1059
    %v1106 = vpack.c.b16 %v1062, %v1060
    %v1107 = vpack.c.b16 %v1065, %v1063
    %v1108 = vpack.c.b16 %v1066, %v1064
    %v1109 = vpack.c.b16 %v1069, %v1067
    %v1110 = vpack.c.b16 %v1070, %v1068
    %v1111 = vpack.c.b16 %v1073, %v1071
    %v1112 = vpack.c.b16 %v1074, %v1072
    %v1113 = vpack.c.b16 %v1077, %v1075
    %v1114 = vpack.c.b16 %v1078, %v1076
    %v1115 = vpack.c.b16 %v1081, %v1079
    %v1116 = vpack.c.b16 %v1082, %v1080
    %v1117 = vpack.c.b16 %v1085, %v1083
    %v1118 = vpack.c.b16 %v1086, %v1084
    %1151 = vmatpush.bf16.msra.mxu0 %v1101
    %1152 = vmatpush.bf16.msra.mxu0 %v1099
    %1153 = vmatpush.bf16.msra.mxu0 %v1097
    %1154 = vmatpush.bf16.msra.mxu0 %v1095
    %1155 = vmatpush.bf16.msra.mxu0 %v1093
    %1156 = vmatpush.bf16.msra.mxu0 %v1091
    %1157 = vmatpush.bf16.msra.mxu0 %v1089
    %1158 = vmatpush.bf16.msra.mxu0 %v1087
    %1159 = vmatmul.bf16.gmra.mxu0 %v951
    %v1160 = vpop.f32.mrf.mxu0
    %v1161 = vadd.f32 %v987, %v1160
    %v1162 = vpop.f32.mrf.mxu0
    %1163 = vdwg.mxu0
    %1164 = vmatpush.bf16.msra.mxu0 %v1117
    %1165 = vmatpush.bf16.msra.mxu0 %v1115
    %1166 = vmatpush.bf16.msra.mxu0 %v1113
    %1167 = vmatpush.bf16.msra.mxu0 %v1111
    %1168 = vmatpush.bf16.msra.mxu0 %v1109
    %1169 = vmatpush.bf16.msra.mxu0 %v1107
    %1170 = vmatpush.bf16.msra.mxu0 %v1105
    %1171 = vmatpush.bf16.msra.mxu0 %v1103
    %1172 = vmatmul.bf16.gmra.mxu0 %v952
    %v1173 = vpop.f32.mrf.mxu0
    %v1174 = vadd.f32 %v1161, %v1173
    %v1175 = vpop.f32.mrf.mxu0
    %1176 = vdwg.mxu0
    %1177 = vmatpush.bf16.msra.mxu0 %v1102
    %1178 = vmatpush.bf16.msra.mxu0 %v1100
    %1179 = vmatpush.bf16.msra.mxu0 %v1098
    %1180 = vmatpush.bf16.msra.mxu0 %v1096
    %1181 = vmatpush.bf16.msra.mxu0 %v1094
    %1182 = vmatpush.bf16.msra.mxu0 %v1092
    %1183 = vmatpush.bf16.msra.mxu0 %v1090
    %1184 = vmatpush.bf16.msra.mxu0 %v1088
    %1185 = vmatmul.bf16.gmra.mxu0 %v951
    %v1186 = vpop.f32.mrf.mxu0
    %v1187 = vadd.f32 %v988, %v1186
    %v1188 = vpop.f32.mrf.mxu0
    %1189 = vdwg.mxu0
    %1190 = vmatpush.bf16.msra.mxu0 %v1118
    %1191 = vmatpush.bf16.msra.mxu0 %v1116
    %1192 = vmatpush.bf16.msra.mxu0 %v1114
    %1193 = vmatpush.bf16.msra.mxu0 %v1112
    %1194 = vmatpush.bf16.msra.mxu0 %v1110
    %1195 = vmatpush.bf16.msra.mxu0 %v1108
    %1196 = vmatpush.bf16.msra.mxu0 %v1106
    %1197 = vmatpush.bf16.msra.mxu0 %v1104
    %1198 = vmatmul.bf16.gmra.mxu0 %v952
    %v1199 = vpop.f32.mrf.mxu0
    %v1200 = vadd.f32 %v1187, %v1199
    %v1201 = vpop.f32.mrf.mxu0
    %1202 = vdwg.mxu0
    %vm1203 = vcmp.gt.f32.partialorder %v1174, 0.0
    %vm1204 = vcmp.gt.f32.partialorder %v1200, 0.0
    %v1205 = vmul.f32 %v1174, 0.2
    %v1206 = vmul.f32 %v1200, 0.2
    %v1207 = vsel %vm1203, %v1174, %v1205
    %v1208 = vsel %vm1204, %v1200, %v1206
    %s1209 = smul.u32 2, 32
    %s1210 = smul.u32 %s1209, 4
    %s1211 = sshll.u32 %s1210, 4
    %1212 = dma.done %s126, %s1211
    %v1213 = vld [vmem:[#allocation3] sm:$0xff]
    %v1214 = vld [vmem:[#allocation3 + $0x8] sm:$0xff]
    %v1215 = vld [vmem:[#allocation3 + $0x10] sm:$0xff]
    %v1216 = vld [vmem:[#allocation3 + $0x18] sm:$0xff]
    %v1217 = vld [vmem:[#allocation3 + $0x20] sm:$0xff]
    %v1218 = vld [vmem:[#allocation3 + $0x28] sm:$0xff]
    %v1219 = vld [vmem:[#allocation3 + $0x30] sm:$0xff]
    %v1220 = vld [vmem:[#allocation3 + $0x38] sm:$0xff]
    %v1221 = vld [vmem:[#allocation3 + $0x40] sm:$0xff]
    %v1222 = vld [vmem:[#allocation3 + $0x48] sm:$0xff]
    %v1223 = vld [vmem:[#allocation3 + $0x50] sm:$0xff]
    %v1224 = vld [vmem:[#allocation3 + $0x58] sm:$0xff]
    %v1225 = vld [vmem:[#allocation3 + $0x60] sm:$0xff]
    %v1226 = vld [vmem:[#allocation3 + $0x68] sm:$0xff]
    %v1227 = vld [vmem:[#allocation3 + $0x70] sm:$0xff]
    %v1228 = vld [vmem:[#allocation3 + $0x78] sm:$0xff]
    %v1229 = vld [vmem:[#allocation3 + $0x80] sm:$0xff]
    %v1230 = vld [vmem:[#allocation3 + $0x88] sm:$0xff]
    %v1231 = vld [vmem:[#allocation3 + $0x90] sm:$0xff]
    %v1232 = vld [vmem:[#allocation3 + $0x98] sm:$0xff]
    %v1233 = vld [vmem:[#allocation3 + $0xa0] sm:$0xff]
    %v1234 = vld [vmem:[#allocation3 + $0xa8] sm:$0xff]
    %v1235 = vld [vmem:[#allocation3 + $0xb0] sm:$0xff]
    %v1236 = vld [vmem:[#allocation3 + $0xb8] sm:$0xff]
    %v1237 = vld [vmem:[#allocation3 + $0xc0] sm:$0xff]
    %v1238 = vld [vmem:[#allocation3 + $0xc8] sm:$0xff]
    %v1239 = vld [vmem:[#allocation3 + $0xd0] sm:$0xff]
    %v1240 = vld [vmem:[#allocation3 + $0xd8] sm:$0xff]
    %v1241 = vld [vmem:[#allocation3 + $0xe0] sm:$0xff]
    %v1242 = vld [vmem:[#allocation3 + $0xe8] sm:$0xff]
    %v1243 = vld [vmem:[#allocation3 + $0xf0] sm:$0xff]
    %v1244 = vld [vmem:[#allocation3 + $0xf8] sm:$0xff]
    %v1245 = vld [vmem:[%s9] sm:$0xf]
    %v1246 = vunpack.c.0.s8 %v1213
    %v1247 = vunpack.c.0.s8 %v1214
    %v1248 = vunpack.c.0.s8 %v1215
    %v1249 = vunpack.c.0.s8 %v1216
    %v1250 = vunpack.c.1.s8 %v1213
    %v1251 = vunpack.c.1.s8 %v1214
    %v1252 = vunpack.c.1.s8 %v1215
    %v1253 = vunpack.c.1.s8 %v1216
    %v1254 = vunpack.c.2.s8 %v1213
    %v1255 = vunpack.c.2.s8 %v1214
    %v1256 = vunpack.c.2.s8 %v1215
    %v1257 = vunpack.c.2.s8 %v1216
    %v1258 = vunpack.c.3.s8 %v1213
    %v1259 = vunpack.c.3.s8 %v1214
    %v1260 = vunpack.c.3.s8 %v1215
    %v1261 = vunpack.c.3.s8 %v1216
    %v1262 = vunpack.c.0.s8 %v1217
    %v1263 = vunpack.c.0.s8 %v1218
    %v1264 = vunpack.c.0.s8 %v1219
    %v1265 = vunpack.c.0.s8 %v1220
    %v1266 = vunpack.c.1.s8 %v1217
    %v1267 = vunpack.c.1.s8 %v1218
    %v1268 = vunpack.c.1.s8 %v1219
    %v1269 = vunpack.c.1.s8 %v1220
    %v1270 = vunpack.c.2.s8 %v1217
    %v1271 = vunpack.c.2.s8 %v1218
    %v1272 = vunpack.c.2.s8 %v1219
    %v1273 = vunpack.c.2.s8 %v1220
    %v1274 = vunpack.c.3.s8 %v1217
    %v1275 = vunpack.c.3.s8 %v1218
    %v1276 = vunpack.c.3.s8 %v1219
    %v1277 = vunpack.c.3.s8 %v1220
    %v1278 = vunpack.c.0.s8 %v1221
    %v1279 = vunpack.c.0.s8 %v1222
    %v1280 = vunpack.c.0.s8 %v1223
    %v1281 = vunpack.c.0.s8 %v1224
    %v1282 = vunpack.c.1.s8 %v1221
    %v1283 = vunpack.c.1.s8 %v1222
    %v1284 = vunpack.c.1.s8 %v1223
    %v1285 = vunpack.c.1.s8 %v1224
    %v1286 = vunpack.c.2.s8 %v1221
    %v1287 = vunpack.c.2.s8 %v1222
    %v1288 = vunpack.c.2.s8 %v1223
    %v1289 = vunpack.c.2.s8 %v1224
    %v1290 = vunpack.c.3.s8 %v1221
    %v1291 = vunpack.c.3.s8 %v1222
    %v1292 = vunpack.c.3.s8 %v1223
    %v1293 = vunpack.c.3.s8 %v1224
    %v1294 = vunpack.c.0.s8 %v1225
    %v1295 = vunpack.c.0.s8 %v1226
    %v1296 = vunpack.c.0.s8 %v1227
    %v1297 = vunpack.c.0.s8 %v1228
    %v1298 = vunpack.c.1.s8 %v1225
    %v1299 = vunpack.c.1.s8 %v1226
    %v1300 = vunpack.c.1.s8 %v1227
    %v1301 = vunpack.c.1.s8 %v1228
    %v1302 = vunpack.c.2.s8 %v1225
    %v1303 = vunpack.c.2.s8 %v1226
    %v1304 = vunpack.c.2.s8 %v1227
    %v1305 = vunpack.c.2.s8 %v1228
    %v1306 = vunpack.c.3.s8 %v1225
    %v1307 = vunpack.c.3.s8 %v1226
    %v1308 = vunpack.c.3.s8 %v1227
    %v1309 = vunpack.c.3.s8 %v1228
    %v1310 = vunpack.c.0.s8 %v1229
    %v1311 = vunpack.c.0.s8 %v1230
    %v1312 = vunpack.c.0.s8 %v1231
    %v1313 = vunpack.c.0.s8 %v1232
    %v1314 = vunpack.c.1.s8 %v1229
    %v1315 = vunpack.c.1.s8 %v1230
    %v1316 = vunpack.c.1.s8 %v1231
    %v1317 = vunpack.c.1.s8 %v1232
    %v1318 = vunpack.c.2.s8 %v1229
    %v1319 = vunpack.c.2.s8 %v1230
    %v1320 = vunpack.c.2.s8 %v1231
    %v1321 = vunpack.c.2.s8 %v1232
    %v1322 = vunpack.c.3.s8 %v1229
    %v1323 = vunpack.c.3.s8 %v1230
    %v1324 = vunpack.c.3.s8 %v1231
    %v1325 = vunpack.c.3.s8 %v1232
    %v1326 = vunpack.c.0.s8 %v1233
    %v1327 = vunpack.c.0.s8 %v1234
    %v1328 = vunpack.c.0.s8 %v1235
    %v1329 = vunpack.c.0.s8 %v1236
    %v1330 = vunpack.c.1.s8 %v1233
    %v1331 = vunpack.c.1.s8 %v1234
    %v1332 = vunpack.c.1.s8 %v1235
    %v1333 = vunpack.c.1.s8 %v1236
    %v1334 = vunpack.c.2.s8 %v1233
    %v1335 = vunpack.c.2.s8 %v1234
    %v1336 = vunpack.c.2.s8 %v1235
    %v1337 = vunpack.c.2.s8 %v1236
    %v1338 = vunpack.c.3.s8 %v1233
    %v1339 = vunpack.c.3.s8 %v1234
    %v1340 = vunpack.c.3.s8 %v1235
    %v1341 = vunpack.c.3.s8 %v1236
    %v1342 = vunpack.c.0.s8 %v1237
    %v1343 = vunpack.c.0.s8 %v1238
    %v1344 = vunpack.c.0.s8 %v1239
    %v1345 = vunpack.c.0.s8 %v1240
    %v1346 = vunpack.c.1.s8 %v1237
    %v1347 = vunpack.c.1.s8 %v1238
    %v1348 = vunpack.c.1.s8 %v1239
    %v1349 = vunpack.c.1.s8 %v1240
    %v1350 = vunpack.c.2.s8 %v1237
    %v1351 = vunpack.c.2.s8 %v1238
    %v1352 = vunpack.c.2.s8 %v1239
    %v1353 = vunpack.c.2.s8 %v1240
    %v1354 = vunpack.c.3.s8 %v1237
    %v1355 = vunpack.c.3.s8 %v1238
    %v1356 = vunpack.c.3.s8 %v1239
    %v1357 = vunpack.c.3.s8 %v1240
    %v1358 = vunpack.c.0.s8 %v1241
    %v1359 = vunpack.c.0.s8 %v1242
    %v1360 = vunpack.c.0.s8 %v1243
    %v1361 = vunpack.c.0.s8 %v1244
    %v1362 = vunpack.c.1.s8 %v1241
    %v1363 = vunpack.c.1.s8 %v1242
    %v1364 = vunpack.c.1.s8 %v1243
    %v1365 = vunpack.c.1.s8 %v1244
    %v1366 = vunpack.c.2.s8 %v1241
    %v1367 = vunpack.c.2.s8 %v1242
    %v1368 = vunpack.c.2.s8 %v1243
    %v1369 = vunpack.c.2.s8 %v1244
    %v1370 = vunpack.c.3.s8 %v1241
    %v1371 = vunpack.c.3.s8 %v1242
    %v1372 = vunpack.c.3.s8 %v1243
    %v1373 = vunpack.c.3.s8 %v1244
    %v1374 = vcvt.s32.f32 %v1246
    %v1375 = vcvt.s32.f32 %v1247
    %v1376 = vcvt.s32.f32 %v1248
    %v1377 = vcvt.s32.f32 %v1249
    %v1378 = vcvt.s32.f32 %v1250
    %v1379 = vcvt.s32.f32 %v1251
    %v1380 = vcvt.s32.f32 %v1252
    %v1381 = vcvt.s32.f32 %v1253
    %v1382 = vcvt.s32.f32 %v1254
    %v1383 = vcvt.s32.f32 %v1255
    %v1384 = vcvt.s32.f32 %v1256
    %v1385 = vcvt.s32.f32 %v1257
    %v1386 = vcvt.s32.f32 %v1258
    %v1387 = vcvt.s32.f32 %v1259
    %v1388 = vcvt.s32.f32 %v1260
    %v1389 = vcvt.s32.f32 %v1261
    %v1390 = vcvt.s32.f32 %v1262
    %v1391 = vcvt.s32.f32 %v1263
    %v1392 = vcvt.s32.f32 %v1264
    %v1393 = vcvt.s32.f32 %v1265
    %v1394 = vcvt.s32.f32 %v1266
    %v1395 = vcvt.s32.f32 %v1267
    %v1396 = vcvt.s32.f32 %v1268
    %v1397 = vcvt.s32.f32 %v1269
    %v1398 = vcvt.s32.f32 %v1270
    %v1399 = vcvt.s32.f32 %v1271
    %v1400 = vcvt.s32.f32 %v1272
    %v1401 = vcvt.s32.f32 %v1273
    %v1402 = vcvt.s32.f32 %v1274
    %v1403 = vcvt.s32.f32 %v1275
    %v1404 = vcvt.s32.f32 %v1276
    %v1405 = vcvt.s32.f32 %v1277
    %v1406 = vcvt.s32.f32 %v1278
    %v1407 = vcvt.s32.f32 %v1279
    %v1408 = vcvt.s32.f32 %v1280
    %v1409 = vcvt.s32.f32 %v1281
    %v1410 = vcvt.s32.f32 %v1282
    %v1411 = vcvt.s32.f32 %v1283
    %v1412 = vcvt.s32.f32 %v1284
    %v1413 = vcvt.s32.f32 %v1285
    %v1414 = vcvt.s32.f32 %v1286
    %v1415 = vcvt.s32.f32 %v1287
    %v1416 = vcvt.s32.f32 %v1288
    %v1417 = vcvt.s32.f32 %v1289
    %v1418 = vcvt.s32.f32 %v1290
    %v1419 = vcvt.s32.f32 %v1291
    %v1420 = vcvt.s32.f32 %v1292
    %v1421 = vcvt.s32.f32 %v1293
    %v1422 = vcvt.s32.f32 %v1294
    %v1423 = vcvt.s32.f32 %v1295
    %v1424 = vcvt.s32.f32 %v1296
    %v1425 = vcvt.s32.f32 %v1297
    %v1426 = vcvt.s32.f32 %v1298
    %v1427 = vcvt.s32.f32 %v1299
    %v1428 = vcvt.s32.f32 %v1300
    %v1429 = vcvt.s32.f32 %v1301
    %v1430 = vcvt.s32.f32 %v1302
    %v1431 = vcvt.s32.f32 %v1303
    %v1432 = vcvt.s32.f32 %v1304
    %v1433 = vcvt.s32.f32 %v1305
    %v1434 = vcvt.s32.f32 %v1306
    %v1435 = vcvt.s32.f32 %v1307
    %v1436 = vcvt.s32.f32 %v1308
    %v1437 = vcvt.s32.f32 %v1309
    %v1438 = vcvt.s32.f32 %v1310
    %v1439 = vcvt.s32.f32 %v1311
    %v1440 = vcvt.s32.f32 %v1312
    %v1441 = vcvt.s32.f32 %v1313
    %v1442 = vcvt.s32.f32 %v1314
    %v1443 = vcvt.s32.f32 %v1315
    %v1444 = vcvt.s32.f32 %v1316
    %v1445 = vcvt.s32.f32 %v1317
    %v1446 = vcvt.s32.f32 %v1318
    %v1447 = vcvt.s32.f32 %v1319
    %v1448 = vcvt.s32.f32 %v1320
    %v1449 = vcvt.s32.f32 %v1321
    %v1450 = vcvt.s32.f32 %v1322
    %v1451 = vcvt.s32.f32 %v1323
    %v1452 = vcvt.s32.f32 %v1324
    %v1453 = vcvt.s32.f32 %v1325
    %v1454 = vcvt.s32.f32 %v1326
    %v1455 = vcvt.s32.f32 %v1327
    %v1456 = vcvt.s32.f32 %v1328
    %v1457 = vcvt.s32.f32 %v1329
    %v1458 = vcvt.s32.f32 %v1330
    %v1459 = vcvt.s32.f32 %v1331
    %v1460 = vcvt.s32.f32 %v1332
    %v1461 = vcvt.s32.f32 %v1333
    %v1462 = vcvt.s32.f32 %v1334
    %v1463 = vcvt.s32.f32 %v1335
    %v1464 = vcvt.s32.f32 %v1336
    %v1465 = vcvt.s32.f32 %v1337
    %v1466 = vcvt.s32.f32 %v1338
    %v1467 = vcvt.s32.f32 %v1339
    %v1468 = vcvt.s32.f32 %v1340
    %v1469 = vcvt.s32.f32 %v1341
    %v1470 = vcvt.s32.f32 %v1342
    %v1471 = vcvt.s32.f32 %v1343
    %v1472 = vcvt.s32.f32 %v1344
    %v1473 = vcvt.s32.f32 %v1345
    %v1474 = vcvt.s32.f32 %v1346
    %v1475 = vcvt.s32.f32 %v1347
    %v1476 = vcvt.s32.f32 %v1348
    %v1477 = vcvt.s32.f32 %v1349
    %v1478 = vcvt.s32.f32 %v1350
    %v1479 = vcvt.s32.f32 %v1351
    %v1480 = vcvt.s32.f32 %v1352
    %v1481 = vcvt.s32.f32 %v1353
    %v1482 = vcvt.s32.f32 %v1354
    %v1483 = vcvt.s32.f32 %v1355
    %v1484 = vcvt.s32.f32 %v1356
    %v1485 = vcvt.s32.f32 %v1357
    %v1486 = vcvt.s32.f32 %v1358
    %v1487 = vcvt.s32.f32 %v1359
    %v1488 = vcvt.s32.f32 %v1360
    %v1489 = vcvt.s32.f32 %v1361
    %v1490 = vcvt.s32.f32 %v1362
    %v1491 = vcvt.s32.f32 %v1363
    %v1492 = vcvt.s32.f32 %v1364
    %v1493 = vcvt.s32.f32 %v1365
    %v1494 = vcvt.s32.f32 %v1366
    %v1495 = vcvt.s32.f32 %v1367
    %v1496 = vcvt.s32.f32 %v1368
    %v1497 = vcvt.s32.f32 %v1369
    %v1498 = vcvt.s32.f32 %v1370
    %v1499 = vcvt.s32.f32 %v1371
    %v1500 = vcvt.s32.f32 %v1372
    %v1501 = vcvt.s32.f32 %v1373
    %v1503 = vperm.slane %v1245, 0
    %v1504 = vperm.slane %v1245, 1
    %v1505 = vperm.slane %v1245, 2
    %v1506 = vperm.slane %v1245, 3
    %v1511 = vmul.f32 %v1374, %v1503
    %v1512 = vmul.f32 %v1375, %v1504
    %v1513 = vmul.f32 %v1376, %v1505
    %v1514 = vmul.f32 %v1377, %v1506
    %v1515 = vmul.f32 %v1378, %v1503
    %v1516 = vmul.f32 %v1379, %v1504
    %v1517 = vmul.f32 %v1380, %v1505
    %v1518 = vmul.f32 %v1381, %v1506
    %v1519 = vmul.f32 %v1382, %v1503
    %v1520 = vmul.f32 %v1383, %v1504
    %v1521 = vmul.f32 %v1384, %v1505
    %v1522 = vmul.f32 %v1385, %v1506
    %v1523 = vmul.f32 %v1386, %v1503
    %v1524 = vmul.f32 %v1387, %v1504
    %v1525 = vmul.f32 %v1388, %v1505
    %v1526 = vmul.f32 %v1389, %v1506
    %v1527 = vmul.f32 %v1390, %v1503
    %v1528 = vmul.f32 %v1391, %v1504
    %v1529 = vmul.f32 %v1392, %v1505
    %v1530 = vmul.f32 %v1393, %v1506
    %v1531 = vmul.f32 %v1394, %v1503
    %v1532 = vmul.f32 %v1395, %v1504
    %v1533 = vmul.f32 %v1396, %v1505
    %v1534 = vmul.f32 %v1397, %v1506
    %v1535 = vmul.f32 %v1398, %v1503
    %v1536 = vmul.f32 %v1399, %v1504
    %v1537 = vmul.f32 %v1400, %v1505
    %v1538 = vmul.f32 %v1401, %v1506
    %v1539 = vmul.f32 %v1402, %v1503
    %v1540 = vmul.f32 %v1403, %v1504
    %v1541 = vmul.f32 %v1404, %v1505
    %v1542 = vmul.f32 %v1405, %v1506
    %v1543 = vmul.f32 %v1406, %v1503
    %v1544 = vmul.f32 %v1407, %v1504
    %v1545 = vmul.f32 %v1408, %v1505
    %v1546 = vmul.f32 %v1409, %v1506
    %v1547 = vmul.f32 %v1410, %v1503
    %v1548 = vmul.f32 %v1411, %v1504
    %v1549 = vmul.f32 %v1412, %v1505
    %v1550 = vmul.f32 %v1413, %v1506
    %v1551 = vmul.f32 %v1414, %v1503
    %v1552 = vmul.f32 %v1415, %v1504
    %v1553 = vmul.f32 %v1416, %v1505
    %v1554 = vmul.f32 %v1417, %v1506
    %v1555 = vmul.f32 %v1418, %v1503
    %v1556 = vmul.f32 %v1419, %v1504
    %v1557 = vmul.f32 %v1420, %v1505
    %v1558 = vmul.f32 %v1421, %v1506
    %v1559 = vmul.f32 %v1422, %v1503
    %v1560 = vmul.f32 %v1423, %v1504
    %v1561 = vmul.f32 %v1424, %v1505
    %v1562 = vmul.f32 %v1425, %v1506
    %v1563 = vmul.f32 %v1426, %v1503
    %v1564 = vmul.f32 %v1427, %v1504
    %v1565 = vmul.f32 %v1428, %v1505
    %v1566 = vmul.f32 %v1429, %v1506
    %v1567 = vmul.f32 %v1430, %v1503
    %v1568 = vmul.f32 %v1431, %v1504
    %v1569 = vmul.f32 %v1432, %v1505
    %v1570 = vmul.f32 %v1433, %v1506
    %v1571 = vmul.f32 %v1434, %v1503
    %v1572 = vmul.f32 %v1435, %v1504
    %v1573 = vmul.f32 %v1436, %v1505
    %v1574 = vmul.f32 %v1437, %v1506
    %v1575 = vmul.f32 %v1438, %v1503
    %v1576 = vmul.f32 %v1439, %v1504
    %v1577 = vmul.f32 %v1440, %v1505
    %v1578 = vmul.f32 %v1441, %v1506
    %v1579 = vmul.f32 %v1442, %v1503
    %v1580 = vmul.f32 %v1443, %v1504
    %v1581 = vmul.f32 %v1444, %v1505
    %v1582 = vmul.f32 %v1445, %v1506
    %v1583 = vmul.f32 %v1446, %v1503
    %v1584 = vmul.f32 %v1447, %v1504
    %v1585 = vmul.f32 %v1448, %v1505
    %v1586 = vmul.f32 %v1449, %v1506
    %v1587 = vmul.f32 %v1450, %v1503
    %v1588 = vmul.f32 %v1451, %v1504
    %v1589 = vmul.f32 %v1452, %v1505
    %v1590 = vmul.f32 %v1453, %v1506
    %v1591 = vmul.f32 %v1454, %v1503
    %v1592 = vmul.f32 %v1455, %v1504
    %v1593 = vmul.f32 %v1456, %v1505
    %v1594 = vmul.f32 %v1457, %v1506
    %v1595 = vmul.f32 %v1458, %v1503
    %v1596 = vmul.f32 %v1459, %v1504
    %v1597 = vmul.f32 %v1460, %v1505
    %v1598 = vmul.f32 %v1461, %v1506
    %v1599 = vmul.f32 %v1462, %v1503
    %v1600 = vmul.f32 %v1463, %v1504
    %v1601 = vmul.f32 %v1464, %v1505
    %v1602 = vmul.f32 %v1465, %v1506
    %v1603 = vmul.f32 %v1466, %v1503
    %v1604 = vmul.f32 %v1467, %v1504
    %v1605 = vmul.f32 %v1468, %v1505
    %v1606 = vmul.f32 %v1469, %v1506
    %v1607 = vmul.f32 %v1470, %v1503
    %v1608 = vmul.f32 %v1471, %v1504
    %v1609 = vmul.f32 %v1472, %v1505
    %v1610 = vmul.f32 %v1473, %v1506
    %v1611 = vmul.f32 %v1474, %v1503
    %v1612 = vmul.f32 %v1475, %v1504
    %v1613 = vmul.f32 %v1476, %v1505
    %v1614 = vmul.f32 %v1477, %v1506
    %v1615 = vmul.f32 %v1478, %v1503
    %v1616 = vmul.f32 %v1479, %v1504
    %v1617 = vmul.f32 %v1480, %v1505
    %v1618 = vmul.f32 %v1481, %v1506
    %v1619 = vmul.f32 %v1482, %v1503
    %v1620 = vmul.f32 %v1483, %v1504
    %v1621 = vmul.f32 %v1484, %v1505
    %v1622 = vmul.f32 %v1485, %v1506
    %v1623 = vmul.f32 %v1486, %v1503
    %v1624 = vmul.f32 %v1487, %v1504
    %v1625 = vmul.f32 %v1488, %v1505
    %v1626 = vmul.f32 %v1489, %v1506
    %v1627 = vmul.f32 %v1490, %v1503
    %v1628 = vmul.f32 %v1491, %v1504
    %v1629 = vmul.f32 %v1492, %v1505
    %v1630 = vmul.f32 %v1493, %v1506
    %v1631 = vmul.f32 %v1494, %v1503
    %v1632 = vmul.f32 %v1495, %v1504
    %v1633 = vmul.f32 %v1496, %v1505
    %v1634 = vmul.f32 %v1497, %v1506
    %v1635 = vmul.f32 %v1498, %v1503
    %v1636 = vmul.f32 %v1499, %v1504
    %v1637 = vmul.f32 %v1500, %v1505
    %v1638 = vmul.f32 %v1501, %v1506
    %v1639 = vpack.c.bf16 %v1515, %v1511
    %v1640 = vpack.c.bf16 %v1516, %v1512
    %v1641 = vpack.c.bf16 %v1517, %v1513
    %v1642 = vpack.c.bf16 %v1518, %v1514
    %v1643 = vpack.c.bf16 %v1523, %v1519
    %v1644 = vpack.c.bf16 %v1524, %v1520
    %v1645 = vpack.c.bf16 %v1525, %v1521
    %v1646 = vpack.c.bf16 %v1526, %v1522
    %v1647 = vpack.c.bf16 %v1531, %v1527
    %v1648 = vpack.c.bf16 %v1532, %v1528
    %v1649 = vpack.c.bf16 %v1533, %v1529
    %v1650 = vpack.c.bf16 %v1534, %v1530
    %v1651 = vpack.c.bf16 %v1539, %v1535
    %v1652 = vpack.c.bf16 %v1540, %v1536
    %v1653 = vpack.c.bf16 %v1541, %v1537
    %v1654 = vpack.c.bf16 %v1542, %v1538
    %v1655 = vpack.c.bf16 %v1547, %v1543
    %v1656 = vpack.c.bf16 %v1548, %v1544
    %v1657 = vpack.c.bf16 %v1549, %v1545
    %v1658 = vpack.c.bf16 %v1550, %v1546
    %v1659 = vpack.c.bf16 %v1555, %v1551
    %v1660 = vpack.c.bf16 %v1556, %v1552
    %v1661 = vpack.c.bf16 %v1557, %v1553
    %v1662 = vpack.c.bf16 %v1558, %v1554
    %v1663 = vpack.c.bf16 %v1563, %v1559
    %v1664 = vpack.c.bf16 %v1564, %v1560
    %v1665 = vpack.c.bf16 %v1565, %v1561
    %v1666 = vpack.c.bf16 %v1566, %v1562
    %v1667 = vpack.c.bf16 %v1571, %v1567
    %v1668 = vpack.c.bf16 %v1572, %v1568
    %v1669 = vpack.c.bf16 %v1573, %v1569
    %v1670 = vpack.c.bf16 %v1574, %v1570
    %v1671 = vpack.c.bf16 %v1579, %v1575
    %v1672 = vpack.c.bf16 %v1580, %v1576
    %v1673 = vpack.c.bf16 %v1581, %v1577
    %v1674 = vpack.c.bf16 %v1582, %v1578
    %v1675 = vpack.c.bf16 %v1587, %v1583
    %v1676 = vpack.c.bf16 %v1588, %v1584
    %v1677 = vpack.c.bf16 %v1589, %v1585
    %v1678 = vpack.c.bf16 %v1590, %v1586
    %v1679 = vpack.c.bf16 %v1595, %v1591
    %v1680 = vpack.c.bf16 %v1596, %v1592
    %v1681 = vpack.c.bf16 %v1597, %v1593
    %v1682 = vpack.c.bf16 %v1598, %v1594
    %v1683 = vpack.c.bf16 %v1603, %v1599
    %v1684 = vpack.c.bf16 %v1604, %v1600
    %v1685 = vpack.c.bf16 %v1605, %v1601
    %v1686 = vpack.c.bf16 %v1606, %v1602
    %v1687 = vpack.c.bf16 %v1611, %v1607
    %v1688 = vpack.c.bf16 %v1612, %v1608
    %v1689 = vpack.c.bf16 %v1613, %v1609
    %v1690 = vpack.c.bf16 %v1614, %v1610
    %v1691 = vpack.c.bf16 %v1619, %v1615
    %v1692 = vpack.c.bf16 %v1620, %v1616
    %v1693 = vpack.c.bf16 %v1621, %v1617
    %v1694 = vpack.c.bf16 %v1622, %v1618
    %v1695 = vpack.c.bf16 %v1627, %v1623
    %v1696 = vpack.c.bf16 %v1628, %v1624
    %v1697 = vpack.c.bf16 %v1629, %v1625
    %v1698 = vpack.c.bf16 %v1630, %v1626
    %v1699 = vpack.c.bf16 %v1635, %v1631
    %v1700 = vpack.c.bf16 %v1636, %v1632
    %v1701 = vpack.c.bf16 %v1637, %v1633
    %v1702 = vpack.c.bf16 %v1638, %v1634
    %v1703 = vpack.c.bf16 %v1207, %v1207
    %v1704 = vpack.c.bf16 %v1208, %v1208
    %v1705 = vld [vmem:[%s6] sm:$0xf]
    %v1707 = vperm.slane %v1705, 0
    %v1708 = vperm.slane %v1705, 1
    %v1709 = vperm.slane %v1705, 2
    %v1710 = vperm.slane %v1705, 3
    %1715 = vmatpush.bf16.msra.mxu0 %v1667
    %1716 = vmatpush.bf16.msra.mxu0 %v1663
    %1717 = vmatpush.bf16.msra.mxu0 %v1659
    %1718 = vmatpush.bf16.msra.mxu0 %v1655
    %1719 = vmatpush.bf16.msra.mxu0 %v1651
    %1720 = vmatpush.bf16.msra.mxu0 %v1647
    %1721 = vmatpush.bf16.msra.mxu0 %v1643
    %1722 = vmatpush.bf16.msra.mxu0 %v1639
    %1723 = vmatmul.bf16.gmra.mxu0 %v1703
    %v1724 = vpop.f32.mrf.mxu0
    %v1725 = vadd.f32 %v1707, %v1724
    %v1726 = vpop.f32.mrf.mxu0
    %1727 = vdwg.mxu0
    %1728 = vmatpush.bf16.msra.mxu0 %v1699
    %1729 = vmatpush.bf16.msra.mxu0 %v1695
    %1730 = vmatpush.bf16.msra.mxu0 %v1691
    %1731 = vmatpush.bf16.msra.mxu0 %v1687
    %1732 = vmatpush.bf16.msra.mxu0 %v1683
    %1733 = vmatpush.bf16.msra.mxu0 %v1679
    %1734 = vmatpush.bf16.msra.mxu0 %v1675
    %1735 = vmatpush.bf16.msra.mxu0 %v1671
    %1736 = vmatmul.bf16.gmra.mxu0 %v1704
    %v1737 = vpop.f32.mrf.mxu0
    %v1738 = vadd.f32 %v1725, %v1737
    %v1739 = vpop.f32.mrf.mxu0
    %1740 = vdwg.mxu0
    %1741 = vmatpush.bf16.msra.mxu0 %v1668
    %1742 = vmatpush.bf16.msra.mxu0 %v1664
    %1743 = vmatpush.bf16.msra.mxu0 %v1660
    %1744 = vmatpush.bf16.msra.mxu0 %v1656
    %1745 = vmatpush.bf16.msra.mxu0 %v1652
    %1746 = vmatpush.bf16.msra.mxu0 %v1648
    %1747 = vmatpush.bf16.msra.mxu0 %v1644
    %1748 = vmatpush.bf16.msra.mxu0 %v1640
    %1749 = vmatmul.bf16.gmra.mxu0 %v1703
    %v1750 = vpop.f32.mrf.mxu0
    %v1751 = vadd.f32 %v1708, %v1750
    %v1752 = vpop.f32.mrf.mxu0
    %1753 = vdwg.mxu0
    %1754 = vmatpush.bf16.msra.mxu0 %v1700
    %1755 = vmatpush.bf16.msra.mxu0 %v1696
    %1756 = vmatpush.bf16.msra.mxu0 %v1692
    %1757 = vmatpush.bf16.msra.mxu0 %v1688
    %1758 = vmatpush.bf16.msra.mxu0 %v1684
    %1759 = vmatpush.bf16.msra.mxu0 %v1680
    %1760 = vmatpush.bf16.msra.mxu0 %v1676
    %1761 = vmatpush.bf16.msra.mxu0 %v1672
    %1762 = vmatmul.bf16.gmra.mxu0 %v1704
    %v1763 = vpop.f32.mrf.mxu0
    %v1764 = vadd.f32 %v1751, %v1763
    %v1765 = vpop.f32.mrf.mxu0
    %1766 = vdwg.mxu0
    %1767 = vmatpush.bf16.msra.mxu0 %v1669
    %1768 = vmatpush.bf16.msra.mxu0 %v1665
    %1769 = vmatpush.bf16.msra.mxu0 %v1661
    %1770 = vmatpush.bf16.msra.mxu0 %v1657
    %1771 = vmatpush.bf16.msra.mxu0 %v1653
    %1772 = vmatpush.bf16.msra.mxu0 %v1649
    %1773 = vmatpush.bf16.msra.mxu0 %v1645
    %1774 = vmatpush.bf16.msra.mxu0 %v1641
    %1775 = vmatmul.bf16.gmra.mxu0 %v1703
    %v1776 = vpop.f32.mrf.mxu0
    %v1777 = vadd.f32 %v1709, %v1776
    %v1778 = vpop.f32.mrf.mxu0
    %1779 = vdwg.mxu0
    %1780 = vmatpush.bf16.msra.mxu0 %v1701
    %1781 = vmatpush.bf16.msra.mxu0 %v1697
    %1782 = vmatpush.bf16.msra.mxu0 %v1693
    %1783 = vmatpush.bf16.msra.mxu0 %v1689
    %1784 = vmatpush.bf16.msra.mxu0 %v1685
    %1785 = vmatpush.bf16.msra.mxu0 %v1681
    %1786 = vmatpush.bf16.msra.mxu0 %v1677
    %1787 = vmatpush.bf16.msra.mxu0 %v1673
    %1788 = vmatmul.bf16.gmra.mxu0 %v1704
    %v1789 = vpop.f32.mrf.mxu0
    %v1790 = vadd.f32 %v1777, %v1789
    %v1791 = vpop.f32.mrf.mxu0
    %1792 = vdwg.mxu0
    %1793 = vmatpush.bf16.msra.mxu0 %v1670
    %1794 = vmatpush.bf16.msra.mxu0 %v1666
    %1795 = vmatpush.bf16.msra.mxu0 %v1662
    %1796 = vmatpush.bf16.msra.mxu0 %v1658
    %1797 = vmatpush.bf16.msra.mxu0 %v1654
    %1798 = vmatpush.bf16.msra.mxu0 %v1650
    %1799 = vmatpush.bf16.msra.mxu0 %v1646
    %1800 = vmatpush.bf16.msra.mxu0 %v1642
    %1801 = vmatmul.bf16.gmra.mxu0 %v1703
    %v1802 = vpop.f32.mrf.mxu0
    %v1803 = vadd.f32 %v1710, %v1802
    %v1804 = vpop.f32.mrf.mxu0
    %1805 = vdwg.mxu0
    %1806 = vmatpush.bf16.msra.mxu0 %v1702
    %1807 = vmatpush.bf16.msra.mxu0 %v1698
    %1808 = vmatpush.bf16.msra.mxu0 %v1694
    %1809 = vmatpush.bf16.msra.mxu0 %v1690
    %1810 = vmatpush.bf16.msra.mxu0 %v1686
    %1811 = vmatpush.bf16.msra.mxu0 %v1682
    %1812 = vmatpush.bf16.msra.mxu0 %v1678
    %1813 = vmatpush.bf16.msra.mxu0 %v1674
    %1814 = vmatmul.bf16.gmra.mxu0 %v1704
    %v1815 = vpop.f32.mrf.mxu0
    %v1816 = vadd.f32 %v1803, %v1815
    %v1817 = vpop.f32.mrf.mxu0
    %1818 = vdwg.mxu0
    %v1819 = vld [vmem:[%s7] sm:$0xf]
    %v1820 = vld [vmem:[%s8] sm:$0xf]
    %v1821 = vrot.slane %v1738, 4
    %v1822 = vadd.f32 %v1738, %v1821
    %v1823 = vrot.slane %v1822, 2
    %v1824 = vadd.f32 %v1822, %v1823
    %v1825 = vrot.slane %v1824, 1
    %v1826 = vadd.f32 %v1824, %v1825
    %v1827 = vrot.slane %v1764, 4
    %v1828 = vadd.f32 %v1764, %v1827
    %v1829 = vrot.slane %v1828, 2
    %v1830 = vadd.f32 %v1828, %v1829
    %v1831 = vrot.slane %v1830, 1
    %v1832 = vadd.f32 %v1830, %v1831
    %v1833 = vrot.slane %v1790, 4
    %v1834 = vadd.f32 %v1790, %v1833
    %v1835 = vrot.slane %v1834, 2
    %v1836 = vadd.f32 %v1834, %v1835
    %v1837 = vrot.slane %v1836, 1
    %v1838 = vadd.f32 %v1836, %v1837
    %v1839 = vrot.slane %v1816, 4
    %v1840 = vadd.f32 %v1816, %v1839
    %v1841 = vrot.slane %v1840, 2
    %v1842 = vadd.f32 %v1840, %v1841
    %v1843 = vrot.slane %v1842, 1
    %v1844 = vadd.f32 %v1842, %v1843
    %v1845 = vrcp.pop 8.0
    %v1846 = vmul.f32 8.0, %v1845
    %v1847 = vsub.f32 1.0, %v1846
    %v1848 = vmul.f32 %v1845, %v1847
    %v1849 = vadd.f32 %v1845, %v1848
    %vm1850 = vweird.f32 %v1845
    %v1851 = vsel %vm1850, %v1845, %v1849
    %v1852 = vmul.f32 %v1826, %v1851
    %v1853 = vmul.f32 %v1832, %v1851
    %v1854 = vmul.f32 %v1838, %v1851
    %v1855 = vmul.f32 %v1844, %v1851
    %v1856 = vmul.f32 %v1738, %v1738
    %v1857 = vmul.f32 %v1764, %v1764
    %v1858 = vmul.f32 %v1790, %v1790
    %v1859 = vmul.f32 %v1816, %v1816
    %v1860 = vrot.slane %v1856, 4
    %v1861 = vadd.f32 %v1856, %v1860
    %v1862 = vrot.slane %v1861, 2
    %v1863 = vadd.f32 %v1861, %v1862
    %v1864 = vrot.slane %v1863, 1
    %v1865 = vadd.f32 %v1863, %v1864
    %v1866 = vrot.slane %v1857, 4
    %v1867 = vadd.f32 %v1857, %v1866
    %v1868 = vrot.slane %v1867, 2
    %v1869 = vadd.f32 %v1867, %v1868
    %v1870 = vrot.slane %v1869, 1
    %v1871 = vadd.f32 %v1869, %v1870
    %v1872 = vrot.slane %v1858, 4
    %v1873 = vadd.f32 %v1858, %v1872
    %v1874 = vrot.slane %v1873, 2
    %v1875 = vadd.f32 %v1873, %v1874
    %v1876 = vrot.slane %v1875, 1
    %v1877 = vadd.f32 %v1875, %v1876
    %v1878 = vrot.slane %v1859, 4
    %v1879 = vadd.f32 %v1859, %v1878
    %v1880 = vrot.slane %v1879, 2
    %v1881 = vadd.f32 %v1879, %v1880
    %v1882 = vrot.slane %v1881, 1
    %v1883 = vadd.f32 %v1881, %v1882
    %v1884 = vmul.f32 %v1865, %v1851
    %v1885 = vmul.f32 %v1871, %v1851
    %v1886 = vmul.f32 %v1877, %v1851
    %v1887 = vmul.f32 %v1883, %v1851
    %v1888 = vmul.f32 %v1852, %v1852
    %v1889 = vmul.f32 %v1853, %v1853
    %v1890 = vmul.f32 %v1854, %v1854
    %v1891 = vmul.f32 %v1855, %v1855
    %v1892 = vsub.f32 %v1884, %v1888
    %v1893 = vsub.f32 %v1885, %v1889
    %v1894 = vsub.f32 %v1886, %v1890
    %v1895 = vsub.f32 %v1887, %v1891
    %v1896 = vmax.f32 %v1892, 0.0
    %v1897 = vmax.f32 %v1893, 0.0
    %v1898 = vmax.f32 %v1894, 0.0
    %v1899 = vmax.f32 %v1895, 0.0
    %v1900 = vadd.f32 %v1896, 0.8
    %v1901 = vadd.f32 %v1897, 0.8
    %v1902 = vadd.f32 %v1898, 0.8
    %v1903 = vadd.f32 %v1899, 0.8
    %v1904 = vrsqrt.pop %v1900
    %v1905 = vmul.f32 %v1904, %v1900
    %v1906 = vmul.f32 %v1905, %v1904
    %v1907 = vmul.f32 0.5, %v1906
    %v1908 = vsub.f32 1.5, %v1907
    %v1909 = vmul.f32 %v1904, %v1908
    %vm1910 = vweird.f32 %v1900
    %vm1911 = vweird.f32 %v1904
    %vm1912 = vmor %vm1910, %vm1911
    %v1913 = vsel %vm1912, %v1904, %v1909
    %v1914 = vrsqrt.pop %v1901
    %v1915 = vmul.f32 %v1914, %v1901
    %v1916 = vmul.f32 %v1915, %v1914
    %v1917 = vmul.f32 0.5, %v1916
    %v1918 = vsub.f32 1.5, %v1917
    %v1919 = vmul.f32 %v1914, %v1918
    %vm1920 = vweird.f32 %v1901
    %vm1921 = vweird.f32 %v1914
    %vm1922 = vmor %vm1920, %vm1921
    %v1923 = vsel %vm1922, %v1914, %v1919
    %v1924 = vrsqrt.pop %v1902
    %v1925 = vmul.f32 %v1924, %v1902
    %v1926 = vmul.f32 %v1925, %v1924
    %v1927 = vmul.f32 0.5, %v1926
    %v1928 = vsub.f32 1.5, %v1927
    %v1929 = vmul.f32 %v1924, %v1928
    %vm1930 = vweird.f32 %v1902
    %vm1931 = vweird.f32 %v1924
    %vm1932 = vmor %vm1930, %vm1931
    %v1933 = vsel %vm1932, %v1924, %v1929
    %v1934 = vrsqrt.pop %v1903
    %v1935 = vmul.f32 %v1934, %v1903
    %v1936 = vmul.f32 %v1935, %v1934
    %v1937 = vmul.f32 0.5, %v1936
    %v1938 = vsub.f32 1.5, %v1937
    %v1939 = vmul.f32 %v1934, %v1938
    %vm1940 = vweird.f32 %v1903
    %vm1941 = vweird.f32 %v1934
    %vm1942 = vmor %vm1940, %vm1941
    %v1943 = vsel %vm1942, %v1934, %v1939
    %v1945 = vperm.slane %v1819, 0
    %v1946 = vperm.slane %v1819, 1
    %v1947 = vperm.slane %v1819, 2
    %v1948 = vperm.slane %v1819, 3
    %v1953 = vmul.f32 %v1913, %v1945
    %v1954 = vmul.f32 %v1923, %v1946
    %v1955 = vmul.f32 %v1933, %v1947
    %v1956 = vmul.f32 %v1943, %v1948
    %v1957 = vsub.f32 %v1738, %v1852
    %v1958 = vsub.f32 %v1764, %v1853
    %v1959 = vsub.f32 %v1790, %v1854
    %v1960 = vsub.f32 %v1816, %v1855
    %v1961 = vperm.slane %v1953, 0
    %v1962 = vperm.slane %v1954, 0
    %v1963 = vperm.slane %v1955, 0
    %v1964 = vperm.slane %v1956, 0
    %v1965 = vmul.f32 %v1957, %v1961
    %v1966 = vmul.f32 %v1958, %v1962
    %v1967 = vmul.f32 %v1959, %v1963
    %v1968 = vmul.f32 %v1960, %v1964
    %v1970 = vperm.slane %v1820, 0
    %v1971 = vperm.slane %v1820, 1
    %v1972 = vperm.slane %v1820, 2
    %v1973 = vperm.slane %v1820, 3
    %v1978 = vadd.f32 %v1965, %v1970
    %v1979 = vadd.f32 %v1966, %v1971
    %v1980 = vadd.f32 %v1967, %v1972
    %v1981 = vadd.f32 %v1968, %v1973
    %vm1982 = vcmp.gt.f32.partialorder %v1978, 0.0
    %vm1983 = vcmp.gt.f32.partialorder %v1979, 0.0
    %vm1984 = vcmp.gt.f32.partialorder %v1980, 0.0
    %vm1985 = vcmp.gt.f32.partialorder %v1981, 0.0
    %v1986 = vmul.f32 %v1978, 0.2
    %v1987 = vmul.f32 %v1979, 0.2
    %v1988 = vmul.f32 %v1980, 0.2
    %v1989 = vmul.f32 %v1981, 0.2
    %v1990 = vsel %vm1982, %v1978, %v1986
    %v1991 = vsel %vm1983, %v1979, %v1987
    %v1992 = vsel %vm1984, %v1980, %v1988
    %v1993 = vsel %vm1985, %v1981, %v1989
    %s1994 = smul.u32 2, 64
    %s1995 = smul.u32 %s1994, 8
    %s1996 = sshll.u32 %s1995, 4
    %1997 = dma.done %s207, %s1996
    %v1998 = vld [vmem:[#allocation4] sm:$0xff]
    %v1999 = vld [vmem:[#allocation4 + $0x8] sm:$0xff]
    %v2000 = vld [vmem:[#allocation4 + $0x10] sm:$0xff]
    %v2001 = vld [vmem:[#allocation4 + $0x18] sm:$0xff]
    %v2002 = vld [vmem:[#allocation4 + $0x20] sm:$0xff]
    %v2003 = vld [vmem:[#allocation4 + $0x28] sm:$0xff]
    %v2004 = vld [vmem:[#allocation4 + $0x30] sm:$0xff]
    %v2005 = vld [vmem:[#allocation4 + $0x38] sm:$0xff]
    %v2006 = vld [vmem:[#allocation4 + $0x40] sm:$0xff]
    %v2007 = vld [vmem:[#allocation4 + $0x48] sm:$0xff]
    %v2008 = vld [vmem:[#allocation4 + $0x50] sm:$0xff]
    %v2009 = vld [vmem:[#allocation4 + $0x58] sm:$0xff]
    %v2010 = vld [vmem:[#allocation4 + $0x60] sm:$0xff]
    %v2011 = vld [vmem:[#allocation4 + $0x68] sm:$0xff]
    %v2012 = vld [vmem:[#allocation4 + $0x70] sm:$0xff]
    %v2013 = vld [vmem:[#allocation4 + $0x78] sm:$0xff]
    %v2014 = vld [vmem:[#allocation4 + $0x80] sm:$0xff]
    %v2015 = vld [vmem:[#allocation4 + $0x88] sm:$0xff]
    %v2016 = vld [vmem:[#allocation4 + $0x90] sm:$0xff]
    %v2017 = vld [vmem:[#allocation4 + $0x98] sm:$0xff]
    %v2018 = vld [vmem:[#allocation4 + $0xa0] sm:$0xff]
    %v2019 = vld [vmem:[#allocation4 + $0xa8] sm:$0xff]
    %v2020 = vld [vmem:[#allocation4 + $0xb0] sm:$0xff]
    %v2021 = vld [vmem:[#allocation4 + $0xb8] sm:$0xff]
    %v2022 = vld [vmem:[#allocation4 + $0xc0] sm:$0xff]
    %v2023 = vld [vmem:[#allocation4 + $0xc8] sm:$0xff]
    %v2024 = vld [vmem:[#allocation4 + $0xd0] sm:$0xff]
    %v2025 = vld [vmem:[#allocation4 + $0xd8] sm:$0xff]
    %v2026 = vld [vmem:[#allocation4 + $0xe0] sm:$0xff]
    %v2027 = vld [vmem:[#allocation4 + $0xe8] sm:$0xff]
    %v2028 = vld [vmem:[#allocation4 + $0xf0] sm:$0xff]
    %v2029 = vld [vmem:[#allocation4 + $0xf8] sm:$0xff]
    %v2030 = vld [vmem:[#allocation4 + $0x100] sm:$0xff]
    %v2031 = vld [vmem:[#allocation4 + $0x108] sm:$0xff]
    %v2032 = vld [vmem:[#allocation4 + $0x110] sm:$0xff]
    %v2033 = vld [vmem:[#allocation4 + $0x118] sm:$0xff]
    %v2034 = vld [vmem:[#allocation4 + $0x120] sm:$0xff]
    %v2035 = vld [vmem:[#allocation4 + $0x128] sm:$0xff]
    %v2036 = vld [vmem:[#allocation4 + $0x130] sm:$0xff]
    %v2037 = vld [vmem:[#allocation4 + $0x138] sm:$0xff]
    %v2038 = vld [vmem:[#allocation4 + $0x140] sm:$0xff]
    %v2039 = vld [vmem:[#allocation4 + $0x148] sm:$0xff]
    %v2040 = vld [vmem:[#allocation4 + $0x150] sm:$0xff]
    %v2041 = vld [vmem:[#allocation4 + $0x158] sm:$0xff]
    %v2042 = vld [vmem:[#allocation4 + $0x160] sm:$0xff]
    %v2043 = vld [vmem:[#allocation4 + $0x168] sm:$0xff]
    %v2044 = vld [vmem:[#allocation4 + $0x170] sm:$0xff]
    %v2045 = vld [vmem:[#allocation4 + $0x178] sm:$0xff]
    %v2046 = vld [vmem:[#allocation4 + $0x180] sm:$0xff]
    %v2047 = vld [vmem:[#allocation4 + $0x188] sm:$0xff]
    %v2048 = vld [vmem:[#allocation4 + $0x190] sm:$0xff]
    %v2049 = vld [vmem:[#allocation4 + $0x198] sm:$0xff]
    %v2050 = vld [vmem:[#allocation4 + $0x1a0] sm:$0xff]
    %v2051 = vld [vmem:[#allocation4 + $0x1a8] sm:$0xff]
    %v2052 = vld [vmem:[#allocation4 + $0x1b0] sm:$0xff]
    %v2053 = vld [vmem:[#allocation4 + $0x1b8] sm:$0xff]
    %v2054 = vld [vmem:[#allocation4 + $0x1c0] sm:$0xff]
    %v2055 = vld [vmem:[#allocation4 + $0x1c8] sm:$0xff]
    %v2056 = vld [vmem:[#allocation4 + $0x1d0] sm:$0xff]
    %v2057 = vld [vmem:[#allocation4 + $0x1d8] sm:$0xff]
    %v2058 = vld [vmem:[#allocation4 + $0x1e0] sm:$0xff]
    %v2059 = vld [vmem:[#allocation4 + $0x1e8] sm:$0xff]
    %v2060 = vld [vmem:[#allocation4 + $0x1f0] sm:$0xff]
    %v2061 = vld [vmem:[#allocation4 + $0x1f8] sm:$0xff]
    %v2062 = vld [vmem:[#allocation4 + $0x200] sm:$0xff]
    %v2063 = vld [vmem:[#allocation4 + $0x208] sm:$0xff]
    %v2064 = vld [vmem:[#allocation4 + $0x210] sm:$0xff]
    %v2065 = vld [vmem:[#allocation4 + $0x218] sm:$0xff]
    %v2066 = vld [vmem:[#allocation4 + $0x220] sm:$0xff]
    %v2067 = vld [vmem:[#allocation4 + $0x228] sm:$0xff]
    %v2068 = vld [vmem:[#allocation4 + $0x230] sm:$0xff]
    %v2069 = vld [vmem:[#allocation4 + $0x238] sm:$0xff]
    %v2070 = vld [vmem:[#allocation4 + $0x240] sm:$0xff]
    %v2071 = vld [vmem:[#allocation4 + $0x248] sm:$0xff]
    %v2072 = vld [vmem:[#allocation4 + $0x250] sm:$0xff]
    %v2073 = vld [vmem:[#allocation4 + $0x258] sm:$0xff]
    %v2074 = vld [vmem:[#allocation4 + $0x260] sm:$0xff]
    %v2075 = vld [vmem:[#allocation4 + $0x268] sm:$0xff]
    %v2076 = vld [vmem:[#allocation4 + $0x270] sm:$0xff]
    %v2077 = vld [vmem:[#allocation4 + $0x278] sm:$0xff]
    %v2078 = vld [vmem:[#allocation4 + $0x280] sm:$0xff]
    %v2079 = vld [vmem:[#allocation4 + $0x288] sm:$0xff]
    %v2080 = vld [vmem:[#allocation4 + $0x290] sm:$0xff]
    %v2081 = vld [vmem:[#allocation4 + $0x298] sm:$0xff]
    %v2082 = vld [vmem:[#allocation4 + $0x2a0] sm:$0xff]
    %v2083 = vld [vmem:[#allocation4 + $0x2a8] sm:$0xff]
    %v2084 = vld [vmem:[#allocation4 + $0x2b0] sm:$0xff]
    %v2085 = vld [vmem:[#allocation4 + $0x2b8] sm:$0xff]
    %v2086 = vld [vmem:[#allocation4 + $0x2c0] sm:$0xff]
    %v2087 = vld [vmem:[#allocation4 + $0x2c8] sm:$0xff]
    %v2088 = vld [vmem:[#allocation4 + $0x2d0] sm:$0xff]
    %v2089 = vld [vmem:[#allocation4 + $0x2d8] sm:$0xff]
    %v2090 = vld [vmem:[#allocation4 + $0x2e0] sm:$0xff]
    %v2091 = vld [vmem:[#allocation4 + $0x2e8] sm:$0xff]
    %v2092 = vld [vmem:[#allocation4 + $0x2f0] sm:$0xff]
    %v2093 = vld [vmem:[#allocation4 + $0x2f8] sm:$0xff]
    %v2094 = vld [vmem:[#allocation4 + $0x300] sm:$0xff]
    %v2095 = vld [vmem:[#allocation4 + $0x308] sm:$0xff]
    %v2096 = vld [vmem:[#allocation4 + $0x310] sm:$0xff]
    %v2097 = vld [vmem:[#allocation4 + $0x318] sm:$0xff]
    %v2098 = vld [vmem:[#allocation4 + $0x320] sm:$0xff]
    %v2099 = vld [vmem:[#allocation4 + $0x328] sm:$0xff]
    %v2100 = vld [vmem:[#allocation4 + $0x330] sm:$0xff]
    %v2101 = vld [vmem:[#allocation4 + $0x338] sm:$0xff]
    %v2102 = vld [vmem:[#allocation4 + $0x340] sm:$0xff]
    %v2103 = vld [vmem:[#allocation4 + $0x348] sm:$0xff]
    %v2104 = vld [vmem:[#allocation4 + $0x350] sm:$0xff]
    %v2105 = vld [vmem:[#allocation4 + $0x358] sm:$0xff]
    %v2106 = vld [vmem:[#allocation4 + $0x360] sm:$0xff]
    %v2107 = vld [vmem:[#allocation4 + $0x368] sm:$0xff]
    %v2108 = vld [vmem:[#allocation4 + $0x370] sm:$0xff]
    %v2109 = vld [vmem:[#allocation4 + $0x378] sm:$0xff]
    %v2110 = vld [vmem:[#allocation4 + $0x380] sm:$0xff]
    %v2111 = vld [vmem:[#allocation4 + $0x388] sm:$0xff]
    %v2112 = vld [vmem:[#allocation4 + $0x390] sm:$0xff]
    %v2113 = vld [vmem:[#allocation4 + $0x398] sm:$0xff]
    %v2114 = vld [vmem:[#allocation4 + $0x3a0] sm:$0xff]
    %v2115 = vld [vmem:[#allocation4 + $0x3a8] sm:$0xff]
    %v2116 = vld [vmem:[#allocation4 + $0x3b0] sm:$0xff]
    %v2117 = vld [vmem:[#allocation4 + $0x3b8] sm:$0xff]
    %v2118 = vld [vmem:[#allocation4 + $0x3c0] sm:$0xff]
    %v2119 = vld [vmem:[#allocation4 + $0x3c8] sm:$0xff]
    %v2120 = vld [vmem:[#allocation4 + $0x3d0] sm:$0xff]
    %v2121 = vld [vmem:[#allocation4 + $0x3d8] sm:$0xff]
    %v2122 = vld [vmem:[#allocation4 + $0x3e0] sm:$0xff]
    %v2123 = vld [vmem:[#allocation4 + $0x3e8] sm:$0xff]
    %v2124 = vld [vmem:[#allocation4 + $0x3f0] sm:$0xff]
    %v2125 = vld [vmem:[#allocation4 + $0x3f8] sm:$0xff]
    %v2126 = vld [vmem:[%s13] sm:$0xff]
    %v2127 = vunpack.c.0.s8 %v1998
    %v2128 = vunpack.c.0.s8 %v1999
    %v2129 = vunpack.c.0.s8 %v2000
    %v2130 = vunpack.c.0.s8 %v2001
    %v2131 = vunpack.c.0.s8 %v2002
    %v2132 = vunpack.c.0.s8 %v2003
    %v2133 = vunpack.c.0.s8 %v2004
    %v2134 = vunpack.c.0.s8 %v2005
    %v2135 = vunpack.c.1.s8 %v1998
    %v2136 = vunpack.c.1.s8 %v1999
    %v2137 = vunpack.c.1.s8 %v2000
    %v2138 = vunpack.c.1.s8 %v2001
    %v2139 = vunpack.c.1.s8 %v2002
    %v2140 = vunpack.c.1.s8 %v2003
    %v2141 = vunpack.c.1.s8 %v2004
    %v2142 = vunpack.c.1.s8 %v2005
    %v2143 = vunpack.c.2.s8 %v1998
    %v2144 = vunpack.c.2.s8 %v1999
    %v2145 = vunpack.c.2.s8 %v2000
    %v2146 = vunpack.c.2.s8 %v2001
    %v2147 = vunpack.c.2.s8 %v2002
    %v2148 = vunpack.c.2.s8 %v2003
    %v2149 = vunpack.c.2.s8 %v2004
    %v2150 = vunpack.c.2.s8 %v2005
    %v2151 = vunpack.c.3.s8 %v1998
    %v2152 = vunpack.c.3.s8 %v1999
    %v2153 = vunpack.c.3.s8 %v2000
    %v2154 = vunpack.c.3.s8 %v2001
    %v2155 = vunpack.c.3.s8 %v2002
    %v2156 = vunpack.c.3.s8 %v2003
    %v2157 = vunpack.c.3.s8 %v2004
    %v2158 = vunpack.c.3.s8 %v2005
    %v2159 = vunpack.c.0.s8 %v2006
    %v2160 = vunpack.c.0.s8 %v2007
    %v2161 = vunpack.c.0.s8 %v2008
    %v2162 = vunpack.c.0.s8 %v2009
    %v2163 = vunpack.c.0.s8 %v2010
    %v2164 = vunpack.c.0.s8 %v2011
    %v2165 = vunpack.c.0.s8 %v2012
    %v2166 = vunpack.c.0.s8 %v2013
    %v2167 = vunpack.c.1.s8 %v2006
    %v2168 = vunpack.c.1.s8 %v2007
    %v2169 = vunpack.c.1.s8 %v2008
    %v2170 = vunpack.c.1.s8 %v2009
    %v2171 = vunpack.c.1.s8 %v2010
    %v2172 = vunpack.c.1.s8 %v2011
    %v2173 = vunpack.c.1.s8 %v2012
    %v2174 = vunpack.c.1.s8 %v2013
    %v2175 = vunpack.c.2.s8 %v2006
    %v2176 = vunpack.c.2.s8 %v2007
    %v2177 = vunpack.c.2.s8 %v2008
    %v2178 = vunpack.c.2.s8 %v2009
    %v2179 = vunpack.c.2.s8 %v2010
    %v2180 = vunpack.c.2.s8 %v2011
    %v2181 = vunpack.c.2.s8 %v2012
    %v2182 = vunpack.c.2.s8 %v2013
    %v2183 = vunpack.c.3.s8 %v2006
    %v2184 = vunpack.c.3.s8 %v2007
    %v2185 = vunpack.c.3.s8 %v2008
    %v2186 = vunpack.c.3.s8 %v2009
    %v2187 = vunpack.c.3.s8 %v2010
    %v2188 = vunpack.c.3.s8 %v2011
    %v2189 = vunpack.c.3.s8 %v2012
    %v2190 = vunpack.c.3.s8 %v2013
    %v2191 = vunpack.c.0.s8 %v2014
    %v2192 = vunpack.c.0.s8 %v2015
    %v2193 = vunpack.c.0.s8 %v2016
    %v2194 = vunpack.c.0.s8 %v2017
    %v2195 = vunpack.c.0.s8 %v2018
    %v2196 = vunpack.c.0.s8 %v2019
    %v2197 = vunpack.c.0.s8 %v2020
    %v2198 = vunpack.c.0.s8 %v2021
    %v2199 = vunpack.c.1.s8 %v2014
    %v2200 = vunpack.c.1.s8 %v2015
    %v2201 = vunpack.c.1.s8 %v2016
    %v2202 = vunpack.c.1.s8 %v2017
    %v2203 = vunpack.c.1.s8 %v2018
    %v2204 = vunpack.c.1.s8 %v2019
    %v2205 = vunpack.c.1.s8 %v2020
    %v2206 = vunpack.c.1.s8 %v2021
    %v2207 = vunpack.c.2.s8 %v2014
    %v2208 = vunpack.c.2.s8 %v2015
    %v2209 = vunpack.c.2.s8 %v2016
    %v2210 = vunpack.c.2.s8 %v2017
    %v2211 = vunpack.c.2.s8 %v2018
    %v2212 = vunpack.c.2.s8 %v2019
    %v2213 = vunpack.c.2.s8 %v2020
    %v2214 = vunpack.c.2.s8 %v2021
    %v2215 = vunpack.c.3.s8 %v2014
    %v2216 = vunpack.c.3.s8 %v2015
    %v2217 = vunpack.c.3.s8 %v2016
    %v2218 = vunpack.c.3.s8 %v2017
    %v2219 = vunpack.c.3.s8 %v2018
    %v2220 = vunpack.c.3.s8 %v2019
    %v2221 = vunpack.c.3.s8 %v2020
    %v2222 = vunpack.c.3.s8 %v2021
    %v2223 = vunpack.c.0.s8 %v2022
    %v2224 = vunpack.c.0.s8 %v2023
    %v2225 = vunpack.c.0.s8 %v2024
    %v2226 = vunpack.c.0.s8 %v2025
    %v2227 = vunpack.c.0.s8 %v2026
    %v2228 = vunpack.c.0.s8 %v2027
    %v2229 = vunpack.c.0.s8 %v2028
    %v2230 = vunpack.c.0.s8 %v2029
    %v2231 = vunpack.c.1.s8 %v2022
    %v2232 = vunpack.c.1.s8 %v2023
    %v2233 = vunpack.c.1.s8 %v2024
    %v2234 = vunpack.c.1.s8 %v2025
    %v2235 = vunpack.c.1.s8 %v2026
    %v2236 = vunpack.c.1.s8 %v2027
    %v2237 = vunpack.c.1.s8 %v2028
    %v2238 = vunpack.c.1.s8 %v2029
    %v2239 = vunpack.c.2.s8 %v2022
    %v2240 = vunpack.c.2.s8 %v2023
    %v2241 = vunpack.c.2.s8 %v2024
    %v2242 = vunpack.c.2.s8 %v2025
    %v2243 = vunpack.c.2.s8 %v2026
    %v2244 = vunpack.c.2.s8 %v2027
    %v2245 = vunpack.c.2.s8 %v2028
    %v2246 = vunpack.c.2.s8 %v2029
    %v2247 = vunpack.c.3.s8 %v2022
    %v2248 = vunpack.c.3.s8 %v2023
    %v2249 = vunpack.c.3.s8 %v2024
    %v2250 = vunpack.c.3.s8 %v2025
    %v2251 = vunpack.c.3.s8 %v2026
    %v2252 = vunpack.c.3.s8 %v2027
    %v2253 = vunpack.c.3.s8 %v2028
    %v2254 = vunpack.c.3.s8 %v2029
    %v2255 = vunpack.c.0.s8 %v2030
    %v2256 = vunpack.c.0.s8 %v2031
    %v2257 = vunpack.c.0.s8 %v2032
    %v2258 = vunpack.c.0.s8 %v2033
    %v2259 = vunpack.c.0.s8 %v2034
    %v2260 = vunpack.c.0.s8 %v2035
    %v2261 = vunpack.c.0.s8 %v2036
    %v2262 = vunpack.c.0.s8 %v2037
    %v2263 = vunpack.c.1.s8 %v2030
    %v2264 = vunpack.c.1.s8 %v2031
    %v2265 = vunpack.c.1.s8 %v2032
    %v2266 = vunpack.c.1.s8 %v2033
    %v2267 = vunpack.c.1.s8 %v2034
    %v2268 = vunpack.c.1.s8 %v2035
    %v2269 = vunpack.c.1.s8 %v2036
    %v2270 = vunpack.c.1.s8 %v2037
    %v2271 = vunpack.c.2.s8 %v2030
    %v2272 = vunpack.c.2.s8 %v2031
    %v2273 = vunpack.c.2.s8 %v2032
    %v2274 = vunpack.c.2.s8 %v2033
    %v2275 = vunpack.c.2.s8 %v2034
    %v2276 = vunpack.c.2.s8 %v2035
    %v2277 = vunpack.c.2.s8 %v2036
    %v2278 = vunpack.c.2.s8 %v2037
    %v2279 = vunpack.c.3.s8 %v2030
    %v2280 = vunpack.c.3.s8 %v2031
    %v2281 = vunpack.c.3.s8 %v2032
    %v2282 = vunpack.c.3.s8 %v2033
    %v2283 = vunpack.c.3.s8 %v2034
    %v2284 = vunpack.c.3.s8 %v2035
    %v2285 = vunpack.c.3.s8 %v2036
    %v2286 = vunpack.c.3.s8 %v2037
    %v2287 = vunpack.c.0.s8 %v2038
    %v2288 = vunpack.c.0.s8 %v2039
    %v2289 = vunpack.c.0.s8 %v2040
    %v2290 = vunpack.c.0.s8 %v2041
    %v2291 = vunpack.c.0.s8 %v2042
    %v2292 = vunpack.c.0.s8 %v2043
    %v2293 = vunpack.c.0.s8 %v2044
    %v2294 = vunpack.c.0.s8 %v2045
    %v2295 = vunpack.c.1.s8 %v2038
    %v2296 = vunpack.c.1.s8 %v2039
    %v2297 = vunpack.c.1.s8 %v2040
    %v2298 = vunpack.c.1.s8 %v2041
    %v2299 = vunpack.c.1.s8 %v2042
    %v2300 = vunpack.c.1.s8 %v2043
    %v2301 = vunpack.c.1.s8 %v2044
    %v2302 = vunpack.c.1.s8 %v2045
    %v2303 = vunpack.c.2.s8 %v2038
    %v2304 = vunpack.c.2.s8 %v2039
    %v2305 = vunpack.c.2.s8 %v2040
    %v2306 = vunpack.c.2.s8 %v2041
    %v2307 = vunpack.c.2.s8 %v2042
    %v2308 = vunpack.c.2.s8 %v2043
    %v2309 = vunpack.c.2.s8 %v2044
    %v2310 = vunpack.c.2.s8 %v2045
    %v2311 = vunpack.c.3.s8 %v2038
    %v2312 = vunpack.c.3.s8 %v2039
    %v2313 = vunpack.c.3.s8 %v2040
    %v2314 = vunpack.c.3.s8 %v2041
    %v2315 = vunpack.c.3.s8 %v2042
    %v2316 = vunpack.c.3.s8 %v2043
    %v2317 = vunpack.c.3.s8 %v2044
    %v2318 = vunpack.c.3.s8 %v2045
    %v2319 = vunpack.c.0.s8 %v2046
    %v2320 = vunpack.c.0.s8 %v2047
    %v2321 = vunpack.c.0.s8 %v2048
    %v2322 = vunpack.c.0.s8 %v2049
    %v2323 = vunpack.c.0.s8 %v2050
    %v2324 = vunpack.c.0.s8 %v2051
    %v2325 = vunpack.c.0.s8 %v2052
    %v2326 = vunpack.c.0.s8 %v2053
    %v2327 = vunpack.c.1.s8 %v2046
    %v2328 = vunpack.c.1.s8 %v2047
    %v2329 = vunpack.c.1.s8 %v2048
    %v2330 = vunpack.c.1.s8 %v2049
    %v2331 = vunpack.c.1.s8 %v2050
    %v2332 = vunpack.c.1.s8 %v2051
    %v2333 = vunpack.c.1.s8 %v2052
    %v2334 = vunpack.c.1.s8 %v2053
    %v2335 = vunpack.c.2.s8 %v2046
    %v2336 = vunpack.c.2.s8 %v2047
    %v2337 = vunpack.c.2.s8 %v2048
    %v2338 = vunpack.c.2.s8 %v2049
    %v2339 = vunpack.c.2.s8 %v2050
    %v2340 = vunpack.c.2.s8 %v2051
    %v2341 = vunpack.c.2.s8 %v2052
    %v2342 = vunpack.c.2.s8 %v2053
    %v2343 = vunpack.c.3.s8 %v2046
    %v2344 = vunpack.c.3.s8 %v2047
    %v2345 = vunpack.c.3.s8 %v2048
    %v2346 = vunpack.c.3.s8 %v2049
    %v2347 = vunpack.c.3.s8 %v2050
    %v2348 = vunpack.c.3.s8 %v2051
    %v2349 = vunpack.c.3.s8 %v2052
    %v2350 = vunpack.c.3.s8 %v2053
    %v2351 = vunpack.c.0.s8 %v2054
    %v2352 = vunpack.c.0.s8 %v2055
    %v2353 = vunpack.c.0.s8 %v2056
    %v2354 = vunpack.c.0.s8 %v2057
    %v2355 = vunpack.c.0.s8 %v2058
    %v2356 = vunpack.c.0.s8 %v2059
    %v2357 = vunpack.c.0.s8 %v2060
    %v2358 = vunpack.c.0.s8 %v2061
    %v2359 = vunpack.c.1.s8 %v2054
    %v2360 = vunpack.c.1.s8 %v2055
    %v2361 = vunpack.c.1.s8 %v2056
    %v2362 = vunpack.c.1.s8 %v2057
    %v2363 = vunpack.c.1.s8 %v2058
    %v2364 = vunpack.c.1.s8 %v2059
    %v2365 = vunpack.c.1.s8 %v2060
    %v2366 = vunpack.c.1.s8 %v2061
    %v2367 = vunpack.c.2.s8 %v2054
    %v2368 = vunpack.c.2.s8 %v2055
    %v2369 = vunpack.c.2.s8 %v2056
    %v2370 = vunpack.c.2.s8 %v2057
    %v2371 = vunpack.c.2.s8 %v2058
    %v2372 = vunpack.c.2.s8 %v2059
    %v2373 = vunpack.c.2.s8 %v2060
    %v2374 = vunpack.c.2.s8 %v2061
    %v2375 = vunpack.c.3.s8 %v2054
    %v2376 = vunpack.c.3.s8 %v2055
    %v2377 = vunpack.c.3.s8 %v2056
    %v2378 = vunpack.c.3.s8 %v2057
    %v2379 = vunpack.c.3.s8 %v2058
    %v2380 = vunpack.c.3.s8 %v2059
    %v2381 = vunpack.c.3.s8 %v2060
    %v2382 = vunpack.c.3.s8 %v2061
    %v2383 = vunpack.c.0.s8 %v2062
    %v2384 = vunpack.c.0.s8 %v2063
    %v2385 = vunpack.c.0.s8 %v2064
    %v2386 = vunpack.c.0.s8 %v2065
    %v2387 = vunpack.c.0.s8 %v2066
    %v2388 = vunpack.c.0.s8 %v2067
    %v2389 = vunpack.c.0.s8 %v2068
    %v2390 = vunpack.c.0.s8 %v2069
    %v2391 = vunpack.c.1.s8 %v2062
    %v2392 = vunpack.c.1.s8 %v2063
    %v2393 = vunpack.c.1.s8 %v2064
    %v2394 = vunpack.c.1.s8 %v2065
    %v2395 = vunpack.c.1.s8 %v2066
    %v2396 = vunpack.c.1.s8 %v2067
    %v2397 = vunpack.c.1.s8 %v2068
    %v2398 = vunpack.c.1.s8 %v2069
    %v2399 = vunpack.c.2.s8 %v2062
    %v2400 = vunpack.c.2.s8 %v2063
    %v2401 = vunpack.c.2.s8 %v2064
    %v2402 = vunpack.c.2.s8 %v2065
    %v2403 = vunpack.c.2.s8 %v2066
    %v2404 = vunpack.c.2.s8 %v2067
    %v2405 = vunpack.c.2.s8 %v2068
    %v2406 = vunpack.c.2.s8 %v2069
    %v2407 = vunpack.c.3.s8 %v2062
    %v2408 = vunpack.c.3.s8 %v2063
    %v2409 = vunpack.c.3.s8 %v2064
    %v2410 = vunpack.c.3.s8 %v2065
    %v2411 = vunpack.c.3.s8 %v2066
    %v2412 = vunpack.c.3.s8 %v2067
    %v2413 = vunpack.c.3.s8 %v2068
    %v2414 = vunpack.c.3.s8 %v2069
    %v2415 = vunpack.c.0.s8 %v2070
    %v2416 = vunpack.c.0.s8 %v2071
    %v2417 = vunpack.c.0.s8 %v2072
    %v2418 = vunpack.c.0.s8 %v2073
    %v2419 = vunpack.c.0.s8 %v2074
    %v2420 = vunpack.c.0.s8 %v2075
    %v2421 = vunpack.c.0.s8 %v2076
    %v2422 = vunpack.c.0.s8 %v2077
    %v2423 = vunpack.c.1.s8 %v2070
    %v2424 = vunpack.c.1.s8 %v2071
    %v2425 = vunpack.c.1.s8 %v2072
    %v2426 = vunpack.c.1.s8 %v2073
    %v2427 = vunpack.c.1.s8 %v2074
    %v2428 = vunpack.c.1.s8 %v2075
    %v2429 = vunpack.c.1.s8 %v2076
    %v2430 = vunpack.c.1.s8 %v2077
    %v2431 = vunpack.c.2.s8 %v2070
    %v2432 = vunpack.c.2.s8 %v2071
    %v2433 = vunpack.c.2.s8 %v2072
    %v2434 = vunpack.c.2.s8 %v2073
    %v2435 = vunpack.c.2.s8 %v2074
    %v2436 = vunpack.c.2.s8 %v2075
    %v2437 = vunpack.c.2.s8 %v2076
    %v2438 = vunpack.c.2.s8 %v2077
    %v2439 = vunpack.c.3.s8 %v2070
    %v2440 = vunpack.c.3.s8 %v2071
    %v2441 = vunpack.c.3.s8 %v2072
    %v2442 = vunpack.c.3.s8 %v2073
    %v2443 = vunpack.c.3.s8 %v2074
    %v2444 = vunpack.c.3.s8 %v2075
    %v2445 = vunpack.c.3.s8 %v2076
    %v2446 = vunpack.c.3.s8 %v2077
    %v2447 = vunpack.c.0.s8 %v2078
    %v2448 = vunpack.c.0.s8 %v2079
    %v2449 = vunpack.c.0.s8 %v2080
    %v2450 = vunpack.c.0.s8 %v2081
    %v2451 = vunpack.c.0.s8 %v2082
    %v2452 = vunpack.c.0.s8 %v2083
    %v2453 = vunpack.c.0.s8 %v2084
    %v2454 = vunpack.c.0.s8 %v2085
    %v2455 = vunpack.c.1.s8 %v2078
    %v2456 = vunpack.c.1.s8 %v2079
    %v2457 = vunpack.c.1.s8 %v2080
    %v2458 = vunpack.c.1.s8 %v2081
    %v2459 = vunpack.c.1.s8 %v2082
    %v2460 = vunpack.c.1.s8 %v2083
    %v2461 = vunpack.c.1.s8 %v2084
    %v2462 = vunpack.c.1.s8 %v2085
    %v2463 = vunpack.c.2.s8 %v2078
    %v2464 = vunpack.c.2.s8 %v2079
    %v2465 = vunpack.c.2.s8 %v2080
    %v2466 = vunpack.c.2.s8 %v2081
    %v2467 = vunpack.c.2.s8 %v2082
    %v2468 = vunpack.c.2.s8 %v2083
    %v2469 = vunpack.c.2.s8 %v2084
    %v2470 = vunpack.c.2.s8 %v2085
    %v2471 = vunpack.c.3.s8 %v2078
    %v2472 = vunpack.c.3.s8 %v2079
    %v2473 = vunpack.c.3.s8 %v2080
    %v2474 = vunpack.c.3.s8 %v2081
    %v2475 = vunpack.c.3.s8 %v2082
    %v2476 = vunpack.c.3.s8 %v2083
    %v2477 = vunpack.c.3.s8 %v2084
    %v2478 = vunpack.c.3.s8 %v2085
    %v2479 = vunpack.c.0.s8 %v2086
    %v2480 = vunpack.c.0.s8 %v2087
    %v2481 = vunpack.c.0.s8 %v2088
    %v2482 = vunpack.c.0.s8 %v2089
    %v2483 = vunpack.c.0.s8 %v2090
    %v2484 = vunpack.c.0.s8 %v2091
    %v2485 = vunpack.c.0.s8 %v2092
    %v2486 = vunpack.c.0.s8 %v2093
    %v2487 = vunpack.c.1.s8 %v2086
    %v2488 = vunpack.c.1.s8 %v2087
    %v2489 = vunpack.c.1.s8 %v2088
    %v2490 = vunpack.c.1.s8 %v2089
    %v2491 = vunpack.c.1.s8 %v2090
    %v2492 = vunpack.c.1.s8 %v2091
    %v2493 = vunpack.c.1.s8 %v2092
    %v2494 = vunpack.c.1.s8 %v2093
    %v2495 = vunpack.c.2.s8 %v2086
    %v2496 = vunpack.c.2.s8 %v2087
    %v2497 = vunpack.c.2.s8 %v2088
    %v2498 = vunpack.c.2.s8 %v2089
    %v2499 = vunpack.c.2.s8 %v2090
    %v2500 = vunpack.c.2.s8 %v2091
    %v2501 = vunpack.c.2.s8 %v2092
    %v2502 = vunpack.c.2.s8 %v2093
    %v2503 = vunpack.c.3.s8 %v2086
    %v2504 = vunpack.c.3.s8 %v2087
    %v2505 = vunpack.c.3.s8 %v2088
    %v2506 = vunpack.c.3.s8 %v2089
    %v2507 = vunpack.c.3.s8 %v2090
    %v2508 = vunpack.c.3.s8 %v2091
    %v2509 = vunpack.c.3.s8 %v2092
    %v2510 = vunpack.c.3.s8 %v2093
    %v2511 = vunpack.c.0.s8 %v2094
    %v2512 = vunpack.c.0.s8 %v2095
    %v2513 = vunpack.c.0.s8 %v2096
    %v2514 = vunpack.c.0.s8 %v2097
    %v2515 = vunpack.c.0.s8 %v2098
    %v2516 = vunpack.c.0.s8 %v2099
    %v2517 = vunpack.c.0.s8 %v2100
    %v2518 = vunpack.c.0.s8 %v2101
    %v2519 = vunpack.c.1.s8 %v2094
    %v2520 = vunpack.c.1.s8 %v2095
    %v2521 = vunpack.c.1.s8 %v2096
    %v2522 = vunpack.c.1.s8 %v2097
    %v2523 = vunpack.c.1.s8 %v2098
    %v2524 = vunpack.c.1.s8 %v2099
    %v2525 = vunpack.c.1.s8 %v2100
    %v2526 = vunpack.c.1.s8 %v2101
    %v2527 = vunpack.c.2.s8 %v2094
    %v2528 = vunpack.c.2.s8 %v2095
    %v2529 = vunpack.c.2.s8 %v2096
    %v2530 = vunpack.c.2.s8 %v2097
    %v2531 = vunpack.c.2.s8 %v2098
    %v2532 = vunpack.c.2.s8 %v2099
    %v2533 = vunpack.c.2.s8 %v2100
    %v2534 = vunpack.c.2.s8 %v2101
    %v2535 = vunpack.c.3.s8 %v2094
    %v2536 = vunpack.c.3.s8 %v2095
    %v2537 = vunpack.c.3.s8 %v2096
    %v2538 = vunpack.c.3.s8 %v2097
    %v2539 = vunpack.c.3.s8 %v2098
    %v2540 = vunpack.c.3.s8 %v2099
    %v2541 = vunpack.c.3.s8 %v2100
    %v2542 = vunpack.c.3.s8 %v2101
    %v2543 = vunpack.c.0.s8 %v2102
    %v2544 = vunpack.c.0.s8 %v2103
    %v2545 = vunpack.c.0.s8 %v2104
    %v2546 = vunpack.c.0.s8 %v2105
    %v2547 = vunpack.c.0.s8 %v2106
    %v2548 = vunpack.c.0.s8 %v2107
    %v2549 = vunpack.c.0.s8 %v2108
    %v2550 = vunpack.c.0.s8 %v2109
    %v2551 = vunpack.c.1.s8 %v2102
    %v2552 = vunpack.c.1.s8 %v2103
    %v2553 = vunpack.c.1.s8 %v2104
    %v2554 = vunpack.c.1.s8 %v2105
    %v2555 = vunpack.c.1.s8 %v2106
    %v2556 = vunpack.c.1.s8 %v2107
    %v2557 = vunpack.c.1.s8 %v2108
    %v2558 = vunpack.c.1.s8 %v2109
    %v2559 = vunpack.c.2.s8 %v2102
    %v2560 = vunpack.c.2.s8 %v2103
    %v2561 = vunpack.c.2.s8 %v2104
    %v2562 = vunpack.c.2.s8 %v2105
    %v2563 = vunpack.c.2.s8 %v2106
    %v2564 = vunpack.c.2.s8 %v2107
    %v2565 = vunpack.c.2.s8 %v2108
    %v2566 = vunpack.c.2.s8 %v2109
    %v2567 = vunpack.c.3.s8 %v2102
    %v2568 = vunpack.c.3.s8 %v2103
    %v2569 = vunpack.c.3.s8 %v2104
    %v2570 = vunpack.c.3.s8 %v2105
    %v2571 = vunpack.c.3.s8 %v2106
    %v2572 = vunpack.c.3.s8 %v2107
    %v2573 = vunpack.c.3.s8 %v2108
    %v2574 = vunpack.c.3.s8 %v2109
    %v2575 = vunpack.c.0.s8 %v2110
    %v2576 = vunpack.c.0.s8 %v2111
    %v2577 = vunpack.c.0.s8 %v2112
    %v2578 = vunpack.c.0.s8 %v2113
    %v2579 = vunpack.c.0.s8 %v2114
    %v2580 = vunpack.c.0.s8 %v2115
    %v2581 = vunpack.c.0.s8 %v2116
    %v2582 = vunpack.c.0.s8 %v2117
    %v2583 = vunpack.c.1.s8 %v2110
    %v2584 = vunpack.c.1.s8 %v2111
    %v2585 = vunpack.c.1.s8 %v2112
    %v2586 = vunpack.c.1.s8 %v2113
    %v2587 = vunpack.c.1.s8 %v2114
    %v2588 = vunpack.c.1.s8 %v2115
    %v2589 = vunpack.c.1.s8 %v2116
    %v2590 = vunpack.c.1.s8 %v2117
    %v2591 = vunpack.c.2.s8 %v2110
    %v2592 = vunpack.c.2.s8 %v2111
    %v2593 = vunpack.c.2.s8 %v2112
    %v2594 = vunpack.c.2.s8 %v2113
    %v2595 = vunpack.c.2.s8 %v2114
    %v2596 = vunpack.c.2.s8 %v2115
    %v2597 = vunpack.c.2.s8 %v2116
    %v2598 = vunpack.c.2.s8 %v2117
    %v2599 = vunpack.c.3.s8 %v2110
    %v2600 = vunpack.c.3.s8 %v2111
    %v2601 = vunpack.c.3.s8 %v2112
    %v2602 = vunpack.c.3.s8 %v2113
    %v2603 = vunpack.c.3.s8 %v2114
    %v2604 = vunpack.c.3.s8 %v2115
    %v2605 = vunpack.c.3.s8 %v2116
    %v2606 = vunpack.c.3.s8 %v2117
    %v2607 = vunpack.c.0.s8 %v2118
    %v2608 = vunpack.c.0.s8 %v2119
    %v2609 = vunpack.c.0.s8 %v2120
    %v2610 = vunpack.c.0.s8 %v2121
    %v2611 = vunpack.c.0.s8 %v2122
    %v2612 = vunpack.c.0.s8 %v2123
    %v2613 = vunpack.c.0.s8 %v2124
    %v2614 = vunpack.c.0.s8 %v2125
    %v2615 = vunpack.c.1.s8 %v2118
    %v2616 = vunpack.c.1.s8 %v2119
    %v2617 = vunpack.c.1.s8 %v2120
    %v2618 = vunpack.c.1.s8 %v2121
    %v2619 = vunpack.c.1.s8 %v2122
    %v2620 = vunpack.c.1.s8 %v2123
    %v2621 = vunpack.c.1.s8 %v2124
    %v2622 = vunpack.c.1.s8 %v2125
    %v2623 = vunpack.c.2.s8 %v2118
    %v2624 = vunpack.c.2.s8 %v2119
    %v2625 = vunpack.c.2.s8 %v2120
    %v2626 = vunpack.c.2.s8 %v2121
    %v2627 = vunpack.c.2.s8 %v2122
    %v2628 = vunpack.c.2.s8 %v2123
    %v2629 = vunpack.c.2.s8 %v2124
    %v2630 = vunpack.c.2.s8 %v2125
    %v2631 = vunpack.c.3.s8 %v2118
    %v2632 = vunpack.c.3.s8 %v2119
    %v2633 = vunpack.c.3.s8 %v2120
    %v2634 = vunpack.c.3.s8 %v2121
    %v2635 = vunpack.c.3.s8 %v2122
    %v2636 = vunpack.c.3.s8 %v2123
    %v2637 = vunpack.c.3.s8 %v2124
    %v2638 = vunpack.c.3.s8 %v2125
    %v2639 = vcvt.s32.f32 %v2127
    %v2640 = vcvt.s32.f32 %v2128
    %v2641 = vcvt.s32.f32 %v2129
    %v2642 = vcvt.s32.f32 %v2130
    %v2643 = vcvt.s32.f32 %v2131
    %v2644 = vcvt.s32.f32 %v2132
    %v2645 = vcvt.s32.f32 %v2133
    %v2646 = vcvt.s32.f32 %v2134
    %v2647 = vcvt.s32.f32 %v2135
    %v2648 = vcvt.s32.f32 %v2136
    %v2649 = vcvt.s32.f32 %v2137
    %v2650 = vcvt.s32.f32 %v2138
    %v2651 = vcvt.s32.f32 %v2139
    %v2652 = vcvt.s32.f32 %v2140
    %v2653 = vcvt.s32.f32 %v2141
    %v2654 = vcvt.s32.f32 %v2142
    %v2655 = vcvt.s32.f32 %v2143
    %v2656 = vcvt.s32.f32 %v2144
    %v2657 = vcvt.s32.f32 %v2145
    %v2658 = vcvt.s32.f32 %v2146
    %v2659 = vcvt.s32.f32 %v2147
    %v2660 = vcvt.s32.f32 %v2148
    %v2661 = vcvt.s32.f32 %v2149
    %v2662 = vcvt.s32.f32 %v2150
    %v2663 = vcvt.s32.f32 %v2151
    %v2664 = vcvt.s32.f32 %v2152
    %v2665 = vcvt.s32.f32 %v2153
    %v2666 = vcvt.s32.f32 %v2154
    %v2667 = vcvt.s32.f32 %v2155
    %v2668 = vcvt.s32.f32 %v2156
    %v2669 = vcvt.s32.f32 %v2157
    %v2670 = vcvt.s32.f32 %v2158
    %v2671 = vcvt.s32.f32 %v2159
    %v2672 = vcvt.s32.f32 %v2160
    %v2673 = vcvt.s32.f32 %v2161
    %v2674 = vcvt.s32.f32 %v2162
    %v2675 = vcvt.s32.f32 %v2163
    %v2676 = vcvt.s32.f32 %v2164
    %v2677 = vcvt.s32.f32 %v2165
    %v2678 = vcvt.s32.f32 %v2166
    %v2679 = vcvt.s32.f32 %v2167
    %v2680 = vcvt.s32.f32 %v2168
    %v2681 = vcvt.s32.f32 %v2169
    %v2682 = vcvt.s32.f32 %v2170
    %v2683 = vcvt.s32.f32 %v2171
    %v2684 = vcvt.s32.f32 %v2172
    %v2685 = vcvt.s32.f32 %v2173
    %v2686 = vcvt.s32.f32 %v2174
    %v2687 = vcvt.s32.f32 %v2175
    %v2688 = vcvt.s32.f32 %v2176
    %v2689 = vcvt.s32.f32 %v2177
    %v2690 = vcvt.s32.f32 %v2178
    %v2691 = vcvt.s32.f32 %v2179
    %v2692 = vcvt.s32.f32 %v2180
    %v2693 = vcvt.s32.f32 %v2181
    %v2694 = vcvt.s32.f32 %v2182
    %v2695 = vcvt.s32.f32 %v2183
    %v2696 = vcvt.s32.f32 %v2184
    %v2697 = vcvt.s32.f32 %v2185
    %v2698 = vcvt.s32.f32 %v2186
    %v2699 = vcvt.s32.f32 %v2187
    %v2700 = vcvt.s32.f32 %v2188
    %v2701 = vcvt.s32.f32 %v2189
    %v2702 = vcvt.s32.f32 %v2190
    %v2703 = vcvt.s32.f32 %v2191
    %v2704 = vcvt.s32.f32 %v2192
    %v2705 = vcvt.s32.f32 %v2193
    %v2706 = vcvt.s32.f32 %v2194
    %v2707 = vcvt.s32.f32 %v2195
    %v2708 = vcvt.s32.f32 %v2196
    %v2709 = vcvt.s32.f32 %v2197
    %v2710 = vcvt.s32.f32 %v2198
    %v2711 = vcvt.s32.f32 %v2199
    %v2712 = vcvt.s32.f32 %v2200
    %v2713 = vcvt.s32.f32 %v2201
    %v2714 = vcvt.s32.f32 %v2202
    %v2715 = vcvt.s32.f32 %v2203
    %v2716 = vcvt.s32.f32 %v2204
    %v2717 = vcvt.s32.f32 %v2205
    %v2718 = vcvt.s32.f32 %v2206
    %v2719 = vcvt.s32.f32 %v2207
    %v2720 = vcvt.s32.f32 %v2208
    %v2721 = vcvt.s32.f32 %v2209
    %v2722 = vcvt.s32.f32 %v2210
    %v2723 = vcvt.s32.f32 %v2211
    %v2724 = vcvt.s32.f32 %v2212
    %v2725 = vcvt.s32.f32 %v2213
    %v2726 = vcvt.s32.f32 %v2214
    %v2727 = vcvt.s32.f32 %v2215
    %v2728 = vcvt.s32.f32 %v2216
    %v2729 = vcvt.s32.f32 %v2217
    %v2730 = vcvt.s32.f32 %v2218
    %v2731 = vcvt.s32.f32 %v2219
    %v2732 = vcvt.s32.f32 %v2220
    %v2733 = vcvt.s32.f32 %v2221
    %v2734 = vcvt.s32.f32 %v2222
    %v2735 = vcvt.s32.f32 %v2223
    %v2736 = vcvt.s32.f32 %v2224
    %v2737 = vcvt.s32.f32 %v2225
    %v2738 = vcvt.s32.f32 %v2226
    %v2739 = vcvt.s32.f32 %v2227
    %v2740 = vcvt.s32.f32 %v2228
    %v2741 = vcvt.s32.f32 %v2229
    %v2742 = vcvt.s32.f32 %v2230
    %v2743 = vcvt.s32.f32 %v2231
    %v2744 = vcvt.s32.f32 %v2232
    %v2745 = vcvt.s32.f32 %v2233
    %v2746 = vcvt.s32.f32 %v2234
    %v2747 = vcvt.s32.f32 %v2235
    %v2748 = vcvt.s32.f32 %v2236
    %v2749 = vcvt.s32.f32 %v2237
    %v2750 = vcvt.s32.f32 %v2238
    %v2751 = vcvt.s32.f32 %v2239
    %v2752 = vcvt.s32.f32 %v2240
    %v2753 = vcvt.s32.f32 %v2241
    %v2754 = vcvt.s32.f32 %v2242
    %v2755 = vcvt.s32.f32 %v2243
    %v2756 = vcvt.s32.f32 %v2244
    %v2757 = vcvt.s32.f32 %v2245
    %v2758 = vcvt.s32.f32 %v2246
    %v2759 = vcvt.s32.f32 %v2247
    %v2760 = vcvt.s32.f32 %v2248
    %v2761 = vcvt.s32.f32 %v2249
    %v2762 = vcvt.s32.f32 %v2250
    %v2763 = vcvt.s32.f32 %v2251
    %v2764 = vcvt.s32.f32 %v2252
    %v2765 = vcvt.s32.f32 %v2253
    %v2766 = vcvt.s32.f32 %v2254
    %v2767 = vcvt.s32.f32 %v2255
    %v2768 = vcvt.s32.f32 %v2256
    %v2769 = vcvt.s32.f32 %v2257
    %v2770 = vcvt.s32.f32 %v2258
    %v2771 = vcvt.s32.f32 %v2259
    %v2772 = vcvt.s32.f32 %v2260
    %v2773 = vcvt.s32.f32 %v2261
    %v2774 = vcvt.s32.f32 %v2262
    %v2775 = vcvt.s32.f32 %v2263
    %v2776 = vcvt.s32.f32 %v2264
    %v2777 = vcvt.s32.f32 %v2265
    %v2778 = vcvt.s32.f32 %v2266
    %v2779 = vcvt.s32.f32 %v2267
    %v2780 = vcvt.s32.f32 %v2268
    %v2781 = vcvt.s32.f32 %v2269
    %v2782 = vcvt.s32.f32 %v2270
    %v2783 = vcvt.s32.f32 %v2271
    %v2784 = vcvt.s32.f32 %v2272
    %v2785 = vcvt.s32.f32 %v2273
    %v2786 = vcvt.s32.f32 %v2274
    %v2787 = vcvt.s32.f32 %v2275
    %v2788 = vcvt.s32.f32 %v2276
    %v2789 = vcvt.s32.f32 %v2277
    %v2790 = vcvt.s32.f32 %v2278
    %v2791 = vcvt.s32.f32 %v2279
    %v2792 = vcvt.s32.f32 %v2280
    %v2793 = vcvt.s32.f32 %v2281
    %v2794 = vcvt.s32.f32 %v2282
    %v2795 = vcvt.s32.f32 %v2283
    %v2796 = vcvt.s32.f32 %v2284
    %v2797 = vcvt.s32.f32 %v2285
    %v2798 = vcvt.s32.f32 %v2286
    %v2799 = vcvt.s32.f32 %v2287
    %v2800 = vcvt.s32.f32 %v2288
    %v2801 = vcvt.s32.f32 %v2289
    %v2802 = vcvt.s32.f32 %v2290
    %v2803 = vcvt.s32.f32 %v2291
    %v2804 = vcvt.s32.f32 %v2292
    %v2805 = vcvt.s32.f32 %v2293
    %v2806 = vcvt.s32.f32 %v2294
    %v2807 = vcvt.s32.f32 %v2295
    %v2808 = vcvt.s32.f32 %v2296
    %v2809 = vcvt.s32.f32 %v2297
    %v2810 = vcvt.s32.f32 %v2298
    %v2811 = vcvt.s32.f32 %v2299
    %v2812 = vcvt.s32.f32 %v2300
    %v2813 = vcvt.s32.f32 %v2301
    %v2814 = vcvt.s32.f32 %v2302
    %v2815 = vcvt.s32.f32 %v2303
    %v2816 = vcvt.s32.f32 %v2304
    %v2817 = vcvt.s32.f32 %v2305
    %v2818 = vcvt.s32.f32 %v2306
    %v2819 = vcvt.s32.f32 %v2307
    %v2820 = vcvt.s32.f32 %v2308
    %v2821 = vcvt.s32.f32 %v2309
    %v2822 = vcvt.s32.f32 %v2310
    %v2823 = vcvt.s32.f32 %v2311
    %v2824 = vcvt.s32.f32 %v2312
    %v2825 = vcvt.s32.f32 %v2313
    %v2826 = vcvt.s32.f32 %v2314
    %v2827 = vcvt.s32.f32 %v2315
    %v2828 = vcvt.s32.f32 %v2316
    %v2829 = vcvt.s32.f32 %v2317
    %v2830 = vcvt.s32.f32 %v2318
    %v2831 = vcvt.s32.f32 %v2319
    %v2832 = vcvt.s32.f32 %v2320
    %v2833 = vcvt.s32.f32 %v2321
    %v2834 = vcvt.s32.f32 %v2322
    %v2835 = vcvt.s32.f32 %v2323
    %v2836 = vcvt.s32.f32 %v2324
    %v2837 = vcvt.s32.f32 %v2325
    %v2838 = vcvt.s32.f32 %v2326
    %v2839 = vcvt.s32.f32 %v2327
    %v2840 = vcvt.s32.f32 %v2328
    %v2841 = vcvt.s32.f32 %v2329
    %v2842 = vcvt.s32.f32 %v2330
    %v2843 = vcvt.s32.f32 %v2331
    %v2844 = vcvt.s32.f32 %v2332
    %v2845 = vcvt.s32.f32 %v2333
    %v2846 = vcvt.s32.f32 %v2334
    %v2847 = vcvt.s32.f32 %v2335
    %v2848 = vcvt.s32.f32 %v2336
    %v2849 = vcvt.s32.f32 %v2337
    %v2850 = vcvt.s32.f32 %v2338
    %v2851 = vcvt.s32.f32 %v2339
    %v2852 = vcvt.s32.f32 %v2340
    %v2853 = vcvt.s32.f32 %v2341
    %v2854 = vcvt.s32.f32 %v2342
    %v2855 = vcvt.s32.f32 %v2343
    %v2856 = vcvt.s32.f32 %v2344
    %v2857 = vcvt.s32.f32 %v2345
    %v2858 = vcvt.s32.f32 %v2346
    %v2859 = vcvt.s32.f32 %v2347
    %v2860 = vcvt.s32.f32 %v2348
    %v2861 = vcvt.s32.f32 %v2349
    %v2862 = vcvt.s32.f32 %v2350
    %v2863 = vcvt.s32.f32 %v2351
    %v2864 = vcvt.s32.f32 %v2352
    %v2865 = vcvt.s32.f32 %v2353
    %v2866 = vcvt.s32.f32 %v2354
    %v2867 = vcvt.s32.f32 %v2355
    %v2868 = vcvt.s32.f32 %v2356
    %v2869 = vcvt.s32.f32 %v2357
    %v2870 = vcvt.s32.f32 %v2358
    %v2871 = vcvt.s32.f32 %v2359
    %v2872 = vcvt.s32.f32 %v2360
    %v2873 = vcvt.s32.f32 %v2361
    %v2874 = vcvt.s32.f32 %v2362
    %v2875 = vcvt.s32.f32 %v2363
    %v2876 = vcvt.s32.f32 %v2364
    %v2877 = vcvt.s32.f32 %v2365
    %v2878 = vcvt.s32.f32 %v2366
    %v2879 = vcvt.s32.f32 %v2367
    %v2880 = vcvt.s32.f32 %v2368
    %v2881 = vcvt.s32.f32 %v2369
    %v2882 = vcvt.s32.f32 %v2370
    %v2883 = vcvt.s32.f32 %v2371
    %v2884 = vcvt.s32.f32 %v2372
    %v2885 = vcvt.s32.f32 %v2373
    %v2886 = vcvt.s32.f32 %v2374
    %v2887 = vcvt.s32.f32 %v2375
    %v2888 = vcvt.s32.f32 %v2376
    %v2889 = vcvt.s32.f32 %v2377
    %v2890 = vcvt.s32.f32 %v2378
    %v2891 = vcvt.s32.f32 %v2379
    %v2892 = vcvt.s32.f32 %v2380
    %v2893 = vcvt.s32.f32 %v2381
    %v2894 = vcvt.s32.f32 %v2382
    %v2895 = vcvt.s32.f32 %v2383
    %v2896 = vcvt.s32.f32 %v2384
    %v2897 = vcvt.s32.f32 %v2385
    %v2898 = vcvt.s32.f32 %v2386
    %v2899 = vcvt.s32.f32 %v2387
    %v2900 = vcvt.s32.f32 %v2388
    %v2901 = vcvt.s32.f32 %v2389
    %v2902 = vcvt.s32.f32 %v2390
    %v2903 = vcvt.s32.f32 %v2391
    %v2904 = vcvt.s32.f32 %v2392
    %v2905 = vcvt.s32.f32 %v2393
    %v2906 = vcvt.s32.f32 %v2394
    %v2907 = vcvt.s32.f32 %v2395
    %v2908 = vcvt.s32.f32 %v2396
    %v2909 = vcvt.s32.f32 %v2397
    %v2910 = vcvt.s32.f32 %v2398
    %v2911 = vcvt.s32.f32 %v2399
    %v2912 = vcvt.s32.f32 %v2400
    %v2913 = vcvt.s32.f32 %v2401
    %v2914 = vcvt.s32.f32 %v2402
    %v2915 = vcvt.s32.f32 %v2403
    %v2916 = vcvt.s32.f32 %v2404
    %v2917 = vcvt.s32.f32 %v2405
    %v2918 = vcvt.s32.f32 %v2406
    %v2919 = vcvt.s32.f32 %v2407
    %v2920 = vcvt.s32.f32 %v2408
    %v2921 = vcvt.s32.f32 %v2409
    %v2922 = vcvt.s32.f32 %v2410
    %v2923 = vcvt.s32.f32 %v2411
    %v2924 = vcvt.s32.f32 %v2412
    %v2925 = vcvt.s32.f32 %v2413
    %v2926 = vcvt.s32.f32 %v2414
    %v2927 = vcvt.s32.f32 %v2415
    %v2928 = vcvt.s32.f32 %v2416
    %v2929 = vcvt.s32.f32 %v2417
    %v2930 = vcvt.s32.f32 %v2418
    %v2931 = vcvt.s32.f32 %v2419
    %v2932 = vcvt.s32.f32 %v2420
    %v2933 = vcvt.s32.f32 %v2421
    %v2934 = vcvt.s32.f32 %v2422
    %v2935 = vcvt.s32.f32 %v2423
    %v2936 = vcvt.s32.f32 %v2424
    %v2937 = vcvt.s32.f32 %v2425
    %v2938 = vcvt.s32.f32 %v2426
    %v2939 = vcvt.s32.f32 %v2427
    %v2940 = vcvt.s32.f32 %v2428
    %v2941 = vcvt.s32.f32 %v2429
    %v2942 = vcvt.s32.f32 %v2430
    %v2943 = vcvt.s32.f32 %v2431
    %v2944 = vcvt.s32.f32 %v2432
    %v2945 = vcvt.s32.f32 %v2433
    %v2946 = vcvt.s32.f32 %v2434
    %v2947 = vcvt.s32.f32 %v2435
    %v2948 = vcvt.s32.f32 %v2436
    %v2949 = vcvt.s32.f32 %v2437
    %v2950 = vcvt.s32.f32 %v2438
    %v2951 = vcvt.s32.f32 %v2439
    %v2952 = vcvt.s32.f32 %v2440
    %v2953 = vcvt.s32.f32 %v2441
    %v2954 = vcvt.s32.f32 %v2442
    %v2955 = vcvt.s32.f32 %v2443
    %v2956 = vcvt.s32.f32 %v2444
    %v2957 = vcvt.s32.f32 %v2445
    %v2958 = vcvt.s32.f32 %v2446
    %v2959 = vcvt.s32.f32 %v2447
    %v2960 = vcvt.s32.f32 %v2448
    %v2961 = vcvt.s32.f32 %v2449
    %v2962 = vcvt.s32.f32 %v2450
    %v2963 = vcvt.s32.f32 %v2451
    %v2964 = vcvt.s32.f32 %v2452
    %v2965 = vcvt.s32.f32 %v2453
    %v2966 = vcvt.s32.f32 %v2454
    %v2967 = vcvt.s32.f32 %v2455
    %v2968 = vcvt.s32.f32 %v2456
    %v2969 = vcvt.s32.f32 %v2457
    %v2970 = vcvt.s32.f32 %v2458
    %v2971 = vcvt.s32.f32 %v2459
    %v2972 = vcvt.s32.f32 %v2460
    %v2973 = vcvt.s32.f32 %v2461
    %v2974 = vcvt.s32.f32 %v2462
    %v2975 = vcvt.s32.f32 %v2463
    %v2976 = vcvt.s32.f32 %v2464
    %v2977 = vcvt.s32.f32 %v2465
    %v2978 = vcvt.s32.f32 %v2466
    %v2979 = vcvt.s32.f32 %v2467
    %v2980 = vcvt.s32.f32 %v2468
    %v2981 = vcvt.s32.f32 %v2469
    %v2982 = vcvt.s32.f32 %v2470
    %v2983 = vcvt.s32.f32 %v2471
    %v2984 = vcvt.s32.f32 %v2472
    %v2985 = vcvt.s32.f32 %v2473
    %v2986 = vcvt.s32.f32 %v2474
    %v2987 = vcvt.s32.f32 %v2475
    %v2988 = vcvt.s32.f32 %v2476
    %v2989 = vcvt.s32.f32 %v2477
    %v2990 = vcvt.s32.f32 %v2478
    %v2991 = vcvt.s32.f32 %v2479
    %v2992 = vcvt.s32.f32 %v2480
    %v2993 = vcvt.s32.f32 %v2481
    %v2994 = vcvt.s32.f32 %v2482
    %v2995 = vcvt.s32.f32 %v2483
    %v2996 = vcvt.s32.f32 %v2484
    %v2997 = vcvt.s32.f32 %v2485
    %v2998 = vcvt.s32.f32 %v2486
    %v2999 = vcvt.s32.f32 %v2487
    %v3000 = vcvt.s32.f32 %v2488
    %v3001 = vcvt.s32.f32 %v2489
    %v3002 = vcvt.s32.f32 %v2490
    %v3003 = vcvt.s32.f32 %v2491
    %v3004 = vcvt.s32.f32 %v2492
    %v3005 = vcvt.s32.f32 %v2493
    %v3006 = vcvt.s32.f32 %v2494
    %v3007 = vcvt.s32.f32 %v2495
    %v3008 = vcvt.s32.f32 %v2496
    %v3009 = vcvt.s32.f32 %v2497
    %v3010 = vcvt.s32.f32 %v2498
    %v3011 = vcvt.s32.f32 %v2499
    %v3012 = vcvt.s32.f32 %v2500
    %v3013 = vcvt.s32.f32 %v2501
    %v3014 = vcvt.s32.f32 %v2502
    %v3015 = vcvt.s32.f32 %v2503
    %v3016 = vcvt.s32.f32 %v2504
    %v3017 = vcvt.s32.f32 %v2505
    %v3018 = vcvt.s32.f32 %v2506
    %v3019 = vcvt.s32.f32 %v2507
    %v3020 = vcvt.s32.f32 %v2508
    %v3021 = vcvt.s32.f32 %v2509
    %v3022 = vcvt.s32.f32 %v2510
    %v3023 = vcvt.s32.f32 %v2511
    %v3024 = vcvt.s32.f32 %v2512
    %v3025 = vcvt.s32.f32 %v2513
    %v3026 = vcvt.s32.f32 %v2514
    %v3027 = vcvt.s32.f32 %v2515
    %v3028 = vcvt.s32.f32 %v2516
    %v3029 = vcvt.s32.f32 %v2517
    %v3030 = vcvt.s32.f32 %v2518
    %v3031 = vcvt.s32.f32 %v2519
    %v3032 = vcvt.s32.f32 %v2520
    %v3033 = vcvt.s32.f32 %v2521
    %v3034 = vcvt.s32.f32 %v2522
    %v3035 = vcvt.s32.f32 %v2523
    %v3036 = vcvt.s32.f32 %v2524
    %v3037 = vcvt.s32.f32 %v2525
    %v3038 = vcvt.s32.f32 %v2526
    %v3039 = vcvt.s32.f32 %v2527
    %v3040 = vcvt.s32.f32 %v2528
    %v3041 = vcvt.s32.f32 %v2529
    %v3042 = vcvt.s32.f32 %v2530
    %v3043 = vcvt.s32.f32 %v2531
    %v3044 = vcvt.s32.f32 %v2532
    %v3045 = vcvt.s32.f32 %v2533
    %v3046 = vcvt.s32.f32 %v2534
    %v3047 = vcvt.s32.f32 %v2535
    %v3048 = vcvt.s32.f32 %v2536
    %v3049 = vcvt.s32.f32 %v2537
    %v3050 = vcvt.s32.f32 %v2538
    %v3051 = vcvt.s32.f32 %v2539
    %v3052 = vcvt.s32.f32 %v2540
    %v3053 = vcvt.s32.f32 %v2541
    %v3054 = vcvt.s32.f32 %v2542
    %v3055 = vcvt.s32.f32 %v2543
    %v3056 = vcvt.s32.f32 %v2544
    %v3057 = vcvt.s32.f32 %v2545
    %v3058 = vcvt.s32.f32 %v2546
    %v3059 = vcvt.s32.f32 %v2547
    %v3060 = vcvt.s32.f32 %v2548
    %v3061 = vcvt.s32.f32 %v2549
    %v3062 = vcvt.s32.f32 %v2550
    %v3063 = vcvt.s32.f32 %v2551
    %v3064 = vcvt.s32.f32 %v2552
    %v3065 = vcvt.s32.f32 %v2553
    %v3066 = vcvt.s32.f32 %v2554
    %v3067 = vcvt.s32.f32 %v2555
    %v3068 = vcvt.s32.f32 %v2556
    %v3069 = vcvt.s32.f32 %v2557
    %v3070 = vcvt.s32.f32 %v2558
    %v3071 = vcvt.s32.f32 %v2559
    %v3072 = vcvt.s32.f32 %v2560
    %v3073 = vcvt.s32.f32 %v2561
    %v3074 = vcvt.s32.f32 %v2562
    %v3075 = vcvt.s32.f32 %v2563
    %v3076 = vcvt.s32.f32 %v2564
    %v3077 = vcvt.s32.f32 %v2565
    %v3078 = vcvt.s32.f32 %v2566
    %v3079 = vcvt.s32.f32 %v2567
    %v3080 = vcvt.s32.f32 %v2568
    %v3081 = vcvt.s32.f32 %v2569
    %v3082 = vcvt.s32.f32 %v2570
    %v3083 = vcvt.s32.f32 %v2571
    %v3084 = vcvt.s32.f32 %v2572
    %v3085 = vcvt.s32.f32 %v2573
    %v3086 = vcvt.s32.f32 %v2574
    %v3087 = vcvt.s32.f32 %v2575
    %v3088 = vcvt.s32.f32 %v2576
    %v3089 = vcvt.s32.f32 %v2577
    %v3090 = vcvt.s32.f32 %v2578
    %v3091 = vcvt.s32.f32 %v2579
    %v3092 = vcvt.s32.f32 %v2580
    %v3093 = vcvt.s32.f32 %v2581
    %v3094 = vcvt.s32.f32 %v2582
    %v3095 = vcvt.s32.f32 %v2583
    %v3096 = vcvt.s32.f32 %v2584
    %v3097 = vcvt.s32.f32 %v2585
    %v3098 = vcvt.s32.f32 %v2586
    %v3099 = vcvt.s32.f32 %v2587
    %v3100 = vcvt.s32.f32 %v2588
    %v3101 = vcvt.s32.f32 %v2589
    %v3102 = vcvt.s32.f32 %v2590
    %v3103 = vcvt.s32.f32 %v2591
    %v3104 = vcvt.s32.f32 %v2592
    %v3105 = vcvt.s32.f32 %v2593
    %v3106 = vcvt.s32.f32 %v2594
    %v3107 = vcvt.s32.f32 %v2595
    %v3108 = vcvt.s32.f32 %v2596
    %v3109 = vcvt.s32.f32 %v2597
    %v3110 = vcvt.s32.f32 %v2598
    %v3111 = vcvt.s32.f32 %v2599
    %v3112 = vcvt.s32.f32 %v2600
    %v3113 = vcvt.s32.f32 %v2601
    %v3114 = vcvt.s32.f32 %v2602
    %v3115 = vcvt.s32.f32 %v2603
    %v3116 = vcvt.s32.f32 %v2604
    %v3117 = vcvt.s32.f32 %v2605
    %v3118 = vcvt.s32.f32 %v2606
    %v3119 = vcvt.s32.f32 %v2607
    %v3120 = vcvt.s32.f32 %v2608
    %v3121 = vcvt.s32.f32 %v2609
    %v3122 = vcvt.s32.f32 %v2610
    %v3123 = vcvt.s32.f32 %v2611
    %v3124 = vcvt.s32.f32 %v2612
    %v3125 = vcvt.s32.f32 %v2613
    %v3126 = vcvt.s32.f32 %v2614
    %v3127 = vcvt.s32.f32 %v2615
    %v3128 = vcvt.s32.f32 %v2616
    %v3129 = vcvt.s32.f32 %v2617
    %v3130 = vcvt.s32.f32 %v2618
    %v3131 = vcvt.s32.f32 %v2619
    %v3132 = vcvt.s32.f32 %v2620
    %v3133 = vcvt.s32.f32 %v2621
    %v3134 = vcvt.s32.f32 %v2622
    %v3135 = vcvt.s32.f32 %v2623
    %v3136 = vcvt.s32.f32 %v2624
    %v3137 = vcvt.s32.f32 %v2625
    %v3138 = vcvt.s32.f32 %v2626
    %v3139 = vcvt.s32.f32 %v2627
    %v3140 = vcvt.s32.f32 %v2628
    %v3141 = vcvt.s32.f32 %v2629
    %v3142 = vcvt.s32.f32 %v2630
    %v3143 = vcvt.s32.f32 %v2631
    %v3144 = vcvt.s32.f32 %v2632
    %v3145 = vcvt.s32.f32 %v2633
    %v3146 = vcvt.s32.f32 %v2634
    %v3147 = vcvt.s32.f32 %v2635
    %v3148 = vcvt.s32.f32 %v2636
    %v3149 = vcvt.s32.f32 %v2637
    %v3150 = vcvt.s32.f32 %v2638
    %v3152 = vperm.slane %v2126, 0
    %v3153 = vperm.slane %v2126, 1
    %v3154 = vperm.slane %v2126, 2
    %v3155 = vperm.slane %v2126, 3
    %v3156 = vperm.slane %v2126, 4
    %v3157 = vperm.slane %v2126, 5
    %v3158 = vperm.slane %v2126, 6
    %v3159 = vperm.slane %v2126, 7
    %v3168 = vmul.f32 %v2639, %v3152
    %v3169 = vmul.f32 %v2640, %v3153
    %v3170 = vmul.f32 %v2641, %v3154
    %v3171 = vmul.f32 %v2642, %v3155
    %v3172 = vmul.f32 %v2643, %v3156
    %v3173 = vmul.f32 %v2644, %v3157
    %v3174 = vmul.f32 %v2645, %v3158
    %v3175 = vmul.f32 %v2646, %v3159
    %v3176 = vmul.f32 %v2647, %v3152
    %v3177 = vmul.f32 %v2648, %v3153
    %v3178 = vmul.f32 %v2649, %v3154
    %v3179 = vmul.f32 %v2650, %v3155
    %v3180 = vmul.f32 %v2651, %v3156
    %v3181 = vmul.f32 %v2652, %v3157
    %v3182 = vmul.f32 %v2653, %v3158
    %v3183 = vmul.f32 %v2654, %v3159
    %v3184 = vmul.f32 %v2655, %v3152
    %v3185 = vmul.f32 %v2656, %v3153
    %v3186 = vmul.f32 %v2657, %v3154
    %v3187 = vmul.f32 %v2658, %v3155
    %v3188 = vmul.f32 %v2659, %v3156
    %v3189 = vmul.f32 %v2660, %v3157
    %v3190 = vmul.f32 %v2661, %v3158
    %v3191 = vmul.f32 %v2662, %v3159
    %v3192 = vmul.f32 %v2663, %v3152
    %v3193 = vmul.f32 %v2664, %v3153
    %v3194 = vmul.f32 %v2665, %v3154
    %v3195 = vmul.f32 %v2666, %v3155
    %v3196 = vmul.f32 %v2667, %v3156
    %v3197 = vmul.f32 %v2668, %v3157
    %v3198 = vmul.f32 %v2669, %v3158
    %v3199 = vmul.f32 %v2670, %v3159
    %v3200 = vmul.f32 %v2671, %v3152
    %v3201 = vmul.f32 %v2672, %v3153
    %v3202 = vmul.f32 %v2673, %v3154
    %v3203 = vmul.f32 %v2674, %v3155
    %v3204 = vmul.f32 %v2675, %v3156
    %v3205 = vmul.f32 %v2676, %v3157
    %v3206 = vmul.f32 %v2677, %v3158
    %v3207 = vmul.f32 %v2678, %v3159
    %v3208 = vmul.f32 %v2679, %v3152
    %v3209 = vmul.f32 %v2680, %v3153
    %v3210 = vmul.f32 %v2681, %v3154
    %v3211 = vmul.f32 %v2682, %v3155
    %v3212 = vmul.f32 %v2683, %v3156
    %v3213 = vmul.f32 %v2684, %v3157
    %v3214 = vmul.f32 %v2685, %v3158
    %v3215 = vmul.f32 %v2686, %v3159
    %v3216 = vmul.f32 %v2687, %v3152
    %v3217 = vmul.f32 %v2688, %v3153
    %v3218 = vmul.f32 %v2689, %v3154
    %v3219 = vmul.f32 %v2690, %v3155
    %v3220 = vmul.f32 %v2691, %v3156
    %v3221 = vmul.f32 %v2692, %v3157
    %v3222 = vmul.f32 %v2693, %v3158
    %v3223 = vmul.f32 %v2694, %v3159
    %v3224 = vmul.f32 %v2695, %v3152
    %v3225 = vmul.f32 %v2696, %v3153
    %v3226 = vmul.f32 %v2697, %v3154
    %v3227 = vmul.f32 %v2698, %v3155
    %v3228 = vmul.f32 %v2699, %v3156
    %v3229 = vmul.f32 %v2700, %v3157
    %v3230 = vmul.f32 %v2701, %v3158
    %v3231 = vmul.f32 %v2702, %v3159
    %v3232 = vmul.f32 %v2703, %v3152
    %v3233 = vmul.f32 %v2704, %v3153
    %v3234 = vmul.f32 %v2705, %v3154
    %v3235 = vmul.f32 %v2706, %v3155
    %v3236 = vmul.f32 %v2707, %v3156
    %v3237 = vmul.f32 %v2708, %v3157
    %v3238 = vmul.f32 %v2709, %v3158
    %v3239 = vmul.f32 %v2710, %v3159
    %v3240 = vmul.f32 %v2711, %v3152
    %v3241 = vmul.f32 %v2712, %v3153
    %v3242 = vmul.f32 %v2713, %v3154
    %v3243 = vmul.f32 %v2714, %v3155
    %v3244 = vmul.f32 %v2715, %v3156
    %v3245 = vmul.f32 %v2716, %v3157
    %v3246 = vmul.f32 %v2717, %v3158
    %v3247 = vmul.f32 %v2718, %v3159
    %v3248 = vmul.f32 %v2719, %v3152
    %v3249 = vmul.f32 %v2720, %v3153
    %v3250 = vmul.f32 %v2721, %v3154
    %v3251 = vmul.f32 %v2722, %v3155
    %v3252 = vmul.f32 %v2723, %v3156
    %v3253 = vmul.f32 %v2724, %v3157
    %v3254 = vmul.f32 %v2725, %v3158
    %v3255 = vmul.f32 %v2726, %v3159
    %v3256 = vmul.f32 %v2727, %v3152
    %v3257 = vmul.f32 %v2728, %v3153
    %v3258 = vmul.f32 %v2729, %v3154
    %v3259 = vmul.f32 %v2730, %v3155
    %v3260 = vmul.f32 %v2731, %v3156
    %v3261 = vmul.f32 %v2732, %v3157
    %v3262 = vmul.f32 %v2733, %v3158
    %v3263 = vmul.f32 %v2734, %v3159
    %v3264 = vmul.f32 %v2735, %v3152
    %v3265 = vmul.f32 %v2736, %v3153
    %v3266 = vmul.f32 %v2737, %v3154
    %v3267 = vmul.f32 %v2738, %v3155
    %v3268 = vmul.f32 %v2739, %v3156
    %v3269 = vmul.f32 %v2740, %v3157
    %v3270 = vmul.f32 %v2741, %v3158
    %v3271 = vmul.f32 %v2742, %v3159
    %v3272 = vmul.f32 %v2743, %v3152
    %v3273 = vmul.f32 %v2744, %v3153
    %v3274 = vmul.f32 %v2745, %v3154
    %v3275 = vmul.f32 %v2746, %v3155
    %v3276 = vmul.f32 %v2747, %v3156
    %v3277 = vmul.f32 %v2748, %v3157
    %v3278 = vmul.f32 %v2749, %v3158
    %v3279 = vmul.f32 %v2750, %v3159
    %v3280 = vmul.f32 %v2751, %v3152
    %v3281 = vmul.f32 %v2752, %v3153
    %v3282 = vmul.f32 %v2753, %v3154
    %v3283 = vmul.f32 %v2754, %v3155
    %v3284 = vmul.f32 %v2755, %v3156
    %v3285 = vmul.f32 %v2756, %v3157
    %v3286 = vmul.f32 %v2757, %v3158
    %v3287 = vmul.f32 %v2758, %v3159
    %v3288 = vmul.f32 %v2759, %v3152
    %v3289 = vmul.f32 %v2760, %v3153
    %v3290 = vmul.f32 %v2761, %v3154
    %v3291 = vmul.f32 %v2762, %v3155
    %v3292 = vmul.f32 %v2763, %v3156
    %v3293 = vmul.f32 %v2764, %v3157
    %v3294 = vmul.f32 %v2765, %v3158
    %v3295 = vmul.f32 %v2766, %v3159
    %v3296 = vmul.f32 %v2767, %v3152
    %v3297 = vmul.f32 %v2768, %v3153
    %v3298 = vmul.f32 %v2769, %v3154
    %v3299 = vmul.f32 %v2770, %v3155
    %v3300 = vmul.f32 %v2771, %v3156
    %v3301 = vmul.f32 %v2772, %v3157
    %v3302 = vmul.f32 %v2773, %v3158
    %v3303 = vmul.f32 %v2774, %v3159
    %v3304 = vmul.f32 %v2775, %v3152
    %v3305 = vmul.f32 %v2776, %v3153
    %v3306 = vmul.f32 %v2777, %v3154
    %v3307 = vmul.f32 %v2778, %v3155
    %v3308 = vmul.f32 %v2779, %v3156
    %v3309 = vmul.f32 %v2780, %v3157
    %v3310 = vmul.f32 %v2781, %v3158
    %v3311 = vmul.f32 %v2782, %v3159
    %v3312 = vmul.f32 %v2783, %v3152
    %v3313 = vmul.f32 %v2784, %v3153
    %v3314 = vmul.f32 %v2785, %v3154
    %v3315 = vmul.f32 %v2786, %v3155
    %v3316 = vmul.f32 %v2787, %v3156
    %v3317 = vmul.f32 %v2788, %v3157
    %v3318 = vmul.f32 %v2789, %v3158
    %v3319 = vmul.f32 %v2790, %v3159
    %v3320 = vmul.f32 %v2791, %v3152
    %v3321 = vmul.f32 %v2792, %v3153
    %v3322 = vmul.f32 %v2793, %v3154
    %v3323 = vmul.f32 %v2794, %v3155
    %v3324 = vmul.f32 %v2795, %v3156
    %v3325 = vmul.f32 %v2796, %v3157
    %v3326 = vmul.f32 %v2797, %v3158
    %v3327 = vmul.f32 %v2798, %v3159
    %v3328 = vmul.f32 %v2799, %v3152
    %v3329 = vmul.f32 %v2800, %v3153
    %v3330 = vmul.f32 %v2801, %v3154
    %v3331 = vmul.f32 %v2802, %v3155
    %v3332 = vmul.f32 %v2803, %v3156
    %v3333 = vmul.f32 %v2804, %v3157
    %v3334 = vmul.f32 %v2805, %v3158
    %v3335 = vmul.f32 %v2806, %v3159
    %v3336 = vmul.f32 %v2807, %v3152
    %v3337 = vmul.f32 %v2808, %v3153
    %v3338 = vmul.f32 %v2809, %v3154
    %v3339 = vmul.f32 %v2810, %v3155
    %v3340 = vmul.f32 %v2811, %v3156
    %v3341 = vmul.f32 %v2812, %v3157
    %v3342 = vmul.f32 %v2813, %v3158
    %v3343 = vmul.f32 %v2814, %v3159
    %v3344 = vmul.f32 %v2815, %v3152
    %v3345 = vmul.f32 %v2816, %v3153
    %v3346 = vmul.f32 %v2817, %v3154
    %v3347 = vmul.f32 %v2818, %v3155
    %v3348 = vmul.f32 %v2819, %v3156
    %v3349 = vmul.f32 %v2820, %v3157
    %v3350 = vmul.f32 %v2821, %v3158
    %v3351 = vmul.f32 %v2822, %v3159
    %v3352 = vmul.f32 %v2823, %v3152
    %v3353 = vmul.f32 %v2824, %v3153
    %v3354 = vmul.f32 %v2825, %v3154
    %v3355 = vmul.f32 %v2826, %v3155
    %v3356 = vmul.f32 %v2827, %v3156
    %v3357 = vmul.f32 %v2828, %v3157
    %v3358 = vmul.f32 %v2829, %v3158
    %v3359 = vmul.f32 %v2830, %v3159
    %v3360 = vmul.f32 %v2831, %v3152
    %v3361 = vmul.f32 %v2832, %v3153
    %v3362 = vmul.f32 %v2833, %v3154
    %v3363 = vmul.f32 %v2834, %v3155
    %v3364 = vmul.f32 %v2835, %v3156
    %v3365 = vmul.f32 %v2836, %v3157
    %v3366 = vmul.f32 %v2837, %v3158
    %v3367 = vmul.f32 %v2838, %v3159
    %v3368 = vmul.f32 %v2839, %v3152
    %v3369 = vmul.f32 %v2840, %v3153
    %v3370 = vmul.f32 %v2841, %v3154
    %v3371 = vmul.f32 %v2842, %v3155
    %v3372 = vmul.f32 %v2843, %v3156
    %v3373 = vmul.f32 %v2844, %v3157
    %v3374 = vmul.f32 %v2845, %v3158
    %v3375 = vmul.f32 %v2846, %v3159
    %v3376 = vmul.f32 %v2847, %v3152
    %v3377 = vmul.f32 %v2848, %v3153
    %v3378 = vmul.f32 %v2849, %v3154
    %v3379 = vmul.f32 %v2850, %v3155
    %v3380 = vmul.f32 %v2851, %v3156
    %v3381 = vmul.f32 %v2852, %v3157
    %v3382 = vmul.f32 %v2853, %v3158
    %v3383 = vmul.f32 %v2854, %v3159
    %v3384 = vmul.f32 %v2855, %v3152
    %v3385 = vmul.f32 %v2856, %v3153
    %v3386 = vmul.f32 %v2857, %v3154
    %v3387 = vmul.f32 %v2858, %v3155
    %v3388 = vmul.f32 %v2859, %v3156
    %v3389 = vmul.f32 %v2860, %v3157
    %v3390 = vmul.f32 %v2861, %v3158
    %v3391 = vmul.f32 %v2862, %v3159
    %v3392 = vmul.f32 %v2863, %v3152
    %v3393 = vmul.f32 %v2864, %v3153
    %v3394 = vmul.f32 %v2865, %v3154
    %v3395 = vmul.f32 %v2866, %v3155
    %v3396 = vmul.f32 %v2867, %v3156
    %v3397 = vmul.f32 %v2868, %v3157
    %v3398 = vmul.f32 %v2869, %v3158
    %v3399 = vmul.f32 %v2870, %v3159
    %v3400 = vmul.f32 %v2871, %v3152
    %v3401 = vmul.f32 %v2872, %v3153
    %v3402 = vmul.f32 %v2873, %v3154
    %v3403 = vmul.f32 %v2874, %v3155
    %v3404 = vmul.f32 %v2875, %v3156
    %v3405 = vmul.f32 %v2876, %v3157
    %v3406 = vmul.f32 %v2877, %v3158
    %v3407 = vmul.f32 %v2878, %v3159
    %v3408 = vmul.f32 %v2879, %v3152
    %v3409 = vmul.f32 %v2880, %v3153
    %v3410 = vmul.f32 %v2881, %v3154
    %v3411 = vmul.f32 %v2882, %v3155
    %v3412 = vmul.f32 %v2883, %v3156
    %v3413 = vmul.f32 %v2884, %v3157
    %v3414 = vmul.f32 %v2885, %v3158
    %v3415 = vmul.f32 %v2886, %v3159
    %v3416 = vmul.f32 %v2887, %v3152
    %v3417 = vmul.f32 %v2888, %v3153
    %v3418 = vmul.f32 %v2889, %v3154
    %v3419 = vmul.f32 %v2890, %v3155
    %v3420 = vmul.f32 %v2891, %v3156
    %v3421 = vmul.f32 %v2892, %v3157
    %v3422 = vmul.f32 %v2893, %v3158
    %v3423 = vmul.f32 %v2894, %v3159
    %v3424 = vmul.f32 %v2895, %v3152
    %v3425 = vmul.f32 %v2896, %v3153
    %v3426 = vmul.f32 %v2897, %v3154
    %v3427 = vmul.f32 %v2898, %v3155
    %v3428 = vmul.f32 %v2899, %v3156
    %v3429 = vmul.f32 %v2900, %v3157
    %v3430 = vmul.f32 %v2901, %v3158
    %v3431 = vmul.f32 %v2902, %v3159
    %v3432 = vmul.f32 %v2903, %v3152
    %v3433 = vmul.f32 %v2904, %v3153
    %v3434 = vmul.f32 %v2905, %v3154
    %v3435 = vmul.f32 %v2906, %v3155
    %v3436 = vmul.f32 %v2907, %v3156
    %v3437 = vmul.f32 %v2908, %v3157
    %v3438 = vmul.f32 %v2909, %v3158
    %v3439 = vmul.f32 %v2910, %v3159
    %v3440 = vmul.f32 %v2911, %v3152
    %v3441 = vmul.f32 %v2912, %v3153
    %v3442 = vmul.f32 %v2913, %v3154
    %v3443 = vmul.f32 %v2914, %v3155
    %v3444 = vmul.f32 %v2915, %v3156
    %v3445 = vmul.f32 %v2916, %v3157
    %v3446 = vmul.f32 %v2917, %v3158
    %v3447 = vmul.f32 %v2918, %v3159
    %v3448 = vmul.f32 %v2919, %v3152
    %v3449 = vmul.f32 %v2920, %v3153
    %v3450 = vmul.f32 %v2921, %v3154
    %v3451 = vmul.f32 %v2922, %v3155
    %v3452 = vmul.f32 %v2923, %v3156
    %v3453 = vmul.f32 %v2924, %v3157
    %v3454 = vmul.f32 %v2925, %v3158
    %v3455 = vmul.f32 %v2926, %v3159
    %v3456 = vmul.f32 %v2927, %v3152
    %v3457 = vmul.f32 %v2928, %v3153
    %v3458 = vmul.f32 %v2929, %v3154
    %v3459 = vmul.f32 %v2930, %v3155
    %v3460 = vmul.f32 %v2931, %v3156
    %v3461 = vmul.f32 %v2932, %v3157
    %v3462 = vmul.f32 %v2933, %v3158
    %v3463 = vmul.f32 %v2934, %v3159
    %v3464 = vmul.f32 %v2935, %v3152
    %v3465 = vmul.f32 %v2936, %v3153
    %v3466 = vmul.f32 %v2937, %v3154
    %v3467 = vmul.f32 %v2938, %v3155
    %v3468 = vmul.f32 %v2939, %v3156
    %v3469 = vmul.f32 %v2940, %v3157
    %v3470 = vmul.f32 %v2941, %v3158
    %v3471 = vmul.f32 %v2942, %v3159
    %v3472 = vmul.f32 %v2943, %v3152
    %v3473 = vmul.f32 %v2944, %v3153
    %v3474 = vmul.f32 %v2945, %v3154
    %v3475 = vmul.f32 %v2946, %v3155
    %v3476 = vmul.f32 %v2947, %v3156
    %v3477 = vmul.f32 %v2948, %v3157
    %v3478 = vmul.f32 %v2949, %v3158
    %v3479 = vmul.f32 %v2950, %v3159
    %v3480 = vmul.f32 %v2951, %v3152
    %v3481 = vmul.f32 %v2952, %v3153
    %v3482 = vmul.f32 %v2953, %v3154
    %v3483 = vmul.f32 %v2954, %v3155
    %v3484 = vmul.f32 %v2955, %v3156
    %v3485 = vmul.f32 %v2956, %v3157
    %v3486 = vmul.f32 %v2957, %v3158
    %v3487 = vmul.f32 %v2958, %v3159
    %v3488 = vmul.f32 %v2959, %v3152
    %v3489 = vmul.f32 %v2960, %v3153
    %v3490 = vmul.f32 %v2961, %v3154
    %v3491 = vmul.f32 %v2962, %v3155
    %v3492 = vmul.f32 %v2963, %v3156
    %v3493 = vmul.f32 %v2964, %v3157
    %v3494 = vmul.f32 %v2965, %v3158
    %v3495 = vmul.f32 %v2966, %v3159
    %v3496 = vmul.f32 %v2967, %v3152
    %v3497 = vmul.f32 %v2968, %v3153
    %v3498 = vmul.f32 %v2969, %v3154
    %v3499 = vmul.f32 %v2970, %v3155
    %v3500 = vmul.f32 %v2971, %v3156
    %v3501 = vmul.f32 %v2972, %v3157
    %v3502 = vmul.f32 %v2973, %v3158
    %v3503 = vmul.f32 %v2974, %v3159
    %v3504 = vmul.f32 %v2975, %v3152
    %v3505 = vmul.f32 %v2976, %v3153
    %v3506 = vmul.f32 %v2977, %v3154
    %v3507 = vmul.f32 %v2978, %v3155
    %v3508 = vmul.f32 %v2979, %v3156
    %v3509 = vmul.f32 %v2980, %v3157
    %v3510 = vmul.f32 %v2981, %v3158
    %v3511 = vmul.f32 %v2982, %v3159
    %v3512 = vmul.f32 %v2983, %v3152
    %v3513 = vmul.f32 %v2984, %v3153
    %v3514 = vmul.f32 %v2985, %v3154
    %v3515 = vmul.f32 %v2986, %v3155
    %v3516 = vmul.f32 %v2987, %v3156
    %v3517 = vmul.f32 %v2988, %v3157
    %v3518 = vmul.f32 %v2989, %v3158
    %v3519 = vmul.f32 %v2990, %v3159
    %v3520 = vmul.f32 %v2991, %v3152
    %v3521 = vmul.f32 %v2992, %v3153
    %v3522 = vmul.f32 %v2993, %v3154
    %v3523 = vmul.f32 %v2994, %v3155
    %v3524 = vmul.f32 %v2995, %v3156
    %v3525 = vmul.f32 %v2996, %v3157
    %v3526 = vmul.f32 %v2997, %v3158
    %v3527 = vmul.f32 %v2998, %v3159
    %v3528 = vmul.f32 %v2999, %v3152
    %v3529 = vmul.f32 %v3000, %v3153
    %v3530 = vmul.f32 %v3001, %v3154
    %v3531 = vmul.f32 %v3002, %v3155
    %v3532 = vmul.f32 %v3003, %v3156
    %v3533 = vmul.f32 %v3004, %v3157
    %v3534 = vmul.f32 %v3005, %v3158
    %v3535 = vmul.f32 %v3006, %v3159
    %v3536 = vmul.f32 %v3007, %v3152
    %v3537 = vmul.f32 %v3008, %v3153
    %v3538 = vmul.f32 %v3009, %v3154
    %v3539 = vmul.f32 %v3010, %v3155
    %v3540 = vmul.f32 %v3011, %v3156
    %v3541 = vmul.f32 %v3012, %v3157
    %v3542 = vmul.f32 %v3013, %v3158
    %v3543 = vmul.f32 %v3014, %v3159
    %v3544 = vmul.f32 %v3015, %v3152
    %v3545 = vmul.f32 %v3016, %v3153
    %v3546 = vmul.f32 %v3017, %v3154
    %v3547 = vmul.f32 %v3018, %v3155
    %v3548 = vmul.f32 %v3019, %v3156
    %v3549 = vmul.f32 %v3020, %v3157
    %v3550 = vmul.f32 %v3021, %v3158
    %v3551 = vmul.f32 %v3022, %v3159
    %v3552 = vmul.f32 %v3023, %v3152
    %v3553 = vmul.f32 %v3024, %v3153
    %v3554 = vmul.f32 %v3025, %v3154
    %v3555 = vmul.f32 %v3026, %v3155
    %v3556 = vmul.f32 %v3027, %v3156
    %v3557 = vmul.f32 %v3028, %v3157
    %v3558 = vmul.f32 %v3029, %v3158
    %v3559 = vmul.f32 %v3030, %v3159
    %v3560 = vmul.f32 %v3031, %v3152
    %v3561 = vmul.f32 %v3032, %v3153
    %v3562 = vmul.f32 %v3033, %v3154
    %v3563 = vmul.f32 %v3034, %v3155
    %v3564 = vmul.f32 %v3035, %v3156
    %v3565 = vmul.f32 %v3036, %v3157
    %v3566 = vmul.f32 %v3037, %v3158
    %v3567 = vmul.f32 %v3038, %v3159
    %v3568 = vmul.f32 %v3039, %v3152
    %v3569 = vmul.f32 %v3040, %v3153
    %v3570 = vmul.f32 %v3041, %v3154
    %v3571 = vmul.f32 %v3042, %v3155
    %v3572 = vmul.f32 %v3043, %v3156
    %v3573 = vmul.f32 %v3044, %v3157
    %v3574 = vmul.f32 %v3045, %v3158
    %v3575 = vmul.f32 %v3046, %v3159
    %v3576 = vmul.f32 %v3047, %v3152
    %v3577 = vmul.f32 %v3048, %v3153
    %v3578 = vmul.f32 %v3049, %v3154
    %v3579 = vmul.f32 %v3050, %v3155
    %v3580 = vmul.f32 %v3051, %v3156
    %v3581 = vmul.f32 %v3052, %v3157
    %v3582 = vmul.f32 %v3053, %v3158
    %v3583 = vmul.f32 %v3054, %v3159
    %v3584 = vmul.f32 %v3055, %v3152
    %v3585 = vmul.f32 %v3056, %v3153
    %v3586 = vmul.f32 %v3057, %v3154
    %v3587 = vmul.f32 %v3058, %v3155
    %v3588 = vmul.f32 %v3059, %v3156
    %v3589 = vmul.f32 %v3060, %v3157
    %v3590 = vmul.f32 %v3061, %v3158
    %v3591 = vmul.f32 %v3062, %v3159
    %v3592 = vmul.f32 %v3063, %v3152
    %v3593 = vmul.f32 %v3064, %v3153
    %v3594 = vmul.f32 %v3065, %v3154
    %v3595 = vmul.f32 %v3066, %v3155
    %v3596 = vmul.f32 %v3067, %v3156
    %v3597 = vmul.f32 %v3068, %v3157
    %v3598 = vmul.f32 %v3069, %v3158
    %v3599 = vmul.f32 %v3070, %v3159
    %v3600 = vmul.f32 %v3071, %v3152
    %v3601 = vmul.f32 %v3072, %v3153
    %v3602 = vmul.f32 %v3073, %v3154
    %v3603 = vmul.f32 %v3074, %v3155
    %v3604 = vmul.f32 %v3075, %v3156
    %v3605 = vmul.f32 %v3076, %v3157
    %v3606 = vmul.f32 %v3077, %v3158
    %v3607 = vmul.f32 %v3078, %v3159
    %v3608 = vmul.f32 %v3079, %v3152
    %v3609 = vmul.f32 %v3080, %v3153
    %v3610 = vmul.f32 %v3081, %v3154
    %v3611 = vmul.f32 %v3082, %v3155
    %v3612 = vmul.f32 %v3083, %v3156
    %v3613 = vmul.f32 %v3084, %v3157
    %v3614 = vmul.f32 %v3085, %v3158
    %v3615 = vmul.f32 %v3086, %v3159
    %v3616 = vmul.f32 %v3087, %v3152
    %v3617 = vmul.f32 %v3088, %v3153
    %v3618 = vmul.f32 %v3089, %v3154
    %v3619 = vmul.f32 %v3090, %v3155
    %v3620 = vmul.f32 %v3091, %v3156
    %v3621 = vmul.f32 %v3092, %v3157
    %v3622 = vmul.f32 %v3093, %v3158
    %v3623 = vmul.f32 %v3094, %v3159
    %v3624 = vmul.f32 %v3095, %v3152
    %v3625 = vmul.f32 %v3096, %v3153
    %v3626 = vmul.f32 %v3097, %v3154
    %v3627 = vmul.f32 %v3098, %v3155
    %v3628 = vmul.f32 %v3099, %v3156
    %v3629 = vmul.f32 %v3100, %v3157
    %v3630 = vmul.f32 %v3101, %v3158
    %v3631 = vmul.f32 %v3102, %v3159
    %v3632 = vmul.f32 %v3103, %v3152
    %v3633 = vmul.f32 %v3104, %v3153
    %v3634 = vmul.f32 %v3105, %v3154
    %v3635 = vmul.f32 %v3106, %v3155
    %v3636 = vmul.f32 %v3107, %v3156
    %v3637 = vmul.f32 %v3108, %v3157
    %v3638 = vmul.f32 %v3109, %v3158
    %v3639 = vmul.f32 %v3110, %v3159
    %v3640 = vmul.f32 %v3111, %v3152
    %v3641 = vmul.f32 %v3112, %v3153
    %v3642 = vmul.f32 %v3113, %v3154
    %v3643 = vmul.f32 %v3114, %v3155
    %v3644 = vmul.f32 %v3115, %v3156
    %v3645 = vmul.f32 %v3116, %v3157
    %v3646 = vmul.f32 %v3117, %v3158
    %v3647 = vmul.f32 %v3118, %v3159
    %v3648 = vmul.f32 %v3119, %v3152
    %v3649 = vmul.f32 %v3120, %v3153
    %v3650 = vmul.f32 %v3121, %v3154
    %v3651 = vmul.f32 %v3122, %v3155
    %v3652 = vmul.f32 %v3123, %v3156
    %v3653 = vmul.f32 %v3124, %v3157
    %v3654 = vmul.f32 %v3125, %v3158
    %v3655 = vmul.f32 %v3126, %v3159
    %v3656 = vmul.f32 %v3127, %v3152
    %v3657 = vmul.f32 %v3128, %v3153
    %v3658 = vmul.f32 %v3129, %v3154
    %v3659 = vmul.f32 %v3130, %v3155
    %v3660 = vmul.f32 %v3131, %v3156
    %v3661 = vmul.f32 %v3132, %v3157
    %v3662 = vmul.f32 %v3133, %v3158
    %v3663 = vmul.f32 %v3134, %v3159
    %v3664 = vmul.f32 %v3135, %v3152
    %v3665 = vmul.f32 %v3136, %v3153
    %v3666 = vmul.f32 %v3137, %v3154
    %v3667 = vmul.f32 %v3138, %v3155
    %v3668 = vmul.f32 %v3139, %v3156
    %v3669 = vmul.f32 %v3140, %v3157
    %v3670 = vmul.f32 %v3141, %v3158
    %v3671 = vmul.f32 %v3142, %v3159
    %v3672 = vmul.f32 %v3143, %v3152
    %v3673 = vmul.f32 %v3144, %v3153
    %v3674 = vmul.f32 %v3145, %v3154
    %v3675 = vmul.f32 %v3146, %v3155
    %v3676 = vmul.f32 %v3147, %v3156
    %v3677 = vmul.f32 %v3148, %v3157
    %v3678 = vmul.f32 %v3149, %v3158
    %v3679 = vmul.f32 %v3150, %v3159
    %v3680 = vpack.c.bf16 %v3176, %v3168
    %v3681 = vpack.c.bf16 %v3177, %v3169
    %v3682 = vpack.c.bf16 %v3178, %v3170
    %v3683 = vpack.c.bf16 %v3179, %v3171
    %v3684 = vpack.c.bf16 %v3180, %v3172
    %v3685 = vpack.c.bf16 %v3181, %v3173
    %v3686 = vpack.c.bf16 %v3182, %v3174
    %v3687 = vpack.c.bf16 %v3183, %v3175
    %v3688 = vpack.c.bf16 %v3192, %v3184
    %v3689 = vpack.c.bf16 %v3193, %v3185
    %v3690 = vpack.c.bf16 %v3194, %v3186
    %v3691 = vpack.c.bf16 %v3195, %v3187
    %v3692 = vpack.c.bf16 %v3196, %v3188
    %v3693 = vpack.c.bf16 %v3197, %v3189
    %v3694 = vpack.c.bf16 %v3198, %v3190
    %v3695 = vpack.c.bf16 %v3199, %v3191
    %v3696 = vpack.c.bf16 %v3208, %v3200
    %v3697 = vpack.c.bf16 %v3209, %v3201
    %v3698 = vpack.c.bf16 %v3210, %v3202
    %v3699 = vpack.c.bf16 %v3211, %v3203
    %v3700 = vpack.c.bf16 %v3212, %v3204
    %v3701 = vpack.c.bf16 %v3213, %v3205
    %v3702 = vpack.c.bf16 %v3214, %v3206
    %v3703 = vpack.c.bf16 %v3215, %v3207
    %v3704 = vpack.c.bf16 %v3224, %v3216
    %v3705 = vpack.c.bf16 %v3225, %v3217
    %v3706 = vpack.c.bf16 %v3226, %v3218
    %v3707 = vpack.c.bf16 %v3227, %v3219
    %v3708 = vpack.c.bf16 %v3228, %v3220
    %v3709 = vpack.c.bf16 %v3229, %v3221
    %v3710 = vpack.c.bf16 %v3230, %v3222
    %v3711 = vpack.c.bf16 %v3231, %v3223
    %v3712 = vpack.c.bf16 %v3240, %v3232
    %v3713 = vpack.c.bf16 %v3241, %v3233
    %v3714 = vpack.c.bf16 %v3242, %v3234
    %v3715 = vpack.c.bf16 %v3243, %v3235
    %v3716 = vpack.c.bf16 %v3244, %v3236
    %v3717 = vpack.c.bf16 %v3245, %v3237
    %v3718 = vpack.c.bf16 %v3246, %v3238
    %v3719 = vpack.c.bf16 %v3247, %v3239
    %v3720 = vpack.c.bf16 %v3256, %v3248
    %v3721 = vpack.c.bf16 %v3257, %v3249
    %v3722 = vpack.c.bf16 %v3258, %v3250
    %v3723 = vpack.c.bf16 %v3259, %v3251
    %v3724 = vpack.c.bf16 %v3260, %v3252
    %v3725 = vpack.c.bf16 %v3261, %v3253
    %v3726 = vpack.c.bf16 %v3262, %v3254
    %v3727 = vpack.c.bf16 %v3263, %v3255
    %v3728 = vpack.c.bf16 %v3272, %v3264
    %v3729 = vpack.c.bf16 %v3273, %v3265
    %v3730 = vpack.c.bf16 %v3274, %v3266
    %v3731 = vpack.c.bf16 %v3275, %v3267
    %v3732 = vpack.c.bf16 %v3276, %v3268
    %v3733 = vpack.c.bf16 %v3277, %v3269
    %v3734 = vpack.c.bf16 %v3278, %v3270
    %v3735 = vpack.c.bf16 %v3279, %v3271
    %v3736 = vpack.c.bf16 %v3288, %v3280
    %v3737 = vpack.c.bf16 %v3289, %v3281
    %v3738 = vpack.c.bf16 %v3290, %v3282
    %v3739 = vpack.c.bf16 %v3291, %v3283
    %v3740 = vpack.c.bf16 %v3292, %v3284
    %v3741 = vpack.c.bf16 %v3293, %v3285
    %v3742 = vpack.c.bf16 %v3294, %v3286
    %v3743 = vpack.c.bf16 %v3295, %v3287
    %v3744 = vpack.c.bf16 %v3304, %v3296
    %v3745 = vpack.c.bf16 %v3305, %v3297
    %v3746 = vpack.c.bf16 %v3306, %v3298
    %v3747 = vpack.c.bf16 %v3307, %v3299
    %v3748 = vpack.c.bf16 %v3308, %v3300
    %v3749 = vpack.c.bf16 %v3309, %v3301
    %v3750 = vpack.c.bf16 %v3310, %v3302
    %v3751 = vpack.c.bf16 %v3311, %v3303
    %v3752 = vpack.c.bf16 %v3320, %v3312
    %v3753 = vpack.c.bf16 %v3321, %v3313
    %v3754 = vpack.c.bf16 %v3322, %v3314
    %v3755 = vpack.c.bf16 %v3323, %v3315
    %v3756 = vpack.c.bf16 %v3324, %v3316
    %v3757 = vpack.c.bf16 %v3325, %v3317
    %v3758 = vpack.c.bf16 %v3326, %v3318
    %v3759 = vpack.c.bf16 %v3327, %v3319
    %v3760 = vpack.c.bf16 %v3336, %v3328
    %v3761 = vpack.c.bf16 %v3337, %v3329
    %v3762 = vpack.c.bf16 %v3338, %v3330
    %v3763 = vpack.c.bf16 %v3339, %v3331
    %v3764 = vpack.c.bf16 %v3340, %v3332
    %v3765 = vpack.c.bf16 %v3341, %v3333
    %v3766 = vpack.c.bf16 %v3342, %v3334
    %v3767 = vpack.c.bf16 %v3343, %v3335
    %v3768 = vpack.c.bf16 %v3352, %v3344
    %v3769 = vpack.c.bf16 %v3353, %v3345
    %v3770 = vpack.c.bf16 %v3354, %v3346
    %v3771 = vpack.c.bf16 %v3355, %v3347
    %v3772 = vpack.c.bf16 %v3356, %v3348
    %v3773 = vpack.c.bf16 %v3357, %v3349
    %v3774 = vpack.c.bf16 %v3358, %v3350
    %v3775 = vpack.c.bf16 %v3359, %v3351
    %v3776 = vpack.c.bf16 %v3368, %v3360
    %v3777 = vpack.c.bf16 %v3369, %v3361
    %v3778 = vpack.c.bf16 %v3370, %v3362
    %v3779 = vpack.c.bf16 %v3371, %v3363
    %v3780 = vpack.c.bf16 %v3372, %v3364
    %v3781 = vpack.c.bf16 %v3373, %v3365
    %v3782 = vpack.c.bf16 %v3374, %v3366
    %v3783 = vpack.c.bf16 %v3375, %v3367
    %v3784 = vpack.c.bf16 %v3384, %v3376
    %v3785 = vpack.c.bf16 %v3385, %v3377
    %v3786 = vpack.c.bf16 %v3386, %v3378
    %v3787 = vpack.c.bf16 %v3387, %v3379
    %v3788 = vpack.c.bf16 %v3388, %v3380
    %v3789 = vpack.c.bf16 %v3389, %v3381
    %v3790 = vpack.c.bf16 %v3390, %v3382
    %v3791 = vpack.c.bf16 %v3391, %v3383
    %v3792 = vpack.c.bf16 %v3400, %v3392
    %v3793 = vpack.c.bf16 %v3401, %v3393
    %v3794 = vpack.c.bf16 %v3402, %v3394
    %v3795 = vpack.c.bf16 %v3403, %v3395
    %v3796 = vpack.c.bf16 %v3404, %v3396
    %v3797 = vpack.c.bf16 %v3405, %v3397
    %v3798 = vpack.c.bf16 %v3406, %v3398
    %v3799 = vpack.c.bf16 %v3407, %v3399
    %v3800 = vpack.c.bf16 %v3416, %v3408
    %v3801 = vpack.c.bf16 %v3417, %v3409
    %v3802 = vpack.c.bf16 %v3418, %v3410
    %v3803 = vpack.c.bf16 %v3419, %v3411
    %v3804 = vpack.c.bf16 %v3420, %v3412
    %v3805 = vpack.c.bf16 %v3421, %v3413
    %v3806 = vpack.c.bf16 %v3422, %v3414
    %v3807 = vpack.c.bf16 %v3423, %v3415
    %v3808 = vpack.c.bf16 %v3432, %v3424
    %v3809 = vpack.c.bf16 %v3433, %v3425
    %v3810 = vpack.c.bf16 %v3434, %v3426
    %v3811 = vpack.c.bf16 %v3435, %v3427
    %v3812 = vpack.c.bf16 %v3436, %v3428
    %v3813 = vpack.c.bf16 %v3437, %v3429
    %v3814 = vpack.c.bf16 %v3438, %v3430
    %v3815 = vpack.c.bf16 %v3439, %v3431
    %v3816 = vpack.c.bf16 %v3448, %v3440
    %v3817 = vpack.c.bf16 %v3449, %v3441
    %v3818 = vpack.c.bf16 %v3450, %v3442
    %v3819 = vpack.c.bf16 %v3451, %v3443
    %v3820 = vpack.c.bf16 %v3452, %v3444
    %v3821 = vpack.c.bf16 %v3453, %v3445
    %v3822 = vpack.c.bf16 %v3454, %v3446
    %v3823 = vpack.c.bf16 %v3455, %v3447
    %v3824 = vpack.c.bf16 %v3464, %v3456
    %v3825 = vpack.c.bf16 %v3465, %v3457
    %v3826 = vpack.c.bf16 %v3466, %v3458
    %v3827 = vpack.c.bf16 %v3467, %v3459
    %v3828 = vpack.c.bf16 %v3468, %v3460
    %v3829 = vpack.c.bf16 %v3469, %v3461
    %v3830 = vpack.c.bf16 %v3470, %v3462
    %v3831 = vpack.c.bf16 %v3471, %v3463
    %v3832 = vpack.c.bf16 %v3480, %v3472
    %v3833 = vpack.c.bf16 %v3481, %v3473
    %v3834 = vpack.c.bf16 %v3482, %v3474
    %v3835 = vpack.c.bf16 %v3483, %v3475
    %v3836 = vpack.c.bf16 %v3484, %v3476
    %v3837 = vpack.c.bf16 %v3485, %v3477
    %v3838 = vpack.c.bf16 %v3486, %v3478
    %v3839 = vpack.c.bf16 %v3487, %v3479
    %v3840 = vpack.c.bf16 %v3496, %v3488
    %v3841 = vpack.c.bf16 %v3497, %v3489
    %v3842 = vpack.c.bf16 %v3498, %v3490
    %v3843 = vpack.c.bf16 %v3499, %v3491
    %v3844 = vpack.c.bf16 %v3500, %v3492
    %v3845 = vpack.c.bf16 %v3501, %v3493
    %v3846 = vpack.c.bf16 %v3502, %v3494
    %v3847 = vpack.c.bf16 %v3503, %v3495
    %v3848 = vpack.c.bf16 %v3512, %v3504
    %v3849 = vpack.c.bf16 %v3513, %v3505
    %v3850 = vpack.c.bf16 %v3514, %v3506
    %v3851 = vpack.c.bf16 %v3515, %v3507
    %v3852 = vpack.c.bf16 %v3516, %v3508
    %v3853 = vpack.c.bf16 %v3517, %v3509
    %v3854 = vpack.c.bf16 %v3518, %v3510
    %v3855 = vpack.c.bf16 %v3519, %v3511
    %v3856 = vpack.c.bf16 %v3528, %v3520
    %v3857 = vpack.c.bf16 %v3529, %v3521
    %v3858 = vpack.c.bf16 %v3530, %v3522
    %v3859 = vpack.c.bf16 %v3531, %v3523
    %v3860 = vpack.c.bf16 %v3532, %v3524
    %v3861 = vpack.c.bf16 %v3533, %v3525
    %v3862 = vpack.c.bf16 %v3534, %v3526
    %v3863 = vpack.c.bf16 %v3535, %v3527
    %v3864 = vpack.c.bf16 %v3544, %v3536
    %v3865 = vpack.c.bf16 %v3545, %v3537
    %v3866 = vpack.c.bf16 %v3546, %v3538
    %v3867 = vpack.c.bf16 %v3547, %v3539
    %v3868 = vpack.c.bf16 %v3548, %v3540
    %v3869 = vpack.c.bf16 %v3549, %v3541
    %v3870 = vpack.c.bf16 %v3550, %v3542
    %v3871 = vpack.c.bf16 %v3551, %v3543
    %v3872 = vpack.c.bf16 %v3560, %v3552
    %v3873 = vpack.c.bf16 %v3561, %v3553
    %v3874 = vpack.c.bf16 %v3562, %v3554
    %v3875 = vpack.c.bf16 %v3563, %v3555
    %v3876 = vpack.c.bf16 %v3564, %v3556
    %v3877 = vpack.c.bf16 %v3565, %v3557
    %v3878 = vpack.c.bf16 %v3566, %v3558
    %v3879 = vpack.c.bf16 %v3567, %v3559
    %v3880 = vpack.c.bf16 %v3576, %v3568
    %v3881 = vpack.c.bf16 %v3577, %v3569
    %v3882 = vpack.c.bf16 %v3578, %v3570
    %v3883 = vpack.c.bf16 %v3579, %v3571
    %v3884 = vpack.c.bf16 %v3580, %v3572
    %v3885 = vpack.c.bf16 %v3581, %v3573
    %v3886 = vpack.c.bf16 %v3582, %v3574
    %v3887 = vpack.c.bf16 %v3583, %v3575
    %v3888 = vpack.c.bf16 %v3592, %v3584
    %v3889 = vpack.c.bf16 %v3593, %v3585
    %v3890 = vpack.c.bf16 %v3594, %v3586
    %v3891 = vpack.c.bf16 %v3595, %v3587
    %v3892 = vpack.c.bf16 %v3596, %v3588
    %v3893 = vpack.c.bf16 %v3597, %v3589
    %v3894 = vpack.c.bf16 %v3598, %v3590
    %v3895 = vpack.c.bf16 %v3599, %v3591
    %v3896 = vpack.c.bf16 %v3608, %v3600
    %v3897 = vpack.c.bf16 %v3609, %v3601
    %v3898 = vpack.c.bf16 %v3610, %v3602
    %v3899 = vpack.c.bf16 %v3611, %v3603
    %v3900 = vpack.c.bf16 %v3612, %v3604
    %v3901 = vpack.c.bf16 %v3613, %v3605
    %v3902 = vpack.c.bf16 %v3614, %v3606
    %v3903 = vpack.c.bf16 %v3615, %v3607
    %v3904 = vpack.c.bf16 %v3624, %v3616
    %v3905 = vpack.c.bf16 %v3625, %v3617
    %v3906 = vpack.c.bf16 %v3626, %v3618
    %v3907 = vpack.c.bf16 %v3627, %v3619
    %v3908 = vpack.c.bf16 %v3628, %v3620
    %v3909 = vpack.c.bf16 %v3629, %v3621
    %v3910 = vpack.c.bf16 %v3630, %v3622
    %v3911 = vpack.c.bf16 %v3631, %v3623
    %v3912 = vpack.c.bf16 %v3640, %v3632
    %v3913 = vpack.c.bf16 %v3641, %v3633
    %v3914 = vpack.c.bf16 %v3642, %v3634
    %v3915 = vpack.c.bf16 %v3643, %v3635
    %v3916 = vpack.c.bf16 %v3644, %v3636
    %v3917 = vpack.c.bf16 %v3645, %v3637
    %v3918 = vpack.c.bf16 %v3646, %v3638
    %v3919 = vpack.c.bf16 %v3647, %v3639
    %v3920 = vpack.c.bf16 %v3656, %v3648
    %v3921 = vpack.c.bf16 %v3657, %v3649
    %v3922 = vpack.c.bf16 %v3658, %v3650
    %v3923 = vpack.c.bf16 %v3659, %v3651
    %v3924 = vpack.c.bf16 %v3660, %v3652
    %v3925 = vpack.c.bf16 %v3661, %v3653
    %v3926 = vpack.c.bf16 %v3662, %v3654
    %v3927 = vpack.c.bf16 %v3663, %v3655
    %v3928 = vpack.c.bf16 %v3672, %v3664
    %v3929 = vpack.c.bf16 %v3673, %v3665
    %v3930 = vpack.c.bf16 %v3674, %v3666
    %v3931 = vpack.c.bf16 %v3675, %v3667
    %v3932 = vpack.c.bf16 %v3676, %v3668
    %v3933 = vpack.c.bf16 %v3677, %v3669
    %v3934 = vpack.c.bf16 %v3678, %v3670
    %v3935 = vpack.c.bf16 %v3679, %v3671
    %v3936 = vpack.c.bf16 %v1990, %v1990
    %v3937 = vpack.c.bf16 %v1991, %v1991
    %v3938 = vpack.c.bf16 %v1992, %v1992
    %v3939 = vpack.c.bf16 %v1993, %v1993
    %v3940 = vld [vmem:[%s10] sm:$0xff]
    %v3942 = vperm.slane %v3940, 0
    %v3943 = vperm.slane %v3940, 1
    %v3944 = vperm.slane %v3940, 2
    %v3945 = vperm.slane %v3940, 3
    %v3946 = vperm.slane %v3940, 4
    %v3947 = vperm.slane %v3940, 5
    %v3948 = vperm.slane %v3940, 6
    %v3949 = vperm.slane %v3940, 7
    %3958 = vmatpush.bf16.msra.mxu0 %v3736
    %3959 = vmatpush.bf16.msra.mxu0 %v3728
    %3960 = vmatpush.bf16.msra.mxu0 %v3720
    %3961 = vmatpush.bf16.msra.mxu0 %v3712
    %3962 = vmatpush.bf16.msra.mxu0 %v3704
    %3963 = vmatpush.bf16.msra.mxu0 %v3696
    %3964 = vmatpush.bf16.msra.mxu0 %v3688
    %3965 = vmatpush.bf16.msra.mxu0 %v3680
    %3966 = vmatmul.bf16.gmra.mxu0 %v3936
    %v3967 = vpop.f32.mrf.mxu0
    %v3968 = vadd.f32 %v3942, %v3967
    %v3969 = vpop.f32.mrf.mxu0
    %3970 = vdwg.mxu0
    %3971 = vmatpush.bf16.msra.mxu0 %v3800
    %3972 = vmatpush.bf16.msra.mxu0 %v3792
    %3973 = vmatpush.bf16.msra.mxu0 %v3784
    %3974 = vmatpush.bf16.msra.mxu0 %v3776
    %3975 = vmatpush.bf16.msra.mxu0 %v3768
    %3976 = vmatpush.bf16.msra.mxu0 %v3760
    %3977 = vmatpush.bf16.msra.mxu0 %v3752
    %3978 = vmatpush.bf16.msra.mxu0 %v3744
    %3979 = vmatmul.bf16.gmra.mxu0 %v3937
    %v3980 = vpop.f32.mrf.mxu0
    %v3981 = vadd.f32 %v3968, %v3980
    %v3982 = vpop.f32.mrf.mxu0
    %3983 = vdwg.mxu0
    %3984 = vmatpush.bf16.msra.mxu0 %v3864
    %3985 = vmatpush.bf16.msra.mxu0 %v3856
    %3986 = vmatpush.bf16.msra.mxu0 %v3848
    %3987 = vmatpush.bf16.msra.mxu0 %v3840
    %3988 = vmatpush.bf16.msra.mxu0 %v3832
    %3989 = vmatpush.bf16.msra.mxu0 %v3824
    %3990 = vmatpush.bf16.msra.mxu0 %v3816
    %3991 = vmatpush.bf16.msra.mxu0 %v3808
    %3992 = vmatmul.bf16.gmra.mxu0 %v3938
    %v3993 = vpop.f32.mrf.mxu0
    %v3994 = vadd.f32 %v3981, %v3993
    %v3995 = vpop.f32.mrf.mxu0
    %3996 = vdwg.mxu0
    %3997 = vmatpush.bf16.msra.mxu0 %v3928
    %3998 = vmatpush.bf16.msra.mxu0 %v3920
    %3999 = vmatpush.bf16.msra.mxu0 %v3912
    %4000 = vmatpush.bf16.msra.mxu0 %v3904
    %4001 = vmatpush.bf16.msra.mxu0 %v3896
    %4002 = vmatpush.bf16.msra.mxu0 %v3888
    %4003 = vmatpush.bf16.msra.mxu0 %v3880
    %4004 = vmatpush.bf16.msra.mxu0 %v3872
    %4005 = vmatmul.bf16.gmra.mxu0 %v3939
    %v4006 = vpop.f32.mrf.mxu0
    %v4007 = vadd.f32 %v3994, %v4006
    %v4008 = vpop.f32.mrf.mxu0
    %4009 = vdwg.mxu0
    %4010 = vmatpush.bf16.msra.mxu0 %v3737
    %4011 = vmatpush.bf16.msra.mxu0 %v3729
    %4012 = vmatpush.bf16.msra.mxu0 %v3721
    %4013 = vmatpush.bf16.msra.mxu0 %v3713
    %4014 = vmatpush.bf16.msra.mxu0 %v3705
    %4015 = vmatpush.bf16.msra.mxu0 %v3697
    %4016 = vmatpush.bf16.msra.mxu0 %v3689
    %4017 = vmatpush.bf16.msra.mxu0 %v3681
    %4018 = vmatmul.bf16.gmra.mxu0 %v3936
    %v4019 = vpop.f32.mrf.mxu0
    %v4020 = vadd.f32 %v3943, %v4019
    %v4021 = vpop.f32.mrf.mxu0
    %4022 = vdwg.mxu0
    %4023 = vmatpush.bf16.msra.mxu0 %v3801
    %4024 = vmatpush.bf16.msra.mxu0 %v3793
    %4025 = vmatpush.bf16.msra.mxu0 %v3785
    %4026 = vmatpush.bf16.msra.mxu0 %v3777
    %4027 = vmatpush.bf16.msra.mxu0 %v3769
    %4028 = vmatpush.bf16.msra.mxu0 %v3761
    %4029 = vmatpush.bf16.msra.mxu0 %v3753
    %4030 = vmatpush.bf16.msra.mxu0 %v3745
    %4031 = vmatmul.bf16.gmra.mxu0 %v3937
    %v4032 = vpop.f32.mrf.mxu0
    %v4033 = vadd.f32 %v4020, %v4032
    %v4034 = vpop.f32.mrf.mxu0
    %4035 = vdwg.mxu0
    %4036 = vmatpush.bf16.msra.mxu0 %v3865
    %4037 = vmatpush.bf16.msra.mxu0 %v3857
    %4038 = vmatpush.bf16.msra.mxu0 %v3849
    %4039 = vmatpush.bf16.msra.mxu0 %v3841
    %4040 = vmatpush.bf16.msra.mxu0 %v3833
    %4041 = vmatpush.bf16.msra.mxu0 %v3825
    %4042 = vmatpush.bf16.msra.mxu0 %v3817
    %4043 = vmatpush.bf16.msra.mxu0 %v3809
    %4044 = vmatmul.bf16.gmra.mxu0 %v3938
    %v4045 = vpop.f32.mrf.mxu0
    %v4046 = vadd.f32 %v4033, %v4045
    %v4047 = vpop.f32.mrf.mxu0
    %4048 = vdwg.mxu0
    %4049 = vmatpush.bf16.msra.mxu0 %v3929
    %4050 = vmatpush.bf16.msra.mxu0 %v3921
    %4051 = vmatpush.bf16.msra.mxu0 %v3913
    %4052 = vmatpush.bf16.msra.mxu0 %v3905
    %4053 = vmatpush.bf16.msra.mxu0 %v3897
    %4054 = vmatpush.bf16.msra.mxu0 %v3889
    %4055 = vmatpush.bf16.msra.mxu0 %v3881
    %4056 = vmatpush.bf16.msra.mxu0 %v3873
    %4057 = vmatmul.bf16.gmra.mxu0 %v3939
    %v4058 = vpop.f32.mrf.mxu0
    %v4059 = vadd.f32 %v4046, %v4058
    %v4060 = vpop.f32.mrf.mxu0
    %4061 = vdwg.mxu0
    %4062 = vmatpush.bf16.msra.mxu0 %v3738
    %4063 = vmatpush.bf16.msra.mxu0 %v3730
    %4064 = vmatpush.bf16.msra.mxu0 %v3722
    %4065 = vmatpush.bf16.msra.mxu0 %v3714
    %4066 = vmatpush.bf16.msra.mxu0 %v3706
    %4067 = vmatpush.bf16.msra.mxu0 %v3698
    %4068 = vmatpush.bf16.msra.mxu0 %v3690
    %4069 = vmatpush.bf16.msra.mxu0 %v3682
    %4070 = vmatmul.bf16.gmra.mxu0 %v3936
    %v4071 = vpop.f32.mrf.mxu0
    %v4072 = vadd.f32 %v3944, %v4071
    %v4073 = vpop.f32.mrf.mxu0
    %4074 = vdwg.mxu0
    %4075 = vmatpush.bf16.msra.mxu0 %v3802
    %4076 = vmatpush.bf16.msra.mxu0 %v3794
    %4077 = vmatpush.bf16.msra.mxu0 %v3786
    %4078 = vmatpush.bf16.msra.mxu0 %v3778
    %4079 = vmatpush.bf16.msra.mxu0 %v3770
    %4080 = vmatpush.bf16.msra.mxu0 %v3762
    %4081 = vmatpush.bf16.msra.mxu0 %v3754
    %4082 = vmatpush.bf16.msra.mxu0 %v3746
    %4083 = vmatmul.bf16.gmra.mxu0 %v3937
    %v4084 = vpop.f32.mrf.mxu0
    %v4085 = vadd.f32 %v4072, %v4084
    %v4086 = vpop.f32.mrf.mxu0
    %4087 = vdwg.mxu0
    %4088 = vmatpush.bf16.msra.mxu0 %v3866
    %4089 = vmatpush.bf16.msra.mxu0 %v3858
    %4090 = vmatpush.bf16.msra.mxu0 %v3850
    %4091 = vmatpush.bf16.msra.mxu0 %v3842
    %4092 = vmatpush.bf16.msra.mxu0 %v3834
    %4093 = vmatpush.bf16.msra.mxu0 %v3826
    %4094 = vmatpush.bf16.msra.mxu0 %v3818
    %4095 = vmatpush.bf16.msra.mxu0 %v3810
    %4096 = vmatmul.bf16.gmra.mxu0 %v3938
    %v4097 = vpop.f32.mrf.mxu0
    %v4098 = vadd.f32 %v4085, %v4097
    %v4099 = vpop.f32.mrf.mxu0
    %4100 = vdwg.mxu0
    %4101 = vmatpush.bf16.msra.mxu0 %v3930
    %4102 = vmatpush.bf16.msra.mxu0 %v3922
    %4103 = vmatpush.bf16.msra.mxu0 %v3914
    %4104 = vmatpush.bf16.msra.mxu0 %v3906
    %4105 = vmatpush.bf16.msra.mxu0 %v3898
    %4106 = vmatpush.bf16.msra.mxu0 %v3890
    %4107 = vmatpush.bf16.msra.mxu0 %v3882
    %4108 = vmatpush.bf16.msra.mxu0 %v3874
    %4109 = vmatmul.bf16.gmra.mxu0 %v3939
    %v4110 = vpop.f32.mrf.mxu0
    %v4111 = vadd.f32 %v4098, %v4110
    %v4112 = vpop.f32.mrf.mxu0
    %4113 = vdwg.mxu0
    %4114 = vmatpush.bf16.msra.mxu0 %v3739
    %4115 = vmatpush.bf16.msra.mxu0 %v3731
    %4116 = vmatpush.bf16.msra.mxu0 %v3723
    %4117 = vmatpush.bf16.msra.mxu0 %v3715
    %4118 = vmatpush.bf16.msra.mxu0 %v3707
    %4119 = vmatpush.bf16.msra.mxu0 %v3699
    %4120 = vmatpush.bf16.msra.mxu0 %v3691
    %4121 = vmatpush.bf16.msra.mxu0 %v3683
    %4122 = vmatmul.bf16.gmra.mxu0 %v3936
    %v4123 = vpop.f32.mrf.mxu0
    %v4124 = vadd.f32 %v3945, %v4123
    %v4125 = vpop.f32.mrf.mxu0
    %4126 = vdwg.mxu0
    %4127 = vmatpush.bf16.msra.mxu0 %v3803
    %4128 = vmatpush.bf16.msra.mxu0 %v3795
    %4129 = vmatpush.bf16.msra.mxu0 %v3787
    %4130 = vmatpush.bf16.msra.mxu0 %v3779
    %4131 = vmatpush.bf16.msra.mxu0 %v3771
    %4132 = vmatpush.bf16.msra.mxu0 %v3763
    %4133 = vmatpush.bf16.msra.mxu0 %v3755
    %4134 = vmatpush.bf16.msra.mxu0 %v3747
    %4135 = vmatmul.bf16.gmra.mxu0 %v3937
    %v4136 = vpop.f32.mrf.mxu0
    %v4137 = vadd.f32 %v4124, %v4136
    %v4138 = vpop.f32.mrf.mxu0
    %4139 = vdwg.mxu0
    %4140 = vmatpush.bf16.msra.mxu0 %v3867
    %4141 = vmatpush.bf16.msra.mxu0 %v3859
    %4142 = vmatpush.bf16.msra.mxu0 %v3851
    %4143 = vmatpush.bf16.msra.mxu0 %v3843
    %4144 = vmatpush.bf16.msra.mxu0 %v3835
    %4145 = vmatpush.bf16.msra.mxu0 %v3827
    %4146 = vmatpush.bf16.msra.mxu0 %v3819
    %4147 = vmatpush.bf16.msra.mxu0 %v3811
    %4148 = vmatmul.bf16.gmra.mxu0 %v3938
    %v4149 = vpop.f32.mrf.mxu0
    %v4150 = vadd.f32 %v4137, %v4149
    %v4151 = vpop.f32.mrf.mxu0
    %4152 = vdwg.mxu0
    %4153 = vmatpush.bf16.msra.mxu0 %v3931
    %4154 = vmatpush.bf16.msra.mxu0 %v3923
    %4155 = vmatpush.bf16.msra.mxu0 %v3915
    %4156 = vmatpush.bf16.msra.mxu0 %v3907
    %4157 = vmatpush.bf16.msra.mxu0 %v3899
    %4158 = vmatpush.bf16.msra.mxu0 %v3891
    %4159 = vmatpush.bf16.msra.mxu0 %v3883
    %4160 = vmatpush.bf16.msra.mxu0 %v3875
    %4161 = vmatmul.bf16.gmra.mxu0 %v3939
    %v4162 = vpop.f32.mrf.mxu0
    %v4163 = vadd.f32 %v4150, %v4162
    %v4164 = vpop.f32.mrf.mxu0
    %4165 = vdwg.mxu0
    %4166 = vmatpush.bf16.msra.mxu0 %v3740
    %4167 = vmatpush.bf16.msra.mxu0 %v3732
    %4168 = vmatpush.bf16.msra.mxu0 %v3724
    %4169 = vmatpush.bf16.msra.mxu0 %v3716
    %4170 = vmatpush.bf16.msra.mxu0 %v3708
    %4171 = vmatpush.bf16.msra.mxu0 %v3700
    %4172 = vmatpush.bf16.msra.mxu0 %v3692
    %4173 = vmatpush.bf16.msra.mxu0 %v3684
    %4174 = vmatmul.bf16.gmra.mxu0 %v3936
    %v4175 = vpop.f32.mrf.mxu0
    %v4176 = vadd.f32 %v3946, %v4175
    %v4177 = vpop.f32.mrf.mxu0
    %4178 = vdwg.mxu0
    %4179 = vmatpush.bf16.msra.mxu0 %v3804
    %4180 = vmatpush.bf16.msra.mxu0 %v3796
    %4181 = vmatpush.bf16.msra.mxu0 %v3788
    %4182 = vmatpush.bf16.msra.mxu0 %v3780
    %4183 = vmatpush.bf16.msra.mxu0 %v3772
    %4184 = vmatpush.bf16.msra.mxu0 %v3764
    %4185 = vmatpush.bf16.msra.mxu0 %v3756
    %4186 = vmatpush.bf16.msra.mxu0 %v3748
    %4187 = vmatmul.bf16.gmra.mxu0 %v3937
    %v4188 = vpop.f32.mrf.mxu0
    %v4189 = vadd.f32 %v4176, %v4188
    %v4190 = vpop.f32.mrf.mxu0
    %4191 = vdwg.mxu0
    %4192 = vmatpush.bf16.msra.mxu0 %v3868
    %4193 = vmatpush.bf16.msra.mxu0 %v3860
    %4194 = vmatpush.bf16.msra.mxu0 %v3852
    %4195 = vmatpush.bf16.msra.mxu0 %v3844
    %4196 = vmatpush.bf16.msra.mxu0 %v3836
    %4197 = vmatpush.bf16.msra.mxu0 %v3828
    %4198 = vmatpush.bf16.msra.mxu0 %v3820
    %4199 = vmatpush.bf16.msra.mxu0 %v3812
    %4200 = vmatmul.bf16.gmra.mxu0 %v3938
    %v4201 = vpop.f32.mrf.mxu0
    %v4202 = vadd.f32 %v4189, %v4201
    %v4203 = vpop.f32.mrf.mxu0
    %4204 = vdwg.mxu0
    %4205 = vmatpush.bf16.msra.mxu0 %v3932
    %4206 = vmatpush.bf16.msra.mxu0 %v3924
    %4207 = vmatpush.bf16.msra.mxu0 %v3916
    %4208 = vmatpush.bf16.msra.mxu0 %v3908
    %4209 = vmatpush.bf16.msra.mxu0 %v3900
    %4210 = vmatpush.bf16.msra.mxu0 %v3892
    %4211 = vmatpush.bf16.msra.mxu0 %v3884
    %4212 = vmatpush.bf16.msra.mxu0 %v3876
    %4213 = vmatmul.bf16.gmra.mxu0 %v3939
    %v4214 = vpop.f32.mrf.mxu0
    %v4215 = vadd.f32 %v4202, %v4214
    %v4216 = vpop.f32.mrf.mxu0
    %4217 = vdwg.mxu0
    %4218 = vmatpush.bf16.msra.mxu0 %v3741
    %4219 = vmatpush.bf16.msra.mxu0 %v3733
    %4220 = vmatpush.bf16.msra.mxu0 %v3725
    %4221 = vmatpush.bf16.msra.mxu0 %v3717
    %4222 = vmatpush.bf16.msra.mxu0 %v3709
    %4223 = vmatpush.bf16.msra.mxu0 %v3701
    %4224 = vmatpush.bf16.msra.mxu0 %v3693
    %4225 = vmatpush.bf16.msra.mxu0 %v3685
    %4226 = vmatmul.bf16.gmra.mxu0 %v3936
    %v4227 = vpop.f32.mrf.mxu0
    %v4228 = vadd.f32 %v3947, %v4227
    %v4229 = vpop.f32.mrf.mxu0
    %4230 = vdwg.mxu0
    %4231 = vmatpush.bf16.msra.mxu0 %v3805
    %4232 = vmatpush.bf16.msra.mxu0 %v3797
    %4233 = vmatpush.bf16.msra.mxu0 %v3789
    %4234 = vmatpush.bf16.msra.mxu0 %v3781
    %4235 = vmatpush.bf16.msra.mxu0 %v3773
    %4236 = vmatpush.bf16.msra.mxu0 %v3765
    %4237 = vmatpush.bf16.msra.mxu0 %v3757
    %4238 = vmatpush.bf16.msra.mxu0 %v3749
    %4239 = vmatmul.bf16.gmra.mxu0 %v3937
    %v4240 = vpop.f32.mrf.mxu0
    %v4241 = vadd.f32 %v4228, %v4240
    %v4242 = vpop.f32.mrf.mxu0
    %4243 = vdwg.mxu0
    %4244 = vmatpush.bf16.msra.mxu0 %v3869
    %4245 = vmatpush.bf16.msra.mxu0 %v3861
    %4246 = vmatpush.bf16.msra.mxu0 %v3853
    %4247 = vmatpush.bf16.msra.mxu0 %v3845
    %4248 = vmatpush.bf16.msra.mxu0 %v3837
    %4249 = vmatpush.bf16.msra.mxu0 %v3829
    %4250 = vmatpush.bf16.msra.mxu0 %v3821
    %4251 = vmatpush.bf16.msra.mxu0 %v3813
    %4252 = vmatmul.bf16.gmra.mxu0 %v3938
    %v4253 = vpop.f32.mrf.mxu0
    %v4254 = vadd.f32 %v4241, %v4253
    %v4255 = vpop.f32.mrf.mxu0
    %4256 = vdwg.mxu0
    %4257 = vmatpush.bf16.msra.mxu0 %v3933
    %4258 = vmatpush.bf16.msra.mxu0 %v3925
    %4259 = vmatpush.bf16.msra.mxu0 %v3917
    %4260 = vmatpush.bf16.msra.mxu0 %v3909
    %4261 = vmatpush.bf16.msra.mxu0 %v3901
    %4262 = vmatpush.bf16.msra.mxu0 %v3893
    %4263 = vmatpush.bf16.msra.mxu0 %v3885
    %4264 = vmatpush.bf16.msra.mxu0 %v3877
    %4265 = vmatmul.bf16.gmra.mxu0 %v3939
    %v4266 = vpop.f32.mrf.mxu0
    %v4267 = vadd.f32 %v4254, %v4266
    %v4268 = vpop.f32.mrf.mxu0
    %4269 = vdwg.mxu0
    %4270 = vmatpush.bf16.msra.mxu0 %v3742
    %4271 = vmatpush.bf16.msra.mxu0 %v3734
    %4272 = vmatpush.bf16.msra.mxu0 %v3726
    %4273 = vmatpush.bf16.msra.mxu0 %v3718
    %4274 = vmatpush.bf16.msra.mxu0 %v3710
    %4275 = vmatpush.bf16.msra.mxu0 %v3702
    %4276 = vmatpush.bf16.msra.mxu0 %v3694
    %4277 = vmatpush.bf16.msra.mxu0 %v3686
    %4278 = vmatmul.bf16.gmra.mxu0 %v3936
    %v4279 = vpop.f32.mrf.mxu0
    %v4280 = vadd.f32 %v3948, %v4279
    %v4281 = vpop.f32.mrf.mxu0
    %4282 = vdwg.mxu0
    %4283 = vmatpush.bf16.msra.mxu0 %v3806
    %4284 = vmatpush.bf16.msra.mxu0 %v3798
    %4285 = vmatpush.bf16.msra.mxu0 %v3790
    %4286 = vmatpush.bf16.msra.mxu0 %v3782
    %4287 = vmatpush.bf16.msra.mxu0 %v3774
    %4288 = vmatpush.bf16.msra.mxu0 %v3766
    %4289 = vmatpush.bf16.msra.mxu0 %v3758
    %4290 = vmatpush.bf16.msra.mxu0 %v3750
    %4291 = vmatmul.bf16.gmra.mxu0 %v3937
    %v4292 = vpop.f32.mrf.mxu0
    %v4293 = vadd.f32 %v4280, %v4292
    %v4294 = vpop.f32.mrf.mxu0
    %4295 = vdwg.mxu0
    %4296 = vmatpush.bf16.msra.mxu0 %v3870
    %4297 = vmatpush.bf16.msra.mxu0 %v3862
    %4298 = vmatpush.bf16.msra.mxu0 %v3854
    %4299 = vmatpush.bf16.msra.mxu0 %v3846
    %4300 = vmatpush.bf16.msra.mxu0 %v3838
    %4301 = vmatpush.bf16.msra.mxu0 %v3830
    %4302 = vmatpush.bf16.msra.mxu0 %v3822
    %4303 = vmatpush.bf16.msra.mxu0 %v3814
    %4304 = vmatmul.bf16.gmra.mxu0 %v3938
    %v4305 = vpop.f32.mrf.mxu0
    %v4306 = vadd.f32 %v4293, %v4305
    %v4307 = vpop.f32.mrf.mxu0
    %4308 = vdwg.mxu0
    %4309 = vmatpush.bf16.msra.mxu0 %v3934
    %4310 = vmatpush.bf16.msra.mxu0 %v3926
    %4311 = vmatpush.bf16.msra.mxu0 %v3918
    %4312 = vmatpush.bf16.msra.mxu0 %v3910
    %4313 = vmatpush.bf16.msra.mxu0 %v3902
    %4314 = vmatpush.bf16.msra.mxu0 %v3894
    %4315 = vmatpush.bf16.msra.mxu0 %v3886
    %4316 = vmatpush.bf16.msra.mxu0 %v3878
    %4317 = vmatmul.bf16.gmra.mxu0 %v3939
    %v4318 = vpop.f32.mrf.mxu0
    %v4319 = vadd.f32 %v4306, %v4318
    %v4320 = vpop.f32.mrf.mxu0
    %4321 = vdwg.mxu0
    %4322 = vmatpush.bf16.msra.mxu0 %v3743
    %4323 = vmatpush.bf16.msra.mxu0 %v3735
    %4324 = vmatpush.bf16.msra.mxu0 %v3727
    %4325 = vmatpush.bf16.msra.mxu0 %v3719
    %4326 = vmatpush.bf16.msra.mxu0 %v3711
    %4327 = vmatpush.bf16.msra.mxu0 %v3703
    %4328 = vmatpush.bf16.msra.mxu0 %v3695
    %4329 = vmatpush.bf16.msra.mxu0 %v3687
    %4330 = vmatmul.bf16.gmra.mxu0 %v3936
    %v4331 = vpop.f32.mrf.mxu0
    %v4332 = vadd.f32 %v3949, %v4331
    %v4333 = vpop.f32.mrf.mxu0
    %4334 = vdwg.mxu0
    %4335 = vmatpush.bf16.msra.mxu0 %v3807
    %4336 = vmatpush.bf16.msra.mxu0 %v3799
    %4337 = vmatpush.bf16.msra.mxu0 %v3791
    %4338 = vmatpush.bf16.msra.mxu0 %v3783
    %4339 = vmatpush.bf16.msra.mxu0 %v3775
    %4340 = vmatpush.bf16.msra.mxu0 %v3767
    %4341 = vmatpush.bf16.msra.mxu0 %v3759
    %4342 = vmatpush.bf16.msra.mxu0 %v3751
    %4343 = vmatmul.bf16.gmra.mxu0 %v3937
    %v4344 = vpop.f32.mrf.mxu0
    %v4345 = vadd.f32 %v4332, %v4344
    %v4346 = vpop.f32.mrf.mxu0
    %4347 = vdwg.mxu0
    %4348 = vmatpush.bf16.msra.mxu0 %v3871
    %4349 = vmatpush.bf16.msra.mxu0 %v3863
    %4350 = vmatpush.bf16.msra.mxu0 %v3855
    %4351 = vmatpush.bf16.msra.mxu0 %v3847
    %4352 = vmatpush.bf16.msra.mxu0 %v3839
    %4353 = vmatpush.bf16.msra.mxu0 %v3831
    %4354 = vmatpush.bf16.msra.mxu0 %v3823
    %4355 = vmatpush.bf16.msra.mxu0 %v3815
    %4356 = vmatmul.bf16.gmra.mxu0 %v3938
    %v4357 = vpop.f32.mrf.mxu0
    %v4358 = vadd.f32 %v4345, %v4357
    %v4359 = vpop.f32.mrf.mxu0
    %4360 = vdwg.mxu0
    %4361 = vmatpush.bf16.msra.mxu0 %v3935
    %4362 = vmatpush.bf16.msra.mxu0 %v3927
    %4363 = vmatpush.bf16.msra.mxu0 %v3919
    %4364 = vmatpush.bf16.msra.mxu0 %v3911
    %4365 = vmatpush.bf16.msra.mxu0 %v3903
    %4366 = vmatpush.bf16.msra.mxu0 %v3895
    %4367 = vmatpush.bf16.msra.mxu0 %v3887
    %4368 = vmatpush.bf16.msra.mxu0 %v3879
    %4369 = vmatmul.bf16.gmra.mxu0 %v3939
    %v4370 = vpop.f32.mrf.mxu0
    %v4371 = vadd.f32 %v4358, %v4370
    %v4372 = vpop.f32.mrf.mxu0
    %4373 = vdwg.mxu0
    %v4374 = vld [vmem:[%s11] sm:$0xff]
    %v4375 = vld [vmem:[%s12] sm:$0xff]
    %v4376 = vrot.slane %v4007, 4
    %v4377 = vadd.f32 %v4007, %v4376
    %v4378 = vrot.slane %v4377, 2
    %v4379 = vadd.f32 %v4377, %v4378
    %v4380 = vrot.slane %v4379, 1
    %v4381 = vadd.f32 %v4379, %v4380
    %v4382 = vrot.slane %v4059, 4
    %v4383 = vadd.f32 %v4059, %v4382
    %v4384 = vrot.slane %v4383, 2
    %v4385 = vadd.f32 %v4383, %v4384
    %v4386 = vrot.slane %v4385, 1
    %v4387 = vadd.f32 %v4385, %v4386
    %v4388 = vrot.slane %v4111, 4
    %v4389 = vadd.f32 %v4111, %v4388
    %v4390 = vrot.slane %v4389, 2
    %v4391 = vadd.f32 %v4389, %v4390
    %v4392 = vrot.slane %v4391, 1
    %v4393 = vadd.f32 %v4391, %v4392
    %v4394 = vrot.slane %v4163, 4
    %v4395 = vadd.f32 %v4163, %v4394
    %v4396 = vrot.slane %v4395, 2
    %v4397 = vadd.f32 %v4395, %v4396
    %v4398 = vrot.slane %v4397, 1
    %v4399 = vadd.f32 %v4397, %v4398
    %v4400 = vrot.slane %v4215, 4
    %v4401 = vadd.f32 %v4215, %v4400
    %v4402 = vrot.slane %v4401, 2
    %v4403 = vadd.f32 %v4401, %v4402
    %v4404 = vrot.slane %v4403, 1
    %v4405 = vadd.f32 %v4403, %v4404
    %v4406 = vrot.slane %v4267, 4
    %v4407 = vadd.f32 %v4267, %v4406
    %v4408 = vrot.slane %v4407, 2
    %v4409 = vadd.f32 %v4407, %v4408
    %v4410 = vrot.slane %v4409, 1
    %v4411 = vadd.f32 %v4409, %v4410
    %v4412 = vrot.slane %v4319, 4
    %v4413 = vadd.f32 %v4319, %v4412
    %v4414 = vrot.slane %v4413, 2
    %v4415 = vadd.f32 %v4413, %v4414
    %v4416 = vrot.slane %v4415, 1
    %v4417 = vadd.f32 %v4415, %v4416
    %v4418 = vrot.slane %v4371, 4
    %v4419 = vadd.f32 %v4371, %v4418
    %v4420 = vrot.slane %v4419, 2
    %v4421 = vadd.f32 %v4419, %v4420
    %v4422 = vrot.slane %v4421, 1
    %v4423 = vadd.f32 %v4421, %v4422
    %v4424 = vmul.f32 %v4381, %v1851
    %v4425 = vmul.f32 %v4387, %v1851
    %v4426 = vmul.f32 %v4393, %v1851
    %v4427 = vmul.f32 %v4399, %v1851
    %v4428 = vmul.f32 %v4405, %v1851
    %v4429 = vmul.f32 %v4411, %v1851
    %v4430 = vmul.f32 %v4417, %v1851
    %v4431 = vmul.f32 %v4423, %v1851
    %v4432 = vmul.f32 %v4007, %v4007
    %v4433 = vmul.f32 %v4059, %v4059
    %v4434 = vmul.f32 %v4111, %v4111
    %v4435 = vmul.f32 %v4163, %v4163
    %v4436 = vmul.f32 %v4215, %v4215
    %v4437 = vmul.f32 %v4267, %v4267
    %v4438 = vmul.f32 %v4319, %v4319
    %v4439 = vmul.f32 %v4371, %v4371
    %v4440 = vrot.slane %v4432, 4
    %v4441 = vadd.f32 %v4432, %v4440
    %v4442 = vrot.slane %v4441, 2
    %v4443 = vadd.f32 %v4441, %v4442
    %v4444 = vrot.slane %v4443, 1
    %v4445 = vadd.f32 %v4443, %v4444
    %v4446 = vrot.slane %v4433, 4
    %v4447 = vadd.f32 %v4433, %v4446
    %v4448 = vrot.slane %v4447, 2
    %v4449 = vadd.f32 %v4447, %v4448
    %v4450 = vrot.slane %v4449, 1
    %v4451 = vadd.f32 %v4449, %v4450
    %v4452 = vrot.slane %v4434, 4
    %v4453 = vadd.f32 %v4434, %v4452
    %v4454 = vrot.slane %v4453, 2
    %v4455 = vadd.f32 %v4453, %v4454
    %v4456 = vrot.slane %v4455, 1
    %v4457 = vadd.f32 %v4455, %v4456
    %v4458 = vrot.slane %v4435, 4
    %v4459 = vadd.f32 %v4435, %v4458
    %v4460 = vrot.slane %v4459, 2
    %v4461 = vadd.f32 %v4459, %v4460
    %v4462 = vrot.slane %v4461, 1
    %v4463 = vadd.f32 %v4461, %v4462
    %v4464 = vrot.slane %v4436, 4
    %v4465 = vadd.f32 %v4436, %v4464
    %v4466 = vrot.slane %v4465, 2
    %v4467 = vadd.f32 %v4465, %v4466
    %v4468 = vrot.slane %v4467, 1
    %v4469 = vadd.f32 %v4467, %v4468
    %v4470 = vrot.slane %v4437, 4
    %v4471 = vadd.f32 %v4437, %v4470
    %v4472 = vrot.slane %v4471, 2
    %v4473 = vadd.f32 %v4471, %v4472
    %v4474 = vrot.slane %v4473, 1
    %v4475 = vadd.f32 %v4473, %v4474
    %v4476 = vrot.slane %v4438, 4
    %v4477 = vadd.f32 %v4438, %v4476
    %v4478 = vrot.slane %v4477, 2
    %v4479 = vadd.f32 %v4477, %v4478
    %v4480 = vrot.slane %v4479, 1
    %v4481 = vadd.f32 %v4479, %v4480
    %v4482 = vrot.slane %v4439, 4
    %v4483 = vadd.f32 %v4439, %v4482
    %v4484 = vrot.slane %v4483, 2
    %v4485 = vadd.f32 %v4483, %v4484
    %v4486 = vrot.slane %v4485, 1
    %v4487 = vadd.f32 %v4485, %v4486
    %v4488 = vmul.f32 %v4445, %v1851
    %v4489 = vmul.f32 %v4451, %v1851
    %v4490 = vmul.f32 %v4457, %v1851
    %v4491 = vmul.f32 %v4463, %v1851
    %v4492 = vmul.f32 %v4469, %v1851
    %v4493 = vmul.f32 %v4475, %v1851
    %v4494 = vmul.f32 %v4481, %v1851
    %v4495 = vmul.f32 %v4487, %v1851
    %v4496 = vmul.f32 %v4424, %v4424
    %v4497 = vmul.f32 %v4425, %v4425
    %v4498 = vmul.f32 %v4426, %v4426
    %v4499 = vmul.f32 %v4427, %v4427
    %v4500 = vmul.f32 %v4428, %v4428
    %v4501 = vmul.f32 %v4429, %v4429
    %v4502 = vmul.f32 %v4430, %v4430
    %v4503 = vmul.f32 %v4431, %v4431
    %v4504 = vsub.f32 %v4488, %v4496
    %v4505 = vsub.f32 %v4489, %v4497
    %v4506 = vsub.f32 %v4490, %v4498
    %v4507 = vsub.f32 %v4491, %v4499
    %v4508 = vsub.f32 %v4492, %v4500
    %v4509 = vsub.f32 %v4493, %v4501
    %v4510 = vsub.f32 %v4494, %v4502
    %v4511 = vsub.f32 %v4495, %v4503
    %v4512 = vmax.f32 %v4504, 0.0
    %v4513 = vmax.f32 %v4505, 0.0
    %v4514 = vmax.f32 %v4506, 0.0
    %v4515 = vmax.f32 %v4507, 0.0
    %v4516 = vmax.f32 %v4508, 0.0
    %v4517 = vmax.f32 %v4509, 0.0
    %v4518 = vmax.f32 %v4510, 0.0
    %v4519 = vmax.f32 %v4511, 0.0
    %v4520 = vadd.f32 %v4512, 0.8
    %v4521 = vadd.f32 %v4513, 0.8
    %v4522 = vadd.f32 %v4514, 0.8
    %v4523 = vadd.f32 %v4515, 0.8
    %v4524 = vadd.f32 %v4516, 0.8
    %v4525 = vadd.f32 %v4517, 0.8
    %v4526 = vadd.f32 %v4518, 0.8
    %v4527 = vadd.f32 %v4519, 0.8
    %v4528 = vrsqrt.pop %v4520
    %v4529 = vmul.f32 %v4528, %v4520
    %v4530 = vmul.f32 %v4529, %v4528
    %v4531 = vmul.f32 0.5, %v4530
    %v4532 = vsub.f32 1.5, %v4531
    %v4533 = vmul.f32 %v4528, %v4532
    %vm4534 = vweird.f32 %v4520
    %vm4535 = vweird.f32 %v4528
    %vm4536 = vmor %vm4534, %vm4535
    %v4537 = vsel %vm4536, %v4528, %v4533
    %v4538 = vrsqrt.pop %v4521
    %v4539 = vmul.f32 %v4538, %v4521
    %v4540 = vmul.f32 %v4539, %v4538
    %v4541 = vmul.f32 0.5, %v4540
    %v4542 = vsub.f32 1.5, %v4541
    %v4543 = vmul.f32 %v4538, %v4542
    %vm4544 = vweird.f32 %v4521
    %vm4545 = vweird.f32 %v4538
    %vm4546 = vmor %vm4544, %vm4545
    %v4547 = vsel %vm4546, %v4538, %v4543
    %v4548 = vrsqrt.pop %v4522
    %v4549 = vmul.f32 %v4548, %v4522
    %v4550 = vmul.f32 %v4549, %v4548
    %v4551 = vmul.f32 0.5, %v4550
    %v4552 = vsub.f32 1.5, %v4551
    %v4553 = vmul.f32 %v4548, %v4552
    %vm4554 = vweird.f32 %v4522
    %vm4555 = vweird.f32 %v4548
    %vm4556 = vmor %vm4554, %vm4555
    %v4557 = vsel %vm4556, %v4548, %v4553
    %v4558 = vrsqrt.pop %v4523
    %v4559 = vmul.f32 %v4558, %v4523
    %v4560 = vmul.f32 %v4559, %v4558
    %v4561 = vmul.f32 0.5, %v4560
    %v4562 = vsub.f32 1.5, %v4561
    %v4563 = vmul.f32 %v4558, %v4562
    %vm4564 = vweird.f32 %v4523
    %vm4565 = vweird.f32 %v4558
    %vm4566 = vmor %vm4564, %vm4565
    %v4567 = vsel %vm4566, %v4558, %v4563
    %v4568 = vrsqrt.pop %v4524
    %v4569 = vmul.f32 %v4568, %v4524
    %v4570 = vmul.f32 %v4569, %v4568
    %v4571 = vmul.f32 0.5, %v4570
    %v4572 = vsub.f32 1.5, %v4571
    %v4573 = vmul.f32 %v4568, %v4572
    %vm4574 = vweird.f32 %v4524
    %vm4575 = vweird.f32 %v4568
    %vm4576 = vmor %vm4574, %vm4575
    %v4577 = vsel %vm4576, %v4568, %v4573
    %v4578 = vrsqrt.pop %v4525
    %v4579 = vmul.f32 %v4578, %v4525
    %v4580 = vmul.f32 %v4579, %v4578
    %v4581 = vmul.f32 0.5, %v4580
    %v4582 = vsub.f32 1.5, %v4581
    %v4583 = vmul.f32 %v4578, %v4582
    %vm4584 = vweird.f32 %v4525
    %vm4585 = vweird.f32 %v4578
    %vm4586 = vmor %vm4584, %vm4585
    %v4587 = vsel %vm4586, %v4578, %v4583
    %v4588 = vrsqrt.pop %v4526
    %v4589 = vmul.f32 %v4588, %v4526
    %v4590 = vmul.f32 %v4589, %v4588
    %v4591 = vmul.f32 0.5, %v4590
    %v4592 = vsub.f32 1.5, %v4591
    %v4593 = vmul.f32 %v4588, %v4592
    %vm4594 = vweird.f32 %v4526
    %vm4595 = vweird.f32 %v4588
    %vm4596 = vmor %vm4594, %vm4595
    %v4597 = vsel %vm4596, %v4588, %v4593
    %v4598 = vrsqrt.pop %v4527
    %v4599 = vmul.f32 %v4598, %v4527
    %v4600 = vmul.f32 %v4599, %v4598
    %v4601 = vmul.f32 0.5, %v4600
    %v4602 = vsub.f32 1.5, %v4601
    %v4603 = vmul.f32 %v4598, %v4602
    %vm4604 = vweird.f32 %v4527
    %vm4605 = vweird.f32 %v4598
    %vm4606 = vmor %vm4604, %vm4605
    %v4607 = vsel %vm4606, %v4598, %v4603
    %v4609 = vperm.slane %v4374, 0
    %v4610 = vperm.slane %v4374, 1
    %v4611 = vperm.slane %v4374, 2
    %v4612 = vperm.slane %v4374, 3
    %v4613 = vperm.slane %v4374, 4
    %v4614 = vperm.slane %v4374, 5
    %v4615 = vperm.slane %v4374, 6
    %v4616 = vperm.slane %v4374, 7
    %v4625 = vmul.f32 %v4537, %v4609
    %v4626 = vmul.f32 %v4547, %v4610
    %v4627 = vmul.f32 %v4557, %v4611
    %v4628 = vmul.f32 %v4567, %v4612
    %v4629 = vmul.f32 %v4577, %v4613
    %v4630 = vmul.f32 %v4587, %v4614
    %v4631 = vmul.f32 %v4597, %v4615
    %v4632 = vmul.f32 %v4607, %v4616
    %v4633 = vsub.f32 %v4007, %v4424
    %v4634 = vsub.f32 %v4059, %v4425
    %v4635 = vsub.f32 %v4111, %v4426
    %v4636 = vsub.f32 %v4163, %v4427
    %v4637 = vsub.f32 %v4215, %v4428
    %v4638 = vsub.f32 %v4267, %v4429
    %v4639 = vsub.f32 %v4319, %v4430
    %v4640 = vsub.f32 %v4371, %v4431
    %v4641 = vperm.slane %v4625, 0
    %v4642 = vperm.slane %v4626, 0
    %v4643 = vperm.slane %v4627, 0
    %v4644 = vperm.slane %v4628, 0
    %v4645 = vperm.slane %v4629, 0
    %v4646 = vperm.slane %v4630, 0
    %v4647 = vperm.slane %v4631, 0
    %v4648 = vperm.slane %v4632, 0
    %v4649 = vmul.f32 %v4633, %v4641
    %v4650 = vmul.f32 %v4634, %v4642
    %v4651 = vmul.f32 %v4635, %v4643
    %v4652 = vmul.f32 %v4636, %v4644
    %v4653 = vmul.f32 %v4637, %v4645
    %v4654 = vmul.f32 %v4638, %v4646
    %v4655 = vmul.f32 %v4639, %v4647
    %v4656 = vmul.f32 %v4640, %v4648
    %v4658 = vperm.slane %v4375, 0
    %v4659 = vperm.slane %v4375, 1
    %v4660 = vperm.slane %v4375, 2
    %v4661 = vperm.slane %v4375, 3
    %v4662 = vperm.slane %v4375, 4
    %v4663 = vperm.slane %v4375, 5
    %v4664 = vperm.slane %v4375, 6
    %v4665 = vperm.slane %v4375, 7
    %v4674 = vadd.f32 %v4649, %v4658
    %v4675 = vadd.f32 %v4650, %v4659
    %v4676 = vadd.f32 %v4651, %v4660
    %v4677 = vadd.f32 %v4652, %v4661
    %v4678 = vadd.f32 %v4653, %v4662
    %v4679 = vadd.f32 %v4654, %v4663
    %v4680 = vadd.f32 %v4655, %v4664
    %v4681 = vadd.f32 %v4656, %v4665
    %vm4682 = vcmp.gt.f32.partialorder %v4674, 0.0
    %vm4683 = vcmp.gt.f32.partialorder %v4675, 0.0
    %vm4684 = vcmp.gt.f32.partialorder %v4676, 0.0
    %vm4685 = vcmp.gt.f32.partialorder %v4677, 0.0
    %vm4686 = vcmp.gt.f32.partialorder %v4678, 0.0
    %vm4687 = vcmp.gt.f32.partialorder %v4679, 0.0
    %vm4688 = vcmp.gt.f32.partialorder %v4680, 0.0
    %vm4689 = vcmp.gt.f32.partialorder %v4681, 0.0
    %v4690 = vmul.f32 %v4674, 0.2
    %v4691 = vmul.f32 %v4675, 0.2
    %v4692 = vmul.f32 %v4676, 0.2
    %v4693 = vmul.f32 %v4677, 0.2
    %v4694 = vmul.f32 %v4678, 0.2
    %v4695 = vmul.f32 %v4679, 0.2
    %v4696 = vmul.f32 %v4680, 0.2
    %v4697 = vmul.f32 %v4681, 0.2
    %v4698 = vsel %vm4682, %v4674, %v4690
    %v4699 = vsel %vm4683, %v4675, %v4691
    %v4700 = vsel %vm4684, %v4676, %v4692
    %v4701 = vsel %vm4685, %v4677, %v4693
    %v4702 = vsel %vm4686, %v4678, %v4694
    %v4703 = vsel %vm4687, %v4679, %v4695
    %v4704 = vsel %vm4688, %v4680, %v4696
    %v4705 = vsel %vm4689, %v4681, %v4697
    %s4706 = smul.u32 2, 128
    %s4707 = smul.u32 %s4706, 7
    %s4708 = sshll.u32 %s4707, 4
    %4709 = dma.done %s480, %s4708
    %v4710 = vld [vmem:[#allocation5] sm:$0xff]
    %v4711 = vld [vmem:[#allocation5 + $0x8] sm:$0xff]
    %v4712 = vld [vmem:[#allocation5 + $0x10] sm:$0xff]
    %v4713 = vld [vmem:[#allocation5 + $0x18] sm:$0xff]
    %v4714 = vld [vmem:[#allocation5 + $0x20] sm:$0xff]
    %v4715 = vld [vmem:[#allocation5 + $0x28] sm:$0xff]
    %v4716 = vld [vmem:[#allocation5 + $0x30] sm:$0xff]
    %v4717 = vld [vmem:[#allocation5 + $0x38] sm:$0xff]
    %v4718 = vld [vmem:[#allocation5 + $0x40] sm:$0xff]
    %v4719 = vld [vmem:[#allocation5 + $0x48] sm:$0xff]
    %v4720 = vld [vmem:[#allocation5 + $0x50] sm:$0xff]
    %v4721 = vld [vmem:[#allocation5 + $0x58] sm:$0xff]
    %v4722 = vld [vmem:[#allocation5 + $0x60] sm:$0xff]
    %v4723 = vld [vmem:[#allocation5 + $0x68] sm:$0xff]
    %v4724 = vld [vmem:[#allocation5 + $0x70] sm:$0xff]
    %v4725 = vld [vmem:[#allocation5 + $0x78] sm:$0xff]
    %v4726 = vld [vmem:[#allocation5 + $0x80] sm:$0xff]
    %v4727 = vld [vmem:[#allocation5 + $0x88] sm:$0xff]
    %v4728 = vld [vmem:[#allocation5 + $0x90] sm:$0xff]
    %v4729 = vld [vmem:[#allocation5 + $0x98] sm:$0xff]
    %v4730 = vld [vmem:[#allocation5 + $0xa0] sm:$0xff]
    %v4731 = vld [vmem:[#allocation5 + $0xa8] sm:$0xff]
    %v4732 = vld [vmem:[#allocation5 + $0xb0] sm:$0xff]
    %v4733 = vld [vmem:[#allocation5 + $0xb8] sm:$0xff]
    %v4734 = vld [vmem:[#allocation5 + $0xc0] sm:$0xff]
    %v4735 = vld [vmem:[#allocation5 + $0xc8] sm:$0xff]
    %v4736 = vld [vmem:[#allocation5 + $0xd0] sm:$0xff]
    %v4737 = vld [vmem:[#allocation5 + $0xd8] sm:$0xff]
    %v4738 = vld [vmem:[#allocation5 + $0xe0] sm:$0xff]
    %v4739 = vld [vmem:[#allocation5 + $0xe8] sm:$0xff]
    %v4740 = vld [vmem:[#allocation5 + $0xf0] sm:$0xff]
    %v4741 = vld [vmem:[#allocation5 + $0xf8] sm:$0xff]
    %v4742 = vld [vmem:[#allocation5 + $0x100] sm:$0xff]
    %v4743 = vld [vmem:[#allocation5 + $0x108] sm:$0xff]
    %v4744 = vld [vmem:[#allocation5 + $0x110] sm:$0xff]
    %v4745 = vld [vmem:[#allocation5 + $0x118] sm:$0xff]
    %v4746 = vld [vmem:[#allocation5 + $0x120] sm:$0xff]
    %v4747 = vld [vmem:[#allocation5 + $0x128] sm:$0xff]
    %v4748 = vld [vmem:[#allocation5 + $0x130] sm:$0xff]
    %v4749 = vld [vmem:[#allocation5 + $0x138] sm:$0xff]
    %v4750 = vld [vmem:[#allocation5 + $0x140] sm:$0xff]
    %v4751 = vld [vmem:[#allocation5 + $0x148] sm:$0xff]
    %v4752 = vld [vmem:[#allocation5 + $0x150] sm:$0xff]
    %v4753 = vld [vmem:[#allocation5 + $0x158] sm:$0xff]
    %v4754 = vld [vmem:[#allocation5 + $0x160] sm:$0xff]
    %v4755 = vld [vmem:[#allocation5 + $0x168] sm:$0xff]
    %v4756 = vld [vmem:[#allocation5 + $0x170] sm:$0xff]
    %v4757 = vld [vmem:[#allocation5 + $0x178] sm:$0xff]
    %v4758 = vld [vmem:[#allocation5 + $0x180] sm:$0xff]
    %v4759 = vld [vmem:[#allocation5 + $0x188] sm:$0xff]
    %v4760 = vld [vmem:[#allocation5 + $0x190] sm:$0xff]
    %v4761 = vld [vmem:[#allocation5 + $0x198] sm:$0xff]
    %v4762 = vld [vmem:[#allocation5 + $0x1a0] sm:$0xff]
    %v4763 = vld [vmem:[#allocation5 + $0x1a8] sm:$0xff]
    %v4764 = vld [vmem:[#allocation5 + $0x1b0] sm:$0xff]
    %v4765 = vld [vmem:[#allocation5 + $0x1b8] sm:$0xff]
    %v4766 = vld [vmem:[#allocation5 + $0x1c0] sm:$0xff]
    %v4767 = vld [vmem:[#allocation5 + $0x1c8] sm:$0xff]
    %v4768 = vld [vmem:[#allocation5 + $0x1d0] sm:$0xff]
    %v4769 = vld [vmem:[#allocation5 + $0x1d8] sm:$0xff]
    %v4770 = vld [vmem:[#allocation5 + $0x1e0] sm:$0xff]
    %v4771 = vld [vmem:[#allocation5 + $0x1e8] sm:$0xff]
    %v4772 = vld [vmem:[#allocation5 + $0x1f0] sm:$0xff]
    %v4773 = vld [vmem:[#allocation5 + $0x1f8] sm:$0xff]
    %v4774 = vld [vmem:[#allocation5 + $0x200] sm:$0xff]
    %v4775 = vld [vmem:[#allocation5 + $0x208] sm:$0xff]
    %v4776 = vld [vmem:[#allocation5 + $0x210] sm:$0xff]
    %v4777 = vld [vmem:[#allocation5 + $0x218] sm:$0xff]
    %v4778 = vld [vmem:[#allocation5 + $0x220] sm:$0xff]
    %v4779 = vld [vmem:[#allocation5 + $0x228] sm:$0xff]
    %v4780 = vld [vmem:[#allocation5 + $0x230] sm:$0xff]
    %v4781 = vld [vmem:[#allocation5 + $0x238] sm:$0xff]
    %v4782 = vld [vmem:[#allocation5 + $0x240] sm:$0xff]
    %v4783 = vld [vmem:[#allocation5 + $0x248] sm:$0xff]
    %v4784 = vld [vmem:[#allocation5 + $0x250] sm:$0xff]
    %v4785 = vld [vmem:[#allocation5 + $0x258] sm:$0xff]
    %v4786 = vld [vmem:[#allocation5 + $0x260] sm:$0xff]
    %v4787 = vld [vmem:[#allocation5 + $0x268] sm:$0xff]
    %v4788 = vld [vmem:[#allocation5 + $0x270] sm:$0xff]
    %v4789 = vld [vmem:[#allocation5 + $0x278] sm:$0xff]
    %v4790 = vld [vmem:[#allocation5 + $0x280] sm:$0xff]
    %v4791 = vld [vmem:[#allocation5 + $0x288] sm:$0xff]
    %v4792 = vld [vmem:[#allocation5 + $0x290] sm:$0xff]
    %v4793 = vld [vmem:[#allocation5 + $0x298] sm:$0xff]
    %v4794 = vld [vmem:[#allocation5 + $0x2a0] sm:$0xff]
    %v4795 = vld [vmem:[#allocation5 + $0x2a8] sm:$0xff]
    %v4796 = vld [vmem:[#allocation5 + $0x2b0] sm:$0xff]
    %v4797 = vld [vmem:[#allocation5 + $0x2b8] sm:$0xff]
    %v4798 = vld [vmem:[#allocation5 + $0x2c0] sm:$0xff]
    %v4799 = vld [vmem:[#allocation5 + $0x2c8] sm:$0xff]
    %v4800 = vld [vmem:[#allocation5 + $0x2d0] sm:$0xff]
    %v4801 = vld [vmem:[#allocation5 + $0x2d8] sm:$0xff]
    %v4802 = vld [vmem:[#allocation5 + $0x2e0] sm:$0xff]
    %v4803 = vld [vmem:[#allocation5 + $0x2e8] sm:$0xff]
    %v4804 = vld [vmem:[#allocation5 + $0x2f0] sm:$0xff]
    %v4805 = vld [vmem:[#allocation5 + $0x2f8] sm:$0xff]
    %v4806 = vld [vmem:[#allocation5 + $0x300] sm:$0xff]
    %v4807 = vld [vmem:[#allocation5 + $0x308] sm:$0xff]
    %v4808 = vld [vmem:[#allocation5 + $0x310] sm:$0xff]
    %v4809 = vld [vmem:[#allocation5 + $0x318] sm:$0xff]
    %v4810 = vld [vmem:[#allocation5 + $0x320] sm:$0xff]
    %v4811 = vld [vmem:[#allocation5 + $0x328] sm:$0xff]
    %v4812 = vld [vmem:[#allocation5 + $0x330] sm:$0xff]
    %v4813 = vld [vmem:[#allocation5 + $0x338] sm:$0xff]
    %v4814 = vld [vmem:[#allocation5 + $0x340] sm:$0xff]
    %v4815 = vld [vmem:[#allocation5 + $0x348] sm:$0xff]
    %v4816 = vld [vmem:[#allocation5 + $0x350] sm:$0xff]
    %v4817 = vld [vmem:[#allocation5 + $0x358] sm:$0xff]
    %v4818 = vld [vmem:[#allocation5 + $0x360] sm:$0xff]
    %v4819 = vld [vmem:[#allocation5 + $0x368] sm:$0xff]
    %v4820 = vld [vmem:[#allocation5 + $0x370] sm:$0xff]
    %v4821 = vld [vmem:[#allocation5 + $0x378] sm:$0xff]
    %v4822 = vld [vmem:[#allocation5 + $0x380] sm:$0xff]
    %v4823 = vld [vmem:[#allocation5 + $0x388] sm:$0xff]
    %v4824 = vld [vmem:[#allocation5 + $0x390] sm:$0xff]
    %v4825 = vld [vmem:[#allocation5 + $0x398] sm:$0xff]
    %v4826 = vld [vmem:[#allocation5 + $0x3a0] sm:$0xff]
    %v4827 = vld [vmem:[#allocation5 + $0x3a8] sm:$0xff]
    %v4828 = vld [vmem:[#allocation5 + $0x3b0] sm:$0xff]
    %v4829 = vld [vmem:[#allocation5 + $0x3b8] sm:$0xff]
    %v4830 = vld [vmem:[#allocation5 + $0x3c0] sm:$0xff]
    %v4831 = vld [vmem:[#allocation5 + $0x3c8] sm:$0xff]
    %v4832 = vld [vmem:[#allocation5 + $0x3d0] sm:$0xff]
    %v4833 = vld [vmem:[#allocation5 + $0x3d8] sm:$0xff]
    %v4834 = vld [vmem:[#allocation5 + $0x3e0] sm:$0xff]
    %v4835 = vld [vmem:[#allocation5 + $0x3e8] sm:$0xff]
    %v4836 = vld [vmem:[#allocation5 + $0x3f0] sm:$0xff]
    %v4837 = vld [vmem:[#allocation5 + $0x3f8] sm:$0xff]
    %v4838 = vld [vmem:[#allocation5 + $0x400] sm:$0xff]
    %v4839 = vld [vmem:[#allocation5 + $0x408] sm:$0xff]
    %v4840 = vld [vmem:[#allocation5 + $0x410] sm:$0xff]
    %v4841 = vld [vmem:[#allocation5 + $0x418] sm:$0xff]
    %v4842 = vld [vmem:[#allocation5 + $0x420] sm:$0xff]
    %v4843 = vld [vmem:[#allocation5 + $0x428] sm:$0xff]
    %v4844 = vld [vmem:[#allocation5 + $0x430] sm:$0xff]
    %v4845 = vld [vmem:[#allocation5 + $0x438] sm:$0xff]
    %v4846 = vld [vmem:[#allocation5 + $0x440] sm:$0xff]
    %v4847 = vld [vmem:[#allocation5 + $0x448] sm:$0xff]
    %v4848 = vld [vmem:[#allocation5 + $0x450] sm:$0xff]
    %v4849 = vld [vmem:[#allocation5 + $0x458] sm:$0xff]
    %v4850 = vld [vmem:[#allocation5 + $0x460] sm:$0xff]
    %v4851 = vld [vmem:[#allocation5 + $0x468] sm:$0xff]
    %v4852 = vld [vmem:[#allocation5 + $0x470] sm:$0xff]
    %v4853 = vld [vmem:[#allocation5 + $0x478] sm:$0xff]
    %v4854 = vld [vmem:[#allocation5 + $0x480] sm:$0xff]
    %v4855 = vld [vmem:[#allocation5 + $0x488] sm:$0xff]
    %v4856 = vld [vmem:[#allocation5 + $0x490] sm:$0xff]
    %v4857 = vld [vmem:[#allocation5 + $0x498] sm:$0xff]
    %v4858 = vld [vmem:[#allocation5 + $0x4a0] sm:$0xff]
    %v4859 = vld [vmem:[#allocation5 + $0x4a8] sm:$0xff]
    %v4860 = vld [vmem:[#allocation5 + $0x4b0] sm:$0xff]
    %v4861 = vld [vmem:[#allocation5 + $0x4b8] sm:$0xff]
    %v4862 = vld [vmem:[#allocation5 + $0x4c0] sm:$0xff]
    %v4863 = vld [vmem:[#allocation5 + $0x4c8] sm:$0xff]
    %v4864 = vld [vmem:[#allocation5 + $0x4d0] sm:$0xff]
    %v4865 = vld [vmem:[#allocation5 + $0x4d8] sm:$0xff]
    %v4866 = vld [vmem:[#allocation5 + $0x4e0] sm:$0xff]
    %v4867 = vld [vmem:[#allocation5 + $0x4e8] sm:$0xff]
    %v4868 = vld [vmem:[#allocation5 + $0x4f0] sm:$0xff]
    %v4869 = vld [vmem:[#allocation5 + $0x4f8] sm:$0xff]
    %v4870 = vld [vmem:[#allocation5 + $0x500] sm:$0xff]
    %v4871 = vld [vmem:[#allocation5 + $0x508] sm:$0xff]
    %v4872 = vld [vmem:[#allocation5 + $0x510] sm:$0xff]
    %v4873 = vld [vmem:[#allocation5 + $0x518] sm:$0xff]
    %v4874 = vld [vmem:[#allocation5 + $0x520] sm:$0xff]
    %v4875 = vld [vmem:[#allocation5 + $0x528] sm:$0xff]
    %v4876 = vld [vmem:[#allocation5 + $0x530] sm:$0xff]
    %v4877 = vld [vmem:[#allocation5 + $0x538] sm:$0xff]
    %v4878 = vld [vmem:[#allocation5 + $0x540] sm:$0xff]
    %v4879 = vld [vmem:[#allocation5 + $0x548] sm:$0xff]
    %v4880 = vld [vmem:[#allocation5 + $0x550] sm:$0xff]
    %v4881 = vld [vmem:[#allocation5 + $0x558] sm:$0xff]
    %v4882 = vld [vmem:[#allocation5 + $0x560] sm:$0xff]
    %v4883 = vld [vmem:[#allocation5 + $0x568] sm:$0xff]
    %v4884 = vld [vmem:[#allocation5 + $0x570] sm:$0xff]
    %v4885 = vld [vmem:[#allocation5 + $0x578] sm:$0xff]
    %v4886 = vld [vmem:[#allocation5 + $0x580] sm:$0xff]
    %v4887 = vld [vmem:[#allocation5 + $0x588] sm:$0xff]
    %v4888 = vld [vmem:[#allocation5 + $0x590] sm:$0xff]
    %v4889 = vld [vmem:[#allocation5 + $0x598] sm:$0xff]
    %v4890 = vld [vmem:[#allocation5 + $0x5a0] sm:$0xff]
    %v4891 = vld [vmem:[#allocation5 + $0x5a8] sm:$0xff]
    %v4892 = vld [vmem:[#allocation5 + $0x5b0] sm:$0xff]
    %v4893 = vld [vmem:[#allocation5 + $0x5b8] sm:$0xff]
    %v4894 = vld [vmem:[#allocation5 + $0x5c0] sm:$0xff]
    %v4895 = vld [vmem:[#allocation5 + $0x5c8] sm:$0xff]
    %v4896 = vld [vmem:[#allocation5 + $0x5d0] sm:$0xff]
    %v4897 = vld [vmem:[#allocation5 + $0x5d8] sm:$0xff]
    %v4898 = vld [vmem:[#allocation5 + $0x5e0] sm:$0xff]
    %v4899 = vld [vmem:[#allocation5 + $0x5e8] sm:$0xff]
    %v4900 = vld [vmem:[#allocation5 + $0x5f0] sm:$0xff]
    %v4901 = vld [vmem:[#allocation5 + $0x5f8] sm:$0xff]
    %v4902 = vld [vmem:[#allocation5 + $0x600] sm:$0xff]
    %v4903 = vld [vmem:[#allocation5 + $0x608] sm:$0xff]
    %v4904 = vld [vmem:[#allocation5 + $0x610] sm:$0xff]
    %v4905 = vld [vmem:[#allocation5 + $0x618] sm:$0xff]
    %v4906 = vld [vmem:[#allocation5 + $0x620] sm:$0xff]
    %v4907 = vld [vmem:[#allocation5 + $0x628] sm:$0xff]
    %v4908 = vld [vmem:[#allocation5 + $0x630] sm:$0xff]
    %v4909 = vld [vmem:[#allocation5 + $0x638] sm:$0xff]
    %v4910 = vld [vmem:[#allocation5 + $0x640] sm:$0xff]
    %v4911 = vld [vmem:[#allocation5 + $0x648] sm:$0xff]
    %v4912 = vld [vmem:[#allocation5 + $0x650] sm:$0xff]
    %v4913 = vld [vmem:[#allocation5 + $0x658] sm:$0xff]
    %v4914 = vld [vmem:[#allocation5 + $0x660] sm:$0xff]
    %v4915 = vld [vmem:[#allocation5 + $0x668] sm:$0xff]
    %v4916 = vld [vmem:[#allocation5 + $0x670] sm:$0xff]
    %v4917 = vld [vmem:[#allocation5 + $0x678] sm:$0xff]
    %v4918 = vld [vmem:[#allocation5 + $0x680] sm:$0xff]
    %v4919 = vld [vmem:[#allocation5 + $0x688] sm:$0xff]
    %v4920 = vld [vmem:[#allocation5 + $0x690] sm:$0xff]
    %v4921 = vld [vmem:[#allocation5 + $0x698] sm:$0xff]
    %v4922 = vld [vmem:[#allocation5 + $0x6a0] sm:$0xff]
    %v4923 = vld [vmem:[#allocation5 + $0x6a8] sm:$0xff]
    %v4924 = vld [vmem:[#allocation5 + $0x6b0] sm:$0xff]
    %v4925 = vld [vmem:[#allocation5 + $0x6b8] sm:$0xff]
    %v4926 = vld [vmem:[#allocation5 + $0x6c0] sm:$0xff]
    %v4927 = vld [vmem:[#allocation5 + $0x6c8] sm:$0xff]
    %v4928 = vld [vmem:[#allocation5 + $0x6d0] sm:$0xff]
    %v4929 = vld [vmem:[#allocation5 + $0x6d8] sm:$0xff]
    %v4930 = vld [vmem:[#allocation5 + $0x6e0] sm:$0xff]
    %v4931 = vld [vmem:[#allocation5 + $0x6e8] sm:$0xff]
    %v4932 = vld [vmem:[#allocation5 + $0x6f0] sm:$0xff]
    %v4933 = vld [vmem:[#allocation5 + $0x6f8] sm:$0xff]
    %v4934 = vld [vmem:[%s15] sm:$0x7f]
    %v4935 = vunpack.c.0.s8 %v4710
    %v4936 = vunpack.c.0.s8 %v4711
    %v4937 = vunpack.c.0.s8 %v4712
    %v4938 = vunpack.c.0.s8 %v4713
    %v4939 = vunpack.c.0.s8 %v4714
    %v4940 = vunpack.c.0.s8 %v4715
    %v4941 = vunpack.c.0.s8 %v4716
    %v4942 = vunpack.c.1.s8 %v4710
    %v4943 = vunpack.c.1.s8 %v4711
    %v4944 = vunpack.c.1.s8 %v4712
    %v4945 = vunpack.c.1.s8 %v4713
    %v4946 = vunpack.c.1.s8 %v4714
    %v4947 = vunpack.c.1.s8 %v4715
    %v4948 = vunpack.c.1.s8 %v4716
    %v4949 = vunpack.c.2.s8 %v4710
    %v4950 = vunpack.c.2.s8 %v4711
    %v4951 = vunpack.c.2.s8 %v4712
    %v4952 = vunpack.c.2.s8 %v4713
    %v4953 = vunpack.c.2.s8 %v4714
    %v4954 = vunpack.c.2.s8 %v4715
    %v4955 = vunpack.c.2.s8 %v4716
    %v4956 = vunpack.c.3.s8 %v4710
    %v4957 = vunpack.c.3.s8 %v4711
    %v4958 = vunpack.c.3.s8 %v4712
    %v4959 = vunpack.c.3.s8 %v4713
    %v4960 = vunpack.c.3.s8 %v4714
    %v4961 = vunpack.c.3.s8 %v4715
    %v4962 = vunpack.c.3.s8 %v4716
    %v4963 = vunpack.c.0.s8 %v4717
    %v4964 = vunpack.c.0.s8 %v4718
    %v4965 = vunpack.c.0.s8 %v4719
    %v4966 = vunpack.c.0.s8 %v4720
    %v4967 = vunpack.c.0.s8 %v4721
    %v4968 = vunpack.c.0.s8 %v4722
    %v4969 = vunpack.c.0.s8 %v4723
    %v4970 = vunpack.c.1.s8 %v4717
    %v4971 = vunpack.c.1.s8 %v4718
    %v4972 = vunpack.c.1.s8 %v4719
    %v4973 = vunpack.c.1.s8 %v4720
    %v4974 = vunpack.c.1.s8 %v4721
    %v4975 = vunpack.c.1.s8 %v4722
    %v4976 = vunpack.c.1.s8 %v4723
    %v4977 = vunpack.c.2.s8 %v4717
    %v4978 = vunpack.c.2.s8 %v4718
    %v4979 = vunpack.c.2.s8 %v4719
    %v4980 = vunpack.c.2.s8 %v4720
    %v4981 = vunpack.c.2.s8 %v4721
    %v4982 = vunpack.c.2.s8 %v4722
    %v4983 = vunpack.c.2.s8 %v4723
    %v4984 = vunpack.c.3.s8 %v4717
    %v4985 = vunpack.c.3.s8 %v4718
    %v4986 = vunpack.c.3.s8 %v4719
    %v4987 = vunpack.c.3.s8 %v4720
    %v4988 = vunpack.c.3.s8 %v4721
    %v4989 = vunpack.c.3.s8 %v4722
    %v4990 = vunpack.c.3.s8 %v4723
    %v4991 = vunpack.c.0.s8 %v4724
    %v4992 = vunpack.c.0.s8 %v4725
    %v4993 = vunpack.c.0.s8 %v4726
    %v4994 = vunpack.c.0.s8 %v4727
    %v4995 = vunpack.c.0.s8 %v4728
    %v4996 = vunpack.c.0.s8 %v4729
    %v4997 = vunpack.c.0.s8 %v4730
    %v4998 = vunpack.c.1.s8 %v4724
    %v4999 = vunpack.c.1.s8 %v4725
    %v5000 = vunpack.c.1.s8 %v4726
    %v5001 = vunpack.c.1.s8 %v4727
    %v5002 = vunpack.c.1.s8 %v4728
    %v5003 = vunpack.c.1.s8 %v4729
    %v5004 = vunpack.c.1.s8 %v4730
    %v5005 = vunpack.c.2.s8 %v4724
    %v5006 = vunpack.c.2.s8 %v4725
    %v5007 = vunpack.c.2.s8 %v4726
    %v5008 = vunpack.c.2.s8 %v4727
    %v5009 = vunpack.c.2.s8 %v4728
    %v5010 = vunpack.c.2.s8 %v4729
    %v5011 = vunpack.c.2.s8 %v4730
    %v5012 = vunpack.c.3.s8 %v4724
    %v5013 = vunpack.c.3.s8 %v4725
    %v5014 = vunpack.c.3.s8 %v4726
    %v5015 = vunpack.c.3.s8 %v4727
    %v5016 = vunpack.c.3.s8 %v4728
    %v5017 = vunpack.c.3.s8 %v4729
    %v5018 = vunpack.c.3.s8 %v4730
    %v5019 = vunpack.c.0.s8 %v4731
    %v5020 = vunpack.c.0.s8 %v4732
    %v5021 = vunpack.c.0.s8 %v4733
    %v5022 = vunpack.c.0.s8 %v4734
    %v5023 = vunpack.c.0.s8 %v4735
    %v5024 = vunpack.c.0.s8 %v4736
    %v5025 = vunpack.c.0.s8 %v4737
    %v5026 = vunpack.c.1.s8 %v4731
    %v5027 = vunpack.c.1.s8 %v4732
    %v5028 = vunpack.c.1.s8 %v4733
    %v5029 = vunpack.c.1.s8 %v4734
    %v5030 = vunpack.c.1.s8 %v4735
    %v5031 = vunpack.c.1.s8 %v4736
    %v5032 = vunpack.c.1.s8 %v4737
    %v5033 = vunpack.c.2.s8 %v4731
    %v5034 = vunpack.c.2.s8 %v4732
    %v5035 = vunpack.c.2.s8 %v4733
    %v5036 = vunpack.c.2.s8 %v4734
    %v5037 = vunpack.c.2.s8 %v4735
    %v5038 = vunpack.c.2.s8 %v4736
    %v5039 = vunpack.c.2.s8 %v4737
    %v5040 = vunpack.c.3.s8 %v4731
    %v5041 = vunpack.c.3.s8 %v4732
    %v5042 = vunpack.c.3.s8 %v4733
    %v5043 = vunpack.c.3.s8 %v4734
    %v5044 = vunpack.c.3.s8 %v4735
    %v5045 = vunpack.c.3.s8 %v4736
    %v5046 = vunpack.c.3.s8 %v4737
    %v5047 = vunpack.c.0.s8 %v4738
    %v5048 = vunpack.c.0.s8 %v4739
    %v5049 = vunpack.c.0.s8 %v4740
    %v5050 = vunpack.c.0.s8 %v4741
    %v5051 = vunpack.c.0.s8 %v4742
    %v5052 = vunpack.c.0.s8 %v4743
    %v5053 = vunpack.c.0.s8 %v4744
    %v5054 = vunpack.c.1.s8 %v4738
    %v5055 = vunpack.c.1.s8 %v4739
    %v5056 = vunpack.c.1.s8 %v4740
    %v5057 = vunpack.c.1.s8 %v4741
    %v5058 = vunpack.c.1.s8 %v4742
    %v5059 = vunpack.c.1.s8 %v4743
    %v5060 = vunpack.c.1.s8 %v4744
    %v5061 = vunpack.c.2.s8 %v4738
    %v5062 = vunpack.c.2.s8 %v4739
    %v5063 = vunpack.c.2.s8 %v4740
    %v5064 = vunpack.c.2.s8 %v4741
    %v5065 = vunpack.c.2.s8 %v4742
    %v5066 = vunpack.c.2.s8 %v4743
    %v5067 = vunpack.c.2.s8 %v4744
    %v5068 = vunpack.c.3.s8 %v4738
    %v5069 = vunpack.c.3.s8 %v4739
    %v5070 = vunpack.c.3.s8 %v4740
    %v5071 = vunpack.c.3.s8 %v4741
    %v5072 = vunpack.c.3.s8 %v4742
    %v5073 = vunpack.c.3.s8 %v4743
    %v5074 = vunpack.c.3.s8 %v4744
    %v5075 = vunpack.c.0.s8 %v4745
    %v5076 = vunpack.c.0.s8 %v4746
    %v5077 = vunpack.c.0.s8 %v4747
    %v5078 = vunpack.c.0.s8 %v4748
    %v5079 = vunpack.c.0.s8 %v4749
    %v5080 = vunpack.c.0.s8 %v4750
    %v5081 = vunpack.c.0.s8 %v4751
    %v5082 = vunpack.c.1.s8 %v4745
    %v5083 = vunpack.c.1.s8 %v4746
    %v5084 = vunpack.c.1.s8 %v4747
    %v5085 = vunpack.c.1.s8 %v4748
    %v5086 = vunpack.c.1.s8 %v4749
    %v5087 = vunpack.c.1.s8 %v4750
    %v5088 = vunpack.c.1.s8 %v4751
    %v5089 = vunpack.c.2.s8 %v4745
    %v5090 = vunpack.c.2.s8 %v4746
    %v5091 = vunpack.c.2.s8 %v4747
    %v5092 = vunpack.c.2.s8 %v4748
    %v5093 = vunpack.c.2.s8 %v4749
    %v5094 = vunpack.c.2.s8 %v4750
    %v5095 = vunpack.c.2.s8 %v4751
    %v5096 = vunpack.c.3.s8 %v4745
    %v5097 = vunpack.c.3.s8 %v4746
    %v5098 = vunpack.c.3.s8 %v4747
    %v5099 = vunpack.c.3.s8 %v4748
    %v5100 = vunpack.c.3.s8 %v4749
    %v5101 = vunpack.c.3.s8 %v4750
    %v5102 = vunpack.c.3.s8 %v4751
    %v5103 = vunpack.c.0.s8 %v4752
    %v5104 = vunpack.c.0.s8 %v4753
    %v5105 = vunpack.c.0.s8 %v4754
    %v5106 = vunpack.c.0.s8 %v4755
    %v5107 = vunpack.c.0.s8 %v4756
    %v5108 = vunpack.c.0.s8 %v4757
    %v5109 = vunpack.c.0.s8 %v4758
    %v5110 = vunpack.c.1.s8 %v4752
    %v5111 = vunpack.c.1.s8 %v4753
    %v5112 = vunpack.c.1.s8 %v4754
    %v5113 = vunpack.c.1.s8 %v4755
    %v5114 = vunpack.c.1.s8 %v4756
    %v5115 = vunpack.c.1.s8 %v4757
    %v5116 = vunpack.c.1.s8 %v4758
    %v5117 = vunpack.c.2.s8 %v4752
    %v5118 = vunpack.c.2.s8 %v4753
    %v5119 = vunpack.c.2.s8 %v4754
    %v5120 = vunpack.c.2.s8 %v4755
    %v5121 = vunpack.c.2.s8 %v4756
    %v5122 = vunpack.c.2.s8 %v4757
    %v5123 = vunpack.c.2.s8 %v4758
    %v5124 = vunpack.c.3.s8 %v4752
    %v5125 = vunpack.c.3.s8 %v4753
    %v5126 = vunpack.c.3.s8 %v4754
    %v5127 = vunpack.c.3.s8 %v4755
    %v5128 = vunpack.c.3.s8 %v4756
    %v5129 = vunpack.c.3.s8 %v4757
    %v5130 = vunpack.c.3.s8 %v4758
    %v5131 = vunpack.c.0.s8 %v4759
    %v5132 = vunpack.c.0.s8 %v4760
    %v5133 = vunpack.c.0.s8 %v4761
    %v5134 = vunpack.c.0.s8 %v4762
    %v5135 = vunpack.c.0.s8 %v4763
    %v5136 = vunpack.c.0.s8 %v4764
    %v5137 = vunpack.c.0.s8 %v4765
    %v5138 = vunpack.c.1.s8 %v4759
    %v5139 = vunpack.c.1.s8 %v4760
    %v5140 = vunpack.c.1.s8 %v4761
    %v5141 = vunpack.c.1.s8 %v4762
    %v5142 = vunpack.c.1.s8 %v4763
    %v5143 = vunpack.c.1.s8 %v4764
    %v5144 = vunpack.c.1.s8 %v4765
    %v5145 = vunpack.c.2.s8 %v4759
    %v5146 = vunpack.c.2.s8 %v4760
    %v5147 = vunpack.c.2.s8 %v4761
    %v5148 = vunpack.c.2.s8 %v4762
    %v5149 = vunpack.c.2.s8 %v4763
    %v5150 = vunpack.c.2.s8 %v4764
    %v5151 = vunpack.c.2.s8 %v4765
    %v5152 = vunpack.c.3.s8 %v4759
    %v5153 = vunpack.c.3.s8 %v4760
    %v5154 = vunpack.c.3.s8 %v4761
    %v5155 = vunpack.c.3.s8 %v4762
    %v5156 = vunpack.c.3.s8 %v4763
    %v5157 = vunpack.c.3.s8 %v4764
    %v5158 = vunpack.c.3.s8 %v4765
    %v5159 = vunpack.c.0.s8 %v4766
    %v5160 = vunpack.c.0.s8 %v4767
    %v5161 = vunpack.c.0.s8 %v4768
    %v5162 = vunpack.c.0.s8 %v4769
    %v5163 = vunpack.c.0.s8 %v4770
    %v5164 = vunpack.c.0.s8 %v4771
    %v5165 = vunpack.c.0.s8 %v4772
    %v5166 = vunpack.c.1.s8 %v4766
    %v5167 = vunpack.c.1.s8 %v4767
    %v5168 = vunpack.c.1.s8 %v4768
    %v5169 = vunpack.c.1.s8 %v4769
    %v5170 = vunpack.c.1.s8 %v4770
    %v5171 = vunpack.c.1.s8 %v4771
    %v5172 = vunpack.c.1.s8 %v4772
    %v5173 = vunpack.c.2.s8 %v4766
    %v5174 = vunpack.c.2.s8 %v4767
    %v5175 = vunpack.c.2.s8 %v4768
    %v5176 = vunpack.c.2.s8 %v4769
    %v5177 = vunpack.c.2.s8 %v4770
    %v5178 = vunpack.c.2.s8 %v4771
    %v5179 = vunpack.c.2.s8 %v4772
    %v5180 = vunpack.c.3.s8 %v4766
    %v5181 = vunpack.c.3.s8 %v4767
    %v5182 = vunpack.c.3.s8 %v4768
    %v5183 = vunpack.c.3.s8 %v4769
    %v5184 = vunpack.c.3.s8 %v4770
    %v5185 = vunpack.c.3.s8 %v4771
    %v5186 = vunpack.c.3.s8 %v4772
    %v5187 = vunpack.c.0.s8 %v4773
    %v5188 = vunpack.c.0.s8 %v4774
    %v5189 = vunpack.c.0.s8 %v4775
    %v5190 = vunpack.c.0.s8 %v4776
    %v5191 = vunpack.c.0.s8 %v4777
    %v5192 = vunpack.c.0.s8 %v4778
    %v5193 = vunpack.c.0.s8 %v4779
    %v5194 = vunpack.c.1.s8 %v4773
    %v5195 = vunpack.c.1.s8 %v4774
    %v5196 = vunpack.c.1.s8 %v4775
    %v5197 = vunpack.c.1.s8 %v4776
    %v5198 = vunpack.c.1.s8 %v4777
    %v5199 = vunpack.c.1.s8 %v4778
    %v5200 = vunpack.c.1.s8 %v4779
    %v5201 = vunpack.c.2.s8 %v4773
    %v5202 = vunpack.c.2.s8 %v4774
    %v5203 = vunpack.c.2.s8 %v4775
    %v5204 = vunpack.c.2.s8 %v4776
    %v5205 = vunpack.c.2.s8 %v4777
    %v5206 = vunpack.c.2.s8 %v4778
    %v5207 = vunpack.c.2.s8 %v4779
    %v5208 = vunpack.c.3.s8 %v4773
    %v5209 = vunpack.c.3.s8 %v4774
    %v5210 = vunpack.c.3.s8 %v4775
    %v5211 = vunpack.c.3.s8 %v4776
    %v5212 = vunpack.c.3.s8 %v4777
    %v5213 = vunpack.c.3.s8 %v4778
    %v5214 = vunpack.c.3.s8 %v4779
    %v5215 = vunpack.c.0.s8 %v4780
    %v5216 = vunpack.c.0.s8 %v4781
    %v5217 = vunpack.c.0.s8 %v4782
    %v5218 = vunpack.c.0.s8 %v4783
    %v5219 = vunpack.c.0.s8 %v4784
    %v5220 = vunpack.c.0.s8 %v4785
    %v5221 = vunpack.c.0.s8 %v4786
    %v5222 = vunpack.c.1.s8 %v4780
    %v5223 = vunpack.c.1.s8 %v4781
    %v5224 = vunpack.c.1.s8 %v4782
    %v5225 = vunpack.c.1.s8 %v4783
    %v5226 = vunpack.c.1.s8 %v4784
    %v5227 = vunpack.c.1.s8 %v4785
    %v5228 = vunpack.c.1.s8 %v4786
    %v5229 = vunpack.c.2.s8 %v4780
    %v5230 = vunpack.c.2.s8 %v4781
    %v5231 = vunpack.c.2.s8 %v4782
    %v5232 = vunpack.c.2.s8 %v4783
    %v5233 = vunpack.c.2.s8 %v4784
    %v5234 = vunpack.c.2.s8 %v4785
    %v5235 = vunpack.c.2.s8 %v4786
    %v5236 = vunpack.c.3.s8 %v4780
    %v5237 = vunpack.c.3.s8 %v4781
    %v5238 = vunpack.c.3.s8 %v4782
    %v5239 = vunpack.c.3.s8 %v4783
    %v5240 = vunpack.c.3.s8 %v4784
    %v5241 = vunpack.c.3.s8 %v4785
    %v5242 = vunpack.c.3.s8 %v4786
    %v5243 = vunpack.c.0.s8 %v4787
    %v5244 = vunpack.c.0.s8 %v4788
    %v5245 = vunpack.c.0.s8 %v4789
    %v5246 = vunpack.c.0.s8 %v4790
    %v5247 = vunpack.c.0.s8 %v4791
    %v5248 = vunpack.c.0.s8 %v4792
    %v5249 = vunpack.c.0.s8 %v4793
    %v5250 = vunpack.c.1.s8 %v4787
    %v5251 = vunpack.c.1.s8 %v4788
    %v5252 = vunpack.c.1.s8 %v4789
    %v5253 = vunpack.c.1.s8 %v4790
    %v5254 = vunpack.c.1.s8 %v4791
    %v5255 = vunpack.c.1.s8 %v4792
    %v5256 = vunpack.c.1.s8 %v4793
    %v5257 = vunpack.c.2.s8 %v4787
    %v5258 = vunpack.c.2.s8 %v4788
    %v5259 = vunpack.c.2.s8 %v4789
    %v5260 = vunpack.c.2.s8 %v4790
    %v5261 = vunpack.c.2.s8 %v4791
    %v5262 = vunpack.c.2.s8 %v4792
    %v5263 = vunpack.c.2.s8 %v4793
    %v5264 = vunpack.c.3.s8 %v4787
    %v5265 = vunpack.c.3.s8 %v4788
    %v5266 = vunpack.c.3.s8 %v4789
    %v5267 = vunpack.c.3.s8 %v4790
    %v5268 = vunpack.c.3.s8 %v4791
    %v5269 = vunpack.c.3.s8 %v4792
    %v5270 = vunpack.c.3.s8 %v4793
    %v5271 = vunpack.c.0.s8 %v4794
    %v5272 = vunpack.c.0.s8 %v4795
    %v5273 = vunpack.c.0.s8 %v4796
    %v5274 = vunpack.c.0.s8 %v4797
    %v5275 = vunpack.c.0.s8 %v4798
    %v5276 = vunpack.c.0.s8 %v4799
    %v5277 = vunpack.c.0.s8 %v4800
    %v5278 = vunpack.c.1.s8 %v4794
    %v5279 = vunpack.c.1.s8 %v4795
    %v5280 = vunpack.c.1.s8 %v4796
    %v5281 = vunpack.c.1.s8 %v4797
    %v5282 = vunpack.c.1.s8 %v4798
    %v5283 = vunpack.c.1.s8 %v4799
    %v5284 = vunpack.c.1.s8 %v4800
    %v5285 = vunpack.c.2.s8 %v4794
    %v5286 = vunpack.c.2.s8 %v4795
    %v5287 = vunpack.c.2.s8 %v4796
    %v5288 = vunpack.c.2.s8 %v4797
    %v5289 = vunpack.c.2.s8 %v4798
    %v5290 = vunpack.c.2.s8 %v4799
    %v5291 = vunpack.c.2.s8 %v4800
    %v5292 = vunpack.c.3.s8 %v4794
    %v5293 = vunpack.c.3.s8 %v4795
    %v5294 = vunpack.c.3.s8 %v4796
    %v5295 = vunpack.c.3.s8 %v4797
    %v5296 = vunpack.c.3.s8 %v4798
    %v5297 = vunpack.c.3.s8 %v4799
    %v5298 = vunpack.c.3.s8 %v4800
    %v5299 = vunpack.c.0.s8 %v4801
    %v5300 = vunpack.c.0.s8 %v4802
    %v5301 = vunpack.c.0.s8 %v4803
    %v5302 = vunpack.c.0.s8 %v4804
    %v5303 = vunpack.c.0.s8 %v4805
    %v5304 = vunpack.c.0.s8 %v4806
    %v5305 = vunpack.c.0.s8 %v4807
    %v5306 = vunpack.c.1.s8 %v4801
    %v5307 = vunpack.c.1.s8 %v4802
    %v5308 = vunpack.c.1.s8 %v4803
    %v5309 = vunpack.c.1.s8 %v4804
    %v5310 = vunpack.c.1.s8 %v4805
    %v5311 = vunpack.c.1.s8 %v4806
    %v5312 = vunpack.c.1.s8 %v4807
    %v5313 = vunpack.c.2.s8 %v4801
    %v5314 = vunpack.c.2.s8 %v4802
    %v5315 = vunpack.c.2.s8 %v4803
    %v5316 = vunpack.c.2.s8 %v4804
    %v5317 = vunpack.c.2.s8 %v4805
    %v5318 = vunpack.c.2.s8 %v4806
    %v5319 = vunpack.c.2.s8 %v4807
    %v5320 = vunpack.c.3.s8 %v4801
    %v5321 = vunpack.c.3.s8 %v4802
    %v5322 = vunpack.c.3.s8 %v4803
    %v5323 = vunpack.c.3.s8 %v4804
    %v5324 = vunpack.c.3.s8 %v4805
    %v5325 = vunpack.c.3.s8 %v4806
    %v5326 = vunpack.c.3.s8 %v4807
    %v5327 = vunpack.c.0.s8 %v4808
    %v5328 = vunpack.c.0.s8 %v4809
    %v5329 = vunpack.c.0.s8 %v4810
    %v5330 = vunpack.c.0.s8 %v4811
    %v5331 = vunpack.c.0.s8 %v4812
    %v5332 = vunpack.c.0.s8 %v4813
    %v5333 = vunpack.c.0.s8 %v4814
    %v5334 = vunpack.c.1.s8 %v4808
    %v5335 = vunpack.c.1.s8 %v4809
    %v5336 = vunpack.c.1.s8 %v4810
    %v5337 = vunpack.c.1.s8 %v4811
    %v5338 = vunpack.c.1.s8 %v4812
    %v5339 = vunpack.c.1.s8 %v4813
    %v5340 = vunpack.c.1.s8 %v4814
    %v5341 = vunpack.c.2.s8 %v4808
    %v5342 = vunpack.c.2.s8 %v4809
    %v5343 = vunpack.c.2.s8 %v4810
    %v5344 = vunpack.c.2.s8 %v4811
    %v5345 = vunpack.c.2.s8 %v4812
    %v5346 = vunpack.c.2.s8 %v4813
    %v5347 = vunpack.c.2.s8 %v4814
    %v5348 = vunpack.c.3.s8 %v4808
    %v5349 = vunpack.c.3.s8 %v4809
    %v5350 = vunpack.c.3.s8 %v4810
    %v5351 = vunpack.c.3.s8 %v4811
    %v5352 = vunpack.c.3.s8 %v4812
    %v5353 = vunpack.c.3.s8 %v4813
    %v5354 = vunpack.c.3.s8 %v4814
    %v5355 = vunpack.c.0.s8 %v4815
    %v5356 = vunpack.c.0.s8 %v4816
    %v5357 = vunpack.c.0.s8 %v4817
    %v5358 = vunpack.c.0.s8 %v4818
    %v5359 = vunpack.c.0.s8 %v4819
    %v5360 = vunpack.c.0.s8 %v4820
    %v5361 = vunpack.c.0.s8 %v4821
    %v5362 = vunpack.c.1.s8 %v4815
    %v5363 = vunpack.c.1.s8 %v4816
    %v5364 = vunpack.c.1.s8 %v4817
    %v5365 = vunpack.c.1.s8 %v4818
    %v5366 = vunpack.c.1.s8 %v4819
    %v5367 = vunpack.c.1.s8 %v4820
    %v5368 = vunpack.c.1.s8 %v4821
    %v5369 = vunpack.c.2.s8 %v4815
    %v5370 = vunpack.c.2.s8 %v4816
    %v5371 = vunpack.c.2.s8 %v4817
    %v5372 = vunpack.c.2.s8 %v4818
    %v5373 = vunpack.c.2.s8 %v4819
    %v5374 = vunpack.c.2.s8 %v4820
    %v5375 = vunpack.c.2.s8 %v4821
    %v5376 = vunpack.c.3.s8 %v4815
    %v5377 = vunpack.c.3.s8 %v4816
    %v5378 = vunpack.c.3.s8 %v4817
    %v5379 = vunpack.c.3.s8 %v4818
    %v5380 = vunpack.c.3.s8 %v4819
    %v5381 = vunpack.c.3.s8 %v4820
    %v5382 = vunpack.c.3.s8 %v4821
    %v5383 = vunpack.c.0.s8 %v4822
    %v5384 = vunpack.c.0.s8 %v4823
    %v5385 = vunpack.c.0.s8 %v4824
    %v5386 = vunpack.c.0.s8 %v4825
    %v5387 = vunpack.c.0.s8 %v4826
    %v5388 = vunpack.c.0.s8 %v4827
    %v5389 = vunpack.c.0.s8 %v4828
    %v5390 = vunpack.c.1.s8 %v4822
    %v5391 = vunpack.c.1.s8 %v4823
    %v5392 = vunpack.c.1.s8 %v4824
    %v5393 = vunpack.c.1.s8 %v4825
    %v5394 = vunpack.c.1.s8 %v4826
    %v5395 = vunpack.c.1.s8 %v4827
    %v5396 = vunpack.c.1.s8 %v4828
    %v5397 = vunpack.c.2.s8 %v4822
    %v5398 = vunpack.c.2.s8 %v4823
    %v5399 = vunpack.c.2.s8 %v4824
    %v5400 = vunpack.c.2.s8 %v4825
    %v5401 = vunpack.c.2.s8 %v4826
    %v5402 = vunpack.c.2.s8 %v4827
    %v5403 = vunpack.c.2.s8 %v4828
    %v5404 = vunpack.c.3.s8 %v4822
    %v5405 = vunpack.c.3.s8 %v4823
    %v5406 = vunpack.c.3.s8 %v4824
    %v5407 = vunpack.c.3.s8 %v4825
    %v5408 = vunpack.c.3.s8 %v4826
    %v5409 = vunpack.c.3.s8 %v4827
    %v5410 = vunpack.c.3.s8 %v4828
    %v5411 = vunpack.c.0.s8 %v4829
    %v5412 = vunpack.c.0.s8 %v4830
    %v5413 = vunpack.c.0.s8 %v4831
    %v5414 = vunpack.c.0.s8 %v4832
    %v5415 = vunpack.c.0.s8 %v4833
    %v5416 = vunpack.c.0.s8 %v4834
    %v5417 = vunpack.c.0.s8 %v4835
    %v5418 = vunpack.c.1.s8 %v4829
    %v5419 = vunpack.c.1.s8 %v4830
    %v5420 = vunpack.c.1.s8 %v4831
    %v5421 = vunpack.c.1.s8 %v4832
    %v5422 = vunpack.c.1.s8 %v4833
    %v5423 = vunpack.c.1.s8 %v4834
    %v5424 = vunpack.c.1.s8 %v4835
    %v5425 = vunpack.c.2.s8 %v4829
    %v5426 = vunpack.c.2.s8 %v4830
    %v5427 = vunpack.c.2.s8 %v4831
    %v5428 = vunpack.c.2.s8 %v4832
    %v5429 = vunpack.c.2.s8 %v4833
    %v5430 = vunpack.c.2.s8 %v4834
    %v5431 = vunpack.c.2.s8 %v4835
    %v5432 = vunpack.c.3.s8 %v4829
    %v5433 = vunpack.c.3.s8 %v4830
    %v5434 = vunpack.c.3.s8 %v4831
    %v5435 = vunpack.c.3.s8 %v4832
    %v5436 = vunpack.c.3.s8 %v4833
    %v5437 = vunpack.c.3.s8 %v4834
    %v5438 = vunpack.c.3.s8 %v4835
    %v5439 = vunpack.c.0.s8 %v4836
    %v5440 = vunpack.c.0.s8 %v4837
    %v5441 = vunpack.c.0.s8 %v4838
    %v5442 = vunpack.c.0.s8 %v4839
    %v5443 = vunpack.c.0.s8 %v4840
    %v5444 = vunpack.c.0.s8 %v4841
    %v5445 = vunpack.c.0.s8 %v4842
    %v5446 = vunpack.c.1.s8 %v4836
    %v5447 = vunpack.c.1.s8 %v4837
    %v5448 = vunpack.c.1.s8 %v4838
    %v5449 = vunpack.c.1.s8 %v4839
    %v5450 = vunpack.c.1.s8 %v4840
    %v5451 = vunpack.c.1.s8 %v4841
    %v5452 = vunpack.c.1.s8 %v4842
    %v5453 = vunpack.c.2.s8 %v4836
    %v5454 = vunpack.c.2.s8 %v4837
    %v5455 = vunpack.c.2.s8 %v4838
    %v5456 = vunpack.c.2.s8 %v4839
    %v5457 = vunpack.c.2.s8 %v4840
    %v5458 = vunpack.c.2.s8 %v4841
    %v5459 = vunpack.c.2.s8 %v4842
    %v5460 = vunpack.c.3.s8 %v4836
    %v5461 = vunpack.c.3.s8 %v4837
    %v5462 = vunpack.c.3.s8 %v4838
    %v5463 = vunpack.c.3.s8 %v4839
    %v5464 = vunpack.c.3.s8 %v4840
    %v5465 = vunpack.c.3.s8 %v4841
    %v5466 = vunpack.c.3.s8 %v4842
    %v5467 = vunpack.c.0.s8 %v4843
    %v5468 = vunpack.c.0.s8 %v4844
    %v5469 = vunpack.c.0.s8 %v4845
    %v5470 = vunpack.c.0.s8 %v4846
    %v5471 = vunpack.c.0.s8 %v4847
    %v5472 = vunpack.c.0.s8 %v4848
    %v5473 = vunpack.c.0.s8 %v4849
    %v5474 = vunpack.c.1.s8 %v4843
    %v5475 = vunpack.c.1.s8 %v4844
    %v5476 = vunpack.c.1.s8 %v4845
    %v5477 = vunpack.c.1.s8 %v4846
    %v5478 = vunpack.c.1.s8 %v4847
    %v5479 = vunpack.c.1.s8 %v4848
    %v5480 = vunpack.c.1.s8 %v4849
    %v5481 = vunpack.c.2.s8 %v4843
    %v5482 = vunpack.c.2.s8 %v4844
    %v5483 = vunpack.c.2.s8 %v4845
    %v5484 = vunpack.c.2.s8 %v4846
    %v5485 = vunpack.c.2.s8 %v4847
    %v5486 = vunpack.c.2.s8 %v4848
    %v5487 = vunpack.c.2.s8 %v4849
    %v5488 = vunpack.c.3.s8 %v4843
    %v5489 = vunpack.c.3.s8 %v4844
    %v5490 = vunpack.c.3.s8 %v4845
    %v5491 = vunpack.c.3.s8 %v4846
    %v5492 = vunpack.c.3.s8 %v4847
    %v5493 = vunpack.c.3.s8 %v4848
    %v5494 = vunpack.c.3.s8 %v4849
    %v5495 = vunpack.c.0.s8 %v4850
    %v5496 = vunpack.c.0.s8 %v4851
    %v5497 = vunpack.c.0.s8 %v4852
    %v5498 = vunpack.c.0.s8 %v4853
    %v5499 = vunpack.c.0.s8 %v4854
    %v5500 = vunpack.c.0.s8 %v4855
    %v5501 = vunpack.c.0.s8 %v4856
    %v5502 = vunpack.c.1.s8 %v4850
    %v5503 = vunpack.c.1.s8 %v4851
    %v5504 = vunpack.c.1.s8 %v4852
    %v5505 = vunpack.c.1.s8 %v4853
    %v5506 = vunpack.c.1.s8 %v4854
    %v5507 = vunpack.c.1.s8 %v4855
    %v5508 = vunpack.c.1.s8 %v4856
    %v5509 = vunpack.c.2.s8 %v4850
    %v5510 = vunpack.c.2.s8 %v4851
    %v5511 = vunpack.c.2.s8 %v4852
    %v5512 = vunpack.c.2.s8 %v4853
    %v5513 = vunpack.c.2.s8 %v4854
    %v5514 = vunpack.c.2.s8 %v4855
    %v5515 = vunpack.c.2.s8 %v4856
    %v5516 = vunpack.c.3.s8 %v4850
    %v5517 = vunpack.c.3.s8 %v4851
    %v5518 = vunpack.c.3.s8 %v4852
    %v5519 = vunpack.c.3.s8 %v4853
    %v5520 = vunpack.c.3.s8 %v4854
    %v5521 = vunpack.c.3.s8 %v4855
    %v5522 = vunpack.c.3.s8 %v4856
    %v5523 = vunpack.c.0.s8 %v4857
    %v5524 = vunpack.c.0.s8 %v4858
    %v5525 = vunpack.c.0.s8 %v4859
    %v5526 = vunpack.c.0.s8 %v4860
    %v5527 = vunpack.c.0.s8 %v4861
    %v5528 = vunpack.c.0.s8 %v4862
    %v5529 = vunpack.c.0.s8 %v4863
    %v5530 = vunpack.c.1.s8 %v4857
    %v5531 = vunpack.c.1.s8 %v4858
    %v5532 = vunpack.c.1.s8 %v4859
    %v5533 = vunpack.c.1.s8 %v4860
    %v5534 = vunpack.c.1.s8 %v4861
    %v5535 = vunpack.c.1.s8 %v4862
    %v5536 = vunpack.c.1.s8 %v4863
    %v5537 = vunpack.c.2.s8 %v4857
    %v5538 = vunpack.c.2.s8 %v4858
    %v5539 = vunpack.c.2.s8 %v4859
    %v5540 = vunpack.c.2.s8 %v4860
    %v5541 = vunpack.c.2.s8 %v4861
    %v5542 = vunpack.c.2.s8 %v4862
    %v5543 = vunpack.c.2.s8 %v4863
    %v5544 = vunpack.c.3.s8 %v4857
    %v5545 = vunpack.c.3.s8 %v4858
    %v5546 = vunpack.c.3.s8 %v4859
    %v5547 = vunpack.c.3.s8 %v4860
    %v5548 = vunpack.c.3.s8 %v4861
    %v5549 = vunpack.c.3.s8 %v4862
    %v5550 = vunpack.c.3.s8 %v4863
    %v5551 = vunpack.c.0.s8 %v4864
    %v5552 = vunpack.c.0.s8 %v4865
    %v5553 = vunpack.c.0.s8 %v4866
    %v5554 = vunpack.c.0.s8 %v4867
    %v5555 = vunpack.c.0.s8 %v4868
    %v5556 = vunpack.c.0.s8 %v4869
    %v5557 = vunpack.c.0.s8 %v4870
    %v5558 = vunpack.c.1.s8 %v4864
    %v5559 = vunpack.c.1.s8 %v4865
    %v5560 = vunpack.c.1.s8 %v4866
    %v5561 = vunpack.c.1.s8 %v4867
    %v5562 = vunpack.c.1.s8 %v4868
    %v5563 = vunpack.c.1.s8 %v4869
    %v5564 = vunpack.c.1.s8 %v4870
    %v5565 = vunpack.c.2.s8 %v4864
    %v5566 = vunpack.c.2.s8 %v4865
    %v5567 = vunpack.c.2.s8 %v4866
    %v5568 = vunpack.c.2.s8 %v4867
    %v5569 = vunpack.c.2.s8 %v4868
    %v5570 = vunpack.c.2.s8 %v4869
    %v5571 = vunpack.c.2.s8 %v4870
    %v5572 = vunpack.c.3.s8 %v4864
    %v5573 = vunpack.c.3.s8 %v4865
    %v5574 = vunpack.c.3.s8 %v4866
    %v5575 = vunpack.c.3.s8 %v4867
    %v5576 = vunpack.c.3.s8 %v4868
    %v5577 = vunpack.c.3.s8 %v4869
    %v5578 = vunpack.c.3.s8 %v4870
    %v5579 = vunpack.c.0.s8 %v4871
    %v5580 = vunpack.c.0.s8 %v4872
    %v5581 = vunpack.c.0.s8 %v4873
    %v5582 = vunpack.c.0.s8 %v4874
    %v5583 = vunpack.c.0.s8 %v4875
    %v5584 = vunpack.c.0.s8 %v4876
    %v5585 = vunpack.c.0.s8 %v4877
    %v5586 = vunpack.c.1.s8 %v4871
    %v5587 = vunpack.c.1.s8 %v4872
    %v5588 = vunpack.c.1.s8 %v4873
    %v5589 = vunpack.c.1.s8 %v4874
    %v5590 = vunpack.c.1.s8 %v4875
    %v5591 = vunpack.c.1.s8 %v4876
    %v5592 = vunpack.c.1.s8 %v4877
    %v5593 = vunpack.c.2.s8 %v4871
    %v5594 = vunpack.c.2.s8 %v4872
    %v5595 = vunpack.c.2.s8 %v4873
    %v5596 = vunpack.c.2.s8 %v4874
    %v5597 = vunpack.c.2.s8 %v4875
    %v5598 = vunpack.c.2.s8 %v4876
    %v5599 = vunpack.c.2.s8 %v4877
    %v5600 = vunpack.c.3.s8 %v4871
    %v5601 = vunpack.c.3.s8 %v4872
    %v5602 = vunpack.c.3.s8 %v4873
    %v5603 = vunpack.c.3.s8 %v4874
    %v5604 = vunpack.c.3.s8 %v4875
    %v5605 = vunpack.c.3.s8 %v4876
    %v5606 = vunpack.c.3.s8 %v4877
    %v5607 = vunpack.c.0.s8 %v4878
    %v5608 = vunpack.c.0.s8 %v4879
    %v5609 = vunpack.c.0.s8 %v4880
    %v5610 = vunpack.c.0.s8 %v4881
    %v5611 = vunpack.c.0.s8 %v4882
    %v5612 = vunpack.c.0.s8 %v4883
    %v5613 = vunpack.c.0.s8 %v4884
    %v5614 = vunpack.c.1.s8 %v4878
    %v5615 = vunpack.c.1.s8 %v4879
    %v5616 = vunpack.c.1.s8 %v4880
    %v5617 = vunpack.c.1.s8 %v4881
    %v5618 = vunpack.c.1.s8 %v4882
    %v5619 = vunpack.c.1.s8 %v4883
    %v5620 = vunpack.c.1.s8 %v4884
    %v5621 = vunpack.c.2.s8 %v4878
    %v5622 = vunpack.c.2.s8 %v4879
    %v5623 = vunpack.c.2.s8 %v4880
    %v5624 = vunpack.c.2.s8 %v4881
    %v5625 = vunpack.c.2.s8 %v4882
    %v5626 = vunpack.c.2.s8 %v4883
    %v5627 = vunpack.c.2.s8 %v4884
    %v5628 = vunpack.c.3.s8 %v4878
    %v5629 = vunpack.c.3.s8 %v4879
    %v5630 = vunpack.c.3.s8 %v4880
    %v5631 = vunpack.c.3.s8 %v4881
    %v5632 = vunpack.c.3.s8 %v4882
    %v5633 = vunpack.c.3.s8 %v4883
    %v5634 = vunpack.c.3.s8 %v4884
    %v5635 = vunpack.c.0.s8 %v4885
    %v5636 = vunpack.c.0.s8 %v4886
    %v5637 = vunpack.c.0.s8 %v4887
    %v5638 = vunpack.c.0.s8 %v4888
    %v5639 = vunpack.c.0.s8 %v4889
    %v5640 = vunpack.c.0.s8 %v4890
    %v5641 = vunpack.c.0.s8 %v4891
    %v5642 = vunpack.c.1.s8 %v4885
    %v5643 = vunpack.c.1.s8 %v4886
    %v5644 = vunpack.c.1.s8 %v4887
    %v5645 = vunpack.c.1.s8 %v4888
    %v5646 = vunpack.c.1.s8 %v4889
    %v5647 = vunpack.c.1.s8 %v4890
    %v5648 = vunpack.c.1.s8 %v4891
    %v5649 = vunpack.c.2.s8 %v4885
    %v5650 = vunpack.c.2.s8 %v4886
    %v5651 = vunpack.c.2.s8 %v4887
    %v5652 = vunpack.c.2.s8 %v4888
    %v5653 = vunpack.c.2.s8 %v4889
    %v5654 = vunpack.c.2.s8 %v4890
    %v5655 = vunpack.c.2.s8 %v4891
    %v5656 = vunpack.c.3.s8 %v4885
    %v5657 = vunpack.c.3.s8 %v4886
    %v5658 = vunpack.c.3.s8 %v4887
    %v5659 = vunpack.c.3.s8 %v4888
    %v5660 = vunpack.c.3.s8 %v4889
    %v5661 = vunpack.c.3.s8 %v4890
    %v5662 = vunpack.c.3.s8 %v4891
    %v5663 = vunpack.c.0.s8 %v4892
    %v5664 = vunpack.c.0.s8 %v4893
    %v5665 = vunpack.c.0.s8 %v4894
    %v5666 = vunpack.c.0.s8 %v4895
    %v5667 = vunpack.c.0.s8 %v4896
    %v5668 = vunpack.c.0.s8 %v4897
    %v5669 = vunpack.c.0.s8 %v4898
    %v5670 = vunpack.c.1.s8 %v4892
    %v5671 = vunpack.c.1.s8 %v4893
    %v5672 = vunpack.c.1.s8 %v4894
    %v5673 = vunpack.c.1.s8 %v4895
    %v5674 = vunpack.c.1.s8 %v4896
    %v5675 = vunpack.c.1.s8 %v4897
    %v5676 = vunpack.c.1.s8 %v4898
    %v5677 = vunpack.c.2.s8 %v4892
    %v5678 = vunpack.c.2.s8 %v4893
    %v5679 = vunpack.c.2.s8 %v4894
    %v5680 = vunpack.c.2.s8 %v4895
    %v5681 = vunpack.c.2.s8 %v4896
    %v5682 = vunpack.c.2.s8 %v4897
    %v5683 = vunpack.c.2.s8 %v4898
    %v5684 = vunpack.c.3.s8 %v4892
    %v5685 = vunpack.c.3.s8 %v4893
    %v5686 = vunpack.c.3.s8 %v4894
    %v5687 = vunpack.c.3.s8 %v4895
    %v5688 = vunpack.c.3.s8 %v4896
    %v5689 = vunpack.c.3.s8 %v4897
    %v5690 = vunpack.c.3.s8 %v4898
    %v5691 = vunpack.c.0.s8 %v4899
    %v5692 = vunpack.c.0.s8 %v4900
    %v5693 = vunpack.c.0.s8 %v4901
    %v5694 = vunpack.c.0.s8 %v4902
    %v5695 = vunpack.c.0.s8 %v4903
    %v5696 = vunpack.c.0.s8 %v4904
    %v5697 = vunpack.c.0.s8 %v4905
    %v5698 = vunpack.c.1.s8 %v4899
    %v5699 = vunpack.c.1.s8 %v4900
    %v5700 = vunpack.c.1.s8 %v4901
    %v5701 = vunpack.c.1.s8 %v4902
    %v5702 = vunpack.c.1.s8 %v4903
    %v5703 = vunpack.c.1.s8 %v4904
    %v5704 = vunpack.c.1.s8 %v4905
    %v5705 = vunpack.c.2.s8 %v4899
    %v5706 = vunpack.c.2.s8 %v4900
    %v5707 = vunpack.c.2.s8 %v4901
    %v5708 = vunpack.c.2.s8 %v4902
    %v5709 = vunpack.c.2.s8 %v4903
    %v5710 = vunpack.c.2.s8 %v4904
    %v5711 = vunpack.c.2.s8 %v4905
    %v5712 = vunpack.c.3.s8 %v4899
    %v5713 = vunpack.c.3.s8 %v4900
    %v5714 = vunpack.c.3.s8 %v4901
    %v5715 = vunpack.c.3.s8 %v4902
    %v5716 = vunpack.c.3.s8 %v4903
    %v5717 = vunpack.c.3.s8 %v4904
    %v5718 = vunpack.c.3.s8 %v4905
    %v5719 = vunpack.c.0.s8 %v4906
    %v5720 = vunpack.c.0.s8 %v4907
    %v5721 = vunpack.c.0.s8 %v4908
    %v5722 = vunpack.c.0.s8 %v4909
    %v5723 = vunpack.c.0.s8 %v4910
    %v5724 = vunpack.c.0.s8 %v4911
    %v5725 = vunpack.c.0.s8 %v4912
    %v5726 = vunpack.c.1.s8 %v4906
    %v5727 = vunpack.c.1.s8 %v4907
    %v5728 = vunpack.c.1.s8 %v4908
    %v5729 = vunpack.c.1.s8 %v4909
    %v5730 = vunpack.c.1.s8 %v4910
    %v5731 = vunpack.c.1.s8 %v4911
    %v5732 = vunpack.c.1.s8 %v4912
    %v5733 = vunpack.c.2.s8 %v4906
    %v5734 = vunpack.c.2.s8 %v4907
    %v5735 = vunpack.c.2.s8 %v4908
    %v5736 = vunpack.c.2.s8 %v4909
    %v5737 = vunpack.c.2.s8 %v4910
    %v5738 = vunpack.c.2.s8 %v4911
    %v5739 = vunpack.c.2.s8 %v4912
    %v5740 = vunpack.c.3.s8 %v4906
    %v5741 = vunpack.c.3.s8 %v4907
    %v5742 = vunpack.c.3.s8 %v4908
    %v5743 = vunpack.c.3.s8 %v4909
    %v5744 = vunpack.c.3.s8 %v4910
    %v5745 = vunpack.c.3.s8 %v4911
    %v5746 = vunpack.c.3.s8 %v4912
    %v5747 = vunpack.c.0.s8 %v4913
    %v5748 = vunpack.c.0.s8 %v4914
    %v5749 = vunpack.c.0.s8 %v4915
    %v5750 = vunpack.c.0.s8 %v4916
    %v5751 = vunpack.c.0.s8 %v4917
    %v5752 = vunpack.c.0.s8 %v4918
    %v5753 = vunpack.c.0.s8 %v4919
    %v5754 = vunpack.c.1.s8 %v4913
    %v5755 = vunpack.c.1.s8 %v4914
    %v5756 = vunpack.c.1.s8 %v4915
    %v5757 = vunpack.c.1.s8 %v4916
    %v5758 = vunpack.c.1.s8 %v4917
    %v5759 = vunpack.c.1.s8 %v4918
    %v5760 = vunpack.c.1.s8 %v4919
    %v5761 = vunpack.c.2.s8 %v4913
    %v5762 = vunpack.c.2.s8 %v4914
    %v5763 = vunpack.c.2.s8 %v4915
    %v5764 = vunpack.c.2.s8 %v4916
    %v5765 = vunpack.c.2.s8 %v4917
    %v5766 = vunpack.c.2.s8 %v4918
    %v5767 = vunpack.c.2.s8 %v4919
    %v5768 = vunpack.c.3.s8 %v4913
    %v5769 = vunpack.c.3.s8 %v4914
    %v5770 = vunpack.c.3.s8 %v4915
    %v5771 = vunpack.c.3.s8 %v4916
    %v5772 = vunpack.c.3.s8 %v4917
    %v5773 = vunpack.c.3.s8 %v4918
    %v5774 = vunpack.c.3.s8 %v4919
    %v5775 = vunpack.c.0.s8 %v4920
    %v5776 = vunpack.c.0.s8 %v4921
    %v5777 = vunpack.c.0.s8 %v4922
    %v5778 = vunpack.c.0.s8 %v4923
    %v5779 = vunpack.c.0.s8 %v4924
    %v5780 = vunpack.c.0.s8 %v4925
    %v5781 = vunpack.c.0.s8 %v4926
    %v5782 = vunpack.c.1.s8 %v4920
    %v5783 = vunpack.c.1.s8 %v4921
    %v5784 = vunpack.c.1.s8 %v4922
    %v5785 = vunpack.c.1.s8 %v4923
    %v5786 = vunpack.c.1.s8 %v4924
    %v5787 = vunpack.c.1.s8 %v4925
    %v5788 = vunpack.c.1.s8 %v4926
    %v5789 = vunpack.c.2.s8 %v4920
    %v5790 = vunpack.c.2.s8 %v4921
    %v5791 = vunpack.c.2.s8 %v4922
    %v5792 = vunpack.c.2.s8 %v4923
    %v5793 = vunpack.c.2.s8 %v4924
    %v5794 = vunpack.c.2.s8 %v4925
    %v5795 = vunpack.c.2.s8 %v4926
    %v5796 = vunpack.c.3.s8 %v4920
    %v5797 = vunpack.c.3.s8 %v4921
    %v5798 = vunpack.c.3.s8 %v4922
    %v5799 = vunpack.c.3.s8 %v4923
    %v5800 = vunpack.c.3.s8 %v4924
    %v5801 = vunpack.c.3.s8 %v4925
    %v5802 = vunpack.c.3.s8 %v4926
    %v5803 = vunpack.c.0.s8 %v4927
    %v5804 = vunpack.c.0.s8 %v4928
    %v5805 = vunpack.c.0.s8 %v4929
    %v5806 = vunpack.c.0.s8 %v4930
    %v5807 = vunpack.c.0.s8 %v4931
    %v5808 = vunpack.c.0.s8 %v4932
    %v5809 = vunpack.c.0.s8 %v4933
    %v5810 = vunpack.c.1.s8 %v4927
    %v5811 = vunpack.c.1.s8 %v4928
    %v5812 = vunpack.c.1.s8 %v4929
    %v5813 = vunpack.c.1.s8 %v4930
    %v5814 = vunpack.c.1.s8 %v4931
    %v5815 = vunpack.c.1.s8 %v4932
    %v5816 = vunpack.c.1.s8 %v4933
    %v5817 = vunpack.c.2.s8 %v4927
    %v5818 = vunpack.c.2.s8 %v4928
    %v5819 = vunpack.c.2.s8 %v4929
    %v5820 = vunpack.c.2.s8 %v4930
    %v5821 = vunpack.c.2.s8 %v4931
    %v5822 = vunpack.c.2.s8 %v4932
    %v5823 = vunpack.c.2.s8 %v4933
    %v5824 = vunpack.c.3.s8 %v4927
    %v5825 = vunpack.c.3.s8 %v4928
    %v5826 = vunpack.c.3.s8 %v4929
    %v5827 = vunpack.c.3.s8 %v4930
    %v5828 = vunpack.c.3.s8 %v4931
    %v5829 = vunpack.c.3.s8 %v4932
    %v5830 = vunpack.c.3.s8 %v4933
    %v5831 = vcvt.s32.f32 %v4935
    %v5832 = vcvt.s32.f32 %v4936
    %v5833 = vcvt.s32.f32 %v4937
    %v5834 = vcvt.s32.f32 %v4938
    %v5835 = vcvt.s32.f32 %v4939
    %v5836 = vcvt.s32.f32 %v4940
    %v5837 = vcvt.s32.f32 %v4941
    %v5838 = vcvt.s32.f32 %v4942
    %v5839 = vcvt.s32.f32 %v4943
    %v5840 = vcvt.s32.f32 %v4944
    %v5841 = vcvt.s32.f32 %v4945
    %v5842 = vcvt.s32.f32 %v4946
    %v5843 = vcvt.s32.f32 %v4947
    %v5844 = vcvt.s32.f32 %v4948
    %v5845 = vcvt.s32.f32 %v4949
    %v5846 = vcvt.s32.f32 %v4950
    %v5847 = vcvt.s32.f32 %v4951
    %v5848 = vcvt.s32.f32 %v4952
    %v5849 = vcvt.s32.f32 %v4953
    %v5850 = vcvt.s32.f32 %v4954
    %v5851 = vcvt.s32.f32 %v4955
    %v5852 = vcvt.s32.f32 %v4956
    %v5853 = vcvt.s32.f32 %v4957
    %v5854 = vcvt.s32.f32 %v4958
    %v5855 = vcvt.s32.f32 %v4959
    %v5856 = vcvt.s32.f32 %v4960
    %v5857 = vcvt.s32.f32 %v4961
    %v5858 = vcvt.s32.f32 %v4962
    %v5859 = vcvt.s32.f32 %v4963
    %v5860 = vcvt.s32.f32 %v4964
    %v5861 = vcvt.s32.f32 %v4965
    %v5862 = vcvt.s32.f32 %v4966
    %v5863 = vcvt.s32.f32 %v4967
    %v5864 = vcvt.s32.f32 %v4968
    %v5865 = vcvt.s32.f32 %v4969
    %v5866 = vcvt.s32.f32 %v4970
    %v5867 = vcvt.s32.f32 %v4971
    %v5868 = vcvt.s32.f32 %v4972
    %v5869 = vcvt.s32.f32 %v4973
    %v5870 = vcvt.s32.f32 %v4974
    %v5871 = vcvt.s32.f32 %v4975
    %v5872 = vcvt.s32.f32 %v4976
    %v5873 = vcvt.s32.f32 %v4977
    %v5874 = vcvt.s32.f32 %v4978
    %v5875 = vcvt.s32.f32 %v4979
    %v5876 = vcvt.s32.f32 %v4980
    %v5877 = vcvt.s32.f32 %v4981
    %v5878 = vcvt.s32.f32 %v4982
    %v5879 = vcvt.s32.f32 %v4983
    %v5880 = vcvt.s32.f32 %v4984
    %v5881 = vcvt.s32.f32 %v4985
    %v5882 = vcvt.s32.f32 %v4986
    %v5883 = vcvt.s32.f32 %v4987
    %v5884 = vcvt.s32.f32 %v4988
    %v5885 = vcvt.s32.f32 %v4989
    %v5886 = vcvt.s32.f32 %v4990
    %v5887 = vcvt.s32.f32 %v4991
    %v5888 = vcvt.s32.f32 %v4992
    %v5889 = vcvt.s32.f32 %v4993
    %v5890 = vcvt.s32.f32 %v4994
    %v5891 = vcvt.s32.f32 %v4995
    %v5892 = vcvt.s32.f32 %v4996
    %v5893 = vcvt.s32.f32 %v4997
    %v5894 = vcvt.s32.f32 %v4998
    %v5895 = vcvt.s32.f32 %v4999
    %v5896 = vcvt.s32.f32 %v5000
    %v5897 = vcvt.s32.f32 %v5001
    %v5898 = vcvt.s32.f32 %v5002
    %v5899 = vcvt.s32.f32 %v5003
    %v5900 = vcvt.s32.f32 %v5004
    %v5901 = vcvt.s32.f32 %v5005
    %v5902 = vcvt.s32.f32 %v5006
    %v5903 = vcvt.s32.f32 %v5007
    %v5904 = vcvt.s32.f32 %v5008
    %v5905 = vcvt.s32.f32 %v5009
    %v5906 = vcvt.s32.f32 %v5010
    %v5907 = vcvt.s32.f32 %v5011
    %v5908 = vcvt.s32.f32 %v5012
    %v5909 = vcvt.s32.f32 %v5013
    %v5910 = vcvt.s32.f32 %v5014
    %v5911 = vcvt.s32.f32 %v5015
    %v5912 = vcvt.s32.f32 %v5016
    %v5913 = vcvt.s32.f32 %v5017
    %v5914 = vcvt.s32.f32 %v5018
    %v5915 = vcvt.s32.f32 %v5019
    %v5916 = vcvt.s32.f32 %v5020
    %v5917 = vcvt.s32.f32 %v5021
    %v5918 = vcvt.s32.f32 %v5022
    %v5919 = vcvt.s32.f32 %v5023
    %v5920 = vcvt.s32.f32 %v5024
    %v5921 = vcvt.s32.f32 %v5025
    %v5922 = vcvt.s32.f32 %v5026
    %v5923 = vcvt.s32.f32 %v5027
    %v5924 = vcvt.s32.f32 %v5028
    %v5925 = vcvt.s32.f32 %v5029
    %v5926 = vcvt.s32.f32 %v5030
    %v5927 = vcvt.s32.f32 %v5031
    %v5928 = vcvt.s32.f32 %v5032
    %v5929 = vcvt.s32.f32 %v5033
    %v5930 = vcvt.s32.f32 %v5034
    %v5931 = vcvt.s32.f32 %v5035
    %v5932 = vcvt.s32.f32 %v5036
    %v5933 = vcvt.s32.f32 %v5037
    %v5934 = vcvt.s32.f32 %v5038
    %v5935 = vcvt.s32.f32 %v5039
    %v5936 = vcvt.s32.f32 %v5040
    %v5937 = vcvt.s32.f32 %v5041
    %v5938 = vcvt.s32.f32 %v5042
    %v5939 = vcvt.s32.f32 %v5043
    %v5940 = vcvt.s32.f32 %v5044
    %v5941 = vcvt.s32.f32 %v5045
    %v5942 = vcvt.s32.f32 %v5046
    %v5943 = vcvt.s32.f32 %v5047
    %v5944 = vcvt.s32.f32 %v5048
    %v5945 = vcvt.s32.f32 %v5049
    %v5946 = vcvt.s32.f32 %v5050
    %v5947 = vcvt.s32.f32 %v5051
    %v5948 = vcvt.s32.f32 %v5052
    %v5949 = vcvt.s32.f32 %v5053
    %v5950 = vcvt.s32.f32 %v5054
    %v5951 = vcvt.s32.f32 %v5055
    %v5952 = vcvt.s32.f32 %v5056
    %v5953 = vcvt.s32.f32 %v5057
    %v5954 = vcvt.s32.f32 %v5058
    %v5955 = vcvt.s32.f32 %v5059
    %v5956 = vcvt.s32.f32 %v5060
    %v5957 = vcvt.s32.f32 %v5061
    %v5958 = vcvt.s32.f32 %v5062
    %v5959 = vcvt.s32.f32 %v5063
    %v5960 = vcvt.s32.f32 %v5064
    %v5961 = vcvt.s32.f32 %v5065
    %v5962 = vcvt.s32.f32 %v5066
    %v5963 = vcvt.s32.f32 %v5067
    %v5964 = vcvt.s32.f32 %v5068
    %v5965 = vcvt.s32.f32 %v5069
    %v5966 = vcvt.s32.f32 %v5070
    %v5967 = vcvt.s32.f32 %v5071
    %v5968 = vcvt.s32.f32 %v5072
    %v5969 = vcvt.s32.f32 %v5073
    %v5970 = vcvt.s32.f32 %v5074
    %v5971 = vcvt.s32.f32 %v5075
    %v5972 = vcvt.s32.f32 %v5076
    %v5973 = vcvt.s32.f32 %v5077
    %v5974 = vcvt.s32.f32 %v5078
    %v5975 = vcvt.s32.f32 %v5079
    %v5976 = vcvt.s32.f32 %v5080
    %v5977 = vcvt.s32.f32 %v5081
    %v5978 = vcvt.s32.f32 %v5082
    %v5979 = vcvt.s32.f32 %v5083
    %v5980 = vcvt.s32.f32 %v5084
    %v5981 = vcvt.s32.f32 %v5085
    %v5982 = vcvt.s32.f32 %v5086
    %v5983 = vcvt.s32.f32 %v5087
    %v5984 = vcvt.s32.f32 %v5088
    %v5985 = vcvt.s32.f32 %v5089
    %v5986 = vcvt.s32.f32 %v5090
    %v5987 = vcvt.s32.f32 %v5091
    %v5988 = vcvt.s32.f32 %v5092
    %v5989 = vcvt.s32.f32 %v5093
    %v5990 = vcvt.s32.f32 %v5094
    %v5991 = vcvt.s32.f32 %v5095
    %v5992 = vcvt.s32.f32 %v5096
    %v5993 = vcvt.s32.f32 %v5097
    %v5994 = vcvt.s32.f32 %v5098
    %v5995 = vcvt.s32.f32 %v5099
    %v5996 = vcvt.s32.f32 %v5100
    %v5997 = vcvt.s32.f32 %v5101
    %v5998 = vcvt.s32.f32 %v5102
    %v5999 = vcvt.s32.f32 %v5103
    %v6000 = vcvt.s32.f32 %v5104
    %v6001 = vcvt.s32.f32 %v5105
    %v6002 = vcvt.s32.f32 %v5106
    %v6003 = vcvt.s32.f32 %v5107
    %v6004 = vcvt.s32.f32 %v5108
    %v6005 = vcvt.s32.f32 %v5109
    %v6006 = vcvt.s32.f32 %v5110
    %v6007 = vcvt.s32.f32 %v5111
    %v6008 = vcvt.s32.f32 %v5112
    %v6009 = vcvt.s32.f32 %v5113
    %v6010 = vcvt.s32.f32 %v5114
    %v6011 = vcvt.s32.f32 %v5115
    %v6012 = vcvt.s32.f32 %v5116
    %v6013 = vcvt.s32.f32 %v5117
    %v6014 = vcvt.s32.f32 %v5118
    %v6015 = vcvt.s32.f32 %v5119
    %v6016 = vcvt.s32.f32 %v5120
    %v6017 = vcvt.s32.f32 %v5121
    %v6018 = vcvt.s32.f32 %v5122
    %v6019 = vcvt.s32.f32 %v5123
    %v6020 = vcvt.s32.f32 %v5124
    %v6021 = vcvt.s32.f32 %v5125
    %v6022 = vcvt.s32.f32 %v5126
    %v6023 = vcvt.s32.f32 %v5127
    %v6024 = vcvt.s32.f32 %v5128
    %v6025 = vcvt.s32.f32 %v5129
    %v6026 = vcvt.s32.f32 %v5130
    %v6027 = vcvt.s32.f32 %v5131
    %v6028 = vcvt.s32.f32 %v5132
    %v6029 = vcvt.s32.f32 %v5133
    %v6030 = vcvt.s32.f32 %v5134
    %v6031 = vcvt.s32.f32 %v5135
    %v6032 = vcvt.s32.f32 %v5136
    %v6033 = vcvt.s32.f32 %v5137
    %v6034 = vcvt.s32.f32 %v5138
    %v6035 = vcvt.s32.f32 %v5139
    %v6036 = vcvt.s32.f32 %v5140
    %v6037 = vcvt.s32.f32 %v5141
    %v6038 = vcvt.s32.f32 %v5142
    %v6039 = vcvt.s32.f32 %v5143
    %v6040 = vcvt.s32.f32 %v5144
    %v6041 = vcvt.s32.f32 %v5145
    %v6042 = vcvt.s32.f32 %v5146
    %v6043 = vcvt.s32.f32 %v5147
    %v6044 = vcvt.s32.f32 %v5148
    %v6045 = vcvt.s32.f32 %v5149
    %v6046 = vcvt.s32.f32 %v5150
    %v6047 = vcvt.s32.f32 %v5151
    %v6048 = vcvt.s32.f32 %v5152
    %v6049 = vcvt.s32.f32 %v5153
    %v6050 = vcvt.s32.f32 %v5154
    %v6051 = vcvt.s32.f32 %v5155
    %v6052 = vcvt.s32.f32 %v5156
    %v6053 = vcvt.s32.f32 %v5157
    %v6054 = vcvt.s32.f32 %v5158
    %v6055 = vcvt.s32.f32 %v5159
    %v6056 = vcvt.s32.f32 %v5160
    %v6057 = vcvt.s32.f32 %v5161
    %v6058 = vcvt.s32.f32 %v5162
    %v6059 = vcvt.s32.f32 %v5163
    %v6060 = vcvt.s32.f32 %v5164
    %v6061 = vcvt.s32.f32 %v5165
    %v6062 = vcvt.s32.f32 %v5166
    %v6063 = vcvt.s32.f32 %v5167
    %v6064 = vcvt.s32.f32 %v5168
    %v6065 = vcvt.s32.f32 %v5169
    %v6066 = vcvt.s32.f32 %v5170
    %v6067 = vcvt.s32.f32 %v5171
    %v6068 = vcvt.s32.f32 %v5172
    %v6069 = vcvt.s32.f32 %v5173
    %v6070 = vcvt.s32.f32 %v5174
    %v6071 = vcvt.s32.f32 %v5175
    %v6072 = vcvt.s32.f32 %v5176
    %v6073 = vcvt.s32.f32 %v5177
    %v6074 = vcvt.s32.f32 %v5178
    %v6075 = vcvt.s32.f32 %v5179
    %v6076 = vcvt.s32.f32 %v5180
    %v6077 = vcvt.s32.f32 %v5181
    %v6078 = vcvt.s32.f32 %v5182
    %v6079 = vcvt.s32.f32 %v5183
    %v6080 = vcvt.s32.f32 %v5184
    %v6081 = vcvt.s32.f32 %v5185
    %v6082 = vcvt.s32.f32 %v5186
    %v6083 = vcvt.s32.f32 %v5187
    %v6084 = vcvt.s32.f32 %v5188
    %v6085 = vcvt.s32.f32 %v5189
    %v6086 = vcvt.s32.f32 %v5190
    %v6087 = vcvt.s32.f32 %v5191
    %v6088 = vcvt.s32.f32 %v5192
    %v6089 = vcvt.s32.f32 %v5193
    %v6090 = vcvt.s32.f32 %v5194
    %v6091 = vcvt.s32.f32 %v5195
    %v6092 = vcvt.s32.f32 %v5196
    %v6093 = vcvt.s32.f32 %v5197
    %v6094 = vcvt.s32.f32 %v5198
    %v6095 = vcvt.s32.f32 %v5199
    %v6096 = vcvt.s32.f32 %v5200
    %v6097 = vcvt.s32.f32 %v5201
    %v6098 = vcvt.s32.f32 %v5202
    %v6099 = vcvt.s32.f32 %v5203
    %v6100 = vcvt.s32.f32 %v5204
    %v6101 = vcvt.s32.f32 %v5205
    %v6102 = vcvt.s32.f32 %v5206
    %v6103 = vcvt.s32.f32 %v5207
    %v6104 = vcvt.s32.f32 %v5208
    %v6105 = vcvt.s32.f32 %v5209
    %v6106 = vcvt.s32.f32 %v5210
    %v6107 = vcvt.s32.f32 %v5211
    %v6108 = vcvt.s32.f32 %v5212
    %v6109 = vcvt.s32.f32 %v5213
    %v6110 = vcvt.s32.f32 %v5214
    %v6111 = vcvt.s32.f32 %v5215
    %v6112 = vcvt.s32.f32 %v5216
    %v6113 = vcvt.s32.f32 %v5217
    %v6114 = vcvt.s32.f32 %v5218
    %v6115 = vcvt.s32.f32 %v5219
    %v6116 = vcvt.s32.f32 %v5220
    %v6117 = vcvt.s32.f32 %v5221
    %v6118 = vcvt.s32.f32 %v5222
    %v6119 = vcvt.s32.f32 %v5223
    %v6120 = vcvt.s32.f32 %v5224
    %v6121 = vcvt.s32.f32 %v5225
    %v6122 = vcvt.s32.f32 %v5226
    %v6123 = vcvt.s32.f32 %v5227
    %v6124 = vcvt.s32.f32 %v5228
    %v6125 = vcvt.s32.f32 %v5229
    %v6126 = vcvt.s32.f32 %v5230
    %v6127 = vcvt.s32.f32 %v5231
    %v6128 = vcvt.s32.f32 %v5232
    %v6129 = vcvt.s32.f32 %v5233
    %v6130 = vcvt.s32.f32 %v5234
    %v6131 = vcvt.s32.f32 %v5235
    %v6132 = vcvt.s32.f32 %v5236
    %v6133 = vcvt.s32.f32 %v5237
    %v6134 = vcvt.s32.f32 %v5238
    %v6135 = vcvt.s32.f32 %v5239
    %v6136 = vcvt.s32.f32 %v5240
    %v6137 = vcvt.s32.f32 %v5241
    %v6138 = vcvt.s32.f32 %v5242
    %v6139 = vcvt.s32.f32 %v5243
    %v6140 = vcvt.s32.f32 %v5244
    %v6141 = vcvt.s32.f32 %v5245
    %v6142 = vcvt.s32.f32 %v5246
    %v6143 = vcvt.s32.f32 %v5247
    %v6144 = vcvt.s32.f32 %v5248
    %v6145 = vcvt.s32.f32 %v5249
    %v6146 = vcvt.s32.f32 %v5250
    %v6147 = vcvt.s32.f32 %v5251
    %v6148 = vcvt.s32.f32 %v5252
    %v6149 = vcvt.s32.f32 %v5253
    %v6150 = vcvt.s32.f32 %v5254
    %v6151 = vcvt.s32.f32 %v5255
    %v6152 = vcvt.s32.f32 %v5256
    %v6153 = vcvt.s32.f32 %v5257
    %v6154 = vcvt.s32.f32 %v5258
    %v6155 = vcvt.s32.f32 %v5259
    %v6156 = vcvt.s32.f32 %v5260
    %v6157 = vcvt.s32.f32 %v5261
    %v6158 = vcvt.s32.f32 %v5262
    %v6159 = vcvt.s32.f32 %v5263
    %v6160 = vcvt.s32.f32 %v5264
    %v6161 = vcvt.s32.f32 %v5265
    %v6162 = vcvt.s32.f32 %v5266
    %v6163 = vcvt.s32.f32 %v5267
    %v6164 = vcvt.s32.f32 %v5268
    %v6165 = vcvt.s32.f32 %v5269
    %v6166 = vcvt.s32.f32 %v5270
    %v6167 = vcvt.s32.f32 %v5271
    %v6168 = vcvt.s32.f32 %v5272
    %v6169 = vcvt.s32.f32 %v5273
    %v6170 = vcvt.s32.f32 %v5274
    %v6171 = vcvt.s32.f32 %v5275
    %v6172 = vcvt.s32.f32 %v5276
    %v6173 = vcvt.s32.f32 %v5277
    %v6174 = vcvt.s32.f32 %v5278
    %v6175 = vcvt.s32.f32 %v5279
    %v6176 = vcvt.s32.f32 %v5280
    %v6177 = vcvt.s32.f32 %v5281
    %v6178 = vcvt.s32.f32 %v5282
    %v6179 = vcvt.s32.f32 %v5283
    %v6180 = vcvt.s32.f32 %v5284
    %v6181 = vcvt.s32.f32 %v5285
    %v6182 = vcvt.s32.f32 %v5286
    %v6183 = vcvt.s32.f32 %v5287
    %v6184 = vcvt.s32.f32 %v5288
    %v6185 = vcvt.s32.f32 %v5289
    %v6186 = vcvt.s32.f32 %v5290
    %v6187 = vcvt.s32.f32 %v5291
    %v6188 = vcvt.s32.f32 %v5292
    %v6189 = vcvt.s32.f32 %v5293
    %v6190 = vcvt.s32.f32 %v5294
    %v6191 = vcvt.s32.f32 %v5295
    %v6192 = vcvt.s32.f32 %v5296
    %v6193 = vcvt.s32.f32 %v5297
    %v6194 = vcvt.s32.f32 %v5298
    %v6195 = vcvt.s32.f32 %v5299
    %v6196 = vcvt.s32.f32 %v5300
    %v6197 = vcvt.s32.f32 %v5301
    %v6198 = vcvt.s32.f32 %v5302
    %v6199 = vcvt.s32.f32 %v5303
    %v6200 = vcvt.s32.f32 %v5304
    %v6201 = vcvt.s32.f32 %v5305
    %v6202 = vcvt.s32.f32 %v5306
    %v6203 = vcvt.s32.f32 %v5307
    %v6204 = vcvt.s32.f32 %v5308
    %v6205 = vcvt.s32.f32 %v5309
    %v6206 = vcvt.s32.f32 %v5310
    %v6207 = vcvt.s32.f32 %v5311
    %v6208 = vcvt.s32.f32 %v5312
    %v6209 = vcvt.s32.f32 %v5313
    %v6210 = vcvt.s32.f32 %v5314
    %v6211 = vcvt.s32.f32 %v5315
    %v6212 = vcvt.s32.f32 %v5316
    %v6213 = vcvt.s32.f32 %v5317
    %v6214 = vcvt.s32.f32 %v5318
    %v6215 = vcvt.s32.f32 %v5319
    %v6216 = vcvt.s32.f32 %v5320
    %v6217 = vcvt.s32.f32 %v5321
    %v6218 = vcvt.s32.f32 %v5322
    %v6219 = vcvt.s32.f32 %v5323
    %v6220 = vcvt.s32.f32 %v5324
    %v6221 = vcvt.s32.f32 %v5325
    %v6222 = vcvt.s32.f32 %v5326
    %v6223 = vcvt.s32.f32 %v5327
    %v6224 = vcvt.s32.f32 %v5328
    %v6225 = vcvt.s32.f32 %v5329
    %v6226 = vcvt.s32.f32 %v5330
    %v6227 = vcvt.s32.f32 %v5331
    %v6228 = vcvt.s32.f32 %v5332
    %v6229 = vcvt.s32.f32 %v5333
    %v6230 = vcvt.s32.f32 %v5334
    %v6231 = vcvt.s32.f32 %v5335
    %v6232 = vcvt.s32.f32 %v5336
    %v6233 = vcvt.s32.f32 %v5337
    %v6234 = vcvt.s32.f32 %v5338
    %v6235 = vcvt.s32.f32 %v5339
    %v6236 = vcvt.s32.f32 %v5340
    %v6237 = vcvt.s32.f32 %v5341
    %v6238 = vcvt.s32.f32 %v5342
    %v6239 = vcvt.s32.f32 %v5343
    %v6240 = vcvt.s32.f32 %v5344
    %v6241 = vcvt.s32.f32 %v5345
    %v6242 = vcvt.s32.f32 %v5346
    %v6243 = vcvt.s32.f32 %v5347
    %v6244 = vcvt.s32.f32 %v5348
    %v6245 = vcvt.s32.f32 %v5349
    %v6246 = vcvt.s32.f32 %v5350
    %v6247 = vcvt.s32.f32 %v5351
    %v6248 = vcvt.s32.f32 %v5352
    %v6249 = vcvt.s32.f32 %v5353
    %v6250 = vcvt.s32.f32 %v5354
    %v6251 = vcvt.s32.f32 %v5355
    %v6252 = vcvt.s32.f32 %v5356
    %v6253 = vcvt.s32.f32 %v5357
    %v6254 = vcvt.s32.f32 %v5358
    %v6255 = vcvt.s32.f32 %v5359
    %v6256 = vcvt.s32.f32 %v5360
    %v6257 = vcvt.s32.f32 %v5361
    %v6258 = vcvt.s32.f32 %v5362
    %v6259 = vcvt.s32.f32 %v5363
    %v6260 = vcvt.s32.f32 %v5364
    %v6261 = vcvt.s32.f32 %v5365
    %v6262 = vcvt.s32.f32 %v5366
    %v6263 = vcvt.s32.f32 %v5367
    %v6264 = vcvt.s32.f32 %v5368
    %v6265 = vcvt.s32.f32 %v5369
    %v6266 = vcvt.s32.f32 %v5370
    %v6267 = vcvt.s32.f32 %v5371
    %v6268 = vcvt.s32.f32 %v5372
    %v6269 = vcvt.s32.f32 %v5373
    %v6270 = vcvt.s32.f32 %v5374
    %v6271 = vcvt.s32.f32 %v5375
    %v6272 = vcvt.s32.f32 %v5376
    %v6273 = vcvt.s32.f32 %v5377
    %v6274 = vcvt.s32.f32 %v5378
    %v6275 = vcvt.s32.f32 %v5379
    %v6276 = vcvt.s32.f32 %v5380
    %v6277 = vcvt.s32.f32 %v5381
    %v6278 = vcvt.s32.f32 %v5382
    %v6279 = vcvt.s32.f32 %v5383
    %v6280 = vcvt.s32.f32 %v5384
    %v6281 = vcvt.s32.f32 %v5385
    %v6282 = vcvt.s32.f32 %v5386
    %v6283 = vcvt.s32.f32 %v5387
    %v6284 = vcvt.s32.f32 %v5388
    %v6285 = vcvt.s32.f32 %v5389
    %v6286 = vcvt.s32.f32 %v5390
    %v6287 = vcvt.s32.f32 %v5391
    %v6288 = vcvt.s32.f32 %v5392
    %v6289 = vcvt.s32.f32 %v5393
    %v6290 = vcvt.s32.f32 %v5394
    %v6291 = vcvt.s32.f32 %v5395
    %v6292 = vcvt.s32.f32 %v5396
    %v6293 = vcvt.s32.f32 %v5397
    %v6294 = vcvt.s32.f32 %v5398
    %v6295 = vcvt.s32.f32 %v5399
    %v6296 = vcvt.s32.f32 %v5400
    %v6297 = vcvt.s32.f32 %v5401
    %v6298 = vcvt.s32.f32 %v5402
    %v6299 = vcvt.s32.f32 %v5403
    %v6300 = vcvt.s32.f32 %v5404
    %v6301 = vcvt.s32.f32 %v5405
    %v6302 = vcvt.s32.f32 %v5406
    %v6303 = vcvt.s32.f32 %v5407
    %v6304 = vcvt.s32.f32 %v5408
    %v6305 = vcvt.s32.f32 %v5409
    %v6306 = vcvt.s32.f32 %v5410
    %v6307 = vcvt.s32.f32 %v5411
    %v6308 = vcvt.s32.f32 %v5412
    %v6309 = vcvt.s32.f32 %v5413
    %v6310 = vcvt.s32.f32 %v5414
    %v6311 = vcvt.s32.f32 %v5415
    %v6312 = vcvt.s32.f32 %v5416
    %v6313 = vcvt.s32.f32 %v5417
    %v6314 = vcvt.s32.f32 %v5418
    %v6315 = vcvt.s32.f32 %v5419
    %v6316 = vcvt.s32.f32 %v5420
    %v6317 = vcvt.s32.f32 %v5421
    %v6318 = vcvt.s32.f32 %v5422
    %v6319 = vcvt.s32.f32 %v5423
    %v6320 = vcvt.s32.f32 %v5424
    %v6321 = vcvt.s32.f32 %v5425
    %v6322 = vcvt.s32.f32 %v5426
    %v6323 = vcvt.s32.f32 %v5427
    %v6324 = vcvt.s32.f32 %v5428
    %v6325 = vcvt.s32.f32 %v5429
    %v6326 = vcvt.s32.f32 %v5430
    %v6327 = vcvt.s32.f32 %v5431
    %v6328 = vcvt.s32.f32 %v5432
    %v6329 = vcvt.s32.f32 %v5433
    %v6330 = vcvt.s32.f32 %v5434
    %v6331 = vcvt.s32.f32 %v5435
    %v6332 = vcvt.s32.f32 %v5436
    %v6333 = vcvt.s32.f32 %v5437
    %v6334 = vcvt.s32.f32 %v5438
    %v6335 = vcvt.s32.f32 %v5439
    %v6336 = vcvt.s32.f32 %v5440
    %v6337 = vcvt.s32.f32 %v5441
    %v6338 = vcvt.s32.f32 %v5442
    %v6339 = vcvt.s32.f32 %v5443
    %v6340 = vcvt.s32.f32 %v5444
    %v6341 = vcvt.s32.f32 %v5445
    %v6342 = vcvt.s32.f32 %v5446
    %v6343 = vcvt.s32.f32 %v5447
    %v6344 = vcvt.s32.f32 %v5448
    %v6345 = vcvt.s32.f32 %v5449
    %v6346 = vcvt.s32.f32 %v5450
    %v6347 = vcvt.s32.f32 %v5451
    %v6348 = vcvt.s32.f32 %v5452
    %v6349 = vcvt.s32.f32 %v5453
    %v6350 = vcvt.s32.f32 %v5454
    %v6351 = vcvt.s32.f32 %v5455
    %v6352 = vcvt.s32.f32 %v5456
    %v6353 = vcvt.s32.f32 %v5457
    %v6354 = vcvt.s32.f32 %v5458
    %v6355 = vcvt.s32.f32 %v5459
    %v6356 = vcvt.s32.f32 %v5460
    %v6357 = vcvt.s32.f32 %v5461
    %v6358 = vcvt.s32.f32 %v5462
    %v6359 = vcvt.s32.f32 %v5463
    %v6360 = vcvt.s32.f32 %v5464
    %v6361 = vcvt.s32.f32 %v5465
    %v6362 = vcvt.s32.f32 %v5466
    %v6363 = vcvt.s32.f32 %v5467
    %v6364 = vcvt.s32.f32 %v5468
    %v6365 = vcvt.s32.f32 %v5469
    %v6366 = vcvt.s32.f32 %v5470
    %v6367 = vcvt.s32.f32 %v5471
    %v6368 = vcvt.s32.f32 %v5472
    %v6369 = vcvt.s32.f32 %v5473
    %v6370 = vcvt.s32.f32 %v5474
    %v6371 = vcvt.s32.f32 %v5475
    %v6372 = vcvt.s32.f32 %v5476
    %v6373 = vcvt.s32.f32 %v5477
    %v6374 = vcvt.s32.f32 %v5478
    %v6375 = vcvt.s32.f32 %v5479
    %v6376 = vcvt.s32.f32 %v5480
    %v6377 = vcvt.s32.f32 %v5481
    %v6378 = vcvt.s32.f32 %v5482
    %v6379 = vcvt.s32.f32 %v5483
    %v6380 = vcvt.s32.f32 %v5484
    %v6381 = vcvt.s32.f32 %v5485
    %v6382 = vcvt.s32.f32 %v5486
    %v6383 = vcvt.s32.f32 %v5487
    %v6384 = vcvt.s32.f32 %v5488
    %v6385 = vcvt.s32.f32 %v5489
    %v6386 = vcvt.s32.f32 %v5490
    %v6387 = vcvt.s32.f32 %v5491
    %v6388 = vcvt.s32.f32 %v5492
    %v6389 = vcvt.s32.f32 %v5493
    %v6390 = vcvt.s32.f32 %v5494
    %v6391 = vcvt.s32.f32 %v5495
    %v6392 = vcvt.s32.f32 %v5496
    %v6393 = vcvt.s32.f32 %v5497
    %v6394 = vcvt.s32.f32 %v5498
    %v6395 = vcvt.s32.f32 %v5499
    %v6396 = vcvt.s32.f32 %v5500
    %v6397 = vcvt.s32.f32 %v5501
    %v6398 = vcvt.s32.f32 %v5502
    %v6399 = vcvt.s32.f32 %v5503
    %v6400 = vcvt.s32.f32 %v5504
    %v6401 = vcvt.s32.f32 %v5505
    %v6402 = vcvt.s32.f32 %v5506
    %v6403 = vcvt.s32.f32 %v5507
    %v6404 = vcvt.s32.f32 %v5508
    %v6405 = vcvt.s32.f32 %v5509
    %v6406 = vcvt.s32.f32 %v5510
    %v6407 = vcvt.s32.f32 %v5511
    %v6408 = vcvt.s32.f32 %v5512
    %v6409 = vcvt.s32.f32 %v5513
    %v6410 = vcvt.s32.f32 %v5514
    %v6411 = vcvt.s32.f32 %v5515
    %v6412 = vcvt.s32.f32 %v5516
    %v6413 = vcvt.s32.f32 %v5517
    %v6414 = vcvt.s32.f32 %v5518
    %v6415 = vcvt.s32.f32 %v5519
    %v6416 = vcvt.s32.f32 %v5520
    %v6417 = vcvt.s32.f32 %v5521
    %v6418 = vcvt.s32.f32 %v5522
    %v6419 = vcvt.s32.f32 %v5523
    %v6420 = vcvt.s32.f32 %v5524
    %v6421 = vcvt.s32.f32 %v5525
    %v6422 = vcvt.s32.f32 %v5526
    %v6423 = vcvt.s32.f32 %v5527
    %v6424 = vcvt.s32.f32 %v5528
    %v6425 = vcvt.s32.f32 %v5529
    %v6426 = vcvt.s32.f32 %v5530
    %v6427 = vcvt.s32.f32 %v5531
    %v6428 = vcvt.s32.f32 %v5532
    %v6429 = vcvt.s32.f32 %v5533
    %v6430 = vcvt.s32.f32 %v5534
    %v6431 = vcvt.s32.f32 %v5535
    %v6432 = vcvt.s32.f32 %v5536
    %v6433 = vcvt.s32.f32 %v5537
    %v6434 = vcvt.s32.f32 %v5538
    %v6435 = vcvt.s32.f32 %v5539
    %v6436 = vcvt.s32.f32 %v5540
    %v6437 = vcvt.s32.f32 %v5541
    %v6438 = vcvt.s32.f32 %v5542
    %v6439 = vcvt.s32.f32 %v5543
    %v6440 = vcvt.s32.f32 %v5544
    %v6441 = vcvt.s32.f32 %v5545
    %v6442 = vcvt.s32.f32 %v5546
    %v6443 = vcvt.s32.f32 %v5547
    %v6444 = vcvt.s32.f32 %v5548
    %v6445 = vcvt.s32.f32 %v5549
    %v6446 = vcvt.s32.f32 %v5550
    %v6447 = vcvt.s32.f32 %v5551
    %v6448 = vcvt.s32.f32 %v5552
    %v6449 = vcvt.s32.f32 %v5553
    %v6450 = vcvt.s32.f32 %v5554
    %v6451 = vcvt.s32.f32 %v5555
    %v6452 = vcvt.s32.f32 %v5556
    %v6453 = vcvt.s32.f32 %v5557
    %v6454 = vcvt.s32.f32 %v5558
    %v6455 = vcvt.s32.f32 %v5559
    %v6456 = vcvt.s32.f32 %v5560
    %v6457 = vcvt.s32.f32 %v5561
    %v6458 = vcvt.s32.f32 %v5562
    %v6459 = vcvt.s32.f32 %v5563
    %v6460 = vcvt.s32.f32 %v5564
    %v6461 = vcvt.s32.f32 %v5565
    %v6462 = vcvt.s32.f32 %v5566
    %v6463 = vcvt.s32.f32 %v5567
    %v6464 = vcvt.s32.f32 %v5568
    %v6465 = vcvt.s32.f32 %v5569
    %v6466 = vcvt.s32.f32 %v5570
    %v6467 = vcvt.s32.f32 %v5571
    %v6468 = vcvt.s32.f32 %v5572
    %v6469 = vcvt.s32.f32 %v5573
    %v6470 = vcvt.s32.f32 %v5574
    %v6471 = vcvt.s32.f32 %v5575
    %v6472 = vcvt.s32.f32 %v5576
    %v6473 = vcvt.s32.f32 %v5577
    %v6474 = vcvt.s32.f32 %v5578
    %v6475 = vcvt.s32.f32 %v5579
    %v6476 = vcvt.s32.f32 %v5580
    %v6477 = vcvt.s32.f32 %v5581
    %v6478 = vcvt.s32.f32 %v5582
    %v6479 = vcvt.s32.f32 %v5583
    %v6480 = vcvt.s32.f32 %v5584
    %v6481 = vcvt.s32.f32 %v5585
    %v6482 = vcvt.s32.f32 %v5586
    %v6483 = vcvt.s32.f32 %v5587
    %v6484 = vcvt.s32.f32 %v5588
    %v6485 = vcvt.s32.f32 %v5589
    %v6486 = vcvt.s32.f32 %v5590
    %v6487 = vcvt.s32.f32 %v5591
    %v6488 = vcvt.s32.f32 %v5592
    %v6489 = vcvt.s32.f32 %v5593
    %v6490 = vcvt.s32.f32 %v5594
    %v6491 = vcvt.s32.f32 %v5595
    %v6492 = vcvt.s32.f32 %v5596
    %v6493 = vcvt.s32.f32 %v5597
    %v6494 = vcvt.s32.f32 %v5598
    %v6495 = vcvt.s32.f32 %v5599
    %v6496 = vcvt.s32.f32 %v5600
    %v6497 = vcvt.s32.f32 %v5601
    %v6498 = vcvt.s32.f32 %v5602
    %v6499 = vcvt.s32.f32 %v5603
    %v6500 = vcvt.s32.f32 %v5604
    %v6501 = vcvt.s32.f32 %v5605
    %v6502 = vcvt.s32.f32 %v5606
    %v6503 = vcvt.s32.f32 %v5607
    %v6504 = vcvt.s32.f32 %v5608
    %v6505 = vcvt.s32.f32 %v5609
    %v6506 = vcvt.s32.f32 %v5610
    %v6507 = vcvt.s32.f32 %v5611
    %v6508 = vcvt.s32.f32 %v5612
    %v6509 = vcvt.s32.f32 %v5613
    %v6510 = vcvt.s32.f32 %v5614
    %v6511 = vcvt.s32.f32 %v5615
    %v6512 = vcvt.s32.f32 %v5616
    %v6513 = vcvt.s32.f32 %v5617
    %v6514 = vcvt.s32.f32 %v5618
    %v6515 = vcvt.s32.f32 %v5619
    %v6516 = vcvt.s32.f32 %v5620
    %v6517 = vcvt.s32.f32 %v5621
    %v6518 = vcvt.s32.f32 %v5622
    %v6519 = vcvt.s32.f32 %v5623
    %v6520 = vcvt.s32.f32 %v5624
    %v6521 = vcvt.s32.f32 %v5625
    %v6522 = vcvt.s32.f32 %v5626
    %v6523 = vcvt.s32.f32 %v5627
    %v6524 = vcvt.s32.f32 %v5628
    %v6525 = vcvt.s32.f32 %v5629
    %v6526 = vcvt.s32.f32 %v5630
    %v6527 = vcvt.s32.f32 %v5631
    %v6528 = vcvt.s32.f32 %v5632
    %v6529 = vcvt.s32.f32 %v5633
    %v6530 = vcvt.s32.f32 %v5634
    %v6531 = vcvt.s32.f32 %v5635
    %v6532 = vcvt.s32.f32 %v5636
    %v6533 = vcvt.s32.f32 %v5637
    %v6534 = vcvt.s32.f32 %v5638
    %v6535 = vcvt.s32.f32 %v5639
    %v6536 = vcvt.s32.f32 %v5640
    %v6537 = vcvt.s32.f32 %v5641
    %v6538 = vcvt.s32.f32 %v5642
    %v6539 = vcvt.s32.f32 %v5643
    %v6540 = vcvt.s32.f32 %v5644
    %v6541 = vcvt.s32.f32 %v5645
    %v6542 = vcvt.s32.f32 %v5646
    %v6543 = vcvt.s32.f32 %v5647
    %v6544 = vcvt.s32.f32 %v5648
    %v6545 = vcvt.s32.f32 %v5649
    %v6546 = vcvt.s32.f32 %v5650
    %v6547 = vcvt.s32.f32 %v5651
    %v6548 = vcvt.s32.f32 %v5652
    %v6549 = vcvt.s32.f32 %v5653
    %v6550 = vcvt.s32.f32 %v5654
    %v6551 = vcvt.s32.f32 %v5655
    %v6552 = vcvt.s32.f32 %v5656
    %v6553 = vcvt.s32.f32 %v5657
    %v6554 = vcvt.s32.f32 %v5658
    %v6555 = vcvt.s32.f32 %v5659
    %v6556 = vcvt.s32.f32 %v5660
    %v6557 = vcvt.s32.f32 %v5661
    %v6558 = vcvt.s32.f32 %v5662
    %v6559 = vcvt.s32.f32 %v5663
    %v6560 = vcvt.s32.f32 %v5664
    %v6561 = vcvt.s32.f32 %v5665
    %v6562 = vcvt.s32.f32 %v5666
    %v6563 = vcvt.s32.f32 %v5667
    %v6564 = vcvt.s32.f32 %v5668
    %v6565 = vcvt.s32.f32 %v5669
    %v6566 = vcvt.s32.f32 %v5670
    %v6567 = vcvt.s32.f32 %v5671
    %v6568 = vcvt.s32.f32 %v5672
    %v6569 = vcvt.s32.f32 %v5673
    %v6570 = vcvt.s32.f32 %v5674
    %v6571 = vcvt.s32.f32 %v5675
    %v6572 = vcvt.s32.f32 %v5676
    %v6573 = vcvt.s32.f32 %v5677
    %v6574 = vcvt.s32.f32 %v5678
    %v6575 = vcvt.s32.f32 %v5679
    %v6576 = vcvt.s32.f32 %v5680
    %v6577 = vcvt.s32.f32 %v5681
    %v6578 = vcvt.s32.f32 %v5682
    %v6579 = vcvt.s32.f32 %v5683
    %v6580 = vcvt.s32.f32 %v5684
    %v6581 = vcvt.s32.f32 %v5685
    %v6582 = vcvt.s32.f32 %v5686
    %v6583 = vcvt.s32.f32 %v5687
    %v6584 = vcvt.s32.f32 %v5688
    %v6585 = vcvt.s32.f32 %v5689
    %v6586 = vcvt.s32.f32 %v5690
    %v6587 = vcvt.s32.f32 %v5691
    %v6588 = vcvt.s32.f32 %v5692
    %v6589 = vcvt.s32.f32 %v5693
    %v6590 = vcvt.s32.f32 %v5694
    %v6591 = vcvt.s32.f32 %v5695
    %v6592 = vcvt.s32.f32 %v5696
    %v6593 = vcvt.s32.f32 %v5697
    %v6594 = vcvt.s32.f32 %v5698
    %v6595 = vcvt.s32.f32 %v5699
    %v6596 = vcvt.s32.f32 %v5700
    %v6597 = vcvt.s32.f32 %v5701
    %v6598 = vcvt.s32.f32 %v5702
    %v6599 = vcvt.s32.f32 %v5703
    %v6600 = vcvt.s32.f32 %v5704
    %v6601 = vcvt.s32.f32 %v5705
    %v6602 = vcvt.s32.f32 %v5706
    %v6603 = vcvt.s32.f32 %v5707
    %v6604 = vcvt.s32.f32 %v5708
    %v6605 = vcvt.s32.f32 %v5709
    %v6606 = vcvt.s32.f32 %v5710
    %v6607 = vcvt.s32.f32 %v5711
    %v6608 = vcvt.s32.f32 %v5712
    %v6609 = vcvt.s32.f32 %v5713
    %v6610 = vcvt.s32.f32 %v5714
    %v6611 = vcvt.s32.f32 %v5715
    %v6612 = vcvt.s32.f32 %v5716
    %v6613 = vcvt.s32.f32 %v5717
    %v6614 = vcvt.s32.f32 %v5718
    %v6615 = vcvt.s32.f32 %v5719
    %v6616 = vcvt.s32.f32 %v5720
    %v6617 = vcvt.s32.f32 %v5721
    %v6618 = vcvt.s32.f32 %v5722
    %v6619 = vcvt.s32.f32 %v5723
    %v6620 = vcvt.s32.f32 %v5724
    %v6621 = vcvt.s32.f32 %v5725
    %v6622 = vcvt.s32.f32 %v5726
    %v6623 = vcvt.s32.f32 %v5727
    %v6624 = vcvt.s32.f32 %v5728
    %v6625 = vcvt.s32.f32 %v5729
    %v6626 = vcvt.s32.f32 %v5730
    %v6627 = vcvt.s32.f32 %v5731
    %v6628 = vcvt.s32.f32 %v5732
    %v6629 = vcvt.s32.f32 %v5733
    %v6630 = vcvt.s32.f32 %v5734
    %v6631 = vcvt.s32.f32 %v5735
    %v6632 = vcvt.s32.f32 %v5736
    %v6633 = vcvt.s32.f32 %v5737
    %v6634 = vcvt.s32.f32 %v5738
    %v6635 = vcvt.s32.f32 %v5739
    %v6636 = vcvt.s32.f32 %v5740
    %v6637 = vcvt.s32.f32 %v5741
    %v6638 = vcvt.s32.f32 %v5742
    %v6639 = vcvt.s32.f32 %v5743
    %v6640 = vcvt.s32.f32 %v5744
    %v6641 = vcvt.s32.f32 %v5745
    %v6642 = vcvt.s32.f32 %v5746
    %v6643 = vcvt.s32.f32 %v5747
    %v6644 = vcvt.s32.f32 %v5748
    %v6645 = vcvt.s32.f32 %v5749
    %v6646 = vcvt.s32.f32 %v5750
    %v6647 = vcvt.s32.f32 %v5751
    %v6648 = vcvt.s32.f32 %v5752
    %v6649 = vcvt.s32.f32 %v5753
    %v6650 = vcvt.s32.f32 %v5754
    %v6651 = vcvt.s32.f32 %v5755
    %v6652 = vcvt.s32.f32 %v5756
    %v6653 = vcvt.s32.f32 %v5757
    %v6654 = vcvt.s32.f32 %v5758
    %v6655 = vcvt.s32.f32 %v5759
    %v6656 = vcvt.s32.f32 %v5760
    %v6657 = vcvt.s32.f32 %v5761
    %v6658 = vcvt.s32.f32 %v5762
    %v6659 = vcvt.s32.f32 %v5763
    %v6660 = vcvt.s32.f32 %v5764
    %v6661 = vcvt.s32.f32 %v5765
    %v6662 = vcvt.s32.f32 %v5766
    %v6663 = vcvt.s32.f32 %v5767
    %v6664 = vcvt.s32.f32 %v5768
    %v6665 = vcvt.s32.f32 %v5769
    %v6666 = vcvt.s32.f32 %v5770
    %v6667 = vcvt.s32.f32 %v5771
    %v6668 = vcvt.s32.f32 %v5772
    %v6669 = vcvt.s32.f32 %v5773
    %v6670 = vcvt.s32.f32 %v5774
    %v6671 = vcvt.s32.f32 %v5775
    %v6672 = vcvt.s32.f32 %v5776
    %v6673 = vcvt.s32.f32 %v5777
    %v6674 = vcvt.s32.f32 %v5778
    %v6675 = vcvt.s32.f32 %v5779
    %v6676 = vcvt.s32.f32 %v5780
    %v6677 = vcvt.s32.f32 %v5781
    %v6678 = vcvt.s32.f32 %v5782
    %v6679 = vcvt.s32.f32 %v5783
    %v6680 = vcvt.s32.f32 %v5784
    %v6681 = vcvt.s32.f32 %v5785
    %v6682 = vcvt.s32.f32 %v5786
    %v6683 = vcvt.s32.f32 %v5787
    %v6684 = vcvt.s32.f32 %v5788
    %v6685 = vcvt.s32.f32 %v5789
    %v6686 = vcvt.s32.f32 %v5790
    %v6687 = vcvt.s32.f32 %v5791
    %v6688 = vcvt.s32.f32 %v5792
    %v6689 = vcvt.s32.f32 %v5793
    %v6690 = vcvt.s32.f32 %v5794
    %v6691 = vcvt.s32.f32 %v5795
    %v6692 = vcvt.s32.f32 %v5796
    %v6693 = vcvt.s32.f32 %v5797
    %v6694 = vcvt.s32.f32 %v5798
    %v6695 = vcvt.s32.f32 %v5799
    %v6696 = vcvt.s32.f32 %v5800
    %v6697 = vcvt.s32.f32 %v5801
    %v6698 = vcvt.s32.f32 %v5802
    %v6699 = vcvt.s32.f32 %v5803
    %v6700 = vcvt.s32.f32 %v5804
    %v6701 = vcvt.s32.f32 %v5805
    %v6702 = vcvt.s32.f32 %v5806
    %v6703 = vcvt.s32.f32 %v5807
    %v6704 = vcvt.s32.f32 %v5808
    %v6705 = vcvt.s32.f32 %v5809
    %v6706 = vcvt.s32.f32 %v5810
    %v6707 = vcvt.s32.f32 %v5811
    %v6708 = vcvt.s32.f32 %v5812
    %v6709 = vcvt.s32.f32 %v5813
    %v6710 = vcvt.s32.f32 %v5814
    %v6711 = vcvt.s32.f32 %v5815
    %v6712 = vcvt.s32.f32 %v5816
    %v6713 = vcvt.s32.f32 %v5817
    %v6714 = vcvt.s32.f32 %v5818
    %v6715 = vcvt.s32.f32 %v5819
    %v6716 = vcvt.s32.f32 %v5820
    %v6717 = vcvt.s32.f32 %v5821
    %v6718 = vcvt.s32.f32 %v5822
    %v6719 = vcvt.s32.f32 %v5823
    %v6720 = vcvt.s32.f32 %v5824
    %v6721 = vcvt.s32.f32 %v5825
    %v6722 = vcvt.s32.f32 %v5826
    %v6723 = vcvt.s32.f32 %v5827
    %v6724 = vcvt.s32.f32 %v5828
    %v6725 = vcvt.s32.f32 %v5829
    %v6726 = vcvt.s32.f32 %v5830
    %v6728 = vperm.slane %v4934, 0
    %v6729 = vperm.slane %v4934, 1
    %v6730 = vperm.slane %v4934, 2
    %v6731 = vperm.slane %v4934, 3
    %v6732 = vperm.slane %v4934, 4
    %v6733 = vperm.slane %v4934, 5
    %v6734 = vperm.slane %v4934, 6
    %v6742 = vmul.f32 %v5831, %v6728
    %v6743 = vmul.f32 %v5832, %v6729
    %v6744 = vmul.f32 %v5833, %v6730
    %v6745 = vmul.f32 %v5834, %v6731
    %v6746 = vmul.f32 %v5835, %v6732
    %v6747 = vmul.f32 %v5836, %v6733
    %v6748 = vmul.f32 %v5837, %v6734
    %v6749 = vmul.f32 %v5838, %v6728
    %v6750 = vmul.f32 %v5839, %v6729
    %v6751 = vmul.f32 %v5840, %v6730
    %v6752 = vmul.f32 %v5841, %v6731
    %v6753 = vmul.f32 %v5842, %v6732
    %v6754 = vmul.f32 %v5843, %v6733
    %v6755 = vmul.f32 %v5844, %v6734
    %v6756 = vmul.f32 %v5845, %v6728
    %v6757 = vmul.f32 %v5846, %v6729
    %v6758 = vmul.f32 %v5847, %v6730
    %v6759 = vmul.f32 %v5848, %v6731
    %v6760 = vmul.f32 %v5849, %v6732
    %v6761 = vmul.f32 %v5850, %v6733
    %v6762 = vmul.f32 %v5851, %v6734
    %v6763 = vmul.f32 %v5852, %v6728
    %v6764 = vmul.f32 %v5853, %v6729
    %v6765 = vmul.f32 %v5854, %v6730
    %v6766 = vmul.f32 %v5855, %v6731
    %v6767 = vmul.f32 %v5856, %v6732
    %v6768 = vmul.f32 %v5857, %v6733
    %v6769 = vmul.f32 %v5858, %v6734
    %v6770 = vmul.f32 %v5859, %v6728
    %v6771 = vmul.f32 %v5860, %v6729
    %v6772 = vmul.f32 %v5861, %v6730
    %v6773 = vmul.f32 %v5862, %v6731
    %v6774 = vmul.f32 %v5863, %v6732
    %v6775 = vmul.f32 %v5864, %v6733
    %v6776 = vmul.f32 %v5865, %v6734
    %v6777 = vmul.f32 %v5866, %v6728
    %v6778 = vmul.f32 %v5867, %v6729
    %v6779 = vmul.f32 %v5868, %v6730
    %v6780 = vmul.f32 %v5869, %v6731
    %v6781 = vmul.f32 %v5870, %v6732
    %v6782 = vmul.f32 %v5871, %v6733
    %v6783 = vmul.f32 %v5872, %v6734
    %v6784 = vmul.f32 %v5873, %v6728
    %v6785 = vmul.f32 %v5874, %v6729
    %v6786 = vmul.f32 %v5875, %v6730
    %v6787 = vmul.f32 %v5876, %v6731
    %v6788 = vmul.f32 %v5877, %v6732
    %v6789 = vmul.f32 %v5878, %v6733
    %v6790 = vmul.f32 %v5879, %v6734
    %v6791 = vmul.f32 %v5880, %v6728
    %v6792 = vmul.f32 %v5881, %v6729
    %v6793 = vmul.f32 %v5882, %v6730
    %v6794 = vmul.f32 %v5883, %v6731
    %v6795 = vmul.f32 %v5884, %v6732
    %v6796 = vmul.f32 %v5885, %v6733
    %v6797 = vmul.f32 %v5886, %v6734
    %v6798 = vmul.f32 %v5887, %v6728
    %v6799 = vmul.f32 %v5888, %v6729
    %v6800 = vmul.f32 %v5889, %v6730
    %v6801 = vmul.f32 %v5890, %v6731
    %v6802 = vmul.f32 %v5891, %v6732
    %v6803 = vmul.f32 %v5892, %v6733
    %v6804 = vmul.f32 %v5893, %v6734
    %v6805 = vmul.f32 %v5894, %v6728
    %v6806 = vmul.f32 %v5895, %v6729
    %v6807 = vmul.f32 %v5896, %v6730
    %v6808 = vmul.f32 %v5897, %v6731
    %v6809 = vmul.f32 %v5898, %v6732
    %v6810 = vmul.f32 %v5899, %v6733
    %v6811 = vmul.f32 %v5900, %v6734
    %v6812 = vmul.f32 %v5901, %v6728
    %v6813 = vmul.f32 %v5902, %v6729
    %v6814 = vmul.f32 %v5903, %v6730
    %v6815 = vmul.f32 %v5904, %v6731
    %v6816 = vmul.f32 %v5905, %v6732
    %v6817 = vmul.f32 %v5906, %v6733
    %v6818 = vmul.f32 %v5907, %v6734
    %v6819 = vmul.f32 %v5908, %v6728
    %v6820 = vmul.f32 %v5909, %v6729
    %v6821 = vmul.f32 %v5910, %v6730
    %v6822 = vmul.f32 %v5911, %v6731
    %v6823 = vmul.f32 %v5912, %v6732
    %v6824 = vmul.f32 %v5913, %v6733
    %v6825 = vmul.f32 %v5914, %v6734
    %v6826 = vmul.f32 %v5915, %v6728
    %v6827 = vmul.f32 %v5916, %v6729
    %v6828 = vmul.f32 %v5917, %v6730
    %v6829 = vmul.f32 %v5918, %v6731
    %v6830 = vmul.f32 %v5919, %v6732
    %v6831 = vmul.f32 %v5920, %v6733
    %v6832 = vmul.f32 %v5921, %v6734
    %v6833 = vmul.f32 %v5922, %v6728
    %v6834 = vmul.f32 %v5923, %v6729
    %v6835 = vmul.f32 %v5924, %v6730
    %v6836 = vmul.f32 %v5925, %v6731
    %v6837 = vmul.f32 %v5926, %v6732
    %v6838 = vmul.f32 %v5927, %v6733
    %v6839 = vmul.f32 %v5928, %v6734
    %v6840 = vmul.f32 %v5929, %v6728
    %v6841 = vmul.f32 %v5930, %v6729
    %v6842 = vmul.f32 %v5931, %v6730
    %v6843 = vmul.f32 %v5932, %v6731
    %v6844 = vmul.f32 %v5933, %v6732
    %v6845 = vmul.f32 %v5934, %v6733
    %v6846 = vmul.f32 %v5935, %v6734
    %v6847 = vmul.f32 %v5936, %v6728
    %v6848 = vmul.f32 %v5937, %v6729
    %v6849 = vmul.f32 %v5938, %v6730
    %v6850 = vmul.f32 %v5939, %v6731
    %v6851 = vmul.f32 %v5940, %v6732
    %v6852 = vmul.f32 %v5941, %v6733
    %v6853 = vmul.f32 %v5942, %v6734
    %v6854 = vmul.f32 %v5943, %v6728
    %v6855 = vmul.f32 %v5944, %v6729
    %v6856 = vmul.f32 %v5945, %v6730
    %v6857 = vmul.f32 %v5946, %v6731
    %v6858 = vmul.f32 %v5947, %v6732
    %v6859 = vmul.f32 %v5948, %v6733
    %v6860 = vmul.f32 %v5949, %v6734
    %v6861 = vmul.f32 %v5950, %v6728
    %v6862 = vmul.f32 %v5951, %v6729
    %v6863 = vmul.f32 %v5952, %v6730
    %v6864 = vmul.f32 %v5953, %v6731
    %v6865 = vmul.f32 %v5954, %v6732
    %v6866 = vmul.f32 %v5955, %v6733
    %v6867 = vmul.f32 %v5956, %v6734
    %v6868 = vmul.f32 %v5957, %v6728
    %v6869 = vmul.f32 %v5958, %v6729
    %v6870 = vmul.f32 %v5959, %v6730
    %v6871 = vmul.f32 %v5960, %v6731
    %v6872 = vmul.f32 %v5961, %v6732
    %v6873 = vmul.f32 %v5962, %v6733
    %v6874 = vmul.f32 %v5963, %v6734
    %v6875 = vmul.f32 %v5964, %v6728
    %v6876 = vmul.f32 %v5965, %v6729
    %v6877 = vmul.f32 %v5966, %v6730
    %v6878 = vmul.f32 %v5967, %v6731
    %v6879 = vmul.f32 %v5968, %v6732
    %v6880 = vmul.f32 %v5969, %v6733
    %v6881 = vmul.f32 %v5970, %v6734
    %v6882 = vmul.f32 %v5971, %v6728
    %v6883 = vmul.f32 %v5972, %v6729
    %v6884 = vmul.f32 %v5973, %v6730
    %v6885 = vmul.f32 %v5974, %v6731
    %v6886 = vmul.f32 %v5975, %v6732
    %v6887 = vmul.f32 %v5976, %v6733
    %v6888 = vmul.f32 %v5977, %v6734
    %v6889 = vmul.f32 %v5978, %v6728
    %v6890 = vmul.f32 %v5979, %v6729
    %v6891 = vmul.f32 %v5980, %v6730
    %v6892 = vmul.f32 %v5981, %v6731
    %v6893 = vmul.f32 %v5982, %v6732
    %v6894 = vmul.f32 %v5983, %v6733
    %v6895 = vmul.f32 %v5984, %v6734
    %v6896 = vmul.f32 %v5985, %v6728
    %v6897 = vmul.f32 %v5986, %v6729
    %v6898 = vmul.f32 %v5987, %v6730
    %v6899 = vmul.f32 %v5988, %v6731
    %v6900 = vmul.f32 %v5989, %v6732
    %v6901 = vmul.f32 %v5990, %v6733
    %v6902 = vmul.f32 %v5991, %v6734
    %v6903 = vmul.f32 %v5992, %v6728
    %v6904 = vmul.f32 %v5993, %v6729
    %v6905 = vmul.f32 %v5994, %v6730
    %v6906 = vmul.f32 %v5995, %v6731
    %v6907 = vmul.f32 %v5996, %v6732
    %v6908 = vmul.f32 %v5997, %v6733
    %v6909 = vmul.f32 %v5998, %v6734
    %v6910 = vmul.f32 %v5999, %v6728
    %v6911 = vmul.f32 %v6000, %v6729
    %v6912 = vmul.f32 %v6001, %v6730
    %v6913 = vmul.f32 %v6002, %v6731
    %v6914 = vmul.f32 %v6003, %v6732
    %v6915 = vmul.f32 %v6004, %v6733
    %v6916 = vmul.f32 %v6005, %v6734
    %v6917 = vmul.f32 %v6006, %v6728
    %v6918 = vmul.f32 %v6007, %v6729
    %v6919 = vmul.f32 %v6008, %v6730
    %v6920 = vmul.f32 %v6009, %v6731
    %v6921 = vmul.f32 %v6010, %v6732
    %v6922 = vmul.f32 %v6011, %v6733
    %v6923 = vmul.f32 %v6012, %v6734
    %v6924 = vmul.f32 %v6013, %v6728
    %v6925 = vmul.f32 %v6014, %v6729
    %v6926 = vmul.f32 %v6015, %v6730
    %v6927 = vmul.f32 %v6016, %v6731
    %v6928 = vmul.f32 %v6017, %v6732
    %v6929 = vmul.f32 %v6018, %v6733
    %v6930 = vmul.f32 %v6019, %v6734
    %v6931 = vmul.f32 %v6020, %v6728
    %v6932 = vmul.f32 %v6021, %v6729
    %v6933 = vmul.f32 %v6022, %v6730
    %v6934 = vmul.f32 %v6023, %v6731
    %v6935 = vmul.f32 %v6024, %v6732
    %v6936 = vmul.f32 %v6025, %v6733
    %v6937 = vmul.f32 %v6026, %v6734
    %v6938 = vmul.f32 %v6027, %v6728
    %v6939 = vmul.f32 %v6028, %v6729
    %v6940 = vmul.f32 %v6029, %v6730
    %v6941 = vmul.f32 %v6030, %v6731
    %v6942 = vmul.f32 %v6031, %v6732
    %v6943 = vmul.f32 %v6032, %v6733
    %v6944 = vmul.f32 %v6033, %v6734
    %v6945 = vmul.f32 %v6034, %v6728
    %v6946 = vmul.f32 %v6035, %v6729
    %v6947 = vmul.f32 %v6036, %v6730
    %v6948 = vmul.f32 %v6037, %v6731
    %v6949 = vmul.f32 %v6038, %v6732
    %v6950 = vmul.f32 %v6039, %v6733
    %v6951 = vmul.f32 %v6040, %v6734
    %v6952 = vmul.f32 %v6041, %v6728
    %v6953 = vmul.f32 %v6042, %v6729
    %v6954 = vmul.f32 %v6043, %v6730
    %v6955 = vmul.f32 %v6044, %v6731
    %v6956 = vmul.f32 %v6045, %v6732
    %v6957 = vmul.f32 %v6046, %v6733
    %v6958 = vmul.f32 %v6047, %v6734
    %v6959 = vmul.f32 %v6048, %v6728
    %v6960 = vmul.f32 %v6049, %v6729
    %v6961 = vmul.f32 %v6050, %v6730
    %v6962 = vmul.f32 %v6051, %v6731
    %v6963 = vmul.f32 %v6052, %v6732
    %v6964 = vmul.f32 %v6053, %v6733
    %v6965 = vmul.f32 %v6054, %v6734
    %v6966 = vmul.f32 %v6055, %v6728
    %v6967 = vmul.f32 %v6056, %v6729
    %v6968 = vmul.f32 %v6057, %v6730
    %v6969 = vmul.f32 %v6058, %v6731
    %v6970 = vmul.f32 %v6059, %v6732
    %v6971 = vmul.f32 %v6060, %v6733
    %v6972 = vmul.f32 %v6061, %v6734
    %v6973 = vmul.f32 %v6062, %v6728
    %v6974 = vmul.f32 %v6063, %v6729
    %v6975 = vmul.f32 %v6064, %v6730
    %v6976 = vmul.f32 %v6065, %v6731
    %v6977 = vmul.f32 %v6066, %v6732
    %v6978 = vmul.f32 %v6067, %v6733
    %v6979 = vmul.f32 %v6068, %v6734
    %v6980 = vmul.f32 %v6069, %v6728
    %v6981 = vmul.f32 %v6070, %v6729
    %v6982 = vmul.f32 %v6071, %v6730
    %v6983 = vmul.f32 %v6072, %v6731
    %v6984 = vmul.f32 %v6073, %v6732
    %v6985 = vmul.f32 %v6074, %v6733
    %v6986 = vmul.f32 %v6075, %v6734
    %v6987 = vmul.f32 %v6076, %v6728
    %v6988 = vmul.f32 %v6077, %v6729
    %v6989 = vmul.f32 %v6078, %v6730
    %v6990 = vmul.f32 %v6079, %v6731
    %v6991 = vmul.f32 %v6080, %v6732
    %v6992 = vmul.f32 %v6081, %v6733
    %v6993 = vmul.f32 %v6082, %v6734
    %v6994 = vmul.f32 %v6083, %v6728
    %v6995 = vmul.f32 %v6084, %v6729
    %v6996 = vmul.f32 %v6085, %v6730
    %v6997 = vmul.f32 %v6086, %v6731
    %v6998 = vmul.f32 %v6087, %v6732
    %v6999 = vmul.f32 %v6088, %v6733
    %v7000 = vmul.f32 %v6089, %v6734
    %v7001 = vmul.f32 %v6090, %v6728
    %v7002 = vmul.f32 %v6091, %v6729
    %v7003 = vmul.f32 %v6092, %v6730
    %v7004 = vmul.f32 %v6093, %v6731
    %v7005 = vmul.f32 %v6094, %v6732
    %v7006 = vmul.f32 %v6095, %v6733
    %v7007 = vmul.f32 %v6096, %v6734
    %v7008 = vmul.f32 %v6097, %v6728
    %v7009 = vmul.f32 %v6098, %v6729
    %v7010 = vmul.f32 %v6099, %v6730
    %v7011 = vmul.f32 %v6100, %v6731
    %v7012 = vmul.f32 %v6101, %v6732
    %v7013 = vmul.f32 %v6102, %v6733
    %v7014 = vmul.f32 %v6103, %v6734
    %v7015 = vmul.f32 %v6104, %v6728
    %v7016 = vmul.f32 %v6105, %v6729
    %v7017 = vmul.f32 %v6106, %v6730
    %v7018 = vmul.f32 %v6107, %v6731
    %v7019 = vmul.f32 %v6108, %v6732
    %v7020 = vmul.f32 %v6109, %v6733
    %v7021 = vmul.f32 %v6110, %v6734
    %v7022 = vmul.f32 %v6111, %v6728
    %v7023 = vmul.f32 %v6112, %v6729
    %v7024 = vmul.f32 %v6113, %v6730
    %v7025 = vmul.f32 %v6114, %v6731
    %v7026 = vmul.f32 %v6115, %v6732
    %v7027 = vmul.f32 %v6116, %v6733
    %v7028 = vmul.f32 %v6117, %v6734
    %v7029 = vmul.f32 %v6118, %v6728
    %v7030 = vmul.f32 %v6119, %v6729
    %v7031 = vmul.f32 %v6120, %v6730
    %v7032 = vmul.f32 %v6121, %v6731
    %v7033 = vmul.f32 %v6122, %v6732
    %v7034 = vmul.f32 %v6123, %v6733
    %v7035 = vmul.f32 %v6124, %v6734
    %v7036 = vmul.f32 %v6125, %v6728
    %v7037 = vmul.f32 %v6126, %v6729
    %v7038 = vmul.f32 %v6127, %v6730
    %v7039 = vmul.f32 %v6128, %v6731
    %v7040 = vmul.f32 %v6129, %v6732
    %v7041 = vmul.f32 %v6130, %v6733
    %v7042 = vmul.f32 %v6131, %v6734
    %v7043 = vmul.f32 %v6132, %v6728
    %v7044 = vmul.f32 %v6133, %v6729
    %v7045 = vmul.f32 %v6134, %v6730
    %v7046 = vmul.f32 %v6135, %v6731
    %v7047 = vmul.f32 %v6136, %v6732
    %v7048 = vmul.f32 %v6137, %v6733
    %v7049 = vmul.f32 %v6138, %v6734
    %v7050 = vmul.f32 %v6139, %v6728
    %v7051 = vmul.f32 %v6140, %v6729
    %v7052 = vmul.f32 %v6141, %v6730
    %v7053 = vmul.f32 %v6142, %v6731
    %v7054 = vmul.f32 %v6143, %v6732
    %v7055 = vmul.f32 %v6144, %v6733
    %v7056 = vmul.f32 %v6145, %v6734
    %v7057 = vmul.f32 %v6146, %v6728
    %v7058 = vmul.f32 %v6147, %v6729
    %v7059 = vmul.f32 %v6148, %v6730
    %v7060 = vmul.f32 %v6149, %v6731
    %v7061 = vmul.f32 %v6150, %v6732
    %v7062 = vmul.f32 %v6151, %v6733
    %v7063 = vmul.f32 %v6152, %v6734
    %v7064 = vmul.f32 %v6153, %v6728
    %v7065 = vmul.f32 %v6154, %v6729
    %v7066 = vmul.f32 %v6155, %v6730
    %v7067 = vmul.f32 %v6156, %v6731
    %v7068 = vmul.f32 %v6157, %v6732
    %v7069 = vmul.f32 %v6158, %v6733
    %v7070 = vmul.f32 %v6159, %v6734
    %v7071 = vmul.f32 %v6160, %v6728
    %v7072 = vmul.f32 %v6161, %v6729
    %v7073 = vmul.f32 %v6162, %v6730
    %v7074 = vmul.f32 %v6163, %v6731
    %v7075 = vmul.f32 %v6164, %v6732
    %v7076 = vmul.f32 %v6165, %v6733
    %v7077 = vmul.f32 %v6166, %v6734
    %v7078 = vmul.f32 %v6167, %v6728
    %v7079 = vmul.f32 %v6168, %v6729
    %v7080 = vmul.f32 %v6169, %v6730
    %v7081 = vmul.f32 %v6170, %v6731
    %v7082 = vmul.f32 %v6171, %v6732
    %v7083 = vmul.f32 %v6172, %v6733
    %v7084 = vmul.f32 %v6173, %v6734
    %v7085 = vmul.f32 %v6174, %v6728
    %v7086 = vmul.f32 %v6175, %v6729
    %v7087 = vmul.f32 %v6176, %v6730
    %v7088 = vmul.f32 %v6177, %v6731
    %v7089 = vmul.f32 %v6178, %v6732
    %v7090 = vmul.f32 %v6179, %v6733
    %v7091 = vmul.f32 %v6180, %v6734
    %v7092 = vmul.f32 %v6181, %v6728
    %v7093 = vmul.f32 %v6182, %v6729
    %v7094 = vmul.f32 %v6183, %v6730
    %v7095 = vmul.f32 %v6184, %v6731
    %v7096 = vmul.f32 %v6185, %v6732
    %v7097 = vmul.f32 %v6186, %v6733
    %v7098 = vmul.f32 %v6187, %v6734
    %v7099 = vmul.f32 %v6188, %v6728
    %v7100 = vmul.f32 %v6189, %v6729
    %v7101 = vmul.f32 %v6190, %v6730
    %v7102 = vmul.f32 %v6191, %v6731
    %v7103 = vmul.f32 %v6192, %v6732
    %v7104 = vmul.f32 %v6193, %v6733
    %v7105 = vmul.f32 %v6194, %v6734
    %v7106 = vmul.f32 %v6195, %v6728
    %v7107 = vmul.f32 %v6196, %v6729
    %v7108 = vmul.f32 %v6197, %v6730
    %v7109 = vmul.f32 %v6198, %v6731
    %v7110 = vmul.f32 %v6199, %v6732
    %v7111 = vmul.f32 %v6200, %v6733
    %v7112 = vmul.f32 %v6201, %v6734
    %v7113 = vmul.f32 %v6202, %v6728
    %v7114 = vmul.f32 %v6203, %v6729
    %v7115 = vmul.f32 %v6204, %v6730
    %v7116 = vmul.f32 %v6205, %v6731
    %v7117 = vmul.f32 %v6206, %v6732
    %v7118 = vmul.f32 %v6207, %v6733
    %v7119 = vmul.f32 %v6208, %v6734
    %v7120 = vmul.f32 %v6209, %v6728
    %v7121 = vmul.f32 %v6210, %v6729
    %v7122 = vmul.f32 %v6211, %v6730
    %v7123 = vmul.f32 %v6212, %v6731
    %v7124 = vmul.f32 %v6213, %v6732
    %v7125 = vmul.f32 %v6214, %v6733
    %v7126 = vmul.f32 %v6215, %v6734
    %v7127 = vmul.f32 %v6216, %v6728
    %v7128 = vmul.f32 %v6217, %v6729
    %v7129 = vmul.f32 %v6218, %v6730
    %v7130 = vmul.f32 %v6219, %v6731
    %v7131 = vmul.f32 %v6220, %v6732
    %v7132 = vmul.f32 %v6221, %v6733
    %v7133 = vmul.f32 %v6222, %v6734
    %v7134 = vmul.f32 %v6223, %v6728
    %v7135 = vmul.f32 %v6224, %v6729
    %v7136 = vmul.f32 %v6225, %v6730
    %v7137 = vmul.f32 %v6226, %v6731
    %v7138 = vmul.f32 %v6227, %v6732
    %v7139 = vmul.f32 %v6228, %v6733
    %v7140 = vmul.f32 %v6229, %v6734
    %v7141 = vmul.f32 %v6230, %v6728
    %v7142 = vmul.f32 %v6231, %v6729
    %v7143 = vmul.f32 %v6232, %v6730
    %v7144 = vmul.f32 %v6233, %v6731
    %v7145 = vmul.f32 %v6234, %v6732
    %v7146 = vmul.f32 %v6235, %v6733
    %v7147 = vmul.f32 %v6236, %v6734
    %v7148 = vmul.f32 %v6237, %v6728
    %v7149 = vmul.f32 %v6238, %v6729
    %v7150 = vmul.f32 %v6239, %v6730
    %v7151 = vmul.f32 %v6240, %v6731
    %v7152 = vmul.f32 %v6241, %v6732
    %v7153 = vmul.f32 %v6242, %v6733
    %v7154 = vmul.f32 %v6243, %v6734
    %v7155 = vmul.f32 %v6244, %v6728
    %v7156 = vmul.f32 %v6245, %v6729
    %v7157 = vmul.f32 %v6246, %v6730
    %v7158 = vmul.f32 %v6247, %v6731
    %v7159 = vmul.f32 %v6248, %v6732
    %v7160 = vmul.f32 %v6249, %v6733
    %v7161 = vmul.f32 %v6250, %v6734
    %v7162 = vmul.f32 %v6251, %v6728
    %v7163 = vmul.f32 %v6252, %v6729
    %v7164 = vmul.f32 %v6253, %v6730
    %v7165 = vmul.f32 %v6254, %v6731
    %v7166 = vmul.f32 %v6255, %v6732
    %v7167 = vmul.f32 %v6256, %v6733
    %v7168 = vmul.f32 %v6257, %v6734
    %v7169 = vmul.f32 %v6258, %v6728
    %v7170 = vmul.f32 %v6259, %v6729
    %v7171 = vmul.f32 %v6260, %v6730
    %v7172 = vmul.f32 %v6261, %v6731
    %v7173 = vmul.f32 %v6262, %v6732
    %v7174 = vmul.f32 %v6263, %v6733
    %v7175 = vmul.f32 %v6264, %v6734
    %v7176 = vmul.f32 %v6265, %v6728
    %v7177 = vmul.f32 %v6266, %v6729
    %v7178 = vmul.f32 %v6267, %v6730
    %v7179 = vmul.f32 %v6268, %v6731
    %v7180 = vmul.f32 %v6269, %v6732
    %v7181 = vmul.f32 %v6270, %v6733
    %v7182 = vmul.f32 %v6271, %v6734
    %v7183 = vmul.f32 %v6272, %v6728
    %v7184 = vmul.f32 %v6273, %v6729
    %v7185 = vmul.f32 %v6274, %v6730
    %v7186 = vmul.f32 %v6275, %v6731
    %v7187 = vmul.f32 %v6276, %v6732
    %v7188 = vmul.f32 %v6277, %v6733
    %v7189 = vmul.f32 %v6278, %v6734
    %v7190 = vmul.f32 %v6279, %v6728
    %v7191 = vmul.f32 %v6280, %v6729
    %v7192 = vmul.f32 %v6281, %v6730
    %v7193 = vmul.f32 %v6282, %v6731
    %v7194 = vmul.f32 %v6283, %v6732
    %v7195 = vmul.f32 %v6284, %v6733
    %v7196 = vmul.f32 %v6285, %v6734
    %v7197 = vmul.f32 %v6286, %v6728
    %v7198 = vmul.f32 %v6287, %v6729
    %v7199 = vmul.f32 %v6288, %v6730
    %v7200 = vmul.f32 %v6289, %v6731
    %v7201 = vmul.f32 %v6290, %v6732
    %v7202 = vmul.f32 %v6291, %v6733
    %v7203 = vmul.f32 %v6292, %v6734
    %v7204 = vmul.f32 %v6293, %v6728
    %v7205 = vmul.f32 %v6294, %v6729
    %v7206 = vmul.f32 %v6295, %v6730
    %v7207 = vmul.f32 %v6296, %v6731
    %v7208 = vmul.f32 %v6297, %v6732
    %v7209 = vmul.f32 %v6298, %v6733
    %v7210 = vmul.f32 %v6299, %v6734
    %v7211 = vmul.f32 %v6300, %v6728
    %v7212 = vmul.f32 %v6301, %v6729
    %v7213 = vmul.f32 %v6302, %v6730
    %v7214 = vmul.f32 %v6303, %v6731
    %v7215 = vmul.f32 %v6304, %v6732
    %v7216 = vmul.f32 %v6305, %v6733
    %v7217 = vmul.f32 %v6306, %v6734
    %v7218 = vmul.f32 %v6307, %v6728
    %v7219 = vmul.f32 %v6308, %v6729
    %v7220 = vmul.f32 %v6309, %v6730
    %v7221 = vmul.f32 %v6310, %v6731
    %v7222 = vmul.f32 %v6311, %v6732
    %v7223 = vmul.f32 %v6312, %v6733
    %v7224 = vmul.f32 %v6313, %v6734
    %v7225 = vmul.f32 %v6314, %v6728
    %v7226 = vmul.f32 %v6315, %v6729
    %v7227 = vmul.f32 %v6316, %v6730
    %v7228 = vmul.f32 %v6317, %v6731
    %v7229 = vmul.f32 %v6318, %v6732
    %v7230 = vmul.f32 %v6319, %v6733
    %v7231 = vmul.f32 %v6320, %v6734
    %v7232 = vmul.f32 %v6321, %v6728
    %v7233 = vmul.f32 %v6322, %v6729
    %v7234 = vmul.f32 %v6323, %v6730
    %v7235 = vmul.f32 %v6324, %v6731
    %v7236 = vmul.f32 %v6325, %v6732
    %v7237 = vmul.f32 %v6326, %v6733
    %v7238 = vmul.f32 %v6327, %v6734
    %v7239 = vmul.f32 %v6328, %v6728
    %v7240 = vmul.f32 %v6329, %v6729
    %v7241 = vmul.f32 %v6330, %v6730
    %v7242 = vmul.f32 %v6331, %v6731
    %v7243 = vmul.f32 %v6332, %v6732
    %v7244 = vmul.f32 %v6333, %v6733
    %v7245 = vmul.f32 %v6334, %v6734
    %v7246 = vmul.f32 %v6335, %v6728
    %v7247 = vmul.f32 %v6336, %v6729
    %v7248 = vmul.f32 %v6337, %v6730
    %v7249 = vmul.f32 %v6338, %v6731
    %v7250 = vmul.f32 %v6339, %v6732
    %v7251 = vmul.f32 %v6340, %v6733
    %v7252 = vmul.f32 %v6341, %v6734
    %v7253 = vmul.f32 %v6342, %v6728
    %v7254 = vmul.f32 %v6343, %v6729
    %v7255 = vmul.f32 %v6344, %v6730
    %v7256 = vmul.f32 %v6345, %v6731
    %v7257 = vmul.f32 %v6346, %v6732
    %v7258 = vmul.f32 %v6347, %v6733
    %v7259 = vmul.f32 %v6348, %v6734
    %v7260 = vmul.f32 %v6349, %v6728
    %v7261 = vmul.f32 %v6350, %v6729
    %v7262 = vmul.f32 %v6351, %v6730
    %v7263 = vmul.f32 %v6352, %v6731
    %v7264 = vmul.f32 %v6353, %v6732
    %v7265 = vmul.f32 %v6354, %v6733
    %v7266 = vmul.f32 %v6355, %v6734
    %v7267 = vmul.f32 %v6356, %v6728
    %v7268 = vmul.f32 %v6357, %v6729
    %v7269 = vmul.f32 %v6358, %v6730
    %v7270 = vmul.f32 %v6359, %v6731
    %v7271 = vmul.f32 %v6360, %v6732
    %v7272 = vmul.f32 %v6361, %v6733
    %v7273 = vmul.f32 %v6362, %v6734
    %v7274 = vmul.f32 %v6363, %v6728
    %v7275 = vmul.f32 %v6364, %v6729
    %v7276 = vmul.f32 %v6365, %v6730
    %v7277 = vmul.f32 %v6366, %v6731
    %v7278 = vmul.f32 %v6367, %v6732
    %v7279 = vmul.f32 %v6368, %v6733
    %v7280 = vmul.f32 %v6369, %v6734
    %v7281 = vmul.f32 %v6370, %v6728
    %v7282 = vmul.f32 %v6371, %v6729
    %v7283 = vmul.f32 %v6372, %v6730
    %v7284 = vmul.f32 %v6373, %v6731
    %v7285 = vmul.f32 %v6374, %v6732
    %v7286 = vmul.f32 %v6375, %v6733
    %v7287 = vmul.f32 %v6376, %v6734
    %v7288 = vmul.f32 %v6377, %v6728
    %v7289 = vmul.f32 %v6378, %v6729
    %v7290 = vmul.f32 %v6379, %v6730
    %v7291 = vmul.f32 %v6380, %v6731
    %v7292 = vmul.f32 %v6381, %v6732
    %v7293 = vmul.f32 %v6382, %v6733
    %v7294 = vmul.f32 %v6383, %v6734
    %v7295 = vmul.f32 %v6384, %v6728
    %v7296 = vmul.f32 %v6385, %v6729
    %v7297 = vmul.f32 %v6386, %v6730
    %v7298 = vmul.f32 %v6387, %v6731
    %v7299 = vmul.f32 %v6388, %v6732
    %v7300 = vmul.f32 %v6389, %v6733
    %v7301 = vmul.f32 %v6390, %v6734
    %v7302 = vmul.f32 %v6391, %v6728
    %v7303 = vmul.f32 %v6392, %v6729
    %v7304 = vmul.f32 %v6393, %v6730
    %v7305 = vmul.f32 %v6394, %v6731
    %v7306 = vmul.f32 %v6395, %v6732
    %v7307 = vmul.f32 %v6396, %v6733
    %v7308 = vmul.f32 %v6397, %v6734
    %v7309 = vmul.f32 %v6398, %v6728
    %v7310 = vmul.f32 %v6399, %v6729
    %v7311 = vmul.f32 %v6400, %v6730
    %v7312 = vmul.f32 %v6401, %v6731
    %v7313 = vmul.f32 %v6402, %v6732
    %v7314 = vmul.f32 %v6403, %v6733
    %v7315 = vmul.f32 %v6404, %v6734
    %v7316 = vmul.f32 %v6405, %v6728
    %v7317 = vmul.f32 %v6406, %v6729
    %v7318 = vmul.f32 %v6407, %v6730
    %v7319 = vmul.f32 %v6408, %v6731
    %v7320 = vmul.f32 %v6409, %v6732
    %v7321 = vmul.f32 %v6410, %v6733
    %v7322 = vmul.f32 %v6411, %v6734
    %v7323 = vmul.f32 %v6412, %v6728
    %v7324 = vmul.f32 %v6413, %v6729
    %v7325 = vmul.f32 %v6414, %v6730
    %v7326 = vmul.f32 %v6415, %v6731
    %v7327 = vmul.f32 %v6416, %v6732
    %v7328 = vmul.f32 %v6417, %v6733
    %v7329 = vmul.f32 %v6418, %v6734
    %v7330 = vmul.f32 %v6419, %v6728
    %v7331 = vmul.f32 %v6420, %v6729
    %v7332 = vmul.f32 %v6421, %v6730
    %v7333 = vmul.f32 %v6422, %v6731
    %v7334 = vmul.f32 %v6423, %v6732
    %v7335 = vmul.f32 %v6424, %v6733
    %v7336 = vmul.f32 %v6425, %v6734
    %v7337 = vmul.f32 %v6426, %v6728
    %v7338 = vmul.f32 %v6427, %v6729
    %v7339 = vmul.f32 %v6428, %v6730
    %v7340 = vmul.f32 %v6429, %v6731
    %v7341 = vmul.f32 %v6430, %v6732
    %v7342 = vmul.f32 %v6431, %v6733
    %v7343 = vmul.f32 %v6432, %v6734
    %v7344 = vmul.f32 %v6433, %v6728
    %v7345 = vmul.f32 %v6434, %v6729
    %v7346 = vmul.f32 %v6435, %v6730
    %v7347 = vmul.f32 %v6436, %v6731
    %v7348 = vmul.f32 %v6437, %v6732
    %v7349 = vmul.f32 %v6438, %v6733
    %v7350 = vmul.f32 %v6439, %v6734
    %v7351 = vmul.f32 %v6440, %v6728
    %v7352 = vmul.f32 %v6441, %v6729
    %v7353 = vmul.f32 %v6442, %v6730
    %v7354 = vmul.f32 %v6443, %v6731
    %v7355 = vmul.f32 %v6444, %v6732
    %v7356 = vmul.f32 %v6445, %v6733
    %v7357 = vmul.f32 %v6446, %v6734
    %v7358 = vmul.f32 %v6447, %v6728
    %v7359 = vmul.f32 %v6448, %v6729
    %v7360 = vmul.f32 %v6449, %v6730
    %v7361 = vmul.f32 %v6450, %v6731
    %v7362 = vmul.f32 %v6451, %v6732
    %v7363 = vmul.f32 %v6452, %v6733
    %v7364 = vmul.f32 %v6453, %v6734
    %v7365 = vmul.f32 %v6454, %v6728
    %v7366 = vmul.f32 %v6455, %v6729
    %v7367 = vmul.f32 %v6456, %v6730
    %v7368 = vmul.f32 %v6457, %v6731
    %v7369 = vmul.f32 %v6458, %v6732
    %v7370 = vmul.f32 %v6459, %v6733
    %v7371 = vmul.f32 %v6460, %v6734
    %v7372 = vmul.f32 %v6461, %v6728
    %v7373 = vmul.f32 %v6462, %v6729
    %v7374 = vmul.f32 %v6463, %v6730
    %v7375 = vmul.f32 %v6464, %v6731
    %v7376 = vmul.f32 %v6465, %v6732
    %v7377 = vmul.f32 %v6466, %v6733
    %v7378 = vmul.f32 %v6467, %v6734
    %v7379 = vmul.f32 %v6468, %v6728
    %v7380 = vmul.f32 %v6469, %v6729
    %v7381 = vmul.f32 %v6470, %v6730
    %v7382 = vmul.f32 %v6471, %v6731
    %v7383 = vmul.f32 %v6472, %v6732
    %v7384 = vmul.f32 %v6473, %v6733
    %v7385 = vmul.f32 %v6474, %v6734
    %v7386 = vmul.f32 %v6475, %v6728
    %v7387 = vmul.f32 %v6476, %v6729
    %v7388 = vmul.f32 %v6477, %v6730
    %v7389 = vmul.f32 %v6478, %v6731
    %v7390 = vmul.f32 %v6479, %v6732
    %v7391 = vmul.f32 %v6480, %v6733
    %v7392 = vmul.f32 %v6481, %v6734
    %v7393 = vmul.f32 %v6482, %v6728
    %v7394 = vmul.f32 %v6483, %v6729
    %v7395 = vmul.f32 %v6484, %v6730
    %v7396 = vmul.f32 %v6485, %v6731
    %v7397 = vmul.f32 %v6486, %v6732
    %v7398 = vmul.f32 %v6487, %v6733
    %v7399 = vmul.f32 %v6488, %v6734
    %v7400 = vmul.f32 %v6489, %v6728
    %v7401 = vmul.f32 %v6490, %v6729
    %v7402 = vmul.f32 %v6491, %v6730
    %v7403 = vmul.f32 %v6492, %v6731
    %v7404 = vmul.f32 %v6493, %v6732
    %v7405 = vmul.f32 %v6494, %v6733
    %v7406 = vmul.f32 %v6495, %v6734
    %v7407 = vmul.f32 %v6496, %v6728
    %v7408 = vmul.f32 %v6497, %v6729
    %v7409 = vmul.f32 %v6498, %v6730
    %v7410 = vmul.f32 %v6499, %v6731
    %v7411 = vmul.f32 %v6500, %v6732
    %v7412 = vmul.f32 %v6501, %v6733
    %v7413 = vmul.f32 %v6502, %v6734
    %v7414 = vmul.f32 %v6503, %v6728
    %v7415 = vmul.f32 %v6504, %v6729
    %v7416 = vmul.f32 %v6505, %v6730
    %v7417 = vmul.f32 %v6506, %v6731
    %v7418 = vmul.f32 %v6507, %v6732
    %v7419 = vmul.f32 %v6508, %v6733
    %v7420 = vmul.f32 %v6509, %v6734
    %v7421 = vmul.f32 %v6510, %v6728
    %v7422 = vmul.f32 %v6511, %v6729
    %v7423 = vmul.f32 %v6512, %v6730
    %v7424 = vmul.f32 %v6513, %v6731
    %v7425 = vmul.f32 %v6514, %v6732
    %v7426 = vmul.f32 %v6515, %v6733
    %v7427 = vmul.f32 %v6516, %v6734
    %v7428 = vmul.f32 %v6517, %v6728
    %v7429 = vmul.f32 %v6518, %v6729
    %v7430 = vmul.f32 %v6519, %v6730
    %v7431 = vmul.f32 %v6520, %v6731
    %v7432 = vmul.f32 %v6521, %v6732
    %v7433 = vmul.f32 %v6522, %v6733
    %v7434 = vmul.f32 %v6523, %v6734
    %v7435 = vmul.f32 %v6524, %v6728
    %v7436 = vmul.f32 %v6525, %v6729
    %v7437 = vmul.f32 %v6526, %v6730
    %v7438 = vmul.f32 %v6527, %v6731
    %v7439 = vmul.f32 %v6528, %v6732
    %v7440 = vmul.f32 %v6529, %v6733
    %v7441 = vmul.f32 %v6530, %v6734
    %v7442 = vmul.f32 %v6531, %v6728
    %v7443 = vmul.f32 %v6532, %v6729
    %v7444 = vmul.f32 %v6533, %v6730
    %v7445 = vmul.f32 %v6534, %v6731
    %v7446 = vmul.f32 %v6535, %v6732
    %v7447 = vmul.f32 %v6536, %v6733
    %v7448 = vmul.f32 %v6537, %v6734
    %v7449 = vmul.f32 %v6538, %v6728
    %v7450 = vmul.f32 %v6539, %v6729
    %v7451 = vmul.f32 %v6540, %v6730
    %v7452 = vmul.f32 %v6541, %v6731
    %v7453 = vmul.f32 %v6542, %v6732
    %v7454 = vmul.f32 %v6543, %v6733
    %v7455 = vmul.f32 %v6544, %v6734
    %v7456 = vmul.f32 %v6545, %v6728
    %v7457 = vmul.f32 %v6546, %v6729
    %v7458 = vmul.f32 %v6547, %v6730
    %v7459 = vmul.f32 %v6548, %v6731
    %v7460 = vmul.f32 %v6549, %v6732
    %v7461 = vmul.f32 %v6550, %v6733
    %v7462 = vmul.f32 %v6551, %v6734
    %v7463 = vmul.f32 %v6552, %v6728
    %v7464 = vmul.f32 %v6553, %v6729
    %v7465 = vmul.f32 %v6554, %v6730
    %v7466 = vmul.f32 %v6555, %v6731
    %v7467 = vmul.f32 %v6556, %v6732
    %v7468 = vmul.f32 %v6557, %v6733
    %v7469 = vmul.f32 %v6558, %v6734
    %v7470 = vmul.f32 %v6559, %v6728
    %v7471 = vmul.f32 %v6560, %v6729
    %v7472 = vmul.f32 %v6561, %v6730
    %v7473 = vmul.f32 %v6562, %v6731
    %v7474 = vmul.f32 %v6563, %v6732
    %v7475 = vmul.f32 %v6564, %v6733
    %v7476 = vmul.f32 %v6565, %v6734
    %v7477 = vmul.f32 %v6566, %v6728
    %v7478 = vmul.f32 %v6567, %v6729
    %v7479 = vmul.f32 %v6568, %v6730
    %v7480 = vmul.f32 %v6569, %v6731
    %v7481 = vmul.f32 %v6570, %v6732
    %v7482 = vmul.f32 %v6571, %v6733
    %v7483 = vmul.f32 %v6572, %v6734
    %v7484 = vmul.f32 %v6573, %v6728
    %v7485 = vmul.f32 %v6574, %v6729
    %v7486 = vmul.f32 %v6575, %v6730
    %v7487 = vmul.f32 %v6576, %v6731
    %v7488 = vmul.f32 %v6577, %v6732
    %v7489 = vmul.f32 %v6578, %v6733
    %v7490 = vmul.f32 %v6579, %v6734
    %v7491 = vmul.f32 %v6580, %v6728
    %v7492 = vmul.f32 %v6581, %v6729
    %v7493 = vmul.f32 %v6582, %v6730
    %v7494 = vmul.f32 %v6583, %v6731
    %v7495 = vmul.f32 %v6584, %v6732
    %v7496 = vmul.f32 %v6585, %v6733
    %v7497 = vmul.f32 %v6586, %v6734
    %v7498 = vmul.f32 %v6587, %v6728
    %v7499 = vmul.f32 %v6588, %v6729
    %v7500 = vmul.f32 %v6589, %v6730
    %v7501 = vmul.f32 %v6590, %v6731
    %v7502 = vmul.f32 %v6591, %v6732
    %v7503 = vmul.f32 %v6592, %v6733
    %v7504 = vmul.f32 %v6593, %v6734
    %v7505 = vmul.f32 %v6594, %v6728
    %v7506 = vmul.f32 %v6595, %v6729
    %v7507 = vmul.f32 %v6596, %v6730
    %v7508 = vmul.f32 %v6597, %v6731
    %v7509 = vmul.f32 %v6598, %v6732
    %v7510 = vmul.f32 %v6599, %v6733
    %v7511 = vmul.f32 %v6600, %v6734
    %v7512 = vmul.f32 %v6601, %v6728
    %v7513 = vmul.f32 %v6602, %v6729
    %v7514 = vmul.f32 %v6603, %v6730
    %v7515 = vmul.f32 %v6604, %v6731
    %v7516 = vmul.f32 %v6605, %v6732
    %v7517 = vmul.f32 %v6606, %v6733
    %v7518 = vmul.f32 %v6607, %v6734
    %v7519 = vmul.f32 %v6608, %v6728
    %v7520 = vmul.f32 %v6609, %v6729
    %v7521 = vmul.f32 %v6610, %v6730
    %v7522 = vmul.f32 %v6611, %v6731
    %v7523 = vmul.f32 %v6612, %v6732
    %v7524 = vmul.f32 %v6613, %v6733
    %v7525 = vmul.f32 %v6614, %v6734
    %v7526 = vmul.f32 %v6615, %v6728
    %v7527 = vmul.f32 %v6616, %v6729
    %v7528 = vmul.f32 %v6617, %v6730
    %v7529 = vmul.f32 %v6618, %v6731
    %v7530 = vmul.f32 %v6619, %v6732
    %v7531 = vmul.f32 %v6620, %v6733
    %v7532 = vmul.f32 %v6621, %v6734
    %v7533 = vmul.f32 %v6622, %v6728
    %v7534 = vmul.f32 %v6623, %v6729
    %v7535 = vmul.f32 %v6624, %v6730
    %v7536 = vmul.f32 %v6625, %v6731
    %v7537 = vmul.f32 %v6626, %v6732
    %v7538 = vmul.f32 %v6627, %v6733
    %v7539 = vmul.f32 %v6628, %v6734
    %v7540 = vmul.f32 %v6629, %v6728
    %v7541 = vmul.f32 %v6630, %v6729
    %v7542 = vmul.f32 %v6631, %v6730
    %v7543 = vmul.f32 %v6632, %v6731
    %v7544 = vmul.f32 %v6633, %v6732
    %v7545 = vmul.f32 %v6634, %v6733
    %v7546 = vmul.f32 %v6635, %v6734
    %v7547 = vmul.f32 %v6636, %v6728
    %v7548 = vmul.f32 %v6637, %v6729
    %v7549 = vmul.f32 %v6638, %v6730
    %v7550 = vmul.f32 %v6639, %v6731
    %v7551 = vmul.f32 %v6640, %v6732
    %v7552 = vmul.f32 %v6641, %v6733
    %v7553 = vmul.f32 %v6642, %v6734
    %v7554 = vmul.f32 %v6643, %v6728
    %v7555 = vmul.f32 %v6644, %v6729
    %v7556 = vmul.f32 %v6645, %v6730
    %v7557 = vmul.f32 %v6646, %v6731
    %v7558 = vmul.f32 %v6647, %v6732
    %v7559 = vmul.f32 %v6648, %v6733
    %v7560 = vmul.f32 %v6649, %v6734
    %v7561 = vmul.f32 %v6650, %v6728
    %v7562 = vmul.f32 %v6651, %v6729
    %v7563 = vmul.f32 %v6652, %v6730
    %v7564 = vmul.f32 %v6653, %v6731
    %v7565 = vmul.f32 %v6654, %v6732
    %v7566 = vmul.f32 %v6655, %v6733
    %v7567 = vmul.f32 %v6656, %v6734
    %v7568 = vmul.f32 %v6657, %v6728
    %v7569 = vmul.f32 %v6658, %v6729
    %v7570 = vmul.f32 %v6659, %v6730
    %v7571 = vmul.f32 %v6660, %v6731
    %v7572 = vmul.f32 %v6661, %v6732
    %v7573 = vmul.f32 %v6662, %v6733
    %v7574 = vmul.f32 %v6663, %v6734
    %v7575 = vmul.f32 %v6664, %v6728
    %v7576 = vmul.f32 %v6665, %v6729
    %v7577 = vmul.f32 %v6666, %v6730
    %v7578 = vmul.f32 %v6667, %v6731
    %v7579 = vmul.f32 %v6668, %v6732
    %v7580 = vmul.f32 %v6669, %v6733
    %v7581 = vmul.f32 %v6670, %v6734
    %v7582 = vmul.f32 %v6671, %v6728
    %v7583 = vmul.f32 %v6672, %v6729
    %v7584 = vmul.f32 %v6673, %v6730
    %v7585 = vmul.f32 %v6674, %v6731
    %v7586 = vmul.f32 %v6675, %v6732
    %v7587 = vmul.f32 %v6676, %v6733
    %v7588 = vmul.f32 %v6677, %v6734
    %v7589 = vmul.f32 %v6678, %v6728
    %v7590 = vmul.f32 %v6679, %v6729
    %v7591 = vmul.f32 %v6680, %v6730
    %v7592 = vmul.f32 %v6681, %v6731
    %v7593 = vmul.f32 %v6682, %v6732
    %v7594 = vmul.f32 %v6683, %v6733
    %v7595 = vmul.f32 %v6684, %v6734
    %v7596 = vmul.f32 %v6685, %v6728
    %v7597 = vmul.f32 %v6686, %v6729
    %v7598 = vmul.f32 %v6687, %v6730
    %v7599 = vmul.f32 %v6688, %v6731
    %v7600 = vmul.f32 %v6689, %v6732
    %v7601 = vmul.f32 %v6690, %v6733
    %v7602 = vmul.f32 %v6691, %v6734
    %v7603 = vmul.f32 %v6692, %v6728
    %v7604 = vmul.f32 %v6693, %v6729
    %v7605 = vmul.f32 %v6694, %v6730
    %v7606 = vmul.f32 %v6695, %v6731
    %v7607 = vmul.f32 %v6696, %v6732
    %v7608 = vmul.f32 %v6697, %v6733
    %v7609 = vmul.f32 %v6698, %v6734
    %v7610 = vmul.f32 %v6699, %v6728
    %v7611 = vmul.f32 %v6700, %v6729
    %v7612 = vmul.f32 %v6701, %v6730
    %v7613 = vmul.f32 %v6702, %v6731
    %v7614 = vmul.f32 %v6703, %v6732
    %v7615 = vmul.f32 %v6704, %v6733
    %v7616 = vmul.f32 %v6705, %v6734
    %v7617 = vmul.f32 %v6706, %v6728
    %v7618 = vmul.f32 %v6707, %v6729
    %v7619 = vmul.f32 %v6708, %v6730
    %v7620 = vmul.f32 %v6709, %v6731
    %v7621 = vmul.f32 %v6710, %v6732
    %v7622 = vmul.f32 %v6711, %v6733
    %v7623 = vmul.f32 %v6712, %v6734
    %v7624 = vmul.f32 %v6713, %v6728
    %v7625 = vmul.f32 %v6714, %v6729
    %v7626 = vmul.f32 %v6715, %v6730
    %v7627 = vmul.f32 %v6716, %v6731
    %v7628 = vmul.f32 %v6717, %v6732
    %v7629 = vmul.f32 %v6718, %v6733
    %v7630 = vmul.f32 %v6719, %v6734
    %v7631 = vmul.f32 %v6720, %v6728
    %v7632 = vmul.f32 %v6721, %v6729
    %v7633 = vmul.f32 %v6722, %v6730
    %v7634 = vmul.f32 %v6723, %v6731
    %v7635 = vmul.f32 %v6724, %v6732
    %v7636 = vmul.f32 %v6725, %v6733
    %v7637 = vmul.f32 %v6726, %v6734
    %v7638 = vpack.c.bf16 %v6749, %v6742
    %v7639 = vpack.c.bf16 %v6750, %v6743
    %v7640 = vpack.c.bf16 %v6751, %v6744
    %v7641 = vpack.c.bf16 %v6752, %v6745
    %v7642 = vpack.c.bf16 %v6753, %v6746
    %v7643 = vpack.c.bf16 %v6754, %v6747
    %v7644 = vpack.c.bf16 %v6755, %v6748
    %v7645 = vpack.c.bf16 %v6763, %v6756
    %v7646 = vpack.c.bf16 %v6764, %v6757
    %v7647 = vpack.c.bf16 %v6765, %v6758
    %v7648 = vpack.c.bf16 %v6766, %v6759
    %v7649 = vpack.c.bf16 %v6767, %v6760
    %v7650 = vpack.c.bf16 %v6768, %v6761
    %v7651 = vpack.c.bf16 %v6769, %v6762
    %v7652 = vpack.c.bf16 %v6777, %v6770
    %v7653 = vpack.c.bf16 %v6778, %v6771
    %v7654 = vpack.c.bf16 %v6779, %v6772
    %v7655 = vpack.c.bf16 %v6780, %v6773
    %v7656 = vpack.c.bf16 %v6781, %v6774
    %v7657 = vpack.c.bf16 %v6782, %v6775
    %v7658 = vpack.c.bf16 %v6783, %v6776
    %v7659 = vpack.c.bf16 %v6791, %v6784
    %v7660 = vpack.c.bf16 %v6792, %v6785
    %v7661 = vpack.c.bf16 %v6793, %v6786
    %v7662 = vpack.c.bf16 %v6794, %v6787
    %v7663 = vpack.c.bf16 %v6795, %v6788
    %v7664 = vpack.c.bf16 %v6796, %v6789
    %v7665 = vpack.c.bf16 %v6797, %v6790
    %v7666 = vpack.c.bf16 %v6805, %v6798
    %v7667 = vpack.c.bf16 %v6806, %v6799
    %v7668 = vpack.c.bf16 %v6807, %v6800
    %v7669 = vpack.c.bf16 %v6808, %v6801
    %v7670 = vpack.c.bf16 %v6809, %v6802
    %v7671 = vpack.c.bf16 %v6810, %v6803
    %v7672 = vpack.c.bf16 %v6811, %v6804
    %v7673 = vpack.c.bf16 %v6819, %v6812
    %v7674 = vpack.c.bf16 %v6820, %v6813
    %v7675 = vpack.c.bf16 %v6821, %v6814
    %v7676 = vpack.c.bf16 %v6822, %v6815
    %v7677 = vpack.c.bf16 %v6823, %v6816
    %v7678 = vpack.c.bf16 %v6824, %v6817
    %v7679 = vpack.c.bf16 %v6825, %v6818
    %v7680 = vpack.c.bf16 %v6833, %v6826
    %v7681 = vpack.c.bf16 %v6834, %v6827
    %v7682 = vpack.c.bf16 %v6835, %v6828
    %v7683 = vpack.c.bf16 %v6836, %v6829
    %v7684 = vpack.c.bf16 %v6837, %v6830
    %v7685 = vpack.c.bf16 %v6838, %v6831
    %v7686 = vpack.c.bf16 %v6839, %v6832
    %v7687 = vpack.c.bf16 %v6847, %v6840
    %v7688 = vpack.c.bf16 %v6848, %v6841
    %v7689 = vpack.c.bf16 %v6849, %v6842
    %v7690 = vpack.c.bf16 %v6850, %v6843
    %v7691 = vpack.c.bf16 %v6851, %v6844
    %v7692 = vpack.c.bf16 %v6852, %v6845
    %v7693 = vpack.c.bf16 %v6853, %v6846
    %v7694 = vpack.c.bf16 %v6861, %v6854
    %v7695 = vpack.c.bf16 %v6862, %v6855
    %v7696 = vpack.c.bf16 %v6863, %v6856
    %v7697 = vpack.c.bf16 %v6864, %v6857
    %v7698 = vpack.c.bf16 %v6865, %v6858
    %v7699 = vpack.c.bf16 %v6866, %v6859
    %v7700 = vpack.c.bf16 %v6867, %v6860
    %v7701 = vpack.c.bf16 %v6875, %v6868
    %v7702 = vpack.c.bf16 %v6876, %v6869
    %v7703 = vpack.c.bf16 %v6877, %v6870
    %v7704 = vpack.c.bf16 %v6878, %v6871
    %v7705 = vpack.c.bf16 %v6879, %v6872
    %v7706 = vpack.c.bf16 %v6880, %v6873
    %v7707 = vpack.c.bf16 %v6881, %v6874
    %v7708 = vpack.c.bf16 %v6889, %v6882
    %v7709 = vpack.c.bf16 %v6890, %v6883
    %v7710 = vpack.c.bf16 %v6891, %v6884
    %v7711 = vpack.c.bf16 %v6892, %v6885
    %v7712 = vpack.c.bf16 %v6893, %v6886
    %v7713 = vpack.c.bf16 %v6894, %v6887
    %v7714 = vpack.c.bf16 %v6895, %v6888
    %v7715 = vpack.c.bf16 %v6903, %v6896
    %v7716 = vpack.c.bf16 %v6904, %v6897
    %v7717 = vpack.c.bf16 %v6905, %v6898
    %v7718 = vpack.c.bf16 %v6906, %v6899
    %v7719 = vpack.c.bf16 %v6907, %v6900
    %v7720 = vpack.c.bf16 %v6908, %v6901
    %v7721 = vpack.c.bf16 %v6909, %v6902
    %v7722 = vpack.c.bf16 %v6917, %v6910
    %v7723 = vpack.c.bf16 %v6918, %v6911
    %v7724 = vpack.c.bf16 %v6919, %v6912
    %v7725 = vpack.c.bf16 %v6920, %v6913
    %v7726 = vpack.c.bf16 %v6921, %v6914
    %v7727 = vpack.c.bf16 %v6922, %v6915
    %v7728 = vpack.c.bf16 %v6923, %v6916
    %v7729 = vpack.c.bf16 %v6931, %v6924
    %v7730 = vpack.c.bf16 %v6932, %v6925
    %v7731 = vpack.c.bf16 %v6933, %v6926
    %v7732 = vpack.c.bf16 %v6934, %v6927
    %v7733 = vpack.c.bf16 %v6935, %v6928
    %v7734 = vpack.c.bf16 %v6936, %v6929
    %v7735 = vpack.c.bf16 %v6937, %v6930
    %v7736 = vpack.c.bf16 %v6945, %v6938
    %v7737 = vpack.c.bf16 %v6946, %v6939
    %v7738 = vpack.c.bf16 %v6947, %v6940
    %v7739 = vpack.c.bf16 %v6948, %v6941
    %v7740 = vpack.c.bf16 %v6949, %v6942
    %v7741 = vpack.c.bf16 %v6950, %v6943
    %v7742 = vpack.c.bf16 %v6951, %v6944
    %v7743 = vpack.c.bf16 %v6959, %v6952
    %v7744 = vpack.c.bf16 %v6960, %v6953
    %v7745 = vpack.c.bf16 %v6961, %v6954
    %v7746 = vpack.c.bf16 %v6962, %v6955
    %v7747 = vpack.c.bf16 %v6963, %v6956
    %v7748 = vpack.c.bf16 %v6964, %v6957
    %v7749 = vpack.c.bf16 %v6965, %v6958
    %v7750 = vpack.c.bf16 %v6973, %v6966
    %v7751 = vpack.c.bf16 %v6974, %v6967
    %v7752 = vpack.c.bf16 %v6975, %v6968
    %v7753 = vpack.c.bf16 %v6976, %v6969
    %v7754 = vpack.c.bf16 %v6977, %v6970
    %v7755 = vpack.c.bf16 %v6978, %v6971
    %v7756 = vpack.c.bf16 %v6979, %v6972
    %v7757 = vpack.c.bf16 %v6987, %v6980
    %v7758 = vpack.c.bf16 %v6988, %v6981
    %v7759 = vpack.c.bf16 %v6989, %v6982
    %v7760 = vpack.c.bf16 %v6990, %v6983
    %v7761 = vpack.c.bf16 %v6991, %v6984
    %v7762 = vpack.c.bf16 %v6992, %v6985
    %v7763 = vpack.c.bf16 %v6993, %v6986
    %v7764 = vpack.c.bf16 %v7001, %v6994
    %v7765 = vpack.c.bf16 %v7002, %v6995
    %v7766 = vpack.c.bf16 %v7003, %v6996
    %v7767 = vpack.c.bf16 %v7004, %v6997
    %v7768 = vpack.c.bf16 %v7005, %v6998
    %v7769 = vpack.c.bf16 %v7006, %v6999
    %v7770 = vpack.c.bf16 %v7007, %v7000
    %v7771 = vpack.c.bf16 %v7015, %v7008
    %v7772 = vpack.c.bf16 %v7016, %v7009
    %v7773 = vpack.c.bf16 %v7017, %v7010
    %v7774 = vpack.c.bf16 %v7018, %v7011
    %v7775 = vpack.c.bf16 %v7019, %v7012
    %v7776 = vpack.c.bf16 %v7020, %v7013
    %v7777 = vpack.c.bf16 %v7021, %v7014
    %v7778 = vpack.c.bf16 %v7029, %v7022
    %v7779 = vpack.c.bf16 %v7030, %v7023
    %v7780 = vpack.c.bf16 %v7031, %v7024
    %v7781 = vpack.c.bf16 %v7032, %v7025
    %v7782 = vpack.c.bf16 %v7033, %v7026
    %v7783 = vpack.c.bf16 %v7034, %v7027
    %v7784 = vpack.c.bf16 %v7035, %v7028
    %v7785 = vpack.c.bf16 %v7043, %v7036
    %v7786 = vpack.c.bf16 %v7044, %v7037
    %v7787 = vpack.c.bf16 %v7045, %v7038
    %v7788 = vpack.c.bf16 %v7046, %v7039
    %v7789 = vpack.c.bf16 %v7047, %v7040
    %v7790 = vpack.c.bf16 %v7048, %v7041
    %v7791 = vpack.c.bf16 %v7049, %v7042
    %v7792 = vpack.c.bf16 %v7057, %v7050
    %v7793 = vpack.c.bf16 %v7058, %v7051
    %v7794 = vpack.c.bf16 %v7059, %v7052
    %v7795 = vpack.c.bf16 %v7060, %v7053
    %v7796 = vpack.c.bf16 %v7061, %v7054
    %v7797 = vpack.c.bf16 %v7062, %v7055
    %v7798 = vpack.c.bf16 %v7063, %v7056
    %v7799 = vpack.c.bf16 %v7071, %v7064
    %v7800 = vpack.c.bf16 %v7072, %v7065
    %v7801 = vpack.c.bf16 %v7073, %v7066
    %v7802 = vpack.c.bf16 %v7074, %v7067
    %v7803 = vpack.c.bf16 %v7075, %v7068
    %v7804 = vpack.c.bf16 %v7076, %v7069
    %v7805 = vpack.c.bf16 %v7077, %v7070
    %v7806 = vpack.c.bf16 %v7085, %v7078
    %v7807 = vpack.c.bf16 %v7086, %v7079
    %v7808 = vpack.c.bf16 %v7087, %v7080
    %v7809 = vpack.c.bf16 %v7088, %v7081
    %v7810 = vpack.c.bf16 %v7089, %v7082
    %v7811 = vpack.c.bf16 %v7090, %v7083
    %v7812 = vpack.c.bf16 %v7091, %v7084
    %v7813 = vpack.c.bf16 %v7099, %v7092
    %v7814 = vpack.c.bf16 %v7100, %v7093
    %v7815 = vpack.c.bf16 %v7101, %v7094
    %v7816 = vpack.c.bf16 %v7102, %v7095
    %v7817 = vpack.c.bf16 %v7103, %v7096
    %v7818 = vpack.c.bf16 %v7104, %v7097
    %v7819 = vpack.c.bf16 %v7105, %v7098
    %v7820 = vpack.c.bf16 %v7113, %v7106
    %v7821 = vpack.c.bf16 %v7114, %v7107
    %v7822 = vpack.c.bf16 %v7115, %v7108
    %v7823 = vpack.c.bf16 %v7116, %v7109
    %v7824 = vpack.c.bf16 %v7117, %v7110
    %v7825 = vpack.c.bf16 %v7118, %v7111
    %v7826 = vpack.c.bf16 %v7119, %v7112
    %v7827 = vpack.c.bf16 %v7127, %v7120
    %v7828 = vpack.c.bf16 %v7128, %v7121
    %v7829 = vpack.c.bf16 %v7129, %v7122
    %v7830 = vpack.c.bf16 %v7130, %v7123
    %v7831 = vpack.c.bf16 %v7131, %v7124
    %v7832 = vpack.c.bf16 %v7132, %v7125
    %v7833 = vpack.c.bf16 %v7133, %v7126
    %v7834 = vpack.c.bf16 %v7141, %v7134
    %v7835 = vpack.c.bf16 %v7142, %v7135
    %v7836 = vpack.c.bf16 %v7143, %v7136
    %v7837 = vpack.c.bf16 %v7144, %v7137
    %v7838 = vpack.c.bf16 %v7145, %v7138
    %v7839 = vpack.c.bf16 %v7146, %v7139
    %v7840 = vpack.c.bf16 %v7147, %v7140
    %v7841 = vpack.c.bf16 %v7155, %v7148
    %v7842 = vpack.c.bf16 %v7156, %v7149
    %v7843 = vpack.c.bf16 %v7157, %v7150
    %v7844 = vpack.c.bf16 %v7158, %v7151
    %v7845 = vpack.c.bf16 %v7159, %v7152
    %v7846 = vpack.c.bf16 %v7160, %v7153
    %v7847 = vpack.c.bf16 %v7161, %v7154
    %v7848 = vpack.c.bf16 %v7169, %v7162
    %v7849 = vpack.c.bf16 %v7170, %v7163
    %v7850 = vpack.c.bf16 %v7171, %v7164
    %v7851 = vpack.c.bf16 %v7172, %v7165
    %v7852 = vpack.c.bf16 %v7173, %v7166
    %v7853 = vpack.c.bf16 %v7174, %v7167
    %v7854 = vpack.c.bf16 %v7175, %v7168
    %v7855 = vpack.c.bf16 %v7183, %v7176
    %v7856 = vpack.c.bf16 %v7184, %v7177
    %v7857 = vpack.c.bf16 %v7185, %v7178
    %v7858 = vpack.c.bf16 %v7186, %v7179
    %v7859 = vpack.c.bf16 %v7187, %v7180
    %v7860 = vpack.c.bf16 %v7188, %v7181
    %v7861 = vpack.c.bf16 %v7189, %v7182
    %v7862 = vpack.c.bf16 %v7197, %v7190
    %v7863 = vpack.c.bf16 %v7198, %v7191
    %v7864 = vpack.c.bf16 %v7199, %v7192
    %v7865 = vpack.c.bf16 %v7200, %v7193
    %v7866 = vpack.c.bf16 %v7201, %v7194
    %v7867 = vpack.c.bf16 %v7202, %v7195
    %v7868 = vpack.c.bf16 %v7203, %v7196
    %v7869 = vpack.c.bf16 %v7211, %v7204
    %v7870 = vpack.c.bf16 %v7212, %v7205
    %v7871 = vpack.c.bf16 %v7213, %v7206
    %v7872 = vpack.c.bf16 %v7214, %v7207
    %v7873 = vpack.c.bf16 %v7215, %v7208
    %v7874 = vpack.c.bf16 %v7216, %v7209
    %v7875 = vpack.c.bf16 %v7217, %v7210
    %v7876 = vpack.c.bf16 %v7225, %v7218
    %v7877 = vpack.c.bf16 %v7226, %v7219
    %v7878 = vpack.c.bf16 %v7227, %v7220
    %v7879 = vpack.c.bf16 %v7228, %v7221
    %v7880 = vpack.c.bf16 %v7229, %v7222
    %v7881 = vpack.c.bf16 %v7230, %v7223
    %v7882 = vpack.c.bf16 %v7231, %v7224
    %v7883 = vpack.c.bf16 %v7239, %v7232
    %v7884 = vpack.c.bf16 %v7240, %v7233
    %v7885 = vpack.c.bf16 %v7241, %v7234
    %v7886 = vpack.c.bf16 %v7242, %v7235
    %v7887 = vpack.c.bf16 %v7243, %v7236
    %v7888 = vpack.c.bf16 %v7244, %v7237
    %v7889 = vpack.c.bf16 %v7245, %v7238
    %v7890 = vpack.c.bf16 %v7253, %v7246
    %v7891 = vpack.c.bf16 %v7254, %v7247
    %v7892 = vpack.c.bf16 %v7255, %v7248
    %v7893 = vpack.c.bf16 %v7256, %v7249
    %v7894 = vpack.c.bf16 %v7257, %v7250
    %v7895 = vpack.c.bf16 %v7258, %v7251
    %v7896 = vpack.c.bf16 %v7259, %v7252
    %v7897 = vpack.c.bf16 %v7267, %v7260
    %v7898 = vpack.c.bf16 %v7268, %v7261
    %v7899 = vpack.c.bf16 %v7269, %v7262
    %v7900 = vpack.c.bf16 %v7270, %v7263
    %v7901 = vpack.c.bf16 %v7271, %v7264
    %v7902 = vpack.c.bf16 %v7272, %v7265
    %v7903 = vpack.c.bf16 %v7273, %v7266
    %v7904 = vpack.c.bf16 %v7281, %v7274
    %v7905 = vpack.c.bf16 %v7282, %v7275
    %v7906 = vpack.c.bf16 %v7283, %v7276
    %v7907 = vpack.c.bf16 %v7284, %v7277
    %v7908 = vpack.c.bf16 %v7285, %v7278
    %v7909 = vpack.c.bf16 %v7286, %v7279
    %v7910 = vpack.c.bf16 %v7287, %v7280
    %v7911 = vpack.c.bf16 %v7295, %v7288
    %v7912 = vpack.c.bf16 %v7296, %v7289
    %v7913 = vpack.c.bf16 %v7297, %v7290
    %v7914 = vpack.c.bf16 %v7298, %v7291
    %v7915 = vpack.c.bf16 %v7299, %v7292
    %v7916 = vpack.c.bf16 %v7300, %v7293
    %v7917 = vpack.c.bf16 %v7301, %v7294
    %v7918 = vpack.c.bf16 %v7309, %v7302
    %v7919 = vpack.c.bf16 %v7310, %v7303
    %v7920 = vpack.c.bf16 %v7311, %v7304
    %v7921 = vpack.c.bf16 %v7312, %v7305
    %v7922 = vpack.c.bf16 %v7313, %v7306
    %v7923 = vpack.c.bf16 %v7314, %v7307
    %v7924 = vpack.c.bf16 %v7315, %v7308
    %v7925 = vpack.c.bf16 %v7323, %v7316
    %v7926 = vpack.c.bf16 %v7324, %v7317
    %v7927 = vpack.c.bf16 %v7325, %v7318
    %v7928 = vpack.c.bf16 %v7326, %v7319
    %v7929 = vpack.c.bf16 %v7327, %v7320
    %v7930 = vpack.c.bf16 %v7328, %v7321
    %v7931 = vpack.c.bf16 %v7329, %v7322
    %v7932 = vpack.c.bf16 %v7337, %v7330
    %v7933 = vpack.c.bf16 %v7338, %v7331
    %v7934 = vpack.c.bf16 %v7339, %v7332
    %v7935 = vpack.c.bf16 %v7340, %v7333
    %v7936 = vpack.c.bf16 %v7341, %v7334
    %v7937 = vpack.c.bf16 %v7342, %v7335
    %v7938 = vpack.c.bf16 %v7343, %v7336
    %v7939 = vpack.c.bf16 %v7351, %v7344
    %v7940 = vpack.c.bf16 %v7352, %v7345
    %v7941 = vpack.c.bf16 %v7353, %v7346
    %v7942 = vpack.c.bf16 %v7354, %v7347
    %v7943 = vpack.c.bf16 %v7355, %v7348
    %v7944 = vpack.c.bf16 %v7356, %v7349
    %v7945 = vpack.c.bf16 %v7357, %v7350
    %v7946 = vpack.c.bf16 %v7365, %v7358
    %v7947 = vpack.c.bf16 %v7366, %v7359
    %v7948 = vpack.c.bf16 %v7367, %v7360
    %v7949 = vpack.c.bf16 %v7368, %v7361
    %v7950 = vpack.c.bf16 %v7369, %v7362
    %v7951 = vpack.c.bf16 %v7370, %v7363
    %v7952 = vpack.c.bf16 %v7371, %v7364
    %v7953 = vpack.c.bf16 %v7379, %v7372
    %v7954 = vpack.c.bf16 %v7380, %v7373
    %v7955 = vpack.c.bf16 %v7381, %v7374
    %v7956 = vpack.c.bf16 %v7382, %v7375
    %v7957 = vpack.c.bf16 %v7383, %v7376
    %v7958 = vpack.c.bf16 %v7384, %v7377
    %v7959 = vpack.c.bf16 %v7385, %v7378
    %v7960 = vpack.c.bf16 %v7393, %v7386
    %v7961 = vpack.c.bf16 %v7394, %v7387
    %v7962 = vpack.c.bf16 %v7395, %v7388
    %v7963 = vpack.c.bf16 %v7396, %v7389
    %v7964 = vpack.c.bf16 %v7397, %v7390
    %v7965 = vpack.c.bf16 %v7398, %v7391
    %v7966 = vpack.c.bf16 %v7399, %v7392
    %v7967 = vpack.c.bf16 %v7407, %v7400
    %v7968 = vpack.c.bf16 %v7408, %v7401
    %v7969 = vpack.c.bf16 %v7409, %v7402
    %v7970 = vpack.c.bf16 %v7410, %v7403
    %v7971 = vpack.c.bf16 %v7411, %v7404
    %v7972 = vpack.c.bf16 %v7412, %v7405
    %v7973 = vpack.c.bf16 %v7413, %v7406
    %v7974 = vpack.c.bf16 %v7421, %v7414
    %v7975 = vpack.c.bf16 %v7422, %v7415
    %v7976 = vpack.c.bf16 %v7423, %v7416
    %v7977 = vpack.c.bf16 %v7424, %v7417
    %v7978 = vpack.c.bf16 %v7425, %v7418
    %v7979 = vpack.c.bf16 %v7426, %v7419
    %v7980 = vpack.c.bf16 %v7427, %v7420
    %v7981 = vpack.c.bf16 %v7435, %v7428
    %v7982 = vpack.c.bf16 %v7436, %v7429
    %v7983 = vpack.c.bf16 %v7437, %v7430
    %v7984 = vpack.c.bf16 %v7438, %v7431
    %v7985 = vpack.c.bf16 %v7439, %v7432
    %v7986 = vpack.c.bf16 %v7440, %v7433
    %v7987 = vpack.c.bf16 %v7441, %v7434
    %v7988 = vpack.c.bf16 %v7449, %v7442
    %v7989 = vpack.c.bf16 %v7450, %v7443
    %v7990 = vpack.c.bf16 %v7451, %v7444
    %v7991 = vpack.c.bf16 %v7452, %v7445
    %v7992 = vpack.c.bf16 %v7453, %v7446
    %v7993 = vpack.c.bf16 %v7454, %v7447
    %v7994 = vpack.c.bf16 %v7455, %v7448
    %v7995 = vpack.c.bf16 %v7463, %v7456
    %v7996 = vpack.c.bf16 %v7464, %v7457
    %v7997 = vpack.c.bf16 %v7465, %v7458
    %v7998 = vpack.c.bf16 %v7466, %v7459
    %v7999 = vpack.c.bf16 %v7467, %v7460
    %v8000 = vpack.c.bf16 %v7468, %v7461
    %v8001 = vpack.c.bf16 %v7469, %v7462
    %v8002 = vpack.c.bf16 %v7477, %v7470
    %v8003 = vpack.c.bf16 %v7478, %v7471
    %v8004 = vpack.c.bf16 %v7479, %v7472
    %v8005 = vpack.c.bf16 %v7480, %v7473
    %v8006 = vpack.c.bf16 %v7481, %v7474
    %v8007 = vpack.c.bf16 %v7482, %v7475
    %v8008 = vpack.c.bf16 %v7483, %v7476
    %v8009 = vpack.c.bf16 %v7491, %v7484
    %v8010 = vpack.c.bf16 %v7492, %v7485
    %v8011 = vpack.c.bf16 %v7493, %v7486
    %v8012 = vpack.c.bf16 %v7494, %v7487
    %v8013 = vpack.c.bf16 %v7495, %v7488
    %v8014 = vpack.c.bf16 %v7496, %v7489
    %v8015 = vpack.c.bf16 %v7497, %v7490
    %v8016 = vpack.c.bf16 %v7505, %v7498
    %v8017 = vpack.c.bf16 %v7506, %v7499
    %v8018 = vpack.c.bf16 %v7507, %v7500
    %v8019 = vpack.c.bf16 %v7508, %v7501
    %v8020 = vpack.c.bf16 %v7509, %v7502
    %v8021 = vpack.c.bf16 %v7510, %v7503
    %v8022 = vpack.c.bf16 %v7511, %v7504
    %v8023 = vpack.c.bf16 %v7519, %v7512
    %v8024 = vpack.c.bf16 %v7520, %v7513
    %v8025 = vpack.c.bf16 %v7521, %v7514
    %v8026 = vpack.c.bf16 %v7522, %v7515
    %v8027 = vpack.c.bf16 %v7523, %v7516
    %v8028 = vpack.c.bf16 %v7524, %v7517
    %v8029 = vpack.c.bf16 %v7525, %v7518
    %v8030 = vpack.c.bf16 %v7533, %v7526
    %v8031 = vpack.c.bf16 %v7534, %v7527
    %v8032 = vpack.c.bf16 %v7535, %v7528
    %v8033 = vpack.c.bf16 %v7536, %v7529
    %v8034 = vpack.c.bf16 %v7537, %v7530
    %v8035 = vpack.c.bf16 %v7538, %v7531
    %v8036 = vpack.c.bf16 %v7539, %v7532
    %v8037 = vpack.c.bf16 %v7547, %v7540
    %v8038 = vpack.c.bf16 %v7548, %v7541
    %v8039 = vpack.c.bf16 %v7549, %v7542
    %v8040 = vpack.c.bf16 %v7550, %v7543
    %v8041 = vpack.c.bf16 %v7551, %v7544
    %v8042 = vpack.c.bf16 %v7552, %v7545
    %v8043 = vpack.c.bf16 %v7553, %v7546
    %v8044 = vpack.c.bf16 %v7561, %v7554
    %v8045 = vpack.c.bf16 %v7562, %v7555
    %v8046 = vpack.c.bf16 %v7563, %v7556
    %v8047 = vpack.c.bf16 %v7564, %v7557
    %v8048 = vpack.c.bf16 %v7565, %v7558
    %v8049 = vpack.c.bf16 %v7566, %v7559
    %v8050 = vpack.c.bf16 %v7567, %v7560
    %v8051 = vpack.c.bf16 %v7575, %v7568
    %v8052 = vpack.c.bf16 %v7576, %v7569
    %v8053 = vpack.c.bf16 %v7577, %v7570
    %v8054 = vpack.c.bf16 %v7578, %v7571
    %v8055 = vpack.c.bf16 %v7579, %v7572
    %v8056 = vpack.c.bf16 %v7580, %v7573
    %v8057 = vpack.c.bf16 %v7581, %v7574
    %v8058 = vpack.c.bf16 %v7589, %v7582
    %v8059 = vpack.c.bf16 %v7590, %v7583
    %v8060 = vpack.c.bf16 %v7591, %v7584
    %v8061 = vpack.c.bf16 %v7592, %v7585
    %v8062 = vpack.c.bf16 %v7593, %v7586
    %v8063 = vpack.c.bf16 %v7594, %v7587
    %v8064 = vpack.c.bf16 %v7595, %v7588
    %v8065 = vpack.c.bf16 %v7603, %v7596
    %v8066 = vpack.c.bf16 %v7604, %v7597
    %v8067 = vpack.c.bf16 %v7605, %v7598
    %v8068 = vpack.c.bf16 %v7606, %v7599
    %v8069 = vpack.c.bf16 %v7607, %v7600
    %v8070 = vpack.c.bf16 %v7608, %v7601
    %v8071 = vpack.c.bf16 %v7609, %v7602
    %v8072 = vpack.c.bf16 %v7617, %v7610
    %v8073 = vpack.c.bf16 %v7618, %v7611
    %v8074 = vpack.c.bf16 %v7619, %v7612
    %v8075 = vpack.c.bf16 %v7620, %v7613
    %v8076 = vpack.c.bf16 %v7621, %v7614
    %v8077 = vpack.c.bf16 %v7622, %v7615
    %v8078 = vpack.c.bf16 %v7623, %v7616
    %v8079 = vpack.c.bf16 %v7631, %v7624
    %v8080 = vpack.c.bf16 %v7632, %v7625
    %v8081 = vpack.c.bf16 %v7633, %v7626
    %v8082 = vpack.c.bf16 %v7634, %v7627
    %v8083 = vpack.c.bf16 %v7635, %v7628
    %v8084 = vpack.c.bf16 %v7636, %v7629
    %v8085 = vpack.c.bf16 %v7637, %v7630
    %v8086 = vpack.c.bf16 %v4698, %v4698
    %v8087 = vpack.c.bf16 %v4699, %v4699
    %v8088 = vpack.c.bf16 %v4700, %v4700
    %v8089 = vpack.c.bf16 %v4701, %v4701
    %v8090 = vpack.c.bf16 %v4702, %v4702
    %v8091 = vpack.c.bf16 %v4703, %v4703
    %v8092 = vpack.c.bf16 %v4704, %v4704
    %v8093 = vpack.c.bf16 %v4705, %v4705
    %v8094 = vld [vmem:[%s14] sm:$0x7f]
    %v8096 = vperm.slane %v8094, 0
    %v8097 = vperm.slane %v8094, 1
    %v8098 = vperm.slane %v8094, 2
    %v8099 = vperm.slane %v8094, 3
    %v8100 = vperm.slane %v8094, 4
    %v8101 = vperm.slane %v8094, 5
    %v8102 = vperm.slane %v8094, 6
    %8110 = vmatpush.bf16.msra.mxu0 %v7687
    %8111 = vmatpush.bf16.msra.mxu0 %v7680
    %8112 = vmatpush.bf16.msra.mxu0 %v7673
    %8113 = vmatpush.bf16.msra.mxu0 %v7666
    %8114 = vmatpush.bf16.msra.mxu0 %v7659
    %8115 = vmatpush.bf16.msra.mxu0 %v7652
    %8116 = vmatpush.bf16.msra.mxu0 %v7645
    %8117 = vmatpush.bf16.msra.mxu0 %v7638
    %8118 = vmatmul.bf16.gmra.mxu0 %v8086
    %v8119 = vpop.f32.mrf.mxu0
    %v8120 = vadd.f32 %v8096, %v8119
    %v8121 = vpop.f32.mrf.mxu0
    %8122 = vdwg.mxu0
    %8123 = vmatpush.bf16.msra.mxu0 %v7743
    %8124 = vmatpush.bf16.msra.mxu0 %v7736
    %8125 = vmatpush.bf16.msra.mxu0 %v7729
    %8126 = vmatpush.bf16.msra.mxu0 %v7722
    %8127 = vmatpush.bf16.msra.mxu0 %v7715
    %8128 = vmatpush.bf16.msra.mxu0 %v7708
    %8129 = vmatpush.bf16.msra.mxu0 %v7701
    %8130 = vmatpush.bf16.msra.mxu0 %v7694
    %8131 = vmatmul.bf16.gmra.mxu0 %v8087
    %v8132 = vpop.f32.mrf.mxu0
    %v8133 = vadd.f32 %v8120, %v8132
    %v8134 = vpop.f32.mrf.mxu0
    %8135 = vdwg.mxu0
    %8136 = vmatpush.bf16.msra.mxu0 %v7799
    %8137 = vmatpush.bf16.msra.mxu0 %v7792
    %8138 = vmatpush.bf16.msra.mxu0 %v7785
    %8139 = vmatpush.bf16.msra.mxu0 %v7778
    %8140 = vmatpush.bf16.msra.mxu0 %v7771
    %8141 = vmatpush.bf16.msra.mxu0 %v7764
    %8142 = vmatpush.bf16.msra.mxu0 %v7757
    %8143 = vmatpush.bf16.msra.mxu0 %v7750
    %8144 = vmatmul.bf16.gmra.mxu0 %v8088
    %v8145 = vpop.f32.mrf.mxu0
    %v8146 = vadd.f32 %v8133, %v8145
    %v8147 = vpop.f32.mrf.mxu0
    %8148 = vdwg.mxu0
    %8149 = vmatpush.bf16.msra.mxu0 %v7855
    %8150 = vmatpush.bf16.msra.mxu0 %v7848
    %8151 = vmatpush.bf16.msra.mxu0 %v7841
    %8152 = vmatpush.bf16.msra.mxu0 %v7834
    %8153 = vmatpush.bf16.msra.mxu0 %v7827
    %8154 = vmatpush.bf16.msra.mxu0 %v7820
    %8155 = vmatpush.bf16.msra.mxu0 %v7813
    %8156 = vmatpush.bf16.msra.mxu0 %v7806
    %8157 = vmatmul.bf16.gmra.mxu0 %v8089
    %v8158 = vpop.f32.mrf.mxu0
    %v8159 = vadd.f32 %v8146, %v8158
    %v8160 = vpop.f32.mrf.mxu0
    %8161 = vdwg.mxu0
    %8162 = vmatpush.bf16.msra.mxu0 %v7911
    %8163 = vmatpush.bf16.msra.mxu0 %v7904
    %8164 = vmatpush.bf16.msra.mxu0 %v7897
    %8165 = vmatpush.bf16.msra.mxu0 %v7890
    %8166 = vmatpush.bf16.msra.mxu0 %v7883
    %8167 = vmatpush.bf16.msra.mxu0 %v7876
    %8168 = vmatpush.bf16.msra.mxu0 %v7869
    %8169 = vmatpush.bf16.msra.mxu0 %v7862
    %8170 = vmatmul.bf16.gmra.mxu0 %v8090
    %v8171 = vpop.f32.mrf.mxu0
    %v8172 = vadd.f32 %v8159, %v8171
    %v8173 = vpop.f32.mrf.mxu0
    %8174 = vdwg.mxu0
    %8175 = vmatpush.bf16.msra.mxu0 %v7967
    %8176 = vmatpush.bf16.msra.mxu0 %v7960
    %8177 = vmatpush.bf16.msra.mxu0 %v7953
    %8178 = vmatpush.bf16.msra.mxu0 %v7946
    %8179 = vmatpush.bf16.msra.mxu0 %v7939
    %8180 = vmatpush.bf16.msra.mxu0 %v7932
    %8181 = vmatpush.bf16.msra.mxu0 %v7925
    %8182 = vmatpush.bf16.msra.mxu0 %v7918
    %8183 = vmatmul.bf16.gmra.mxu0 %v8091
    %v8184 = vpop.f32.mrf.mxu0
    %v8185 = vadd.f32 %v8172, %v8184
    %v8186 = vpop.f32.mrf.mxu0
    %8187 = vdwg.mxu0
    %8188 = vmatpush.bf16.msra.mxu0 %v8023
    %8189 = vmatpush.bf16.msra.mxu0 %v8016
    %8190 = vmatpush.bf16.msra.mxu0 %v8009
    %8191 = vmatpush.bf16.msra.mxu0 %v8002
    %8192 = vmatpush.bf16.msra.mxu0 %v7995
    %8193 = vmatpush.bf16.msra.mxu0 %v7988
    %8194 = vmatpush.bf16.msra.mxu0 %v7981
    %8195 = vmatpush.bf16.msra.mxu0 %v7974
    %8196 = vmatmul.bf16.gmra.mxu0 %v8092
    %v8197 = vpop.f32.mrf.mxu0
    %v8198 = vadd.f32 %v8185, %v8197
    %v8199 = vpop.f32.mrf.mxu0
    %8200 = vdwg.mxu0
    %8201 = vmatpush.bf16.msra.mxu0 %v8079
    %8202 = vmatpush.bf16.msra.mxu0 %v8072
    %8203 = vmatpush.bf16.msra.mxu0 %v8065
    %8204 = vmatpush.bf16.msra.mxu0 %v8058
    %8205 = vmatpush.bf16.msra.mxu0 %v8051
    %8206 = vmatpush.bf16.msra.mxu0 %v8044
    %8207 = vmatpush.bf16.msra.mxu0 %v8037
    %8208 = vmatpush.bf16.msra.mxu0 %v8030
    %8209 = vmatmul.bf16.gmra.mxu0 %v8093
    %v8210 = vpop.f32.mrf.mxu0
    %v8211 = vadd.f32 %v8198, %v8210
    %v8212 = vpop.f32.mrf.mxu0
    %8213 = vdwg.mxu0
    %8214 = vmatpush.bf16.msra.mxu0 %v7688
    %8215 = vmatpush.bf16.msra.mxu0 %v7681
    %8216 = vmatpush.bf16.msra.mxu0 %v7674
    %8217 = vmatpush.bf16.msra.mxu0 %v7667
    %8218 = vmatpush.bf16.msra.mxu0 %v7660
    %8219 = vmatpush.bf16.msra.mxu0 %v7653
    %8220 = vmatpush.bf16.msra.mxu0 %v7646
    %8221 = vmatpush.bf16.msra.mxu0 %v7639
    %8222 = vmatmul.bf16.gmra.mxu0 %v8086
    %v8223 = vpop.f32.mrf.mxu0
    %v8224 = vadd.f32 %v8097, %v8223
    %v8225 = vpop.f32.mrf.mxu0
    %8226 = vdwg.mxu0
    %8227 = vmatpush.bf16.msra.mxu0 %v7744
    %8228 = vmatpush.bf16.msra.mxu0 %v7737
    %8229 = vmatpush.bf16.msra.mxu0 %v7730
    %8230 = vmatpush.bf16.msra.mxu0 %v7723
    %8231 = vmatpush.bf16.msra.mxu0 %v7716
    %8232 = vmatpush.bf16.msra.mxu0 %v7709
    %8233 = vmatpush.bf16.msra.mxu0 %v7702
    %8234 = vmatpush.bf16.msra.mxu0 %v7695
    %8235 = vmatmul.bf16.gmra.mxu0 %v8087
    %v8236 = vpop.f32.mrf.mxu0
    %v8237 = vadd.f32 %v8224, %v8236
    %v8238 = vpop.f32.mrf.mxu0
    %8239 = vdwg.mxu0
    %8240 = vmatpush.bf16.msra.mxu0 %v7800
    %8241 = vmatpush.bf16.msra.mxu0 %v7793
    %8242 = vmatpush.bf16.msra.mxu0 %v7786
    %8243 = vmatpush.bf16.msra.mxu0 %v7779
    %8244 = vmatpush.bf16.msra.mxu0 %v7772
    %8245 = vmatpush.bf16.msra.mxu0 %v7765
    %8246 = vmatpush.bf16.msra.mxu0 %v7758
    %8247 = vmatpush.bf16.msra.mxu0 %v7751
    %8248 = vmatmul.bf16.gmra.mxu0 %v8088
    %v8249 = vpop.f32.mrf.mxu0
    %v8250 = vadd.f32 %v8237, %v8249
    %v8251 = vpop.f32.mrf.mxu0
    %8252 = vdwg.mxu0
    %8253 = vmatpush.bf16.msra.mxu0 %v7856
    %8254 = vmatpush.bf16.msra.mxu0 %v7849
    %8255 = vmatpush.bf16.msra.mxu0 %v7842
    %8256 = vmatpush.bf16.msra.mxu0 %v7835
    %8257 = vmatpush.bf16.msra.mxu0 %v7828
    %8258 = vmatpush.bf16.msra.mxu0 %v7821
    %8259 = vmatpush.bf16.msra.mxu0 %v7814
    %8260 = vmatpush.bf16.msra.mxu0 %v7807
    %8261 = vmatmul.bf16.gmra.mxu0 %v8089
    %v8262 = vpop.f32.mrf.mxu0
    %v8263 = vadd.f32 %v8250, %v8262
    %v8264 = vpop.f32.mrf.mxu0
    %8265 = vdwg.mxu0
    %8266 = vmatpush.bf16.msra.mxu0 %v7912
    %8267 = vmatpush.bf16.msra.mxu0 %v7905
    %8268 = vmatpush.bf16.msra.mxu0 %v7898
    %8269 = vmatpush.bf16.msra.mxu0 %v7891
    %8270 = vmatpush.bf16.msra.mxu0 %v7884
    %8271 = vmatpush.bf16.msra.mxu0 %v7877
    %8272 = vmatpush.bf16.msra.mxu0 %v7870
    %8273 = vmatpush.bf16.msra.mxu0 %v7863
    %8274 = vmatmul.bf16.gmra.mxu0 %v8090
    %v8275 = vpop.f32.mrf.mxu0
    %v8276 = vadd.f32 %v8263, %v8275
    %v8277 = vpop.f32.mrf.mxu0
    %8278 = vdwg.mxu0
    %8279 = vmatpush.bf16.msra.mxu0 %v7968
    %8280 = vmatpush.bf16.msra.mxu0 %v7961
    %8281 = vmatpush.bf16.msra.mxu0 %v7954
    %8282 = vmatpush.bf16.msra.mxu0 %v7947
    %8283 = vmatpush.bf16.msra.mxu0 %v7940
    %8284 = vmatpush.bf16.msra.mxu0 %v7933
    %8285 = vmatpush.bf16.msra.mxu0 %v7926
    %8286 = vmatpush.bf16.msra.mxu0 %v7919
    %8287 = vmatmul.bf16.gmra.mxu0 %v8091
    %v8288 = vpop.f32.mrf.mxu0
    %v8289 = vadd.f32 %v8276, %v8288
    %v8290 = vpop.f32.mrf.mxu0
    %8291 = vdwg.mxu0
    %8292 = vmatpush.bf16.msra.mxu0 %v8024
    %8293 = vmatpush.bf16.msra.mxu0 %v8017
    %8294 = vmatpush.bf16.msra.mxu0 %v8010
    %8295 = vmatpush.bf16.msra.mxu0 %v8003
    %8296 = vmatpush.bf16.msra.mxu0 %v7996
    %8297 = vmatpush.bf16.msra.mxu0 %v7989
    %8298 = vmatpush.bf16.msra.mxu0 %v7982
    %8299 = vmatpush.bf16.msra.mxu0 %v7975
    %8300 = vmatmul.bf16.gmra.mxu0 %v8092
    %v8301 = vpop.f32.mrf.mxu0
    %v8302 = vadd.f32 %v8289, %v8301
    %v8303 = vpop.f32.mrf.mxu0
    %8304 = vdwg.mxu0
    %8305 = vmatpush.bf16.msra.mxu0 %v8080
    %8306 = vmatpush.bf16.msra.mxu0 %v8073
    %8307 = vmatpush.bf16.msra.mxu0 %v8066
    %8308 = vmatpush.bf16.msra.mxu0 %v8059
    %8309 = vmatpush.bf16.msra.mxu0 %v8052
    %8310 = vmatpush.bf16.msra.mxu0 %v8045
    %8311 = vmatpush.bf16.msra.mxu0 %v8038
    %8312 = vmatpush.bf16.msra.mxu0 %v8031
    %8313 = vmatmul.bf16.gmra.mxu0 %v8093
    %v8314 = vpop.f32.mrf.mxu0
    %v8315 = vadd.f32 %v8302, %v8314
    %v8316 = vpop.f32.mrf.mxu0
    %8317 = vdwg.mxu0
    %8318 = vmatpush.bf16.msra.mxu0 %v7689
    %8319 = vmatpush.bf16.msra.mxu0 %v7682
    %8320 = vmatpush.bf16.msra.mxu0 %v7675
    %8321 = vmatpush.bf16.msra.mxu0 %v7668
    %8322 = vmatpush.bf16.msra.mxu0 %v7661
    %8323 = vmatpush.bf16.msra.mxu0 %v7654
    %8324 = vmatpush.bf16.msra.mxu0 %v7647
    %8325 = vmatpush.bf16.msra.mxu0 %v7640
    %8326 = vmatmul.bf16.gmra.mxu0 %v8086
    %v8327 = vpop.f32.mrf.mxu0
    %v8328 = vadd.f32 %v8098, %v8327
    %v8329 = vpop.f32.mrf.mxu0
    %8330 = vdwg.mxu0
    %8331 = vmatpush.bf16.msra.mxu0 %v7745
    %8332 = vmatpush.bf16.msra.mxu0 %v7738
    %8333 = vmatpush.bf16.msra.mxu0 %v7731
    %8334 = vmatpush.bf16.msra.mxu0 %v7724
    %8335 = vmatpush.bf16.msra.mxu0 %v7717
    %8336 = vmatpush.bf16.msra.mxu0 %v7710
    %8337 = vmatpush.bf16.msra.mxu0 %v7703
    %8338 = vmatpush.bf16.msra.mxu0 %v7696
    %8339 = vmatmul.bf16.gmra.mxu0 %v8087
    %v8340 = vpop.f32.mrf.mxu0
    %v8341 = vadd.f32 %v8328, %v8340
    %v8342 = vpop.f32.mrf.mxu0
    %8343 = vdwg.mxu0
    %8344 = vmatpush.bf16.msra.mxu0 %v7801
    %8345 = vmatpush.bf16.msra.mxu0 %v7794
    %8346 = vmatpush.bf16.msra.mxu0 %v7787
    %8347 = vmatpush.bf16.msra.mxu0 %v7780
    %8348 = vmatpush.bf16.msra.mxu0 %v7773
    %8349 = vmatpush.bf16.msra.mxu0 %v7766
    %8350 = vmatpush.bf16.msra.mxu0 %v7759
    %8351 = vmatpush.bf16.msra.mxu0 %v7752
    %8352 = vmatmul.bf16.gmra.mxu0 %v8088
    %v8353 = vpop.f32.mrf.mxu0
    %v8354 = vadd.f32 %v8341, %v8353
    %v8355 = vpop.f32.mrf.mxu0
    %8356 = vdwg.mxu0
    %8357 = vmatpush.bf16.msra.mxu0 %v7857
    %8358 = vmatpush.bf16.msra.mxu0 %v7850
    %8359 = vmatpush.bf16.msra.mxu0 %v7843
    %8360 = vmatpush.bf16.msra.mxu0 %v7836
    %8361 = vmatpush.bf16.msra.mxu0 %v7829
    %8362 = vmatpush.bf16.msra.mxu0 %v7822
    %8363 = vmatpush.bf16.msra.mxu0 %v7815
    %8364 = vmatpush.bf16.msra.mxu0 %v7808
    %8365 = vmatmul.bf16.gmra.mxu0 %v8089
    %v8366 = vpop.f32.mrf.mxu0
    %v8367 = vadd.f32 %v8354, %v8366
    %v8368 = vpop.f32.mrf.mxu0
    %8369 = vdwg.mxu0
    %8370 = vmatpush.bf16.msra.mxu0 %v7913
    %8371 = vmatpush.bf16.msra.mxu0 %v7906
    %8372 = vmatpush.bf16.msra.mxu0 %v7899
    %8373 = vmatpush.bf16.msra.mxu0 %v7892
    %8374 = vmatpush.bf16.msra.mxu0 %v7885
    %8375 = vmatpush.bf16.msra.mxu0 %v7878
    %8376 = vmatpush.bf16.msra.mxu0 %v7871
    %8377 = vmatpush.bf16.msra.mxu0 %v7864
    %8378 = vmatmul.bf16.gmra.mxu0 %v8090
    %v8379 = vpop.f32.mrf.mxu0
    %v8380 = vadd.f32 %v8367, %v8379
    %v8381 = vpop.f32.mrf.mxu0
    %8382 = vdwg.mxu0
    %8383 = vmatpush.bf16.msra.mxu0 %v7969
    %8384 = vmatpush.bf16.msra.mxu0 %v7962
    %8385 = vmatpush.bf16.msra.mxu0 %v7955
    %8386 = vmatpush.bf16.msra.mxu0 %v7948
    %8387 = vmatpush.bf16.msra.mxu0 %v7941
    %8388 = vmatpush.bf16.msra.mxu0 %v7934
    %8389 = vmatpush.bf16.msra.mxu0 %v7927
    %8390 = vmatpush.bf16.msra.mxu0 %v7920
    %8391 = vmatmul.bf16.gmra.mxu0 %v8091
    %v8392 = vpop.f32.mrf.mxu0
    %v8393 = vadd.f32 %v8380, %v8392
    %v8394 = vpop.f32.mrf.mxu0
    %8395 = vdwg.mxu0
    %8396 = vmatpush.bf16.msra.mxu0 %v8025
    %8397 = vmatpush.bf16.msra.mxu0 %v8018
    %8398 = vmatpush.bf16.msra.mxu0 %v8011
    %8399 = vmatpush.bf16.msra.mxu0 %v8004
    %8400 = vmatpush.bf16.msra.mxu0 %v7997
    %8401 = vmatpush.bf16.msra.mxu0 %v7990
    %8402 = vmatpush.bf16.msra.mxu0 %v7983
    %8403 = vmatpush.bf16.msra.mxu0 %v7976
    %8404 = vmatmul.bf16.gmra.mxu0 %v8092
    %v8405 = vpop.f32.mrf.mxu0
    %v8406 = vadd.f32 %v8393, %v8405
    %v8407 = vpop.f32.mrf.mxu0
    %8408 = vdwg.mxu0
    %8409 = vmatpush.bf16.msra.mxu0 %v8081
    %8410 = vmatpush.bf16.msra.mxu0 %v8074
    %8411 = vmatpush.bf16.msra.mxu0 %v8067
    %8412 = vmatpush.bf16.msra.mxu0 %v8060
    %8413 = vmatpush.bf16.msra.mxu0 %v8053
    %8414 = vmatpush.bf16.msra.mxu0 %v8046
    %8415 = vmatpush.bf16.msra.mxu0 %v8039
    %8416 = vmatpush.bf16.msra.mxu0 %v8032
    %8417 = vmatmul.bf16.gmra.mxu0 %v8093
    %v8418 = vpop.f32.mrf.mxu0
    %v8419 = vadd.f32 %v8406, %v8418
    %v8420 = vpop.f32.mrf.mxu0
    %8421 = vdwg.mxu0
    %8422 = vmatpush.bf16.msra.mxu0 %v7690
    %8423 = vmatpush.bf16.msra.mxu0 %v7683
    %8424 = vmatpush.bf16.msra.mxu0 %v7676
    %8425 = vmatpush.bf16.msra.mxu0 %v7669
    %8426 = vmatpush.bf16.msra.mxu0 %v7662
    %8427 = vmatpush.bf16.msra.mxu0 %v7655
    %8428 = vmatpush.bf16.msra.mxu0 %v7648
    %8429 = vmatpush.bf16.msra.mxu0 %v7641
    %8430 = vmatmul.bf16.gmra.mxu0 %v8086
    %v8431 = vpop.f32.mrf.mxu0
    %v8432 = vadd.f32 %v8099, %v8431
    %v8433 = vpop.f32.mrf.mxu0
    %8434 = vdwg.mxu0
    %8435 = vmatpush.bf16.msra.mxu0 %v7746
    %8436 = vmatpush.bf16.msra.mxu0 %v7739
    %8437 = vmatpush.bf16.msra.mxu0 %v7732
    %8438 = vmatpush.bf16.msra.mxu0 %v7725
    %8439 = vmatpush.bf16.msra.mxu0 %v7718
    %8440 = vmatpush.bf16.msra.mxu0 %v7711
    %8441 = vmatpush.bf16.msra.mxu0 %v7704
    %8442 = vmatpush.bf16.msra.mxu0 %v7697
    %8443 = vmatmul.bf16.gmra.mxu0 %v8087
    %v8444 = vpop.f32.mrf.mxu0
    %v8445 = vadd.f32 %v8432, %v8444
    %v8446 = vpop.f32.mrf.mxu0
    %8447 = vdwg.mxu0
    %8448 = vmatpush.bf16.msra.mxu0 %v7802
    %8449 = vmatpush.bf16.msra.mxu0 %v7795
    %8450 = vmatpush.bf16.msra.mxu0 %v7788
    %8451 = vmatpush.bf16.msra.mxu0 %v7781
    %8452 = vmatpush.bf16.msra.mxu0 %v7774
    %8453 = vmatpush.bf16.msra.mxu0 %v7767
    %8454 = vmatpush.bf16.msra.mxu0 %v7760
    %8455 = vmatpush.bf16.msra.mxu0 %v7753
    %8456 = vmatmul.bf16.gmra.mxu0 %v8088
    %v8457 = vpop.f32.mrf.mxu0
    %v8458 = vadd.f32 %v8445, %v8457
    %v8459 = vpop.f32.mrf.mxu0
    %8460 = vdwg.mxu0
    %8461 = vmatpush.bf16.msra.mxu0 %v7858
    %8462 = vmatpush.bf16.msra.mxu0 %v7851
    %8463 = vmatpush.bf16.msra.mxu0 %v7844
    %8464 = vmatpush.bf16.msra.mxu0 %v7837
    %8465 = vmatpush.bf16.msra.mxu0 %v7830
    %8466 = vmatpush.bf16.msra.mxu0 %v7823
    %8467 = vmatpush.bf16.msra.mxu0 %v7816
    %8468 = vmatpush.bf16.msra.mxu0 %v7809
    %8469 = vmatmul.bf16.gmra.mxu0 %v8089
    %v8470 = vpop.f32.mrf.mxu0
    %v8471 = vadd.f32 %v8458, %v8470
    %v8472 = vpop.f32.mrf.mxu0
    %8473 = vdwg.mxu0
    %8474 = vmatpush.bf16.msra.mxu0 %v7914
    %8475 = vmatpush.bf16.msra.mxu0 %v7907
    %8476 = vmatpush.bf16.msra.mxu0 %v7900
    %8477 = vmatpush.bf16.msra.mxu0 %v7893
    %8478 = vmatpush.bf16.msra.mxu0 %v7886
    %8479 = vmatpush.bf16.msra.mxu0 %v7879
    %8480 = vmatpush.bf16.msra.mxu0 %v7872
    %8481 = vmatpush.bf16.msra.mxu0 %v7865
    %8482 = vmatmul.bf16.gmra.mxu0 %v8090
    %v8483 = vpop.f32.mrf.mxu0
    %v8484 = vadd.f32 %v8471, %v8483
    %v8485 = vpop.f32.mrf.mxu0
    %8486 = vdwg.mxu0
    %8487 = vmatpush.bf16.msra.mxu0 %v7970
    %8488 = vmatpush.bf16.msra.mxu0 %v7963
    %8489 = vmatpush.bf16.msra.mxu0 %v7956
    %8490 = vmatpush.bf16.msra.mxu0 %v7949
    %8491 = vmatpush.bf16.msra.mxu0 %v7942
    %8492 = vmatpush.bf16.msra.mxu0 %v7935
    %8493 = vmatpush.bf16.msra.mxu0 %v7928
    %8494 = vmatpush.bf16.msra.mxu0 %v7921
    %8495 = vmatmul.bf16.gmra.mxu0 %v8091
    %v8496 = vpop.f32.mrf.mxu0
    %v8497 = vadd.f32 %v8484, %v8496
    %v8498 = vpop.f32.mrf.mxu0
    %8499 = vdwg.mxu0
    %8500 = vmatpush.bf16.msra.mxu0 %v8026
    %8501 = vmatpush.bf16.msra.mxu0 %v8019
    %8502 = vmatpush.bf16.msra.mxu0 %v8012
    %8503 = vmatpush.bf16.msra.mxu0 %v8005
    %8504 = vmatpush.bf16.msra.mxu0 %v7998
    %8505 = vmatpush.bf16.msra.mxu0 %v7991
    %8506 = vmatpush.bf16.msra.mxu0 %v7984
    %8507 = vmatpush.bf16.msra.mxu0 %v7977
    %8508 = vmatmul.bf16.gmra.mxu0 %v8092
    %v8509 = vpop.f32.mrf.mxu0
    %v8510 = vadd.f32 %v8497, %v8509
    %v8511 = vpop.f32.mrf.mxu0
    %8512 = vdwg.mxu0
    %8513 = vmatpush.bf16.msra.mxu0 %v8082
    %8514 = vmatpush.bf16.msra.mxu0 %v8075
    %8515 = vmatpush.bf16.msra.mxu0 %v8068
    %8516 = vmatpush.bf16.msra.mxu0 %v8061
    %8517 = vmatpush.bf16.msra.mxu0 %v8054
    %8518 = vmatpush.bf16.msra.mxu0 %v8047
    %8519 = vmatpush.bf16.msra.mxu0 %v8040
    %8520 = vmatpush.bf16.msra.mxu0 %v8033
    %8521 = vmatmul.bf16.gmra.mxu0 %v8093
    %v8522 = vpop.f32.mrf.mxu0
    %v8523 = vadd.f32 %v8510, %v8522
    %v8524 = vpop.f32.mrf.mxu0
    %8525 = vdwg.mxu0
    %8526 = vmatpush.bf16.msra.mxu0 %v7691
    %8527 = vmatpush.bf16.msra.mxu0 %v7684
    %8528 = vmatpush.bf16.msra.mxu0 %v7677
    %8529 = vmatpush.bf16.msra.mxu0 %v7670
    %8530 = vmatpush.bf16.msra.mxu0 %v7663
    %8531 = vmatpush.bf16.msra.mxu0 %v7656
    %8532 = vmatpush.bf16.msra.mxu0 %v7649
    %8533 = vmatpush.bf16.msra.mxu0 %v7642
    %8534 = vmatmul.bf16.gmra.mxu0 %v8086
    %v8535 = vpop.f32.mrf.mxu0
    %v8536 = vadd.f32 %v8100, %v8535
    %v8537 = vpop.f32.mrf.mxu0
    %8538 = vdwg.mxu0
    %8539 = vmatpush.bf16.msra.mxu0 %v7747
    %8540 = vmatpush.bf16.msra.mxu0 %v7740
    %8541 = vmatpush.bf16.msra.mxu0 %v7733
    %8542 = vmatpush.bf16.msra.mxu0 %v7726
    %8543 = vmatpush.bf16.msra.mxu0 %v7719
    %8544 = vmatpush.bf16.msra.mxu0 %v7712
    %8545 = vmatpush.bf16.msra.mxu0 %v7705
    %8546 = vmatpush.bf16.msra.mxu0 %v7698
    %8547 = vmatmul.bf16.gmra.mxu0 %v8087
    %v8548 = vpop.f32.mrf.mxu0
    %v8549 = vadd.f32 %v8536, %v8548
    %v8550 = vpop.f32.mrf.mxu0
    %8551 = vdwg.mxu0
    %8552 = vmatpush.bf16.msra.mxu0 %v7803
    %8553 = vmatpush.bf16.msra.mxu0 %v7796
    %8554 = vmatpush.bf16.msra.mxu0 %v7789
    %8555 = vmatpush.bf16.msra.mxu0 %v7782
    %8556 = vmatpush.bf16.msra.mxu0 %v7775
    %8557 = vmatpush.bf16.msra.mxu0 %v7768
    %8558 = vmatpush.bf16.msra.mxu0 %v7761
    %8559 = vmatpush.bf16.msra.mxu0 %v7754
    %8560 = vmatmul.bf16.gmra.mxu0 %v8088
    %v8561 = vpop.f32.mrf.mxu0
    %v8562 = vadd.f32 %v8549, %v8561
    %v8563 = vpop.f32.mrf.mxu0
    %8564 = vdwg.mxu0
    %8565 = vmatpush.bf16.msra.mxu0 %v7859
    %8566 = vmatpush.bf16.msra.mxu0 %v7852
    %8567 = vmatpush.bf16.msra.mxu0 %v7845
    %8568 = vmatpush.bf16.msra.mxu0 %v7838
    %8569 = vmatpush.bf16.msra.mxu0 %v7831
    %8570 = vmatpush.bf16.msra.mxu0 %v7824
    %8571 = vmatpush.bf16.msra.mxu0 %v7817
    %8572 = vmatpush.bf16.msra.mxu0 %v7810
    %8573 = vmatmul.bf16.gmra.mxu0 %v8089
    %v8574 = vpop.f32.mrf.mxu0
    %v8575 = vadd.f32 %v8562, %v8574
    %v8576 = vpop.f32.mrf.mxu0
    %8577 = vdwg.mxu0
    %8578 = vmatpush.bf16.msra.mxu0 %v7915
    %8579 = vmatpush.bf16.msra.mxu0 %v7908
    %8580 = vmatpush.bf16.msra.mxu0 %v7901
    %8581 = vmatpush.bf16.msra.mxu0 %v7894
    %8582 = vmatpush.bf16.msra.mxu0 %v7887
    %8583 = vmatpush.bf16.msra.mxu0 %v7880
    %8584 = vmatpush.bf16.msra.mxu0 %v7873
    %8585 = vmatpush.bf16.msra.mxu0 %v7866
    %8586 = vmatmul.bf16.gmra.mxu0 %v8090
    %v8587 = vpop.f32.mrf.mxu0
    %v8588 = vadd.f32 %v8575, %v8587
    %v8589 = vpop.f32.mrf.mxu0
    %8590 = vdwg.mxu0
    %8591 = vmatpush.bf16.msra.mxu0 %v7971
    %8592 = vmatpush.bf16.msra.mxu0 %v7964
    %8593 = vmatpush.bf16.msra.mxu0 %v7957
    %8594 = vmatpush.bf16.msra.mxu0 %v7950
    %8595 = vmatpush.bf16.msra.mxu0 %v7943
    %8596 = vmatpush.bf16.msra.mxu0 %v7936
    %8597 = vmatpush.bf16.msra.mxu0 %v7929
    %8598 = vmatpush.bf16.msra.mxu0 %v7922
    %8599 = vmatmul.bf16.gmra.mxu0 %v8091
    %v8600 = vpop.f32.mrf.mxu0
    %v8601 = vadd.f32 %v8588, %v8600
    %v8602 = vpop.f32.mrf.mxu0
    %8603 = vdwg.mxu0
    %8604 = vmatpush.bf16.msra.mxu0 %v8027
    %8605 = vmatpush.bf16.msra.mxu0 %v8020
    %8606 = vmatpush.bf16.msra.mxu0 %v8013
    %8607 = vmatpush.bf16.msra.mxu0 %v8006
    %8608 = vmatpush.bf16.msra.mxu0 %v7999
    %8609 = vmatpush.bf16.msra.mxu0 %v7992
    %8610 = vmatpush.bf16.msra.mxu0 %v7985
    %8611 = vmatpush.bf16.msra.mxu0 %v7978
    %8612 = vmatmul.bf16.gmra.mxu0 %v8092
    %v8613 = vpop.f32.mrf.mxu0
    %v8614 = vadd.f32 %v8601, %v8613
    %v8615 = vpop.f32.mrf.mxu0
    %8616 = vdwg.mxu0
    %8617 = vmatpush.bf16.msra.mxu0 %v8083
    %8618 = vmatpush.bf16.msra.mxu0 %v8076
    %8619 = vmatpush.bf16.msra.mxu0 %v8069
    %8620 = vmatpush.bf16.msra.mxu0 %v8062
    %8621 = vmatpush.bf16.msra.mxu0 %v8055
    %8622 = vmatpush.bf16.msra.mxu0 %v8048
    %8623 = vmatpush.bf16.msra.mxu0 %v8041
    %8624 = vmatpush.bf16.msra.mxu0 %v8034
    %8625 = vmatmul.bf16.gmra.mxu0 %v8093
    %v8626 = vpop.f32.mrf.mxu0
    %v8627 = vadd.f32 %v8614, %v8626
    %v8628 = vpop.f32.mrf.mxu0
    %8629 = vdwg.mxu0
    %8630 = vmatpush.bf16.msra.mxu0 %v7692
    %8631 = vmatpush.bf16.msra.mxu0 %v7685
    %8632 = vmatpush.bf16.msra.mxu0 %v7678
    %8633 = vmatpush.bf16.msra.mxu0 %v7671
    %8634 = vmatpush.bf16.msra.mxu0 %v7664
    %8635 = vmatpush.bf16.msra.mxu0 %v7657
    %8636 = vmatpush.bf16.msra.mxu0 %v7650
    %8637 = vmatpush.bf16.msra.mxu0 %v7643
    %8638 = vmatmul.bf16.gmra.mxu0 %v8086
    %v8639 = vpop.f32.mrf.mxu0
    %v8640 = vadd.f32 %v8101, %v8639
    %v8641 = vpop.f32.mrf.mxu0
    %8642 = vdwg.mxu0
    %8643 = vmatpush.bf16.msra.mxu0 %v7748
    %8644 = vmatpush.bf16.msra.mxu0 %v7741
    %8645 = vmatpush.bf16.msra.mxu0 %v7734
    %8646 = vmatpush.bf16.msra.mxu0 %v7727
    %8647 = vmatpush.bf16.msra.mxu0 %v7720
    %8648 = vmatpush.bf16.msra.mxu0 %v7713
    %8649 = vmatpush.bf16.msra.mxu0 %v7706
    %8650 = vmatpush.bf16.msra.mxu0 %v7699
    %8651 = vmatmul.bf16.gmra.mxu0 %v8087
    %v8652 = vpop.f32.mrf.mxu0
    %v8653 = vadd.f32 %v8640, %v8652
    %v8654 = vpop.f32.mrf.mxu0
    %8655 = vdwg.mxu0
    %8656 = vmatpush.bf16.msra.mxu0 %v7804
    %8657 = vmatpush.bf16.msra.mxu0 %v7797
    %8658 = vmatpush.bf16.msra.mxu0 %v7790
    %8659 = vmatpush.bf16.msra.mxu0 %v7783
    %8660 = vmatpush.bf16.msra.mxu0 %v7776
    %8661 = vmatpush.bf16.msra.mxu0 %v7769
    %8662 = vmatpush.bf16.msra.mxu0 %v7762
    %8663 = vmatpush.bf16.msra.mxu0 %v7755
    %8664 = vmatmul.bf16.gmra.mxu0 %v8088
    %v8665 = vpop.f32.mrf.mxu0
    %v8666 = vadd.f32 %v8653, %v8665
    %v8667 = vpop.f32.mrf.mxu0
    %8668 = vdwg.mxu0
    %8669 = vmatpush.bf16.msra.mxu0 %v7860
    %8670 = vmatpush.bf16.msra.mxu0 %v7853
    %8671 = vmatpush.bf16.msra.mxu0 %v7846
    %8672 = vmatpush.bf16.msra.mxu0 %v7839
    %8673 = vmatpush.bf16.msra.mxu0 %v7832
    %8674 = vmatpush.bf16.msra.mxu0 %v7825
    %8675 = vmatpush.bf16.msra.mxu0 %v7818
    %8676 = vmatpush.bf16.msra.mxu0 %v7811
    %8677 = vmatmul.bf16.gmra.mxu0 %v8089
    %v8678 = vpop.f32.mrf.mxu0
    %v8679 = vadd.f32 %v8666, %v8678
    %v8680 = vpop.f32.mrf.mxu0
    %8681 = vdwg.mxu0
    %8682 = vmatpush.bf16.msra.mxu0 %v7916
    %8683 = vmatpush.bf16.msra.mxu0 %v7909
    %8684 = vmatpush.bf16.msra.mxu0 %v7902
    %8685 = vmatpush.bf16.msra.mxu0 %v7895
    %8686 = vmatpush.bf16.msra.mxu0 %v7888
    %8687 = vmatpush.bf16.msra.mxu0 %v7881
    %8688 = vmatpush.bf16.msra.mxu0 %v7874
    %8689 = vmatpush.bf16.msra.mxu0 %v7867
    %8690 = vmatmul.bf16.gmra.mxu0 %v8090
    %v8691 = vpop.f32.mrf.mxu0
    %v8692 = vadd.f32 %v8679, %v8691
    %v8693 = vpop.f32.mrf.mxu0
    %8694 = vdwg.mxu0
    %8695 = vmatpush.bf16.msra.mxu0 %v7972
    %8696 = vmatpush.bf16.msra.mxu0 %v7965
    %8697 = vmatpush.bf16.msra.mxu0 %v7958
    %8698 = vmatpush.bf16.msra.mxu0 %v7951
    %8699 = vmatpush.bf16.msra.mxu0 %v7944
    %8700 = vmatpush.bf16.msra.mxu0 %v7937
    %8701 = vmatpush.bf16.msra.mxu0 %v7930
    %8702 = vmatpush.bf16.msra.mxu0 %v7923
    %8703 = vmatmul.bf16.gmra.mxu0 %v8091
    %v8704 = vpop.f32.mrf.mxu0
    %v8705 = vadd.f32 %v8692, %v8704
    %v8706 = vpop.f32.mrf.mxu0
    %8707 = vdwg.mxu0
    %8708 = vmatpush.bf16.msra.mxu0 %v8028
    %8709 = vmatpush.bf16.msra.mxu0 %v8021
    %8710 = vmatpush.bf16.msra.mxu0 %v8014
    %8711 = vmatpush.bf16.msra.mxu0 %v8007
    %8712 = vmatpush.bf16.msra.mxu0 %v8000
    %8713 = vmatpush.bf16.msra.mxu0 %v7993
    %8714 = vmatpush.bf16.msra.mxu0 %v7986
    %8715 = vmatpush.bf16.msra.mxu0 %v7979
    %8716 = vmatmul.bf16.gmra.mxu0 %v8092
    %v8717 = vpop.f32.mrf.mxu0
    %v8718 = vadd.f32 %v8705, %v8717
    %v8719 = vpop.f32.mrf.mxu0
    %8720 = vdwg.mxu0
    %8721 = vmatpush.bf16.msra.mxu0 %v8084
    %8722 = vmatpush.bf16.msra.mxu0 %v8077
    %8723 = vmatpush.bf16.msra.mxu0 %v8070
    %8724 = vmatpush.bf16.msra.mxu0 %v8063
    %8725 = vmatpush.bf16.msra.mxu0 %v8056
    %8726 = vmatpush.bf16.msra.mxu0 %v8049
    %8727 = vmatpush.bf16.msra.mxu0 %v8042
    %8728 = vmatpush.bf16.msra.mxu0 %v8035
    %8729 = vmatmul.bf16.gmra.mxu0 %v8093
    %v8730 = vpop.f32.mrf.mxu0
    %v8731 = vadd.f32 %v8718, %v8730
    %v8732 = vpop.f32.mrf.mxu0
    %8733 = vdwg.mxu0
    %8734 = vmatpush.bf16.msra.mxu0 %v7693
    %8735 = vmatpush.bf16.msra.mxu0 %v7686
    %8736 = vmatpush.bf16.msra.mxu0 %v7679
    %8737 = vmatpush.bf16.msra.mxu0 %v7672
    %8738 = vmatpush.bf16.msra.mxu0 %v7665
    %8739 = vmatpush.bf16.msra.mxu0 %v7658
    %8740 = vmatpush.bf16.msra.mxu0 %v7651
    %8741 = vmatpush.bf16.msra.mxu0 %v7644
    %8742 = vmatmul.bf16.gmra.mxu0 %v8086
    %v8743 = vpop.f32.mrf.mxu0
    %v8744 = vadd.f32 %v8102, %v8743
    %v8745 = vpop.f32.mrf.mxu0
    %8746 = vdwg.mxu0
    %8747 = vmatpush.bf16.msra.mxu0 %v7749
    %8748 = vmatpush.bf16.msra.mxu0 %v7742
    %8749 = vmatpush.bf16.msra.mxu0 %v7735
    %8750 = vmatpush.bf16.msra.mxu0 %v7728
    %8751 = vmatpush.bf16.msra.mxu0 %v7721
    %8752 = vmatpush.bf16.msra.mxu0 %v7714
    %8753 = vmatpush.bf16.msra.mxu0 %v7707
    %8754 = vmatpush.bf16.msra.mxu0 %v7700
    %8755 = vmatmul.bf16.gmra.mxu0 %v8087
    %v8756 = vpop.f32.mrf.mxu0
    %v8757 = vadd.f32 %v8744, %v8756
    %v8758 = vpop.f32.mrf.mxu0
    %8759 = vdwg.mxu0
    %8760 = vmatpush.bf16.msra.mxu0 %v7805
    %8761 = vmatpush.bf16.msra.mxu0 %v7798
    %8762 = vmatpush.bf16.msra.mxu0 %v7791
    %8763 = vmatpush.bf16.msra.mxu0 %v7784
    %8764 = vmatpush.bf16.msra.mxu0 %v7777
    %8765 = vmatpush.bf16.msra.mxu0 %v7770
    %8766 = vmatpush.bf16.msra.mxu0 %v7763
    %8767 = vmatpush.bf16.msra.mxu0 %v7756
    %8768 = vmatmul.bf16.gmra.mxu0 %v8088
    %v8769 = vpop.f32.mrf.mxu0
    %v8770 = vadd.f32 %v8757, %v8769
    %v8771 = vpop.f32.mrf.mxu0
    %8772 = vdwg.mxu0
    %8773 = vmatpush.bf16.msra.mxu0 %v7861
    %8774 = vmatpush.bf16.msra.mxu0 %v7854
    %8775 = vmatpush.bf16.msra.mxu0 %v7847
    %8776 = vmatpush.bf16.msra.mxu0 %v7840
    %8777 = vmatpush.bf16.msra.mxu0 %v7833
    %8778 = vmatpush.bf16.msra.mxu0 %v7826
    %8779 = vmatpush.bf16.msra.mxu0 %v7819
    %8780 = vmatpush.bf16.msra.mxu0 %v7812
    %8781 = vmatmul.bf16.gmra.mxu0 %v8089
    %v8782 = vpop.f32.mrf.mxu0
    %v8783 = vadd.f32 %v8770, %v8782
    %v8784 = vpop.f32.mrf.mxu0
    %8785 = vdwg.mxu0
    %8786 = vmatpush.bf16.msra.mxu0 %v7917
    %8787 = vmatpush.bf16.msra.mxu0 %v7910
    %8788 = vmatpush.bf16.msra.mxu0 %v7903
    %8789 = vmatpush.bf16.msra.mxu0 %v7896
    %8790 = vmatpush.bf16.msra.mxu0 %v7889
    %8791 = vmatpush.bf16.msra.mxu0 %v7882
    %8792 = vmatpush.bf16.msra.mxu0 %v7875
    %8793 = vmatpush.bf16.msra.mxu0 %v7868
    %8794 = vmatmul.bf16.gmra.mxu0 %v8090
    %v8795 = vpop.f32.mrf.mxu0
    %v8796 = vadd.f32 %v8783, %v8795
    %v8797 = vpop.f32.mrf.mxu0
    %8798 = vdwg.mxu0
    %8799 = vmatpush.bf16.msra.mxu0 %v7973
    %8800 = vmatpush.bf16.msra.mxu0 %v7966
    %8801 = vmatpush.bf16.msra.mxu0 %v7959
    %8802 = vmatpush.bf16.msra.mxu0 %v7952
    %8803 = vmatpush.bf16.msra.mxu0 %v7945
    %8804 = vmatpush.bf16.msra.mxu0 %v7938
    %8805 = vmatpush.bf16.msra.mxu0 %v7931
    %8806 = vmatpush.bf16.msra.mxu0 %v7924
    %8807 = vmatmul.bf16.gmra.mxu0 %v8091
    %v8808 = vpop.f32.mrf.mxu0
    %v8809 = vadd.f32 %v8796, %v8808
    %v8810 = vpop.f32.mrf.mxu0
    %8811 = vdwg.mxu0
    %8812 = vmatpush.bf16.msra.mxu0 %v8029
    %8813 = vmatpush.bf16.msra.mxu0 %v8022
    %8814 = vmatpush.bf16.msra.mxu0 %v8015
    %8815 = vmatpush.bf16.msra.mxu0 %v8008
    %8816 = vmatpush.bf16.msra.mxu0 %v8001
    %8817 = vmatpush.bf16.msra.mxu0 %v7994
    %8818 = vmatpush.bf16.msra.mxu0 %v7987
    %8819 = vmatpush.bf16.msra.mxu0 %v7980
    %8820 = vmatmul.bf16.gmra.mxu0 %v8092
    %v8821 = vpop.f32.mrf.mxu0
    %v8822 = vadd.f32 %v8809, %v8821
    %v8823 = vpop.f32.mrf.mxu0
    %8824 = vdwg.mxu0
    %8825 = vmatpush.bf16.msra.mxu0 %v8085
    %8826 = vmatpush.bf16.msra.mxu0 %v8078
    %8827 = vmatpush.bf16.msra.mxu0 %v8071
    %8828 = vmatpush.bf16.msra.mxu0 %v8064
    %8829 = vmatpush.bf16.msra.mxu0 %v8057
    %8830 = vmatpush.bf16.msra.mxu0 %v8050
    %8831 = vmatpush.bf16.msra.mxu0 %v8043
    %8832 = vmatpush.bf16.msra.mxu0 %v8036
    %8833 = vmatmul.bf16.gmra.mxu0 %v8093
    %v8834 = vpop.f32.mrf.mxu0
    %v8835 = vadd.f32 %v8822, %v8834
    %v8836 = vpop.f32.mrf.mxu0
    %8837 = vdwg.mxu0
    %v8838 = vtanh.pop %v8211
    %v8839 = vtanh.pop %v8315
    %v8840 = vtanh.pop %v8419
    %v8841 = vtanh.pop %v8523
    %v8842 = vtanh.pop %v8627
    %v8843 = vtanh.pop %v8731
    %v8844 = vtanh.pop %v8835
    %8845 = vst [vmem:[#allocation7] sm:$0xff] %v8838
    %8846 = vst [vmem:[#allocation7 + $0x8] sm:$0xff] %v8839
    %8847 = vst [vmem:[#allocation7 + $0x10] sm:$0xff] %v8840
    %8848 = vst [vmem:[#allocation7 + $0x18] sm:$0xff] %v8841
    %8849 = vst [vmem:[#allocation7 + $0x20] sm:$0xff] %v8842
    %8850 = vst [vmem:[#allocation7 + $0x28] sm:$0xff] %v8843
    %vm8851 = vcmask 130048
    %8852 = vst.msk [vmem:[#allocation7 + $0x30] sm:$0xff] %vm8851, %v8844
    // Predicated region
    $region126: #{tpu_custom_call.1} parent=1 // pred_check
      _
    $region127: #{tpu_custom_call.1} parent=1 // pred_check_branch
      %8854 = sbr.rel (0) target = $region129
    $region128: #{tpu_custom_call.1} parent=1 // pred_region
      %8856 = vsyncadd [#allocation8], 0
      %s8858 = sshll.u32 [#allocation7], 4
      %s8859 = int_to_ptr.vmem [resolvable:$true] %s8858
      %s8860 = sshll.u32 %s16, 4
      %s8861 = int_to_ptr.hbm [resolvable:$true] %s8860
      %8863 = dma.vmem_to_hbm [thread:$0]  %s8859, 896, %s8861, [#allocation8]
    $region129: #{tpu_custom_call.1} parent=1 // pred_fallthru
      _
    // Predicated region
    $region130: #{tpu_custom_call.1} parent=1 // pred_check
      _
    $region131: #{tpu_custom_call.1} parent=1 // pred_check_branch
      %8865 = sbr.rel (0) target = $region133
    $region132: #{tpu_custom_call.1} parent=1 // pred_region
      %8867 = dma.done [#allocation8], 896
    $region133: #{tpu_custom_call.1} parent=1 // pred_fallthru
      _
    %8868 = vsyncpa [#allocation8], 1
  %8869 = vsyncmov [#allocation6]
  %s8870 = vpop.sfrf %8869
  %p8871 = scmp.eq.s32.totalorder %s8870, 0
  %p8872 = pneg %p8871
  %8874 = shalt.err (%p8872)
  %s8875 = scalar_lea.sflag [#allocation6], 1
  %8876 = vsyncmov %s8875
  %s8877 = vpop.sfrf %8876
  %p8878 = scmp.eq.s32.totalorder %s8877, 0
  %p8879 = pneg %p8878
  %8881 = shalt.err (%p8879)
  %s8882 = scalar_lea.sflag [#allocation6], 2
  %8883 = vsyncmov %s8882
  %s8884 = vpop.sfrf %8883
  %p8885 = scmp.eq.s32.totalorder %s8884, 0
  %p8886 = pneg %p8885
  %8888 = shalt.err (%p8886)
  %s8889 = scalar_lea.sflag [#allocation6], 3
  %8890 = vsyncmov %s8889
  %s8891 = vpop.sfrf %8890
  %p8892 = scmp.eq.s32.totalorder %s8891, 0
  %p8893 = pneg %p8892
  %8895 = shalt.err (%p8893)

</llo_original>
